<compile_context>
chip_gen: v7x
topology: tpu7x:2x2x1
jax: 0.10.0
libtpu: 0.0.40
codegen_flags: <defaults>
</compile_context>

<pallas_src>
import functools

import jax
import jax.numpy as jnp
from jax.experimental import pallas as pl
from jax.experimental.pallas import tpu as pltpu

BN_EPS = 1e-5
CPAD = 128          # every channel dim is zero-padded to 128 lanes
M_CHUNK = 256       # M tile of the in-kernel matmuls (multiple of 8 sublanes)

# Flat-layout geometry, specialized to 16x16 inputs.
#   conv input spatial per layer: 16, 8, 4, 2 ; pooled output: 8, 4, 2, 1
#   conv1 output : dense 16x16 rows        -> per-image stride 256, row width 16
#   a1 (conv2 in): zero-padded 10x10 rows  -> per-image stride 104 (ceil8(100)), wp 10
#   a2 (conv3 in): zero-padded  6x6  rows  -> per-image stride  40 (ceil8(36)),  wp  6
#   a3 (conv4 in): zero-padded  4x4  rows  -> per-image stride  16,              wp  4
# Activation buffers get a few zero "tail" rows so the last image's shifted
# slab loads (offset up to 2*wp+2) stay in bounds.


# ----------------------------------------------------------------------------
# Fused Pallas kernel: 4 x (conv3x3 + BN + ReLU + maxpool 2x2), B images/step
# ----------------------------------------------------------------------------
def _make_protoconvnet_kernel(b_tile):
    B = b_tile

    def kernel(x_ref, w1_ref, w2_ref, w3_ref, w4_ref, shift_ref, o_ref,
               a1, a2, a3, o_scr):

        # -- Prologue: zero the padded activation scratches.  Their zero
        #    border is the 'same' padding of convs 2-4; interiors are fully
        #    overwritten below.  Dense bf16 zero-fill of these small buffers
        #    (~340 KB per 8-image step) costs ~10 vst issues per image, which
        #    is cheaper in issued ops than fine-grained border-only stores.
        for ap in (a1, a2, a3):
            ap[...] = jnp.zeros_like(ap)

        # -- conv helper: accumulate `n_slabs` shifted-window K=128 matmuls
        #    into o_scr[0:m_tot] (f32 accumulation), chunked over M so no
        #    (M, 9*128) im2col slab is ever materialized and the per-chunk
        #    accumulator stays small.
        def conv(load_slab, n_slabs, w_ref, m_tot):
            for m0 in range(0, m_tot, M_CHUNK):
                m = min(M_CHUNK, m_tot - m0)
                acc = None
                for s in range(n_slabs):
                    part = jnp.dot(load_slab(s, m0, m),
                                   w_ref[s * CPAD:(s + 1) * CPAD, :],
                                   preferred_element_type=jnp.float32)
                    acc = part if acc is None else acc + part
                o_scr[m0:m0 + m, :] = acc

        # -- fused epilogue: 2x2 / stride-2 max-pool of the conv output
        #    (sublane-strided reads of o_scr) + folded conv-bias/BN shift +
        #    ReLU.  relu(maxpool(conv) + shift) == maxpool(relu(conv + shift))
        #    because the shift is a per-channel constant and relu/max are
        #    monotonic, so the epilogue runs on the small pooled rows only.
        def pool(layer, stride, wp, out_sp, store):
            shift = jnp.broadcast_to(shift_ref[layer:layer + 1, :],
                                     (out_sp, CPAD))
            for b in range(B):
                for yo in range(out_sp):
                    r0 = b * stride + 2 * yo * wp

                    def rd(off, r0=r0):
                        if out_sp == 1:
                            return o_scr[r0 + off:r0 + off + 1, :]
                        return o_scr[pl.ds(r0 + off, out_sp, stride=2), :]

                    v = jnp.maximum(jnp.maximum(rd(0), rd(1)),
                                    jnp.maximum(rd(wp), rd(wp + 1)))
                    store(b, yo, jnp.maximum(v + shift, 0.0))

        def store_act(a_ref, pr, wp):
            def store(b, yo, v):
                r = b * pr + (yo + 1) * wp + 1   # interior of padded row yo+1
                a_ref[r:r + v.shape[0], :] = v.astype(a_ref.dtype)
            return store

        def store_out(b, yo, v):
            o_ref[0, b:b + 1, :] = v             # final pool is 1x1 per image

        # ---- conv1: host-side im2col -> one K=128 matmul per M-chunk -------
        conv(lambda s, m0, m: x_ref[m0:m0 + m, :], 1, w1_ref, B * 256)
        pool(0, 256, 16, 8, store_act(a1, 104, 10))

        # ---- conv2: 9 shifted-window slabs of a1 (wp=10, stride 104) -------
        offs2 = [ky * 10 + kx for ky in range(3) for kx in range(3)]
        conv(lambda s, m0, m, a=a1, o=offs2: a[o[s] + m0:o[s] + m0 + m, :],
             9, w2_ref, B * 104)
        pool(1, 104, 10, 4, store_act(a2, 40, 6))

        # ---- conv3: slabs of a2 (wp=6, stride 40) ---------------------------
        offs3 = [ky * 6 + kx for ky in range(3) for kx in range(3)]
        conv(lambda s, m0, m, a=a2, o=offs3: a[o[s] + m0:o[s] + m0 + m, :],
             9, w3_ref, B * 40)
        pool(2, 40, 6, 2, store_act(a3, 16, 4))

        # ---- conv4: slabs of a3 (wp=4, stride 16) ---------------------------
        offs4 = [ky * 4 + kx for ky in range(3) for kx in range(3)]
        conv(lambda s, m0, m, a=a3, o=offs4: a[o[s] + m0:o[s] + m0 + m, :],
             9, w4_ref, B * 16)
        pool(3, 16, 4, 1, store_out)

    return kernel


# ----------------------------------------------------------------------------
# Host wrapper: layout plumbing + parameter folding + pallas_call
# ----------------------------------------------------------------------------
def _pick_batch_tile(n):
    for b in (8, 4, 2, 1):
        if n % b == 0:
            return b


def protoconvnet_forward(params, x_nchw):
    """params: list of 4 layer dicts (w, b, gamma, beta, mean, var). x: NCHW."""
    n, cin, h, w = x_nchw.shape
    assert (h, w) == (16, 16), "wrapper is specialized to 16x16 inputs"
    assert 9 * cin <= CPAD, "in_channels must satisfy 9*in_channels <= 128"
    assert len(params) == 4
    bt = _pick_batch_tile(n)

    # ---- layer-1 im2col on the host: tiny, and it gives the stem K=128 ------
    # K order is (ky, kx, cin), matching the folded layer-1 weight below.
    x = jnp.transpose(x_nchw, (0, 2, 3, 1)).astype(jnp.float32)          # NHWC
    xp = jnp.pad(x, ((0, 0), (1, 1), (1, 1), (0, 0)))
    patches = jnp.concatenate(
        [xp[:, ky:ky + h, kx:kx + w, :] for ky in range(3) for kx in range(3)],
        axis=-1)                                                  # (N,16,16,9*cin)
    patches = patches.reshape(n * h * w, 9 * cin)
    patches = jnp.pad(patches,
                      ((0, 0), (0, CPAD - 9 * cin))).astype(jnp.bfloat16)

    # ---- fold BN scale into weights; conv bias + BN shift into one vector ----
    w_mats, shifts = [], []
    for li, p in enumerate(params):
        cout, cin_l = p["w"].shape[0], p["w"].shape[1]
        scale = p["gamma"] / jnp.sqrt(p["var"] + BN_EPS)                  # (cout,)
        shift = (p["b"] - p["mean"]) * scale + p["beta"]                  # (cout,)
        wk = jnp.transpose(p["w"], (2, 3, 1, 0)) * scale                  # (3,3,cin,cout)
        if li == 0:   # stem: dense (9*cin, cout) -> pad to (128, 128)
            wk = wk.reshape(9 * cin_l, cout)
            wk = jnp.pad(wk, ((0, CPAD - 9 * cin_l), (0, CPAD - cout)))
        else:         # hidden: (3,3,128,128) -> (1152,128): 9 slabs of 128 rows
            wk = jnp.pad(wk, ((0, 0), (0, 0),
                              (0, CPAD - cin_l), (0, CPAD - cout)))
            wk = wk.reshape(9 * CPAD, CPAD)
        w_mats.append(wk.astype(jnp.bfloat16))
        shifts.append(jnp.pad(shift, (0, CPAD - cout)))
    shift_mat = jnp.stack(shifts).astype(jnp.float32)                     # (4, 128)

    grid_n = n // bt
    out = pl.pallas_call(
        _make_protoconvnet_kernel(bt),
        out_shape=jax.ShapeDtypeStruct((grid_n, bt, CPAD), jnp.float32),
        grid=(grid_n,),
        in_specs=[
            pl.BlockSpec((bt * 256, CPAD), lambda i: (i, 0)),   # stem patches
            pl.BlockSpec((CPAD, CPAD), lambda i: (0, 0)),       # w1 (constant)
            pl.BlockSpec((9 * CPAD, CPAD), lambda i: (0, 0)),   # w2 (constant)
            pl.BlockSpec((9 * CPAD, CPAD), lambda i: (0, 0)),   # w3 (constant)
            pl.BlockSpec((9 * CPAD, CPAD), lambda i: (0, 0)),   # w4 (constant)
            pl.BlockSpec((4, CPAD), lambda i: (0, 0)),          # folded shifts
        ],
        out_specs=pl.BlockSpec((1, bt, CPAD), lambda i: (i, 0, 0)),
        scratch_shapes=[
            pltpu.VMEM((bt * 104 + 24, CPAD), jnp.bfloat16),  # a1: padded 10x10/img
            pltpu.VMEM((bt * 40 + 16, CPAD), jnp.bfloat16),   # a2: padded 6x6/img
            pltpu.VMEM((bt * 16 + 16, CPAD), jnp.bfloat16),   # a3: padded 4x4/img
            pltpu.VMEM((bt * 256, CPAD), jnp.float32),        # conv-output staging
        ],
        compiler_params=pltpu.CompilerParams(
            dimension_semantics=("parallel",)),
    )(patches, *w_mats, shift_mat)

    cout_last = params[-1]["w"].shape[0]
    return out.reshape(n, CPAD)[:, :cout_last]   # y.view(N, -1), 1x1 final spatial


# ----------------------------------------------------------------------------
# Pure-JAX f32 reference of the same forward pass (for a sanity check)
# ----------------------------------------------------------------------------
def protoconvnet_reference(params, x_nchw):
    x = jnp.transpose(x_nchw, (0, 2, 3, 1)).astype(jnp.float32)
    for p in params:
        scale = p["gamma"] / jnp.sqrt(p["var"] + BN_EPS)
        shift = (p["b"] - p["mean"]) * scale + p["beta"]
        w_hwio = jnp.transpose(p["w"], (2, 3, 1, 0)) * scale
        x = jax.lax.conv_general_dilated(
            x, w_hwio, (1, 1), "SAME",
            dimension_numbers=("NHWC", "HWIO", "NHWC"))
        x = jnp.maximum(x + shift, 0.0)
        nn, hh, ww, c = x.shape
        x = x.reshape(nn, hh // 2, 2, ww // 2, 2, c).max(axis=(2, 4))
    return x.reshape(x.shape[0], -1)


# ----------------------------------------------------------------------------
# Parameter initialization (mirrors the PyTorch module's __init__)
# ----------------------------------------------------------------------------
def _trunc_normal(key, shape, std=0.02):
    # trunc_normal_(std=0.02, a=-0.04, b=0.04) == N(0, 0.02) truncated at +-2 sigma
    return std * jax.random.truncated_normal(key, -2.0, 2.0, shape, jnp.float32)


def init_protoconvnet_params(key, in_channels=3, hidden_channels=64,
                             out_channels=64):
    cins = [in_channels, hidden_channels, hidden_channels, hidden_channels]
    couts = [hidden_channels, hidden_channels, hidden_channels, out_channels]
    keys = jax.random.split(key, 4)
    layers = []
    for k, ci, co in zip(keys, cins, couts):
        layers.append(dict(
            w=_trunc_normal(k, (co, ci, 3, 3)),   # PyTorch (Cout, Cin, kH, kW)
            b=jnp.zeros((co,), jnp.float32),      # Conv2d bias  (zeros_)
            gamma=jnp.ones((co,), jnp.float32),   # BN weight    (ones_)
            beta=jnp.zeros((co,), jnp.float32),   # BN bias      (zeros_)
            mean=jnp.zeros((co,), jnp.float32),   # running_mean
            var=jnp.ones((co,), jnp.float32),     # running_var
        ))
    return layers


# ----------------------------------------------------------------------------
if __name__ == "__main__":
    key = jax.random.PRNGKey(0)
    k_param, k_input = jax.random.split(key)

    in_channels = 3
    params = init_protoconvnet_params(k_param, in_channels=in_channels)

    # Small deterministic input: batch=2, channels=3, spatial 16x16 (NCHW).
    x = jax.random.normal(k_input, (2, in_channels, 16, 16), jnp.float32)

    fwd = jax.jit(functools.partial(protoconvnet_forward, params))
    y = fwd(x)
    jax.block_until_ready(y)

    assert y.shape == (2, 64), y.shape
    assert bool(jnp.all(jnp.isfinite(y)))

    # Loose tolerance: the kernel uses bf16 matmul operands with f32 accumulation.
    y_ref = protoconvnet_reference(params, x)
    err = float(jnp.max(jnp.abs(y - y_ref)))
    tol = 5e-3 + 5e-2 * float(jnp.max(jnp.abs(y_ref)))
    assert err <= tol, (err, tol)

    print("KERNEL_OK")
</pallas_src>

<mosaic_0001>
module attributes {stable_mosaic.version = 11 : i64} {
  func.func @kernel(%arg0: i32, %arg1: memref<512x128xbf16, #tpu.memory_space<vmem>>, %arg2: memref<128x128xbf16, #tpu.memory_space<vmem>>, %arg3: memref<1152x128xbf16, #tpu.memory_space<vmem>>, %arg4: memref<1152x128xbf16, #tpu.memory_space<vmem>>, %arg5: memref<1152x128xbf16, #tpu.memory_space<vmem>>, %arg6: memref<4x128xf32, #tpu.memory_space<vmem>>, %arg7: memref<1x2x128xf32, #tpu.memory_space<vmem>>, %arg8: memref<232x128xbf16, #tpu.memory_space<vmem>>, %arg9: memref<96x128xbf16, #tpu.memory_space<vmem>>, %arg10: memref<48x128xbf16, #tpu.memory_space<vmem>>, %arg11: memref<512x128xf32, #tpu.memory_space<vmem>>) attributes {dimension_semantics = [#tpu.dimension_semantics<parallel>], iteration_bounds = array<i64: 1>, scalar_prefetch = 0 : i64, scratch_operands = 4 : i64, tpu.core_type = #tpu.core_type<tc>, window_params = [{transform_indices = @transform_0, window_bounds = array<i64: 512, 128>}, {pipeline_mode = #tpu.pipeline_mode<synchronous>, transform_indices = @transform_1, window_bounds = array<i64: 128, 128>}, {pipeline_mode = #tpu.pipeline_mode<synchronous>, transform_indices = @transform_2, window_bounds = array<i64: 1152, 128>}, {pipeline_mode = #tpu.pipeline_mode<synchronous>, transform_indices = @transform_3, window_bounds = array<i64: 1152, 128>}, {pipeline_mode = #tpu.pipeline_mode<synchronous>, transform_indices = @transform_4, window_bounds = array<i64: 1152, 128>}, {pipeline_mode = #tpu.pipeline_mode<synchronous>, transform_indices = @transform_5, window_bounds = array<i64: 4, 128>}, {transform_indices = @transform_6, window_bounds = array<i64: 1, 2, 128>}]} {
    %cst = arith.constant 0.000000e+00 : bf16
    %0 = vector.broadcast %cst : bf16 to vector<232x128xbf16>
    %c0 = arith.constant 0 : index
    %c0_0 = arith.constant 0 : index
    %1 = vector.load %arg8[%c0, %c0_0] : memref<232x128xbf16, #tpu.memory_space<vmem>>, vector<232x128xbf16>
    tpu.vector_store %arg8[%c0, %c0_0], %0 {strides = array<i32>} : memref<232x128xbf16, #tpu.memory_space<vmem>>, vector<232x128xbf16>,
    %cst_1 = arith.constant 0.000000e+00 : bf16
    %2 = vector.broadcast %cst_1 : bf16 to vector<96x128xbf16>
    %c0_2 = arith.constant 0 : index
    %c0_3 = arith.constant 0 : index
    %3 = vector.load %arg9[%c0_2, %c0_3] : memref<96x128xbf16, #tpu.memory_space<vmem>>, vector<96x128xbf16>
    tpu.vector_store %arg9[%c0_2, %c0_3], %2 {strides = array<i32>} : memref<96x128xbf16, #tpu.memory_space<vmem>>, vector<96x128xbf16>,
    %cst_4 = arith.constant 0.000000e+00 : bf16
    %4 = vector.broadcast %cst_4 : bf16 to vector<48x128xbf16>
    %c0_5 = arith.constant 0 : index
    %c0_6 = arith.constant 0 : index
    %5 = vector.load %arg10[%c0_5, %c0_6] : memref<48x128xbf16, #tpu.memory_space<vmem>>, vector<48x128xbf16>
    tpu.vector_store %arg10[%c0_5, %c0_6], %4 {strides = array<i32>} : memref<48x128xbf16, #tpu.memory_space<vmem>>, vector<48x128xbf16>,
    %c0_7 = arith.constant 0 : index
    %c0_8 = arith.constant 0 : index
    %6 = vector.load %arg1[%c0_7, %c0_8] : memref<512x128xbf16, #tpu.memory_space<vmem>>, vector<256x128xbf16>
    %c0_9 = arith.constant 0 : index
    %c0_10 = arith.constant 0 : index
    %7 = vector.load %arg2[%c0_9, %c0_10] : memref<128x128xbf16, #tpu.memory_space<vmem>>, vector<128x128xbf16>
    %cst_11 = arith.constant dense<0.000000e+00> : vector<256x128xf32>
    %8 = tpu.matmul %6, %7, %cst_11 {dimension_numbers = #tpu.dot_dimension_numbers<[1], [0], [0], [1], [0, 0, 1, 1], [], []>} : vector<256x128xbf16>, vector<128x128xbf16>, vector<256x128xf32> -> vector<256x128xf32>
    %c0_12 = arith.constant 0 : index
    %c0_13 = arith.constant 0 : index
    %9 = vector.load %arg11[%c0_12, %c0_13] : memref<512x128xf32, #tpu.memory_space<vmem>>, vector<256x128xf32>
    tpu.vector_store %arg11[%c0_12, %c0_13], %8 {strides = array<i32>} : memref<512x128xf32, #tpu.memory_space<vmem>>, vector<256x128xf32>,
    %c256 = arith.constant 256 : index
    %c0_14 = arith.constant 0 : index
    %10 = vector.load %arg1[%c256, %c0_14] : memref<512x128xbf16, #tpu.memory_space<vmem>>, vector<256x128xbf16>
    %c0_15 = arith.constant 0 : index
    %c0_16 = arith.constant 0 : index
    %11 = vector.load %arg2[%c0_15, %c0_16] : memref<128x128xbf16, #tpu.memory_space<vmem>>, vector<128x128xbf16>
    %cst_17 = arith.constant dense<0.000000e+00> : vector<256x128xf32>
    %12 = tpu.matmul %10, %11, %cst_17 {dimension_numbers = #tpu.dot_dimension_numbers<[1], [0], [0], [1], [0, 0, 1, 1], [], []>} : vector<256x128xbf16>, vector<128x128xbf16>, vector<256x128xf32> -> vector<256x128xf32>
    %c256_18 = arith.constant 256 : index
    %c0_19 = arith.constant 0 : index
    %13 = vector.load %arg11[%c256_18, %c0_19] : memref<512x128xf32, #tpu.memory_space<vmem>>, vector<256x128xf32>
    tpu.vector_store %arg11[%c256_18, %c0_19], %12 {strides = array<i32>} : memref<512x128xf32, #tpu.memory_space<vmem>>, vector<256x128xf32>,
    %c0_20 = arith.constant 0 : index
    %c0_21 = arith.constant 0 : index
    %14 = vector.load %arg6[%c0_20, %c0_21] : memref<4x128xf32, #tpu.memory_space<vmem>>, vector<1x128xf32>
    %15 = vector.shape_cast %14 : vector<1x128xf32> to vector<1x128xf32>
    %16 = vector.broadcast %15 : vector<1x128xf32> to vector<8x128xf32>
    %c0_22 = arith.constant 0 : index
    %c0_23 = arith.constant 0 : index
    %17 = tpu.strided_load %arg11[%c0_22, %c0_23] {strides = array<i32: 2, 1>} : memref<512x128xf32, #tpu.memory_space<vmem>>, vector<8x128xf32>
    %c1 = arith.constant 1 : index
    %c0_24 = arith.constant 0 : index
    %18 = tpu.strided_load %arg11[%c1, %c0_24] {strides = array<i32: 2, 1>} : memref<512x128xf32, #tpu.memory_space<vmem>>, vector<8x128xf32>
    %19 = arith.maximumf %17, %18 : vector<8x128xf32>
    %c16 = arith.constant 16 : index
    %c0_25 = arith.constant 0 : index
    %20 = tpu.strided_load %arg11[%c16, %c0_25] {strides = array<i32: 2, 1>} : memref<512x128xf32, #tpu.memory_space<vmem>>, vector<8x128xf32>
    %c17 = arith.constant 17 : index
    %c0_26 = arith.constant 0 : index
    %21 = tpu.strided_load %arg11[%c17, %c0_26] {strides = array<i32: 2, 1>} : memref<512x128xf32, #tpu.memory_space<vmem>>, vector<8x128xf32>
    %22 = arith.maximumf %20, %21 : vector<8x128xf32>
    %23 = arith.maximumf %19, %22 : vector<8x128xf32>
    %24 = arith.addf %23, %16 : vector<8x128xf32>
    %cst_27 = arith.constant 0.000000e+00 : f32
    %25 = vector.broadcast %cst_27 : f32 to vector<8x128xf32>
    %26 = arith.maximumf %24, %25 : vector<8x128xf32>
    %27 = arith.truncf %26 : vector<8x128xf32> to vector<8x128xbf16>
    %c11 = arith.constant 11 : index
    %c0_28 = arith.constant 0 : index
    %28 = vector.load %arg8[%c11, %c0_28] : memref<232x128xbf16, #tpu.memory_space<vmem>>, vector<8x128xbf16>
    tpu.vector_store %arg8[%c11, %c0_28], %27 {strides = array<i32>} : memref<232x128xbf16, #tpu.memory_space<vmem>>, vector<8x128xbf16>,
    %c32 = arith.constant 32 : index
    %c0_29 = arith.constant 0 : index
    %29 = tpu.strided_load %arg11[%c32, %c0_29] {strides = array<i32: 2, 1>} : memref<512x128xf32, #tpu.memory_space<vmem>>, vector<8x128xf32>
    %c33 = arith.constant 33 : index
    %c0_30 = arith.constant 0 : index
    %30 = tpu.strided_load %arg11[%c33, %c0_30] {strides = array<i32: 2, 1>} : memref<512x128xf32, #tpu.memory_space<vmem>>, vector<8x128xf32>
    %31 = arith.maximumf %29, %30 : vector<8x128xf32>
    %c48 = arith.constant 48 : index
    %c0_31 = arith.constant 0 : index
    %32 = tpu.strided_load %arg11[%c48, %c0_31] {strides = array<i32: 2, 1>} : memref<512x128xf32, #tpu.memory_space<vmem>>, vector<8x128xf32>
    %c49 = arith.constant 49 : index
    %c0_32 = arith.constant 0 : index
    %33 = tpu.strided_load %arg11[%c49, %c0_32] {strides = array<i32: 2, 1>} : memref<512x128xf32, #tpu.memory_space<vmem>>, vector<8x128xf32>
    %34 = arith.maximumf %32, %33 : vector<8x128xf32>
    %35 = arith.maximumf %31, %34 : vector<8x128xf32>
    %36 = arith.addf %35, %16 : vector<8x128xf32>
    %cst_33 = arith.constant 0.000000e+00 : f32
    %37 = vector.broadcast %cst_33 : f32 to vector<8x128xf32>
    %38 = arith.maximumf %36, %37 : vector<8x128xf32>
    %39 = arith.truncf %38 : vector<8x128xf32> to vector<8x128xbf16>
    %c21 = arith.constant 21 : index
    %c0_34 = arith.constant 0 : index
    %40 = vector.load %arg8[%c21, %c0_34] : memref<232x128xbf16, #tpu.memory_space<vmem>>, vector<8x128xbf16>
    tpu.vector_store %arg8[%c21, %c0_34], %39 {strides = array<i32>} : memref<232x128xbf16, #tpu.memory_space<vmem>>, vector<8x128xbf16>,
    %c64 = arith.constant 64 : index
    %c0_35 = arith.constant 0 : index
    %41 = tpu.strided_load %arg11[%c64, %c0_35] {strides = array<i32: 2, 1>} : memref<512x128xf32, #tpu.memory_space<vmem>>, vector<8x128xf32>
    %c65 = arith.constant 65 : index
    %c0_36 = arith.constant 0 : index
    %42 = tpu.strided_load %arg11[%c65, %c0_36] {strides = array<i32: 2, 1>} : memref<512x128xf32, #tpu.memory_space<vmem>>, vector<8x128xf32>
    %43 = arith.maximumf %41, %42 : vector<8x128xf32>
    %c80 = arith.constant 80 : index
    %c0_37 = arith.constant 0 : index
    %44 = tpu.strided_load %arg11[%c80, %c0_37] {strides = array<i32: 2, 1>} : memref<512x128xf32, #tpu.memory_space<vmem>>, vector<8x128xf32>
    %c81 = arith.constant 81 : index
    %c0_38 = arith.constant 0 : index
    %45 = tpu.strided_load %arg11[%c81, %c0_38] {strides = array<i32: 2, 1>} : memref<512x128xf32, #tpu.memory_space<vmem>>, vector<8x128xf32>
    %46 = arith.maximumf %44, %45 : vector<8x128xf32>
    %47 = arith.maximumf %43, %46 : vector<8x128xf32>
    %48 = arith.addf %47, %16 : vector<8x128xf32>
    %cst_39 = arith.constant 0.000000e+00 : f32
    %49 = vector.broadcast %cst_39 : f32 to vector<8x128xf32>
    %50 = arith.maximumf %48, %49 : vector<8x128xf32>
    %51 = arith.truncf %50 : vector<8x128xf32> to vector<8x128xbf16>
    %c31 = arith.constant 31 : index
    %c0_40 = arith.constant 0 : index
    %52 = vector.load %arg8[%c31, %c0_40] : memref<232x128xbf16, #tpu.memory_space<vmem>>, vector<8x128xbf16>
    tpu.vector_store %arg8[%c31, %c0_40], %51 {strides = array<i32>} : memref<232x128xbf16, #tpu.memory_space<vmem>>, vector<8x128xbf16>,
    %c96 = arith.constant 96 : index
    %c0_41 = arith.constant 0 : index
    %53 = tpu.strided_load %arg11[%c96, %c0_41] {strides = array<i32: 2, 1>} : memref<512x128xf32, #tpu.memory_space<vmem>>, vector<8x128xf32>
    %c97 = arith.constant 97 : index
    %c0_42 = arith.constant 0 : index
    %54 = tpu.strided_load %arg11[%c97, %c0_42] {strides = array<i32: 2, 1>} : memref<512x128xf32, #tpu.memory_space<vmem>>, vector<8x128xf32>
    %55 = arith.maximumf %53, %54 : vector<8x128xf32>
    %c112 = arith.constant 112 : index
    %c0_43 = arith.constant 0 : index
    %56 = tpu.strided_load %arg11[%c112, %c0_43] {strides = array<i32: 2, 1>} : memref<512x128xf32, #tpu.memory_space<vmem>>, vector<8x128xf32>
    %c113 = arith.constant 113 : index
    %c0_44 = arith.constant 0 : index
    %57 = tpu.strided_load %arg11[%c113, %c0_44] {strides = array<i32: 2, 1>} : memref<512x128xf32, #tpu.memory_space<vmem>>, vector<8x128xf32>
    %58 = arith.maximumf %56, %57 : vector<8x128xf32>
    %59 = arith.maximumf %55, %58 : vector<8x128xf32>
    %60 = arith.addf %59, %16 : vector<8x128xf32>
    %cst_45 = arith.constant 0.000000e+00 : f32
    %61 = vector.broadcast %cst_45 : f32 to vector<8x128xf32>
    %62 = arith.maximumf %60, %61 : vector<8x128xf32>
    %63 = arith.truncf %62 : vector<8x128xf32> to vector<8x128xbf16>
    %c41 = arith.constant 41 : index
    %c0_46 = arith.constant 0 : index
    %64 = vector.load %arg8[%c41, %c0_46] : memref<232x128xbf16, #tpu.memory_space<vmem>>, vector<8x128xbf16>
    tpu.vector_store %arg8[%c41, %c0_46], %63 {strides = array<i32>} : memref<232x128xbf16, #tpu.memory_space<vmem>>, vector<8x128xbf16>,
    %c128 = arith.constant 128 : index
    %c0_47 = arith.constant 0 : index
    %65 = tpu.strided_load %arg11[%c128, %c0_47] {strides = array<i32: 2, 1>} : memref<512x128xf32, #tpu.memory_space<vmem>>, vector<8x128xf32>
    %c129 = arith.constant 129 : index
    %c0_48 = arith.constant 0 : index
    %66 = tpu.strided_load %arg11[%c129, %c0_48] {strides = array<i32: 2, 1>} : memref<512x128xf32, #tpu.memory_space<vmem>>, vector<8x128xf32>
    %67 = arith.maximumf %65, %66 : vector<8x128xf32>
    %c144 = arith.constant 144 : index
    %c0_49 = arith.constant 0 : index
    %68 = tpu.strided_load %arg11[%c144, %c0_49] {strides = array<i32: 2, 1>} : memref<512x128xf32, #tpu.memory_space<vmem>>, vector<8x128xf32>
    %c145 = arith.constant 145 : index
    %c0_50 = arith.constant 0 : index
    %69 = tpu.strided_load %arg11[%c145, %c0_50] {strides = array<i32: 2, 1>} : memref<512x128xf32, #tpu.memory_space<vmem>>, vector<8x128xf32>
    %70 = arith.maximumf %68, %69 : vector<8x128xf32>
    %71 = arith.maximumf %67, %70 : vector<8x128xf32>
    %72 = arith.addf %71, %16 : vector<8x128xf32>
    %cst_51 = arith.constant 0.000000e+00 : f32
    %73 = vector.broadcast %cst_51 : f32 to vector<8x128xf32>
    %74 = arith.maximumf %72, %73 : vector<8x128xf32>
    %75 = arith.truncf %74 : vector<8x128xf32> to vector<8x128xbf16>
    %c51 = arith.constant 51 : index
    %c0_52 = arith.constant 0 : index
    %76 = vector.load %arg8[%c51, %c0_52] : memref<232x128xbf16, #tpu.memory_space<vmem>>, vector<8x128xbf16>
    tpu.vector_store %arg8[%c51, %c0_52], %75 {strides = array<i32>} : memref<232x128xbf16, #tpu.memory_space<vmem>>, vector<8x128xbf16>,
    %c160 = arith.constant 160 : index
    %c0_53 = arith.constant 0 : index
    %77 = tpu.strided_load %arg11[%c160, %c0_53] {strides = array<i32: 2, 1>} : memref<512x128xf32, #tpu.memory_space<vmem>>, vector<8x128xf32>
    %c161 = arith.constant 161 : index
    %c0_54 = arith.constant 0 : index
    %78 = tpu.strided_load %arg11[%c161, %c0_54] {strides = array<i32: 2, 1>} : memref<512x128xf32, #tpu.memory_space<vmem>>, vector<8x128xf32>
    %79 = arith.maximumf %77, %78 : vector<8x128xf32>
    %c176 = arith.constant 176 : index
    %c0_55 = arith.constant 0 : index
    %80 = tpu.strided_load %arg11[%c176, %c0_55] {strides = array<i32: 2, 1>} : memref<512x128xf32, #tpu.memory_space<vmem>>, vector<8x128xf32>
    %c177 = arith.constant 177 : index
    %c0_56 = arith.constant 0 : index
    %81 = tpu.strided_load %arg11[%c177, %c0_56] {strides = array<i32: 2, 1>} : memref<512x128xf32, #tpu.memory_space<vmem>>, vector<8x128xf32>
    %82 = arith.maximumf %80, %81 : vector<8x128xf32>
    %83 = arith.maximumf %79, %82 : vector<8x128xf32>
    %84 = arith.addf %83, %16 : vector<8x128xf32>
    %cst_57 = arith.constant 0.000000e+00 : f32
    %85 = vector.broadcast %cst_57 : f32 to vector<8x128xf32>
    %86 = arith.maximumf %84, %85 : vector<8x128xf32>
    %87 = arith.truncf %86 : vector<8x128xf32> to vector<8x128xbf16>
    %c61 = arith.constant 61 : index
    %c0_58 = arith.constant 0 : index
    %88 = vector.load %arg8[%c61, %c0_58] : memref<232x128xbf16, #tpu.memory_space<vmem>>, vector<8x128xbf16>
    tpu.vector_store %arg8[%c61, %c0_58], %87 {strides = array<i32>} : memref<232x128xbf16, #tpu.memory_space<vmem>>, vector<8x128xbf16>,
    %c192 = arith.constant 192 : index
    %c0_59 = arith.constant 0 : index
    %89 = tpu.strided_load %arg11[%c192, %c0_59] {strides = array<i32: 2, 1>} : memref<512x128xf32, #tpu.memory_space<vmem>>, vector<8x128xf32>
    %c193 = arith.constant 193 : index
    %c0_60 = arith.constant 0 : index
    %90 = tpu.strided_load %arg11[%c193, %c0_60] {strides = array<i32: 2, 1>} : memref<512x128xf32, #tpu.memory_space<vmem>>, vector<8x128xf32>
    %91 = arith.maximumf %89, %90 : vector<8x128xf32>
    %c208 = arith.constant 208 : index
    %c0_61 = arith.constant 0 : index
    %92 = tpu.strided_load %arg11[%c208, %c0_61] {strides = array<i32: 2, 1>} : memref<512x128xf32, #tpu.memory_space<vmem>>, vector<8x128xf32>
    %c209 = arith.constant 209 : index
    %c0_62 = arith.constant 0 : index
    %93 = tpu.strided_load %arg11[%c209, %c0_62] {strides = array<i32: 2, 1>} : memref<512x128xf32, #tpu.memory_space<vmem>>, vector<8x128xf32>
    %94 = arith.maximumf %92, %93 : vector<8x128xf32>
    %95 = arith.maximumf %91, %94 : vector<8x128xf32>
    %96 = arith.addf %95, %16 : vector<8x128xf32>
    %cst_63 = arith.constant 0.000000e+00 : f32
    %97 = vector.broadcast %cst_63 : f32 to vector<8x128xf32>
    %98 = arith.maximumf %96, %97 : vector<8x128xf32>
    %99 = arith.truncf %98 : vector<8x128xf32> to vector<8x128xbf16>
    %c71 = arith.constant 71 : index
    %c0_64 = arith.constant 0 : index
    %100 = vector.load %arg8[%c71, %c0_64] : memref<232x128xbf16, #tpu.memory_space<vmem>>, vector<8x128xbf16>
    tpu.vector_store %arg8[%c71, %c0_64], %99 {strides = array<i32>} : memref<232x128xbf16, #tpu.memory_space<vmem>>, vector<8x128xbf16>,
    %c224 = arith.constant 224 : index
    %c0_65 = arith.constant 0 : index
    %101 = tpu.strided_load %arg11[%c224, %c0_65] {strides = array<i32: 2, 1>} : memref<512x128xf32, #tpu.memory_space<vmem>>, vector<8x128xf32>
    %c225 = arith.constant 225 : index
    %c0_66 = arith.constant 0 : index
    %102 = tpu.strided_load %arg11[%c225, %c0_66] {strides = array<i32: 2, 1>} : memref<512x128xf32, #tpu.memory_space<vmem>>, vector<8x128xf32>
    %103 = arith.maximumf %101, %102 : vector<8x128xf32>
    %c240 = arith.constant 240 : index
    %c0_67 = arith.constant 0 : index
    %104 = tpu.strided_load %arg11[%c240, %c0_67] {strides = array<i32: 2, 1>} : memref<512x128xf32, #tpu.memory_space<vmem>>, vector<8x128xf32>
    %c241 = arith.constant 241 : index
    %c0_68 = arith.constant 0 : index
    %105 = tpu.strided_load %arg11[%c241, %c0_68] {strides = array<i32: 2, 1>} : memref<512x128xf32, #tpu.memory_space<vmem>>, vector<8x128xf32>
    %106 = arith.maximumf %104, %105 : vector<8x128xf32>
    %107 = arith.maximumf %103, %106 : vector<8x128xf32>
    %108 = arith.addf %107, %16 : vector<8x128xf32>
    %cst_69 = arith.constant 0.000000e+00 : f32
    %109 = vector.broadcast %cst_69 : f32 to vector<8x128xf32>
    %110 = arith.maximumf %108, %109 : vector<8x128xf32>
    %111 = arith.truncf %110 : vector<8x128xf32> to vector<8x128xbf16>
    %c81_70 = arith.constant 81 : index
    %c0_71 = arith.constant 0 : index
    %112 = vector.load %arg8[%c81_70, %c0_71] : memref<232x128xbf16, #tpu.memory_space<vmem>>, vector<8x128xbf16>
    tpu.vector_store %arg8[%c81_70, %c0_71], %111 {strides = array<i32>} : memref<232x128xbf16, #tpu.memory_space<vmem>>, vector<8x128xbf16>,
    %c256_72 = arith.constant 256 : index
    %c0_73 = arith.constant 0 : index
    %113 = tpu.strided_load %arg11[%c256_72, %c0_73] {strides = array<i32: 2, 1>} : memref<512x128xf32, #tpu.memory_space<vmem>>, vector<8x128xf32>
    %c257 = arith.constant 257 : index
    %c0_74 = arith.constant 0 : index
    %114 = tpu.strided_load %arg11[%c257, %c0_74] {strides = array<i32: 2, 1>} : memref<512x128xf32, #tpu.memory_space<vmem>>, vector<8x128xf32>
    %115 = arith.maximumf %113, %114 : vector<8x128xf32>
    %c272 = arith.constant 272 : index
    %c0_75 = arith.constant 0 : index
    %116 = tpu.strided_load %arg11[%c272, %c0_75] {strides = array<i32: 2, 1>} : memref<512x128xf32, #tpu.memory_space<vmem>>, vector<8x128xf32>
    %c273 = arith.constant 273 : index
    %c0_76 = arith.constant 0 : index
    %117 = tpu.strided_load %arg11[%c273, %c0_76] {strides = array<i32: 2, 1>} : memref<512x128xf32, #tpu.memory_space<vmem>>, vector<8x128xf32>
    %118 = arith.maximumf %116, %117 : vector<8x128xf32>
    %119 = arith.maximumf %115, %118 : vector<8x128xf32>
    %120 = arith.addf %119, %16 : vector<8x128xf32>
    %cst_77 = arith.constant 0.000000e+00 : f32
    %121 = vector.broadcast %cst_77 : f32 to vector<8x128xf32>
    %122 = arith.maximumf %120, %121 : vector<8x128xf32>
    %123 = arith.truncf %122 : vector<8x128xf32> to vector<8x128xbf16>
    %c115 = arith.constant 115 : index
    %c0_78 = arith.constant 0 : index
    %124 = vector.load %arg8[%c115, %c0_78] : memref<232x128xbf16, #tpu.memory_space<vmem>>, vector<8x128xbf16>
    tpu.vector_store %arg8[%c115, %c0_78], %123 {strides = array<i32>} : memref<232x128xbf16, #tpu.memory_space<vmem>>, vector<8x128xbf16>,
    %c288 = arith.constant 288 : index
    %c0_79 = arith.constant 0 : index
    %125 = tpu.strided_load %arg11[%c288, %c0_79] {strides = array<i32: 2, 1>} : memref<512x128xf32, #tpu.memory_space<vmem>>, vector<8x128xf32>
    %c289 = arith.constant 289 : index
    %c0_80 = arith.constant 0 : index
    %126 = tpu.strided_load %arg11[%c289, %c0_80] {strides = array<i32: 2, 1>} : memref<512x128xf32, #tpu.memory_space<vmem>>, vector<8x128xf32>
    %127 = arith.maximumf %125, %126 : vector<8x128xf32>
    %c304 = arith.constant 304 : index
    %c0_81 = arith.constant 0 : index
    %128 = tpu.strided_load %arg11[%c304, %c0_81] {strides = array<i32: 2, 1>} : memref<512x128xf32, #tpu.memory_space<vmem>>, vector<8x128xf32>
    %c305 = arith.constant 305 : index
    %c0_82 = arith.constant 0 : index
    %129 = tpu.strided_load %arg11[%c305, %c0_82] {strides = array<i32: 2, 1>} : memref<512x128xf32, #tpu.memory_space<vmem>>, vector<8x128xf32>
    %130 = arith.maximumf %128, %129 : vector<8x128xf32>
    %131 = arith.maximumf %127, %130 : vector<8x128xf32>
    %132 = arith.addf %131, %16 : vector<8x128xf32>
    %cst_83 = arith.constant 0.000000e+00 : f32
    %133 = vector.broadcast %cst_83 : f32 to vector<8x128xf32>
    %134 = arith.maximumf %132, %133 : vector<8x128xf32>
    %135 = arith.truncf %134 : vector<8x128xf32> to vector<8x128xbf16>
    %c125 = arith.constant 125 : index
    %c0_84 = arith.constant 0 : index
    %136 = vector.load %arg8[%c125, %c0_84] : memref<232x128xbf16, #tpu.memory_space<vmem>>, vector<8x128xbf16>
    tpu.vector_store %arg8[%c125, %c0_84], %135 {strides = array<i32>} : memref<232x128xbf16, #tpu.memory_space<vmem>>, vector<8x128xbf16>,
    %c320 = arith.constant 320 : index
    %c0_85 = arith.constant 0 : index
    %137 = tpu.strided_load %arg11[%c320, %c0_85] {strides = array<i32: 2, 1>} : memref<512x128xf32, #tpu.memory_space<vmem>>, vector<8x128xf32>
    %c321 = arith.constant 321 : index
    %c0_86 = arith.constant 0 : index
    %138 = tpu.strided_load %arg11[%c321, %c0_86] {strides = array<i32: 2, 1>} : memref<512x128xf32, #tpu.memory_space<vmem>>, vector<8x128xf32>
    %139 = arith.maximumf %137, %138 : vector<8x128xf32>
    %c336 = arith.constant 336 : index
    %c0_87 = arith.constant 0 : index
    %140 = tpu.strided_load %arg11[%c336, %c0_87] {strides = array<i32: 2, 1>} : memref<512x128xf32, #tpu.memory_space<vmem>>, vector<8x128xf32>
    %c337 = arith.constant 337 : index
    %c0_88 = arith.constant 0 : index
    %141 = tpu.strided_load %arg11[%c337, %c0_88] {strides = array<i32: 2, 1>} : memref<512x128xf32, #tpu.memory_space<vmem>>, vector<8x128xf32>
    %142 = arith.maximumf %140, %141 : vector<8x128xf32>
    %143 = arith.maximumf %139, %142 : vector<8x128xf32>
    %144 = arith.addf %143, %16 : vector<8x128xf32>
    %cst_89 = arith.constant 0.000000e+00 : f32
    %145 = vector.broadcast %cst_89 : f32 to vector<8x128xf32>
    %146 = arith.maximumf %144, %145 : vector<8x128xf32>
    %147 = arith.truncf %146 : vector<8x128xf32> to vector<8x128xbf16>
    %c135 = arith.constant 135 : index
    %c0_90 = arith.constant 0 : index
    %148 = vector.load %arg8[%c135, %c0_90] : memref<232x128xbf16, #tpu.memory_space<vmem>>, vector<8x128xbf16>
    tpu.vector_store %arg8[%c135, %c0_90], %147 {strides = array<i32>} : memref<232x128xbf16, #tpu.memory_space<vmem>>, vector<8x128xbf16>,
    %c352 = arith.constant 352 : index
    %c0_91 = arith.constant 0 : index
    %149 = tpu.strided_load %arg11[%c352, %c0_91] {strides = array<i32: 2, 1>} : memref<512x128xf32, #tpu.memory_space<vmem>>, vector<8x128xf32>
    %c353 = arith.constant 353 : index
    %c0_92 = arith.constant 0 : index
    %150 = tpu.strided_load %arg11[%c353, %c0_92] {strides = array<i32: 2, 1>} : memref<512x128xf32, #tpu.memory_space<vmem>>, vector<8x128xf32>
    %151 = arith.maximumf %149, %150 : vector<8x128xf32>
    %c368 = arith.constant 368 : index
    %c0_93 = arith.constant 0 : index
    %152 = tpu.strided_load %arg11[%c368, %c0_93] {strides = array<i32: 2, 1>} : memref<512x128xf32, #tpu.memory_space<vmem>>, vector<8x128xf32>
    %c369 = arith.constant 369 : index
    %c0_94 = arith.constant 0 : index
    %153 = tpu.strided_load %arg11[%c369, %c0_94] {strides = array<i32: 2, 1>} : memref<512x128xf32, #tpu.memory_space<vmem>>, vector<8x128xf32>
    %154 = arith.maximumf %152, %153 : vector<8x128xf32>
    %155 = arith.maximumf %151, %154 : vector<8x128xf32>
    %156 = arith.addf %155, %16 : vector<8x128xf32>
    %cst_95 = arith.constant 0.000000e+00 : f32
    %157 = vector.broadcast %cst_95 : f32 to vector<8x128xf32>
    %158 = arith.maximumf %156, %157 : vector<8x128xf32>
    %159 = arith.truncf %158 : vector<8x128xf32> to vector<8x128xbf16>
    %c145_96 = arith.constant 145 : index
    %c0_97 = arith.constant 0 : index
    %160 = vector.load %arg8[%c145_96, %c0_97] : memref<232x128xbf16, #tpu.memory_space<vmem>>, vector<8x128xbf16>
    tpu.vector_store %arg8[%c145_96, %c0_97], %159 {strides = array<i32>} : memref<232x128xbf16, #tpu.memory_space<vmem>>, vector<8x128xbf16>,
    %c384 = arith.constant 384 : index
    %c0_98 = arith.constant 0 : index
    %161 = tpu.strided_load %arg11[%c384, %c0_98] {strides = array<i32: 2, 1>} : memref<512x128xf32, #tpu.memory_space<vmem>>, vector<8x128xf32>
    %c385 = arith.constant 385 : index
    %c0_99 = arith.constant 0 : index
    %162 = tpu.strided_load %arg11[%c385, %c0_99] {strides = array<i32: 2, 1>} : memref<512x128xf32, #tpu.memory_space<vmem>>, vector<8x128xf32>
    %163 = arith.maximumf %161, %162 : vector<8x128xf32>
    %c400 = arith.constant 400 : index
    %c0_100 = arith.constant 0 : index
    %164 = tpu.strided_load %arg11[%c400, %c0_100] {strides = array<i32: 2, 1>} : memref<512x128xf32, #tpu.memory_space<vmem>>, vector<8x128xf32>
    %c401 = arith.constant 401 : index
    %c0_101 = arith.constant 0 : index
    %165 = tpu.strided_load %arg11[%c401, %c0_101] {strides = array<i32: 2, 1>} : memref<512x128xf32, #tpu.memory_space<vmem>>, vector<8x128xf32>
    %166 = arith.maximumf %164, %165 : vector<8x128xf32>
    %167 = arith.maximumf %163, %166 : vector<8x128xf32>
    %168 = arith.addf %167, %16 : vector<8x128xf32>
    %cst_102 = arith.constant 0.000000e+00 : f32
    %169 = vector.broadcast %cst_102 : f32 to vector<8x128xf32>
    %170 = arith.maximumf %168, %169 : vector<8x128xf32>
    %171 = arith.truncf %170 : vector<8x128xf32> to vector<8x128xbf16>
    %c155 = arith.constant 155 : index
    %c0_103 = arith.constant 0 : index
    %172 = vector.load %arg8[%c155, %c0_103] : memref<232x128xbf16, #tpu.memory_space<vmem>>, vector<8x128xbf16>
    tpu.vector_store %arg8[%c155, %c0_103], %171 {strides = array<i32>} : memref<232x128xbf16, #tpu.memory_space<vmem>>, vector<8x128xbf16>,
    %c416 = arith.constant 416 : index
    %c0_104 = arith.constant 0 : index
    %173 = tpu.strided_load %arg11[%c416, %c0_104] {strides = array<i32: 2, 1>} : memref<512x128xf32, #tpu.memory_space<vmem>>, vector<8x128xf32>
    %c417 = arith.constant 417 : index
    %c0_105 = arith.constant 0 : index
    %174 = tpu.strided_load %arg11[%c417, %c0_105] {strides = array<i32: 2, 1>} : memref<512x128xf32, #tpu.memory_space<vmem>>, vector<8x128xf32>
    %175 = arith.maximumf %173, %174 : vector<8x128xf32>
    %c432 = arith.constant 432 : index
    %c0_106 = arith.constant 0 : index
    %176 = tpu.strided_load %arg11[%c432, %c0_106] {strides = array<i32: 2, 1>} : memref<512x128xf32, #tpu.memory_space<vmem>>, vector<8x128xf32>
    %c433 = arith.constant 433 : index
    %c0_107 = arith.constant 0 : index
    %177 = tpu.strided_load %arg11[%c433, %c0_107] {strides = array<i32: 2, 1>} : memref<512x128xf32, #tpu.memory_space<vmem>>, vector<8x128xf32>
    %178 = arith.maximumf %176, %177 : vector<8x128xf32>
    %179 = arith.maximumf %175, %178 : vector<8x128xf32>
    %180 = arith.addf %179, %16 : vector<8x128xf32>
    %cst_108 = arith.constant 0.000000e+00 : f32
    %181 = vector.broadcast %cst_108 : f32 to vector<8x128xf32>
    %182 = arith.maximumf %180, %181 : vector<8x128xf32>
    %183 = arith.truncf %182 : vector<8x128xf32> to vector<8x128xbf16>
    %c165 = arith.constant 165 : index
    %c0_109 = arith.constant 0 : index
    %184 = vector.load %arg8[%c165, %c0_109] : memref<232x128xbf16, #tpu.memory_space<vmem>>, vector<8x128xbf16>
    tpu.vector_store %arg8[%c165, %c0_109], %183 {strides = array<i32>} : memref<232x128xbf16, #tpu.memory_space<vmem>>, vector<8x128xbf16>,
    %c448 = arith.constant 448 : index
    %c0_110 = arith.constant 0 : index
    %185 = tpu.strided_load %arg11[%c448, %c0_110] {strides = array<i32: 2, 1>} : memref<512x128xf32, #tpu.memory_space<vmem>>, vector<8x128xf32>
    %c449 = arith.constant 449 : index
    %c0_111 = arith.constant 0 : index
    %186 = tpu.strided_load %arg11[%c449, %c0_111] {strides = array<i32: 2, 1>} : memref<512x128xf32, #tpu.memory_space<vmem>>, vector<8x128xf32>
    %187 = arith.maximumf %185, %186 : vector<8x128xf32>
    %c464 = arith.constant 464 : index
    %c0_112 = arith.constant 0 : index
    %188 = tpu.strided_load %arg11[%c464, %c0_112] {strides = array<i32: 2, 1>} : memref<512x128xf32, #tpu.memory_space<vmem>>, vector<8x128xf32>
    %c465 = arith.constant 465 : index
    %c0_113 = arith.constant 0 : index
    %189 = tpu.strided_load %arg11[%c465, %c0_113] {strides = array<i32: 2, 1>} : memref<512x128xf32, #tpu.memory_space<vmem>>, vector<8x128xf32>
    %190 = arith.maximumf %188, %189 : vector<8x128xf32>
    %191 = arith.maximumf %187, %190 : vector<8x128xf32>
    %192 = arith.addf %191, %16 : vector<8x128xf32>
    %cst_114 = arith.constant 0.000000e+00 : f32
    %193 = vector.broadcast %cst_114 : f32 to vector<8x128xf32>
    %194 = arith.maximumf %192, %193 : vector<8x128xf32>
    %195 = arith.truncf %194 : vector<8x128xf32> to vector<8x128xbf16>
    %c175 = arith.constant 175 : index
    %c0_115 = arith.constant 0 : index
    %196 = vector.load %arg8[%c175, %c0_115] : memref<232x128xbf16, #tpu.memory_space<vmem>>, vector<8x128xbf16>
    tpu.vector_store %arg8[%c175, %c0_115], %195 {strides = array<i32>} : memref<232x128xbf16, #tpu.memory_space<vmem>>, vector<8x128xbf16>,
    %c480 = arith.constant 480 : index
    %c0_116 = arith.constant 0 : index
    %197 = tpu.strided_load %arg11[%c480, %c0_116] {strides = array<i32: 2, 1>} : memref<512x128xf32, #tpu.memory_space<vmem>>, vector<8x128xf32>
    %c481 = arith.constant 481 : index
    %c0_117 = arith.constant 0 : index
    %198 = tpu.strided_load %arg11[%c481, %c0_117] {strides = array<i32: 2, 1>} : memref<512x128xf32, #tpu.memory_space<vmem>>, vector<8x128xf32>
    %199 = arith.maximumf %197, %198 : vector<8x128xf32>
    %c496 = arith.constant 496 : index
    %c0_118 = arith.constant 0 : index
    %200 = tpu.strided_load %arg11[%c496, %c0_118] {strides = array<i32: 2, 1>} : memref<512x128xf32, #tpu.memory_space<vmem>>, vector<8x128xf32>
    %c497 = arith.constant 497 : index
    %c0_119 = arith.constant 0 : index
    %201 = tpu.strided_load %arg11[%c497, %c0_119] {strides = array<i32: 2, 1>} : memref<512x128xf32, #tpu.memory_space<vmem>>, vector<8x128xf32>
    %202 = arith.maximumf %200, %201 : vector<8x128xf32>
    %203 = arith.maximumf %199, %202 : vector<8x128xf32>
    %204 = arith.addf %203, %16 : vector<8x128xf32>
    %cst_120 = arith.constant 0.000000e+00 : f32
    %205 = vector.broadcast %cst_120 : f32 to vector<8x128xf32>
    %206 = arith.maximumf %204, %205 : vector<8x128xf32>
    %207 = arith.truncf %206 : vector<8x128xf32> to vector<8x128xbf16>
    %c185 = arith.constant 185 : index
    %c0_121 = arith.constant 0 : index
    %208 = vector.load %arg8[%c185, %c0_121] : memref<232x128xbf16, #tpu.memory_space<vmem>>, vector<8x128xbf16>
    tpu.vector_store %arg8[%c185, %c0_121], %207 {strides = array<i32>} : memref<232x128xbf16, #tpu.memory_space<vmem>>, vector<8x128xbf16>,
    %c0_122 = arith.constant 0 : index
    %c0_123 = arith.constant 0 : index
    %209 = vector.load %arg8[%c0_122, %c0_123] : memref<232x128xbf16, #tpu.memory_space<vmem>>, vector<208x128xbf16>
    %c0_124 = arith.constant 0 : index
    %c0_125 = arith.constant 0 : index
    %210 = vector.load %arg3[%c0_124, %c0_125] : memref<1152x128xbf16, #tpu.memory_space<vmem>>, vector<128x128xbf16>
    %cst_126 = arith.constant dense<0.000000e+00> : vector<208x128xf32>
    %211 = tpu.matmul %209, %210, %cst_126 {dimension_numbers = #tpu.dot_dimension_numbers<[1], [0], [0], [1], [0, 0, 1, 1], [], []>} : vector<208x128xbf16>, vector<128x128xbf16>, vector<208x128xf32> -> vector<208x128xf32>
    %c1_127 = arith.constant 1 : index
    %c0_128 = arith.constant 0 : index
    %212 = vector.load %arg8[%c1_127, %c0_128] : memref<232x128xbf16, #tpu.memory_space<vmem>>, vector<208x128xbf16>
    %c128_129 = arith.constant 128 : index
    %c0_130 = arith.constant 0 : index
    %213 = vector.load %arg3[%c128_129, %c0_130] : memref<1152x128xbf16, #tpu.memory_space<vmem>>, vector<128x128xbf16>
    %cst_131 = arith.constant dense<0.000000e+00> : vector<208x128xf32>
    %214 = tpu.matmul %212, %213, %cst_131 {dimension_numbers = #tpu.dot_dimension_numbers<[1], [0], [0], [1], [0, 0, 1, 1], [], []>} : vector<208x128xbf16>, vector<128x128xbf16>, vector<208x128xf32> -> vector<208x128xf32>
    %215 = arith.addf %211, %214 : vector<208x128xf32>
    %c2 = arith.constant 2 : index
    %c0_132 = arith.constant 0 : index
    %216 = vector.load %arg8[%c2, %c0_132] : memref<232x128xbf16, #tpu.memory_space<vmem>>, vector<208x128xbf16>
    %c256_133 = arith.constant 256 : index
    %c0_134 = arith.constant 0 : index
    %217 = vector.load %arg3[%c256_133, %c0_134] : memref<1152x128xbf16, #tpu.memory_space<vmem>>, vector<128x128xbf16>
    %cst_135 = arith.constant dense<0.000000e+00> : vector<208x128xf32>
    %218 = tpu.matmul %216, %217, %cst_135 {dimension_numbers = #tpu.dot_dimension_numbers<[1], [0], [0], [1], [0, 0, 1, 1], [], []>} : vector<208x128xbf16>, vector<128x128xbf16>, vector<208x128xf32> -> vector<208x128xf32>
    %219 = arith.addf %215, %218 : vector<208x128xf32>
    %c10 = arith.constant 10 : index
    %c0_136 = arith.constant 0 : index
    %220 = vector.load %arg8[%c10, %c0_136] : memref<232x128xbf16, #tpu.memory_space<vmem>>, vector<208x128xbf16>
    %c384_137 = arith.constant 384 : index
    %c0_138 = arith.constant 0 : index
    %221 = vector.load %arg3[%c384_137, %c0_138] : memref<1152x128xbf16, #tpu.memory_space<vmem>>, vector<128x128xbf16>
    %cst_139 = arith.constant dense<0.000000e+00> : vector<208x128xf32>
    %222 = tpu.matmul %220, %221, %cst_139 {dimension_numbers = #tpu.dot_dimension_numbers<[1], [0], [0], [1], [0, 0, 1, 1], [], []>} : vector<208x128xbf16>, vector<128x128xbf16>, vector<208x128xf32> -> vector<208x128xf32>
    %223 = arith.addf %219, %222 : vector<208x128xf32>
    %c11_140 = arith.constant 11 : index
    %c0_141 = arith.constant 0 : index
    %224 = vector.load %arg8[%c11_140, %c0_141] : memref<232x128xbf16, #tpu.memory_space<vmem>>, vector<208x128xbf16>
    %c512 = arith.constant 512 : index
    %c0_142 = arith.constant 0 : index
    %225 = vector.load %arg3[%c512, %c0_142] : memref<1152x128xbf16, #tpu.memory_space<vmem>>, vector<128x128xbf16>
    %cst_143 = arith.constant dense<0.000000e+00> : vector<208x128xf32>
    %226 = tpu.matmul %224, %225, %cst_143 {dimension_numbers = #tpu.dot_dimension_numbers<[1], [0], [0], [1], [0, 0, 1, 1], [], []>} : vector<208x128xbf16>, vector<128x128xbf16>, vector<208x128xf32> -> vector<208x128xf32>
    %227 = arith.addf %223, %226 : vector<208x128xf32>
    %c12 = arith.constant 12 : index
    %c0_144 = arith.constant 0 : index
    %228 = vector.load %arg8[%c12, %c0_144] : memref<232x128xbf16, #tpu.memory_space<vmem>>, vector<208x128xbf16>
    %c640 = arith.constant 640 : index
    %c0_145 = arith.constant 0 : index
    %229 = vector.load %arg3[%c640, %c0_145] : memref<1152x128xbf16, #tpu.memory_space<vmem>>, vector<128x128xbf16>
    %cst_146 = arith.constant dense<0.000000e+00> : vector<208x128xf32>
    %230 = tpu.matmul %228, %229, %cst_146 {dimension_numbers = #tpu.dot_dimension_numbers<[1], [0], [0], [1], [0, 0, 1, 1], [], []>} : vector<208x128xbf16>, vector<128x128xbf16>, vector<208x128xf32> -> vector<208x128xf32>
    %231 = arith.addf %227, %230 : vector<208x128xf32>
    %c20 = arith.constant 20 : index
    %c0_147 = arith.constant 0 : index
    %232 = vector.load %arg8[%c20, %c0_147] : memref<232x128xbf16, #tpu.memory_space<vmem>>, vector<208x128xbf16>
    %c768 = arith.constant 768 : index
    %c0_148 = arith.constant 0 : index
    %233 = vector.load %arg3[%c768, %c0_148] : memref<1152x128xbf16, #tpu.memory_space<vmem>>, vector<128x128xbf16>
    %cst_149 = arith.constant dense<0.000000e+00> : vector<208x128xf32>
    %234 = tpu.matmul %232, %233, %cst_149 {dimension_numbers = #tpu.dot_dimension_numbers<[1], [0], [0], [1], [0, 0, 1, 1], [], []>} : vector<208x128xbf16>, vector<128x128xbf16>, vector<208x128xf32> -> vector<208x128xf32>
    %235 = arith.addf %231, %234 : vector<208x128xf32>
    %c21_150 = arith.constant 21 : index
    %c0_151 = arith.constant 0 : index
    %236 = vector.load %arg8[%c21_150, %c0_151] : memref<232x128xbf16, #tpu.memory_space<vmem>>, vector<208x128xbf16>
    %c896 = arith.constant 896 : index
    %c0_152 = arith.constant 0 : index
    %237 = vector.load %arg3[%c896, %c0_152] : memref<1152x128xbf16, #tpu.memory_space<vmem>>, vector<128x128xbf16>
    %cst_153 = arith.constant dense<0.000000e+00> : vector<208x128xf32>
    %238 = tpu.matmul %236, %237, %cst_153 {dimension_numbers = #tpu.dot_dimension_numbers<[1], [0], [0], [1], [0, 0, 1, 1], [], []>} : vector<208x128xbf16>, vector<128x128xbf16>, vector<208x128xf32> -> vector<208x128xf32>
    %239 = arith.addf %235, %238 : vector<208x128xf32>
    %c22 = arith.constant 22 : index
    %c0_154 = arith.constant 0 : index
    %240 = vector.load %arg8[%c22, %c0_154] : memref<232x128xbf16, #tpu.memory_space<vmem>>, vector<208x128xbf16>
    %c1024 = arith.constant 1024 : index
    %c0_155 = arith.constant 0 : index
    %241 = vector.load %arg3[%c1024, %c0_155] : memref<1152x128xbf16, #tpu.memory_space<vmem>>, vector<128x128xbf16>
    %cst_156 = arith.constant dense<0.000000e+00> : vector<208x128xf32>
    %242 = tpu.matmul %240, %241, %cst_156 {dimension_numbers = #tpu.dot_dimension_numbers<[1], [0], [0], [1], [0, 0, 1, 1], [], []>} : vector<208x128xbf16>, vector<128x128xbf16>, vector<208x128xf32> -> vector<208x128xf32>
    %243 = arith.addf %239, %242 : vector<208x128xf32>
    %c0_157 = arith.constant 0 : index
    %c0_158 = arith.constant 0 : index
    %244 = vector.load %arg11[%c0_157, %c0_158] : memref<512x128xf32, #tpu.memory_space<vmem>>, vector<208x128xf32>
    tpu.vector_store %arg11[%c0_157, %c0_158], %243 {strides = array<i32>} : memref<512x128xf32, #tpu.memory_space<vmem>>, vector<208x128xf32>,
    %c1_159 = arith.constant 1 : index
    %c0_160 = arith.constant 0 : index
    %245 = vector.load %arg6[%c1_159, %c0_160] : memref<4x128xf32, #tpu.memory_space<vmem>>, vector<1x128xf32>
    %246 = vector.shape_cast %245 : vector<1x128xf32> to vector<1x128xf32>
    %247 = vector.broadcast %246 : vector<1x128xf32> to vector<4x128xf32>
    %c0_161 = arith.constant 0 : index
    %c0_162 = arith.constant 0 : index
    %248 = tpu.strided_load %arg11[%c0_161, %c0_162] {strides = array<i32: 2, 1>} : memref<512x128xf32, #tpu.memory_space<vmem>>, vector<4x128xf32>
    %c1_163 = arith.constant 1 : index
    %c0_164 = arith.constant 0 : index
    %249 = tpu.strided_load %arg11[%c1_163, %c0_164] {strides = array<i32: 2, 1>} : memref<512x128xf32, #tpu.memory_space<vmem>>, vector<4x128xf32>
    %250 = arith.maximumf %248, %249 : vector<4x128xf32>
    %c10_165 = arith.constant 10 : index
    %c0_166 = arith.constant 0 : index
    %251 = tpu.strided_load %arg11[%c10_165, %c0_166] {strides = array<i32: 2, 1>} : memref<512x128xf32, #tpu.memory_space<vmem>>, vector<4x128xf32>
    %c11_167 = arith.constant 11 : index
    %c0_168 = arith.constant 0 : index
    %252 = tpu.strided_load %arg11[%c11_167, %c0_168] {strides = array<i32: 2, 1>} : memref<512x128xf32, #tpu.memory_space<vmem>>, vector<4x128xf32>
    %253 = arith.maximumf %251, %252 : vector<4x128xf32>
    %254 = arith.maximumf %250, %253 : vector<4x128xf32>
    %255 = arith.addf %254, %247 : vector<4x128xf32>
    %cst_169 = arith.constant 0.000000e+00 : f32
    %256 = vector.broadcast %cst_169 : f32 to vector<4x128xf32>
    %257 = arith.maximumf %255, %256 : vector<4x128xf32>
    %258 = arith.truncf %257 : vector<4x128xf32> to vector<4x128xbf16>
    %c7 = arith.constant 7 : index
    %c0_170 = arith.constant 0 : index
    %259 = vector.load %arg9[%c7, %c0_170] : memref<96x128xbf16, #tpu.memory_space<vmem>>, vector<4x128xbf16>
    tpu.vector_store %arg9[%c7, %c0_170], %258 {strides = array<i32>} : memref<96x128xbf16, #tpu.memory_space<vmem>>, vector<4x128xbf16>,
    %c20_171 = arith.constant 20 : index
    %c0_172 = arith.constant 0 : index
    %260 = tpu.strided_load %arg11[%c20_171, %c0_172] {strides = array<i32: 2, 1>} : memref<512x128xf32, #tpu.memory_space<vmem>>, vector<4x128xf32>
    %c21_173 = arith.constant 21 : index
    %c0_174 = arith.constant 0 : index
    %261 = tpu.strided_load %arg11[%c21_173, %c0_174] {strides = array<i32: 2, 1>} : memref<512x128xf32, #tpu.memory_space<vmem>>, vector<4x128xf32>
    %262 = arith.maximumf %260, %261 : vector<4x128xf32>
    %c30 = arith.constant 30 : index
    %c0_175 = arith.constant 0 : index
    %263 = tpu.strided_load %arg11[%c30, %c0_175] {strides = array<i32: 2, 1>} : memref<512x128xf32, #tpu.memory_space<vmem>>, vector<4x128xf32>
    %c31_176 = arith.constant 31 : index
    %c0_177 = arith.constant 0 : index
    %264 = tpu.strided_load %arg11[%c31_176, %c0_177] {strides = array<i32: 2, 1>} : memref<512x128xf32, #tpu.memory_space<vmem>>, vector<4x128xf32>
    %265 = arith.maximumf %263, %264 : vector<4x128xf32>
    %266 = arith.maximumf %262, %265 : vector<4x128xf32>
    %267 = arith.addf %266, %247 : vector<4x128xf32>
    %cst_178 = arith.constant 0.000000e+00 : f32
    %268 = vector.broadcast %cst_178 : f32 to vector<4x128xf32>
    %269 = arith.maximumf %267, %268 : vector<4x128xf32>
    %270 = arith.truncf %269 : vector<4x128xf32> to vector<4x128xbf16>
    %c13 = arith.constant 13 : index
    %c0_179 = arith.constant 0 : index
    %271 = vector.load %arg9[%c13, %c0_179] : memref<96x128xbf16, #tpu.memory_space<vmem>>, vector<4x128xbf16>
    tpu.vector_store %arg9[%c13, %c0_179], %270 {strides = array<i32>} : memref<96x128xbf16, #tpu.memory_space<vmem>>, vector<4x128xbf16>,
    %c40 = arith.constant 40 : index
    %c0_180 = arith.constant 0 : index
    %272 = tpu.strided_load %arg11[%c40, %c0_180] {strides = array<i32: 2, 1>} : memref<512x128xf32, #tpu.memory_space<vmem>>, vector<4x128xf32>
    %c41_181 = arith.constant 41 : index
    %c0_182 = arith.constant 0 : index
    %273 = tpu.strided_load %arg11[%c41_181, %c0_182] {strides = array<i32: 2, 1>} : memref<512x128xf32, #tpu.memory_space<vmem>>, vector<4x128xf32>
    %274 = arith.maximumf %272, %273 : vector<4x128xf32>
    %c50 = arith.constant 50 : index
    %c0_183 = arith.constant 0 : index
    %275 = tpu.strided_load %arg11[%c50, %c0_183] {strides = array<i32: 2, 1>} : memref<512x128xf32, #tpu.memory_space<vmem>>, vector<4x128xf32>
    %c51_184 = arith.constant 51 : index
    %c0_185 = arith.constant 0 : index
    %276 = tpu.strided_load %arg11[%c51_184, %c0_185] {strides = array<i32: 2, 1>} : memref<512x128xf32, #tpu.memory_space<vmem>>, vector<4x128xf32>
    %277 = arith.maximumf %275, %276 : vector<4x128xf32>
    %278 = arith.maximumf %274, %277 : vector<4x128xf32>
    %279 = arith.addf %278, %247 : vector<4x128xf32>
    %cst_186 = arith.constant 0.000000e+00 : f32
    %280 = vector.broadcast %cst_186 : f32 to vector<4x128xf32>
    %281 = arith.maximumf %279, %280 : vector<4x128xf32>
    %282 = arith.truncf %281 : vector<4x128xf32> to vector<4x128xbf16>
    %c19 = arith.constant 19 : index
    %c0_187 = arith.constant 0 : index
    %283 = vector.load %arg9[%c19, %c0_187] : memref<96x128xbf16, #tpu.memory_space<vmem>>, vector<4x128xbf16>
    tpu.vector_store %arg9[%c19, %c0_187], %282 {strides = array<i32>} : memref<96x128xbf16, #tpu.memory_space<vmem>>, vector<4x128xbf16>,
    %c60 = arith.constant 60 : index
    %c0_188 = arith.constant 0 : index
    %284 = tpu.strided_load %arg11[%c60, %c0_188] {strides = array<i32: 2, 1>} : memref<512x128xf32, #tpu.memory_space<vmem>>, vector<4x128xf32>
    %c61_189 = arith.constant 61 : index
    %c0_190 = arith.constant 0 : index
    %285 = tpu.strided_load %arg11[%c61_189, %c0_190] {strides = array<i32: 2, 1>} : memref<512x128xf32, #tpu.memory_space<vmem>>, vector<4x128xf32>
    %286 = arith.maximumf %284, %285 : vector<4x128xf32>
    %c70 = arith.constant 70 : index
    %c0_191 = arith.constant 0 : index
    %287 = tpu.strided_load %arg11[%c70, %c0_191] {strides = array<i32: 2, 1>} : memref<512x128xf32, #tpu.memory_space<vmem>>, vector<4x128xf32>
    %c71_192 = arith.constant 71 : index
    %c0_193 = arith.constant 0 : index
    %288 = tpu.strided_load %arg11[%c71_192, %c0_193] {strides = array<i32: 2, 1>} : memref<512x128xf32, #tpu.memory_space<vmem>>, vector<4x128xf32>
    %289 = arith.maximumf %287, %288 : vector<4x128xf32>
    %290 = arith.maximumf %286, %289 : vector<4x128xf32>
    %291 = arith.addf %290, %247 : vector<4x128xf32>
    %cst_194 = arith.constant 0.000000e+00 : f32
    %292 = vector.broadcast %cst_194 : f32 to vector<4x128xf32>
    %293 = arith.maximumf %291, %292 : vector<4x128xf32>
    %294 = arith.truncf %293 : vector<4x128xf32> to vector<4x128xbf16>
    %c25 = arith.constant 25 : index
    %c0_195 = arith.constant 0 : index
    %295 = vector.load %arg9[%c25, %c0_195] : memref<96x128xbf16, #tpu.memory_space<vmem>>, vector<4x128xbf16>
    tpu.vector_store %arg9[%c25, %c0_195], %294 {strides = array<i32>} : memref<96x128xbf16, #tpu.memory_space<vmem>>, vector<4x128xbf16>,
    %c104 = arith.constant 104 : index
    %c0_196 = arith.constant 0 : index
    %296 = tpu.strided_load %arg11[%c104, %c0_196] {strides = array<i32: 2, 1>} : memref<512x128xf32, #tpu.memory_space<vmem>>, vector<4x128xf32>
    %c105 = arith.constant 105 : index
    %c0_197 = arith.constant 0 : index
    %297 = tpu.strided_load %arg11[%c105, %c0_197] {strides = array<i32: 2, 1>} : memref<512x128xf32, #tpu.memory_space<vmem>>, vector<4x128xf32>
    %298 = arith.maximumf %296, %297 : vector<4x128xf32>
    %c114 = arith.constant 114 : index
    %c0_198 = arith.constant 0 : index
    %299 = tpu.strided_load %arg11[%c114, %c0_198] {strides = array<i32: 2, 1>} : memref<512x128xf32, #tpu.memory_space<vmem>>, vector<4x128xf32>
    %c115_199 = arith.constant 115 : index
    %c0_200 = arith.constant 0 : index
    %300 = tpu.strided_load %arg11[%c115_199, %c0_200] {strides = array<i32: 2, 1>} : memref<512x128xf32, #tpu.memory_space<vmem>>, vector<4x128xf32>
    %301 = arith.maximumf %299, %300 : vector<4x128xf32>
    %302 = arith.maximumf %298, %301 : vector<4x128xf32>
    %303 = arith.addf %302, %247 : vector<4x128xf32>
    %cst_201 = arith.constant 0.000000e+00 : f32
    %304 = vector.broadcast %cst_201 : f32 to vector<4x128xf32>
    %305 = arith.maximumf %303, %304 : vector<4x128xf32>
    %306 = arith.truncf %305 : vector<4x128xf32> to vector<4x128xbf16>
    %c47 = arith.constant 47 : index
    %c0_202 = arith.constant 0 : index
    %307 = vector.load %arg9[%c47, %c0_202] : memref<96x128xbf16, #tpu.memory_space<vmem>>, vector<4x128xbf16>
    tpu.vector_store %arg9[%c47, %c0_202], %306 {strides = array<i32>} : memref<96x128xbf16, #tpu.memory_space<vmem>>, vector<4x128xbf16>,
    %c124 = arith.constant 124 : index
    %c0_203 = arith.constant 0 : index
    %308 = tpu.strided_load %arg11[%c124, %c0_203] {strides = array<i32: 2, 1>} : memref<512x128xf32, #tpu.memory_space<vmem>>, vector<4x128xf32>
    %c125_204 = arith.constant 125 : index
    %c0_205 = arith.constant 0 : index
    %309 = tpu.strided_load %arg11[%c125_204, %c0_205] {strides = array<i32: 2, 1>} : memref<512x128xf32, #tpu.memory_space<vmem>>, vector<4x128xf32>
    %310 = arith.maximumf %308, %309 : vector<4x128xf32>
    %c134 = arith.constant 134 : index
    %c0_206 = arith.constant 0 : index
    %311 = tpu.strided_load %arg11[%c134, %c0_206] {strides = array<i32: 2, 1>} : memref<512x128xf32, #tpu.memory_space<vmem>>, vector<4x128xf32>
    %c135_207 = arith.constant 135 : index
    %c0_208 = arith.constant 0 : index
    %312 = tpu.strided_load %arg11[%c135_207, %c0_208] {strides = array<i32: 2, 1>} : memref<512x128xf32, #tpu.memory_space<vmem>>, vector<4x128xf32>
    %313 = arith.maximumf %311, %312 : vector<4x128xf32>
    %314 = arith.maximumf %310, %313 : vector<4x128xf32>
    %315 = arith.addf %314, %247 : vector<4x128xf32>
    %cst_209 = arith.constant 0.000000e+00 : f32
    %316 = vector.broadcast %cst_209 : f32 to vector<4x128xf32>
    %317 = arith.maximumf %315, %316 : vector<4x128xf32>
    %318 = arith.truncf %317 : vector<4x128xf32> to vector<4x128xbf16>
    %c53 = arith.constant 53 : index
    %c0_210 = arith.constant 0 : index
    %319 = vector.load %arg9[%c53, %c0_210] : memref<96x128xbf16, #tpu.memory_space<vmem>>, vector<4x128xbf16>
    tpu.vector_store %arg9[%c53, %c0_210], %318 {strides = array<i32>} : memref<96x128xbf16, #tpu.memory_space<vmem>>, vector<4x128xbf16>,
    %c144_211 = arith.constant 144 : index
    %c0_212 = arith.constant 0 : index
    %320 = tpu.strided_load %arg11[%c144_211, %c0_212] {strides = array<i32: 2, 1>} : memref<512x128xf32, #tpu.memory_space<vmem>>, vector<4x128xf32>
    %c145_213 = arith.constant 145 : index
    %c0_214 = arith.constant 0 : index
    %321 = tpu.strided_load %arg11[%c145_213, %c0_214] {strides = array<i32: 2, 1>} : memref<512x128xf32, #tpu.memory_space<vmem>>, vector<4x128xf32>
    %322 = arith.maximumf %320, %321 : vector<4x128xf32>
    %c154 = arith.constant 154 : index
    %c0_215 = arith.constant 0 : index
    %323 = tpu.strided_load %arg11[%c154, %c0_215] {strides = array<i32: 2, 1>} : memref<512x128xf32, #tpu.memory_space<vmem>>, vector<4x128xf32>
    %c155_216 = arith.constant 155 : index
    %c0_217 = arith.constant 0 : index
    %324 = tpu.strided_load %arg11[%c155_216, %c0_217] {strides = array<i32: 2, 1>} : memref<512x128xf32, #tpu.memory_space<vmem>>, vector<4x128xf32>
    %325 = arith.maximumf %323, %324 : vector<4x128xf32>
    %326 = arith.maximumf %322, %325 : vector<4x128xf32>
    %327 = arith.addf %326, %247 : vector<4x128xf32>
    %cst_218 = arith.constant 0.000000e+00 : f32
    %328 = vector.broadcast %cst_218 : f32 to vector<4x128xf32>
    %329 = arith.maximumf %327, %328 : vector<4x128xf32>
    %330 = arith.truncf %329 : vector<4x128xf32> to vector<4x128xbf16>
    %c59 = arith.constant 59 : index
    %c0_219 = arith.constant 0 : index
    %331 = vector.load %arg9[%c59, %c0_219] : memref<96x128xbf16, #tpu.memory_space<vmem>>, vector<4x128xbf16>
    tpu.vector_store %arg9[%c59, %c0_219], %330 {strides = array<i32>} : memref<96x128xbf16, #tpu.memory_space<vmem>>, vector<4x128xbf16>,
    %c164 = arith.constant 164 : index
    %c0_220 = arith.constant 0 : index
    %332 = tpu.strided_load %arg11[%c164, %c0_220] {strides = array<i32: 2, 1>} : memref<512x128xf32, #tpu.memory_space<vmem>>, vector<4x128xf32>
    %c165_221 = arith.constant 165 : index
    %c0_222 = arith.constant 0 : index
    %333 = tpu.strided_load %arg11[%c165_221, %c0_222] {strides = array<i32: 2, 1>} : memref<512x128xf32, #tpu.memory_space<vmem>>, vector<4x128xf32>
    %334 = arith.maximumf %332, %333 : vector<4x128xf32>
    %c174 = arith.constant 174 : index
    %c0_223 = arith.constant 0 : index
    %335 = tpu.strided_load %arg11[%c174, %c0_223] {strides = array<i32: 2, 1>} : memref<512x128xf32, #tpu.memory_space<vmem>>, vector<4x128xf32>
    %c175_224 = arith.constant 175 : index
    %c0_225 = arith.constant 0 : index
    %336 = tpu.strided_load %arg11[%c175_224, %c0_225] {strides = array<i32: 2, 1>} : memref<512x128xf32, #tpu.memory_space<vmem>>, vector<4x128xf32>
    %337 = arith.maximumf %335, %336 : vector<4x128xf32>
    %338 = arith.maximumf %334, %337 : vector<4x128xf32>
    %339 = arith.addf %338, %247 : vector<4x128xf32>
    %cst_226 = arith.constant 0.000000e+00 : f32
    %340 = vector.broadcast %cst_226 : f32 to vector<4x128xf32>
    %341 = arith.maximumf %339, %340 : vector<4x128xf32>
    %342 = arith.truncf %341 : vector<4x128xf32> to vector<4x128xbf16>
    %c65_227 = arith.constant 65 : index
    %c0_228 = arith.constant 0 : index
    %343 = vector.load %arg9[%c65_227, %c0_228] : memref<96x128xbf16, #tpu.memory_space<vmem>>, vector<4x128xbf16>
    tpu.vector_store %arg9[%c65_227, %c0_228], %342 {strides = array<i32>} : memref<96x128xbf16, #tpu.memory_space<vmem>>, vector<4x128xbf16>,
    %c0_229 = arith.constant 0 : index
    %c0_230 = arith.constant 0 : index
    %344 = vector.load %arg9[%c0_229, %c0_230] : memref<96x128xbf16, #tpu.memory_space<vmem>>, vector<80x128xbf16>
    %c0_231 = arith.constant 0 : index
    %c0_232 = arith.constant 0 : index
    %345 = vector.load %arg4[%c0_231, %c0_232] : memref<1152x128xbf16, #tpu.memory_space<vmem>>, vector<128x128xbf16>
    %cst_233 = arith.constant dense<0.000000e+00> : vector<80x128xf32>
    %346 = tpu.matmul %344, %345, %cst_233 {dimension_numbers = #tpu.dot_dimension_numbers<[1], [0], [0], [1], [0, 0, 1, 1], [], []>} : vector<80x128xbf16>, vector<128x128xbf16>, vector<80x128xf32> -> vector<80x128xf32>
    %c1_234 = arith.constant 1 : index
    %c0_235 = arith.constant 0 : index
    %347 = vector.load %arg9[%c1_234, %c0_235] : memref<96x128xbf16, #tpu.memory_space<vmem>>, vector<80x128xbf16>
    %c128_236 = arith.constant 128 : index
    %c0_237 = arith.constant 0 : index
    %348 = vector.load %arg4[%c128_236, %c0_237] : memref<1152x128xbf16, #tpu.memory_space<vmem>>, vector<128x128xbf16>
    %cst_238 = arith.constant dense<0.000000e+00> : vector<80x128xf32>
    %349 = tpu.matmul %347, %348, %cst_238 {dimension_numbers = #tpu.dot_dimension_numbers<[1], [0], [0], [1], [0, 0, 1, 1], [], []>} : vector<80x128xbf16>, vector<128x128xbf16>, vector<80x128xf32> -> vector<80x128xf32>
    %350 = arith.addf %346, %349 : vector<80x128xf32>
    %c2_239 = arith.constant 2 : index
    %c0_240 = arith.constant 0 : index
    %351 = vector.load %arg9[%c2_239, %c0_240] : memref<96x128xbf16, #tpu.memory_space<vmem>>, vector<80x128xbf16>
    %c256_241 = arith.constant 256 : index
    %c0_242 = arith.constant 0 : index
    %352 = vector.load %arg4[%c256_241, %c0_242] : memref<1152x128xbf16, #tpu.memory_space<vmem>>, vector<128x128xbf16>
    %cst_243 = arith.constant dense<0.000000e+00> : vector<80x128xf32>
    %353 = tpu.matmul %351, %352, %cst_243 {dimension_numbers = #tpu.dot_dimension_numbers<[1], [0], [0], [1], [0, 0, 1, 1], [], []>} : vector<80x128xbf16>, vector<128x128xbf16>, vector<80x128xf32> -> vector<80x128xf32>
    %354 = arith.addf %350, %353 : vector<80x128xf32>
    %c6 = arith.constant 6 : index
    %c0_244 = arith.constant 0 : index
    %355 = vector.load %arg9[%c6, %c0_244] : memref<96x128xbf16, #tpu.memory_space<vmem>>, vector<80x128xbf16>
    %c384_245 = arith.constant 384 : index
    %c0_246 = arith.constant 0 : index
    %356 = vector.load %arg4[%c384_245, %c0_246] : memref<1152x128xbf16, #tpu.memory_space<vmem>>, vector<128x128xbf16>
    %cst_247 = arith.constant dense<0.000000e+00> : vector<80x128xf32>
    %357 = tpu.matmul %355, %356, %cst_247 {dimension_numbers = #tpu.dot_dimension_numbers<[1], [0], [0], [1], [0, 0, 1, 1], [], []>} : vector<80x128xbf16>, vector<128x128xbf16>, vector<80x128xf32> -> vector<80x128xf32>
    %358 = arith.addf %354, %357 : vector<80x128xf32>
    %c7_248 = arith.constant 7 : index
    %c0_249 = arith.constant 0 : index
    %359 = vector.load %arg9[%c7_248, %c0_249] : memref<96x128xbf16, #tpu.memory_space<vmem>>, vector<80x128xbf16>
    %c512_250 = arith.constant 512 : index
    %c0_251 = arith.constant 0 : index
    %360 = vector.load %arg4[%c512_250, %c0_251] : memref<1152x128xbf16, #tpu.memory_space<vmem>>, vector<128x128xbf16>
    %cst_252 = arith.constant dense<0.000000e+00> : vector<80x128xf32>
    %361 = tpu.matmul %359, %360, %cst_252 {dimension_numbers = #tpu.dot_dimension_numbers<[1], [0], [0], [1], [0, 0, 1, 1], [], []>} : vector<80x128xbf16>, vector<128x128xbf16>, vector<80x128xf32> -> vector<80x128xf32>
    %362 = arith.addf %358, %361 : vector<80x128xf32>
    %c8 = arith.constant 8 : index
    %c0_253 = arith.constant 0 : index
    %363 = vector.load %arg9[%c8, %c0_253] : memref<96x128xbf16, #tpu.memory_space<vmem>>, vector<80x128xbf16>
    %c640_254 = arith.constant 640 : index
    %c0_255 = arith.constant 0 : index
    %364 = vector.load %arg4[%c640_254, %c0_255] : memref<1152x128xbf16, #tpu.memory_space<vmem>>, vector<128x128xbf16>
    %cst_256 = arith.constant dense<0.000000e+00> : vector<80x128xf32>
    %365 = tpu.matmul %363, %364, %cst_256 {dimension_numbers = #tpu.dot_dimension_numbers<[1], [0], [0], [1], [0, 0, 1, 1], [], []>} : vector<80x128xbf16>, vector<128x128xbf16>, vector<80x128xf32> -> vector<80x128xf32>
    %366 = arith.addf %362, %365 : vector<80x128xf32>
    %c12_257 = arith.constant 12 : index
    %c0_258 = arith.constant 0 : index
    %367 = vector.load %arg9[%c12_257, %c0_258] : memref<96x128xbf16, #tpu.memory_space<vmem>>, vector<80x128xbf16>
    %c768_259 = arith.constant 768 : index
    %c0_260 = arith.constant 0 : index
    %368 = vector.load %arg4[%c768_259, %c0_260] : memref<1152x128xbf16, #tpu.memory_space<vmem>>, vector<128x128xbf16>
    %cst_261 = arith.constant dense<0.000000e+00> : vector<80x128xf32>
    %369 = tpu.matmul %367, %368, %cst_261 {dimension_numbers = #tpu.dot_dimension_numbers<[1], [0], [0], [1], [0, 0, 1, 1], [], []>} : vector<80x128xbf16>, vector<128x128xbf16>, vector<80x128xf32> -> vector<80x128xf32>
    %370 = arith.addf %366, %369 : vector<80x128xf32>
    %c13_262 = arith.constant 13 : index
    %c0_263 = arith.constant 0 : index
    %371 = vector.load %arg9[%c13_262, %c0_263] : memref<96x128xbf16, #tpu.memory_space<vmem>>, vector<80x128xbf16>
    %c896_264 = arith.constant 896 : index
    %c0_265 = arith.constant 0 : index
    %372 = vector.load %arg4[%c896_264, %c0_265] : memref<1152x128xbf16, #tpu.memory_space<vmem>>, vector<128x128xbf16>
    %cst_266 = arith.constant dense<0.000000e+00> : vector<80x128xf32>
    %373 = tpu.matmul %371, %372, %cst_266 {dimension_numbers = #tpu.dot_dimension_numbers<[1], [0], [0], [1], [0, 0, 1, 1], [], []>} : vector<80x128xbf16>, vector<128x128xbf16>, vector<80x128xf32> -> vector<80x128xf32>
    %374 = arith.addf %370, %373 : vector<80x128xf32>
    %c14 = arith.constant 14 : index
    %c0_267 = arith.constant 0 : index
    %375 = vector.load %arg9[%c14, %c0_267] : memref<96x128xbf16, #tpu.memory_space<vmem>>, vector<80x128xbf16>
    %c1024_268 = arith.constant 1024 : index
    %c0_269 = arith.constant 0 : index
    %376 = vector.load %arg4[%c1024_268, %c0_269] : memref<1152x128xbf16, #tpu.memory_space<vmem>>, vector<128x128xbf16>
    %cst_270 = arith.constant dense<0.000000e+00> : vector<80x128xf32>
    %377 = tpu.matmul %375, %376, %cst_270 {dimension_numbers = #tpu.dot_dimension_numbers<[1], [0], [0], [1], [0, 0, 1, 1], [], []>} : vector<80x128xbf16>, vector<128x128xbf16>, vector<80x128xf32> -> vector<80x128xf32>
    %378 = arith.addf %374, %377 : vector<80x128xf32>
    %c0_271 = arith.constant 0 : index
    %c0_272 = arith.constant 0 : index
    %379 = vector.load %arg11[%c0_271, %c0_272] : memref<512x128xf32, #tpu.memory_space<vmem>>, vector<80x128xf32>
    tpu.vector_store %arg11[%c0_271, %c0_272], %378 {strides = array<i32>} : memref<512x128xf32, #tpu.memory_space<vmem>>, vector<80x128xf32>,
    %c2_273 = arith.constant 2 : index
    %c0_274 = arith.constant 0 : index
    %380 = vector.load %arg6[%c2_273, %c0_274] : memref<4x128xf32, #tpu.memory_space<vmem>>, vector<1x128xf32>
    %381 = vector.shape_cast %380 : vector<1x128xf32> to vector<1x128xf32>
    %382 = vector.broadcast %381 : vector<1x128xf32> to vector<2x128xf32>
    %c0_275 = arith.constant 0 : index
    %c0_276 = arith.constant 0 : index
    %383 = tpu.strided_load %arg11[%c0_275, %c0_276] {strides = array<i32: 2, 1>} : memref<512x128xf32, #tpu.memory_space<vmem>>, vector<2x128xf32>
    %c1_277 = arith.constant 1 : index
    %c0_278 = arith.constant 0 : index
    %384 = tpu.strided_load %arg11[%c1_277, %c0_278] {strides = array<i32: 2, 1>} : memref<512x128xf32, #tpu.memory_space<vmem>>, vector<2x128xf32>
    %385 = arith.maximumf %383, %384 : vector<2x128xf32>
    %c6_279 = arith.constant 6 : index
    %c0_280 = arith.constant 0 : index
    %386 = tpu.strided_load %arg11[%c6_279, %c0_280] {strides = array<i32: 2, 1>} : memref<512x128xf32, #tpu.memory_space<vmem>>, vector<2x128xf32>
    %c7_281 = arith.constant 7 : index
    %c0_282 = arith.constant 0 : index
    %387 = tpu.strided_load %arg11[%c7_281, %c0_282] {strides = array<i32: 2, 1>} : memref<512x128xf32, #tpu.memory_space<vmem>>, vector<2x128xf32>
    %388 = arith.maximumf %386, %387 : vector<2x128xf32>
    %389 = arith.maximumf %385, %388 : vector<2x128xf32>
    %390 = arith.addf %389, %382 : vector<2x128xf32>
    %cst_283 = arith.constant 0.000000e+00 : f32
    %391 = vector.broadcast %cst_283 : f32 to vector<2x128xf32>
    %392 = arith.maximumf %390, %391 : vector<2x128xf32>
    %393 = arith.truncf %392 : vector<2x128xf32> to vector<2x128xbf16>
    %c5 = arith.constant 5 : index
    %c0_284 = arith.constant 0 : index
    %394 = vector.load %arg10[%c5, %c0_284] : memref<48x128xbf16, #tpu.memory_space<vmem>>, vector<2x128xbf16>
    tpu.vector_store %arg10[%c5, %c0_284], %393 {strides = array<i32>} : memref<48x128xbf16, #tpu.memory_space<vmem>>, vector<2x128xbf16>,
    %c12_285 = arith.constant 12 : index
    %c0_286 = arith.constant 0 : index
    %395 = tpu.strided_load %arg11[%c12_285, %c0_286] {strides = array<i32: 2, 1>} : memref<512x128xf32, #tpu.memory_space<vmem>>, vector<2x128xf32>
    %c13_287 = arith.constant 13 : index
    %c0_288 = arith.constant 0 : index
    %396 = tpu.strided_load %arg11[%c13_287, %c0_288] {strides = array<i32: 2, 1>} : memref<512x128xf32, #tpu.memory_space<vmem>>, vector<2x128xf32>
    %397 = arith.maximumf %395, %396 : vector<2x128xf32>
    %c18 = arith.constant 18 : index
    %c0_289 = arith.constant 0 : index
    %398 = tpu.strided_load %arg11[%c18, %c0_289] {strides = array<i32: 2, 1>} : memref<512x128xf32, #tpu.memory_space<vmem>>, vector<2x128xf32>
    %c19_290 = arith.constant 19 : index
    %c0_291 = arith.constant 0 : index
    %399 = tpu.strided_load %arg11[%c19_290, %c0_291] {strides = array<i32: 2, 1>} : memref<512x128xf32, #tpu.memory_space<vmem>>, vector<2x128xf32>
    %400 = arith.maximumf %398, %399 : vector<2x128xf32>
    %401 = arith.maximumf %397, %400 : vector<2x128xf32>
    %402 = arith.addf %401, %382 : vector<2x128xf32>
    %cst_292 = arith.constant 0.000000e+00 : f32
    %403 = vector.broadcast %cst_292 : f32 to vector<2x128xf32>
    %404 = arith.maximumf %402, %403 : vector<2x128xf32>
    %405 = arith.truncf %404 : vector<2x128xf32> to vector<2x128xbf16>
    %c9 = arith.constant 9 : index
    %c0_293 = arith.constant 0 : index
    %406 = vector.load %arg10[%c9, %c0_293] : memref<48x128xbf16, #tpu.memory_space<vmem>>, vector<2x128xbf16>
    tpu.vector_store %arg10[%c9, %c0_293], %405 {strides = array<i32>} : memref<48x128xbf16, #tpu.memory_space<vmem>>, vector<2x128xbf16>,
    %c40_294 = arith.constant 40 : index
    %c0_295 = arith.constant 0 : index
    %407 = tpu.strided_load %arg11[%c40_294, %c0_295] {strides = array<i32: 2, 1>} : memref<512x128xf32, #tpu.memory_space<vmem>>, vector<2x128xf32>
    %c41_296 = arith.constant 41 : index
    %c0_297 = arith.constant 0 : index
    %408 = tpu.strided_load %arg11[%c41_296, %c0_297] {strides = array<i32: 2, 1>} : memref<512x128xf32, #tpu.memory_space<vmem>>, vector<2x128xf32>
    %409 = arith.maximumf %407, %408 : vector<2x128xf32>
    %c46 = arith.constant 46 : index
    %c0_298 = arith.constant 0 : index
    %410 = tpu.strided_load %arg11[%c46, %c0_298] {strides = array<i32: 2, 1>} : memref<512x128xf32, #tpu.memory_space<vmem>>, vector<2x128xf32>
    %c47_299 = arith.constant 47 : index
    %c0_300 = arith.constant 0 : index
    %411 = tpu.strided_load %arg11[%c47_299, %c0_300] {strides = array<i32: 2, 1>} : memref<512x128xf32, #tpu.memory_space<vmem>>, vector<2x128xf32>
    %412 = arith.maximumf %410, %411 : vector<2x128xf32>
    %413 = arith.maximumf %409, %412 : vector<2x128xf32>
    %414 = arith.addf %413, %382 : vector<2x128xf32>
    %cst_301 = arith.constant 0.000000e+00 : f32
    %415 = vector.broadcast %cst_301 : f32 to vector<2x128xf32>
    %416 = arith.maximumf %414, %415 : vector<2x128xf32>
    %417 = arith.truncf %416 : vector<2x128xf32> to vector<2x128xbf16>
    %c21_302 = arith.constant 21 : index
    %c0_303 = arith.constant 0 : index
    %418 = vector.load %arg10[%c21_302, %c0_303] : memref<48x128xbf16, #tpu.memory_space<vmem>>, vector<2x128xbf16>
    tpu.vector_store %arg10[%c21_302, %c0_303], %417 {strides = array<i32>} : memref<48x128xbf16, #tpu.memory_space<vmem>>, vector<2x128xbf16>,
    %c52 = arith.constant 52 : index
    %c0_304 = arith.constant 0 : index
    %419 = tpu.strided_load %arg11[%c52, %c0_304] {strides = array<i32: 2, 1>} : memref<512x128xf32, #tpu.memory_space<vmem>>, vector<2x128xf32>
    %c53_305 = arith.constant 53 : index
    %c0_306 = arith.constant 0 : index
    %420 = tpu.strided_load %arg11[%c53_305, %c0_306] {strides = array<i32: 2, 1>} : memref<512x128xf32, #tpu.memory_space<vmem>>, vector<2x128xf32>
    %421 = arith.maximumf %419, %420 : vector<2x128xf32>
    %c58 = arith.constant 58 : index
    %c0_307 = arith.constant 0 : index
    %422 = tpu.strided_load %arg11[%c58, %c0_307] {strides = array<i32: 2, 1>} : memref<512x128xf32, #tpu.memory_space<vmem>>, vector<2x128xf32>
    %c59_308 = arith.constant 59 : index
    %c0_309 = arith.constant 0 : index
    %423 = tpu.strided_load %arg11[%c59_308, %c0_309] {strides = array<i32: 2, 1>} : memref<512x128xf32, #tpu.memory_space<vmem>>, vector<2x128xf32>
    %424 = arith.maximumf %422, %423 : vector<2x128xf32>
    %425 = arith.maximumf %421, %424 : vector<2x128xf32>
    %426 = arith.addf %425, %382 : vector<2x128xf32>
    %cst_310 = arith.constant 0.000000e+00 : f32
    %427 = vector.broadcast %cst_310 : f32 to vector<2x128xf32>
    %428 = arith.maximumf %426, %427 : vector<2x128xf32>
    %429 = arith.truncf %428 : vector<2x128xf32> to vector<2x128xbf16>
    %c25_311 = arith.constant 25 : index
    %c0_312 = arith.constant 0 : index
    %430 = vector.load %arg10[%c25_311, %c0_312] : memref<48x128xbf16, #tpu.memory_space<vmem>>, vector<2x128xbf16>
    tpu.vector_store %arg10[%c25_311, %c0_312], %429 {strides = array<i32>} : memref<48x128xbf16, #tpu.memory_space<vmem>>, vector<2x128xbf16>,
    %c0_313 = arith.constant 0 : index
    %c0_314 = arith.constant 0 : index
    %431 = vector.load %arg10[%c0_313, %c0_314] : memref<48x128xbf16, #tpu.memory_space<vmem>>, vector<32x128xbf16>
    %c0_315 = arith.constant 0 : index
    %c0_316 = arith.constant 0 : index
    %432 = vector.load %arg5[%c0_315, %c0_316] : memref<1152x128xbf16, #tpu.memory_space<vmem>>, vector<128x128xbf16>
    %cst_317 = arith.constant dense<0.000000e+00> : vector<32x128xf32>
    %433 = tpu.matmul %431, %432, %cst_317 {dimension_numbers = #tpu.dot_dimension_numbers<[1], [0], [0], [1], [0, 0, 1, 1], [], []>} : vector<32x128xbf16>, vector<128x128xbf16>, vector<32x128xf32> -> vector<32x128xf32>
    %c1_318 = arith.constant 1 : index
    %c0_319 = arith.constant 0 : index
    %434 = vector.load %arg10[%c1_318, %c0_319] : memref<48x128xbf16, #tpu.memory_space<vmem>>, vector<32x128xbf16>
    %c128_320 = arith.constant 128 : index
    %c0_321 = arith.constant 0 : index
    %435 = vector.load %arg5[%c128_320, %c0_321] : memref<1152x128xbf16, #tpu.memory_space<vmem>>, vector<128x128xbf16>
    %cst_322 = arith.constant dense<0.000000e+00> : vector<32x128xf32>
    %436 = tpu.matmul %434, %435, %cst_322 {dimension_numbers = #tpu.dot_dimension_numbers<[1], [0], [0], [1], [0, 0, 1, 1], [], []>} : vector<32x128xbf16>, vector<128x128xbf16>, vector<32x128xf32> -> vector<32x128xf32>
    %437 = arith.addf %433, %436 : vector<32x128xf32>
    %c2_323 = arith.constant 2 : index
    %c0_324 = arith.constant 0 : index
    %438 = vector.load %arg10[%c2_323, %c0_324] : memref<48x128xbf16, #tpu.memory_space<vmem>>, vector<32x128xbf16>
    %c256_325 = arith.constant 256 : index
    %c0_326 = arith.constant 0 : index
    %439 = vector.load %arg5[%c256_325, %c0_326] : memref<1152x128xbf16, #tpu.memory_space<vmem>>, vector<128x128xbf16>
    %cst_327 = arith.constant dense<0.000000e+00> : vector<32x128xf32>
    %440 = tpu.matmul %438, %439, %cst_327 {dimension_numbers = #tpu.dot_dimension_numbers<[1], [0], [0], [1], [0, 0, 1, 1], [], []>} : vector<32x128xbf16>, vector<128x128xbf16>, vector<32x128xf32> -> vector<32x128xf32>
    %441 = arith.addf %437, %440 : vector<32x128xf32>
    %c4 = arith.constant 4 : index
    %c0_328 = arith.constant 0 : index
    %442 = vector.load %arg10[%c4, %c0_328] : memref<48x128xbf16, #tpu.memory_space<vmem>>, vector<32x128xbf16>
    %c384_329 = arith.constant 384 : index
    %c0_330 = arith.constant 0 : index
    %443 = vector.load %arg5[%c384_329, %c0_330] : memref<1152x128xbf16, #tpu.memory_space<vmem>>, vector<128x128xbf16>
    %cst_331 = arith.constant dense<0.000000e+00> : vector<32x128xf32>
    %444 = tpu.matmul %442, %443, %cst_331 {dimension_numbers = #tpu.dot_dimension_numbers<[1], [0], [0], [1], [0, 0, 1, 1], [], []>} : vector<32x128xbf16>, vector<128x128xbf16>, vector<32x128xf32> -> vector<32x128xf32>
    %445 = arith.addf %441, %444 : vector<32x128xf32>
    %c5_332 = arith.constant 5 : index
    %c0_333 = arith.constant 0 : index
    %446 = vector.load %arg10[%c5_332, %c0_333] : memref<48x128xbf16, #tpu.memory_space<vmem>>, vector<32x128xbf16>
    %c512_334 = arith.constant 512 : index
    %c0_335 = arith.constant 0 : index
    %447 = vector.load %arg5[%c512_334, %c0_335] : memref<1152x128xbf16, #tpu.memory_space<vmem>>, vector<128x128xbf16>
    %cst_336 = arith.constant dense<0.000000e+00> : vector<32x128xf32>
    %448 = tpu.matmul %446, %447, %cst_336 {dimension_numbers = #tpu.dot_dimension_numbers<[1], [0], [0], [1], [0, 0, 1, 1], [], []>} : vector<32x128xbf16>, vector<128x128xbf16>, vector<32x128xf32> -> vector<32x128xf32>
    %449 = arith.addf %445, %448 : vector<32x128xf32>
    %c6_337 = arith.constant 6 : index
    %c0_338 = arith.constant 0 : index
    %450 = vector.load %arg10[%c6_337, %c0_338] : memref<48x128xbf16, #tpu.memory_space<vmem>>, vector<32x128xbf16>
    %c640_339 = arith.constant 640 : index
    %c0_340 = arith.constant 0 : index
    %451 = vector.load %arg5[%c640_339, %c0_340] : memref<1152x128xbf16, #tpu.memory_space<vmem>>, vector<128x128xbf16>
    %cst_341 = arith.constant dense<0.000000e+00> : vector<32x128xf32>
    %452 = tpu.matmul %450, %451, %cst_341 {dimension_numbers = #tpu.dot_dimension_numbers<[1], [0], [0], [1], [0, 0, 1, 1], [], []>} : vector<32x128xbf16>, vector<128x128xbf16>, vector<32x128xf32> -> vector<32x128xf32>
    %453 = arith.addf %449, %452 : vector<32x128xf32>
    %c8_342 = arith.constant 8 : index
    %c0_343 = arith.constant 0 : index
    %454 = vector.load %arg10[%c8_342, %c0_343] : memref<48x128xbf16, #tpu.memory_space<vmem>>, vector<32x128xbf16>
    %c768_344 = arith.constant 768 : index
    %c0_345 = arith.constant 0 : index
    %455 = vector.load %arg5[%c768_344, %c0_345] : memref<1152x128xbf16, #tpu.memory_space<vmem>>, vector<128x128xbf16>
    %cst_346 = arith.constant dense<0.000000e+00> : vector<32x128xf32>
    %456 = tpu.matmul %454, %455, %cst_346 {dimension_numbers = #tpu.dot_dimension_numbers<[1], [0], [0], [1], [0, 0, 1, 1], [], []>} : vector<32x128xbf16>, vector<128x128xbf16>, vector<32x128xf32> -> vector<32x128xf32>
    %457 = arith.addf %453, %456 : vector<32x128xf32>
    %c9_347 = arith.constant 9 : index
    %c0_348 = arith.constant 0 : index
    %458 = vector.load %arg10[%c9_347, %c0_348] : memref<48x128xbf16, #tpu.memory_space<vmem>>, vector<32x128xbf16>
    %c896_349 = arith.constant 896 : index
    %c0_350 = arith.constant 0 : index
    %459 = vector.load %arg5[%c896_349, %c0_350] : memref<1152x128xbf16, #tpu.memory_space<vmem>>, vector<128x128xbf16>
    %cst_351 = arith.constant dense<0.000000e+00> : vector<32x128xf32>
    %460 = tpu.matmul %458, %459, %cst_351 {dimension_numbers = #tpu.dot_dimension_numbers<[1], [0], [0], [1], [0, 0, 1, 1], [], []>} : vector<32x128xbf16>, vector<128x128xbf16>, vector<32x128xf32> -> vector<32x128xf32>
    %461 = arith.addf %457, %460 : vector<32x128xf32>
    %c10_352 = arith.constant 10 : index
    %c0_353 = arith.constant 0 : index
    %462 = vector.load %arg10[%c10_352, %c0_353] : memref<48x128xbf16, #tpu.memory_space<vmem>>, vector<32x128xbf16>
    %c1024_354 = arith.constant 1024 : index
    %c0_355 = arith.constant 0 : index
    %463 = vector.load %arg5[%c1024_354, %c0_355] : memref<1152x128xbf16, #tpu.memory_space<vmem>>, vector<128x128xbf16>
    %cst_356 = arith.constant dense<0.000000e+00> : vector<32x128xf32>
    %464 = tpu.matmul %462, %463, %cst_356 {dimension_numbers = #tpu.dot_dimension_numbers<[1], [0], [0], [1], [0, 0, 1, 1], [], []>} : vector<32x128xbf16>, vector<128x128xbf16>, vector<32x128xf32> -> vector<32x128xf32>
    %465 = arith.addf %461, %464 : vector<32x128xf32>
    %c0_357 = arith.constant 0 : index
    %c0_358 = arith.constant 0 : index
    %466 = vector.load %arg11[%c0_357, %c0_358] : memref<512x128xf32, #tpu.memory_space<vmem>>, vector<32x128xf32>
    tpu.vector_store %arg11[%c0_357, %c0_358], %465 {strides = array<i32>} : memref<512x128xf32, #tpu.memory_space<vmem>>, vector<32x128xf32>,
    %c3 = arith.constant 3 : index
    %c0_359 = arith.constant 0 : index
    %467 = vector.load %arg6[%c3, %c0_359] : memref<4x128xf32, #tpu.memory_space<vmem>>, vector<1x128xf32>
    %c0_360 = arith.constant 0 : index
    %c0_361 = arith.constant 0 : index
    %468 = vector.load %arg11[%c0_360, %c0_361] : memref<512x128xf32, #tpu.memory_space<vmem>>, vector<1x128xf32>
    %c1_362 = arith.constant 1 : index
    %c0_363 = arith.constant 0 : index
    %469 = vector.load %arg11[%c1_362, %c0_363] : memref<512x128xf32, #tpu.memory_space<vmem>>, vector<1x128xf32>
    %470 = arith.maximumf %468, %469 : vector<1x128xf32>
    %c4_364 = arith.constant 4 : index
    %c0_365 = arith.constant 0 : index
    %471 = vector.load %arg11[%c4_364, %c0_365] : memref<512x128xf32, #tpu.memory_space<vmem>>, vector<1x128xf32>
    %c5_366 = arith.constant 5 : index
    %c0_367 = arith.constant 0 : index
    %472 = vector.load %arg11[%c5_366, %c0_367] : memref<512x128xf32, #tpu.memory_space<vmem>>, vector<1x128xf32>
    %473 = arith.maximumf %471, %472 : vector<1x128xf32>
    %474 = arith.maximumf %470, %473 : vector<1x128xf32>
    %475 = arith.addf %474, %467 : vector<1x128xf32>
    %cst_368 = arith.constant 0.000000e+00 : f32
    %476 = vector.broadcast %cst_368 : f32 to vector<1x128xf32>
    %477 = arith.maximumf %475, %476 : vector<1x128xf32>
    %c0_369 = arith.constant 0 : index
    %c0_370 = arith.constant 0 : index
    %c0_371 = arith.constant 0 : index
    %478 = vector.load %arg7[%c0_369, %c0_370, %c0_371] : memref<1x2x128xf32, #tpu.memory_space<vmem>>, vector<1x1x128xf32>
    %479 = vector.shape_cast %478 : vector<1x1x128xf32> to vector<1x128xf32>
    %480 = vector.shape_cast %477 : vector<1x128xf32> to vector<1x1x128xf32>
    tpu.vector_store %arg7[%c0_369, %c0_370, %c0_371], %480 {strides = array<i32>} : memref<1x2x128xf32, #tpu.memory_space<vmem>>, vector<1x1x128xf32>,
    %c16_372 = arith.constant 16 : index
    %c0_373 = arith.constant 0 : index
    %481 = vector.load %arg11[%c16_372, %c0_373] : memref<512x128xf32, #tpu.memory_space<vmem>>, vector<1x128xf32>
    %c17_374 = arith.constant 17 : index
    %c0_375 = arith.constant 0 : index
    %482 = vector.load %arg11[%c17_374, %c0_375] : memref<512x128xf32, #tpu.memory_space<vmem>>, vector<1x128xf32>
    %483 = arith.maximumf %481, %482 : vector<1x128xf32>
    %c20_376 = arith.constant 20 : index
    %c0_377 = arith.constant 0 : index
    %484 = vector.load %arg11[%c20_376, %c0_377] : memref<512x128xf32, #tpu.memory_space<vmem>>, vector<1x128xf32>
    %c21_378 = arith.constant 21 : index
    %c0_379 = arith.constant 0 : index
    %485 = vector.load %arg11[%c21_378, %c0_379] : memref<512x128xf32, #tpu.memory_space<vmem>>, vector<1x128xf32>
    %486 = arith.maximumf %484, %485 : vector<1x128xf32>
    %487 = arith.maximumf %483, %486 : vector<1x128xf32>
    %488 = arith.addf %487, %467 : vector<1x128xf32>
    %cst_380 = arith.constant 0.000000e+00 : f32
    %489 = vector.broadcast %cst_380 : f32 to vector<1x128xf32>
    %490 = arith.maximumf %488, %489 : vector<1x128xf32>
    %c0_381 = arith.constant 0 : index
    %c1_382 = arith.constant 1 : index
    %c0_383 = arith.constant 0 : index
    %491 = vector.load %arg7[%c0_381, %c1_382, %c0_383] : memref<1x2x128xf32, #tpu.memory_space<vmem>>, vector<1x1x128xf32>
    %492 = vector.shape_cast %491 : vector<1x1x128xf32> to vector<1x128xf32>
    %493 = vector.shape_cast %490 : vector<1x128xf32> to vector<1x1x128xf32>
    tpu.vector_store %arg7[%c0_381, %c1_382, %c0_383], %493 {strides = array<i32>} : memref<1x2x128xf32, #tpu.memory_space<vmem>>, vector<1x1x128xf32>,
    return
  }
  func.func @transform_0(%arg0: i32) -> (i32, i32) {
    %c0_i32 = arith.constant 0 : i32
    %c0_i32_0 = arith.constant 0 : i32
    return %arg0, %c0_i32 : i32, i32
  }
  func.func @transform_1(%arg0: i32) -> (i32, i32) {
    %c0_i32 = arith.constant 0 : i32
    %c0_i32_0 = arith.constant 0 : i32
    %c0_i32_1 = arith.constant 0 : i32
    return %c0_i32, %c0_i32_0 : i32, i32
  }
  func.func @transform_2(%arg0: i32) -> (i32, i32) {
    %c0_i32 = arith.constant 0 : i32
    %c0_i32_0 = arith.constant 0 : i32
    %c0_i32_1 = arith.constant 0 : i32
    return %c0_i32, %c0_i32_0 : i32, i32
  }
  func.func @transform_3(%arg0: i32) -> (i32, i32) {
    %c0_i32 = arith.constant 0 : i32
    %c0_i32_0 = arith.constant 0 : i32
    %c0_i32_1 = arith.constant 0 : i32
    return %c0_i32, %c0_i32_0 : i32, i32
  }
  func.func @transform_4(%arg0: i32) -> (i32, i32) {
    %c0_i32 = arith.constant 0 : i32
    %c0_i32_0 = arith.constant 0 : i32
    %c0_i32_1 = arith.constant 0 : i32
    return %c0_i32, %c0_i32_0 : i32, i32
  }
  func.func @transform_5(%arg0: i32) -> (i32, i32) {
    %c0_i32 = arith.constant 0 : i32
    %c0_i32_0 = arith.constant 0 : i32
    %c0_i32_1 = arith.constant 0 : i32
    return %c0_i32, %c0_i32_0 : i32, i32
  }
  func.func @transform_6(%arg0: i32) -> (i32, i32, i32) {
    %c0_i32 = arith.constant 0 : i32
    %c0_i32_0 = arith.constant 0 : i32
    %c0_i32_1 = arith.constant 0 : i32
    return %arg0, %c0_i32, %c0_i32_0 : i32, i32, i32
  }
}

</mosaic_0001>

<llo_original>
// kernel: protoconvnet_forward.1
$region0: #{protoconvnet_forward.1}
  #allocation0 [shape = 'u32[]', space=smem, size = 0x4, offset = 0x4, fixed_abs, tag = 'smem constant byte address 0x4 - core index']
  #allocation1 [shape = 'u32[144,128]{1,0:T(1,128)}', space=vmem, size = 0x12000, scoped, tag = 'internal scratch']
  #allocation2 [shape = 'bf16[232,128]{1,0:T(8,128)(2,1)}', space=vmem, size = 0xe800, scoped, tag = 'scratch operand']
  #allocation3 [shape = 'bf16[96,128]{1,0:T(16,128)(2,1)}', space=vmem, size = 0x6000, scoped, tag = 'scratch operand']
  #allocation4 [shape = 'bf16[48,128]{1,0:T(16,128)(2,1)}', space=vmem, size = 0x3000, scoped, tag = 'scratch operand']
  #allocation5 [shape = 'f32[512,128]{1,0:T(8,128)}', space=vmem, size = 0x40000, scoped, tag = 'scratch operand']
  %s0 = inlined_call_operand.vmem [shape: bf16[512,128], index: 0, kind: input, shape index: {}]
  %s1 = inlined_call_operand.vmem [shape: bf16[128,128], index: 1, kind: input, shape index: {}]
  %s2 = inlined_call_operand.vmem [shape: bf16[1152,128], index: 2, kind: input, shape index: {}]
  %s3 = inlined_call_operand.vmem [shape: bf16[1152,128], index: 3, kind: input, shape index: {}]
  %s4 = inlined_call_operand.vmem [shape: bf16[1152,128], index: 4, kind: input, shape index: {}]
  %s5 = inlined_call_operand.vmem [shape: f32[4,128], index: 5, kind: input, shape index: {}]
  %s6 = inlined_call_operand.hbm [shape: f32[1,2,128], index: 6, kind: output, shape index: {}]
  %s7 = sld [smem:[#allocation0]]
  $region34: #{protoconvnet_forward.1} parent=0
    _
  %s9 = ssub.s32 1, %s7
  %s10 = scalar_select 0, %s9, %s7
  $region1: #{protoconvnet_forward.1} parent=0
    #allocation6 [shape = 'u8[1024]{0}', space=vmem, size = 0x400, scoped, tag = 'output window, operand 0, single buffered']
    #allocation7 [shape = 's32[1]{0}', space=sflag, size = 0x4, scoped, tag = 'scoped memory for protoconvnet_forward.1']
    %11 = vsyncpa [#allocation7], 0
    // Predicated region
    $region2: #{protoconvnet_forward.1} parent=1 // pred_check
      _
    $region3: #{protoconvnet_forward.1} parent=1 // pred_check_branch
      %13 = sbr.rel (0) target = $region5
    $region4: #{protoconvnet_forward.1} parent=1 // pred_region
      _
    $region5: #{protoconvnet_forward.1} parent=1 // pred_fallthru
      _
    // Predicated region
    $region6: #{protoconvnet_forward.1} parent=1 // pred_check
      _
    $region7: #{protoconvnet_forward.1} parent=1 // pred_check_branch
      %15 = sbr.rel (0) target = $region9
    $region8: #{protoconvnet_forward.1} parent=1 // pred_region
      _
    $region9: #{protoconvnet_forward.1} parent=1 // pred_fallthru
      _
    // Predicated region
    $region10: #{protoconvnet_forward.1} parent=1 // pred_check
      _
    $region11: #{protoconvnet_forward.1} parent=1 // pred_check_branch
      %17 = sbr.rel (0) target = $region13
    $region12: #{protoconvnet_forward.1} parent=1 // pred_region
      _
    $region13: #{protoconvnet_forward.1} parent=1 // pred_fallthru
      _
    // Predicated region
    $region14: #{protoconvnet_forward.1} parent=1 // pred_check
      _
    $region15: #{protoconvnet_forward.1} parent=1 // pred_check_branch
      %19 = sbr.rel (0) target = $region17
    $region16: #{protoconvnet_forward.1} parent=1 // pred_region
      _
    $region17: #{protoconvnet_forward.1} parent=1 // pred_fallthru
      _
    // Predicated region
    $region18: #{protoconvnet_forward.1} parent=1 // pred_check
      _
    $region19: #{protoconvnet_forward.1} parent=1 // pred_check_branch
      %21 = sbr.rel (0) target = $region21
    $region20: #{protoconvnet_forward.1} parent=1 // pred_region
      _
    $region21: #{protoconvnet_forward.1} parent=1 // pred_fallthru
      _
    // Predicated region
    $region22: #{protoconvnet_forward.1} parent=1 // pred_check
      _
    $region23: #{protoconvnet_forward.1} parent=1 // pred_check_branch
      %23 = sbr.rel (0) target = $region25
    $region24: #{protoconvnet_forward.1} parent=1 // pred_region
      _
    $region25: #{protoconvnet_forward.1} parent=1 // pred_fallthru
      _
    %25 = vst [vmem:[#allocation2] sm:$0xf] 0
    %26 = vst [vmem:[#allocation2 + $0x4] sm:$0xf] 0
    %27 = vst [vmem:[#allocation2 + $0x8] sm:$0xf] 0
    %28 = vst [vmem:[#allocation2 + $0xc] sm:$0xf] 0
    %29 = vst [vmem:[#allocation2 + $0x10] sm:$0xf] 0
    %30 = vst [vmem:[#allocation2 + $0x14] sm:$0xf] 0
    %31 = vst [vmem:[#allocation2 + $0x18] sm:$0xf] 0
    %32 = vst [vmem:[#allocation2 + $0x1c] sm:$0xf] 0
    %33 = vst [vmem:[#allocation2 + $0x20] sm:$0xf] 0
    %34 = vst [vmem:[#allocation2 + $0x24] sm:$0xf] 0
    %35 = vst [vmem:[#allocation2 + $0x28] sm:$0xf] 0
    %36 = vst [vmem:[#allocation2 + $0x2c] sm:$0xf] 0
    %37 = vst [vmem:[#allocation2 + $0x30] sm:$0xf] 0
    %38 = vst [vmem:[#allocation2 + $0x34] sm:$0xf] 0
    %39 = vst [vmem:[#allocation2 + $0x38] sm:$0xf] 0
    %40 = vst [vmem:[#allocation2 + $0x3c] sm:$0xf] 0
    %41 = vst [vmem:[#allocation2 + $0x40] sm:$0xf] 0
    %42 = vst [vmem:[#allocation2 + $0x44] sm:$0xf] 0
    %43 = vst [vmem:[#allocation2 + $0x48] sm:$0xf] 0
    %44 = vst [vmem:[#allocation2 + $0x4c] sm:$0xf] 0
    %45 = vst [vmem:[#allocation2 + $0x50] sm:$0xf] 0
    %46 = vst [vmem:[#allocation2 + $0x54] sm:$0xf] 0
    %47 = vst [vmem:[#allocation2 + $0x58] sm:$0xf] 0
    %48 = vst [vmem:[#allocation2 + $0x5c] sm:$0xf] 0
    %49 = vst [vmem:[#allocation2 + $0x60] sm:$0xf] 0
    %50 = vst [vmem:[#allocation2 + $0x64] sm:$0xf] 0
    %51 = vst [vmem:[#allocation2 + $0x68] sm:$0xf] 0
    %52 = vst [vmem:[#allocation2 + $0x6c] sm:$0xf] 0
    %53 = vst [vmem:[#allocation2 + $0x70] sm:$0xf] 0
    %54 = vst [vmem:[#allocation3] sm:$0xff] 0
    %55 = vst [vmem:[#allocation3 + $0x8] sm:$0xff] 0
    %56 = vst [vmem:[#allocation3 + $0x10] sm:$0xff] 0
    %57 = vst [vmem:[#allocation3 + $0x18] sm:$0xff] 0
    %58 = vst [vmem:[#allocation3 + $0x20] sm:$0xff] 0
    %59 = vst [vmem:[#allocation3 + $0x28] sm:$0xff] 0
    %60 = vst [vmem:[#allocation4] sm:$0xff] 0
    %61 = vst [vmem:[#allocation4 + $0x8] sm:$0xff] 0
    %62 = vst [vmem:[#allocation4 + $0x10] sm:$0xff] 0
    %v63 = vld [vmem:[%s0] sm:$0xf]
    %v64 = vld [vmem:[%s0 + $0x4] sm:$0xf]
    %v65 = vld [vmem:[%s0 + $0x8] sm:$0xf]
    %v66 = vld [vmem:[%s0 + $0xc] sm:$0xf]
    %v67 = vld [vmem:[%s0 + $0x10] sm:$0xf]
    %v68 = vld [vmem:[%s0 + $0x14] sm:$0xf]
    %v69 = vld [vmem:[%s0 + $0x18] sm:$0xf]
    %v70 = vld [vmem:[%s0 + $0x1c] sm:$0xf]
    %v71 = vld [vmem:[%s0 + $0x20] sm:$0xf]
    %v72 = vld [vmem:[%s0 + $0x24] sm:$0xf]
    %v73 = vld [vmem:[%s0 + $0x28] sm:$0xf]
    %v74 = vld [vmem:[%s0 + $0x2c] sm:$0xf]
    %v75 = vld [vmem:[%s0 + $0x30] sm:$0xf]
    %v76 = vld [vmem:[%s0 + $0x34] sm:$0xf]
    %v77 = vld [vmem:[%s0 + $0x38] sm:$0xf]
    %v78 = vld [vmem:[%s0 + $0x3c] sm:$0xf]
    %v79 = vld [vmem:[%s0 + $0x40] sm:$0xf]
    %v80 = vld [vmem:[%s0 + $0x44] sm:$0xf]
    %v81 = vld [vmem:[%s0 + $0x48] sm:$0xf]
    %v82 = vld [vmem:[%s0 + $0x4c] sm:$0xf]
    %v83 = vld [vmem:[%s0 + $0x50] sm:$0xf]
    %v84 = vld [vmem:[%s0 + $0x54] sm:$0xf]
    %v85 = vld [vmem:[%s0 + $0x58] sm:$0xf]
    %v86 = vld [vmem:[%s0 + $0x5c] sm:$0xf]
    %v87 = vld [vmem:[%s0 + $0x60] sm:$0xf]
    %v88 = vld [vmem:[%s0 + $0x64] sm:$0xf]
    %v89 = vld [vmem:[%s0 + $0x68] sm:$0xf]
    %v90 = vld [vmem:[%s0 + $0x6c] sm:$0xf]
    %v91 = vld [vmem:[%s0 + $0x70] sm:$0xf]
    %v92 = vld [vmem:[%s0 + $0x74] sm:$0xf]
    %v93 = vld [vmem:[%s0 + $0x78] sm:$0xf]
    %v94 = vld [vmem:[%s0 + $0x7c] sm:$0xf]
    %v95 = vld [vmem:[%s1] sm:$0xf]
    %v96 = vld [vmem:[%s1 + $0x4] sm:$0xf]
    %v97 = vld [vmem:[%s1 + $0x8] sm:$0xf]
    %v98 = vld [vmem:[%s1 + $0xc] sm:$0xf]
    %v99 = vld [vmem:[%s1 + $0x10] sm:$0xf]
    %v100 = vld [vmem:[%s1 + $0x14] sm:$0xf]
    %v101 = vld [vmem:[%s1 + $0x18] sm:$0xf]
    %v102 = vld [vmem:[%s1 + $0x1c] sm:$0xf]
    %v103 = vld [vmem:[%s1 + $0x20] sm:$0xf]
    %v104 = vld [vmem:[%s1 + $0x24] sm:$0xf]
    %v105 = vld [vmem:[%s1 + $0x28] sm:$0xf]
    %v106 = vld [vmem:[%s1 + $0x2c] sm:$0xf]
    %v107 = vld [vmem:[%s1 + $0x30] sm:$0xf]
    %v108 = vld [vmem:[%s1 + $0x34] sm:$0xf]
    %v109 = vld [vmem:[%s1 + $0x38] sm:$0xf]
    %v110 = vld [vmem:[%s1 + $0x3c] sm:$0xf]
    %v143 = vunpack.c.l.b16 %v63
    %v144 = vunpack.c.l.b16 %v64
    %v145 = vunpack.c.l.b16 %v65
    %v146 = vunpack.c.l.b16 %v66
    %v147 = vunpack.c.l.b16 %v67
    %v148 = vunpack.c.l.b16 %v68
    %v149 = vunpack.c.l.b16 %v69
    %v150 = vunpack.c.l.b16 %v70
    %v151 = vunpack.c.l.b16 %v71
    %v152 = vunpack.c.l.b16 %v72
    %v153 = vunpack.c.l.b16 %v73
    %v154 = vunpack.c.l.b16 %v74
    %v155 = vunpack.c.l.b16 %v75
    %v156 = vunpack.c.l.b16 %v76
    %v157 = vunpack.c.l.b16 %v77
    %v158 = vunpack.c.l.b16 %v78
    %v159 = vunpack.c.l.b16 %v79
    %v160 = vunpack.c.l.b16 %v80
    %v161 = vunpack.c.l.b16 %v81
    %v162 = vunpack.c.l.b16 %v82
    %v163 = vunpack.c.l.b16 %v83
    %v164 = vunpack.c.l.b16 %v84
    %v165 = vunpack.c.l.b16 %v85
    %v166 = vunpack.c.l.b16 %v86
    %v167 = vunpack.c.l.b16 %v87
    %v168 = vunpack.c.l.b16 %v88
    %v169 = vunpack.c.l.b16 %v89
    %v170 = vunpack.c.l.b16 %v90
    %v171 = vunpack.c.l.b16 %v91
    %v172 = vunpack.c.l.b16 %v92
    %v173 = vunpack.c.l.b16 %v93
    %v174 = vunpack.c.l.b16 %v94
    %v175 = vpack.c.b16 %v144, %v143
    %v176 = vpack.c.b16 %v146, %v145
    %v177 = vpack.c.b16 %v148, %v147
    %v178 = vpack.c.b16 %v150, %v149
    %v179 = vpack.c.b16 %v152, %v151
    %v180 = vpack.c.b16 %v154, %v153
    %v181 = vpack.c.b16 %v156, %v155
    %v182 = vpack.c.b16 %v158, %v157
    %v183 = vpack.c.b16 %v160, %v159
    %v184 = vpack.c.b16 %v162, %v161
    %v185 = vpack.c.b16 %v164, %v163
    %v186 = vpack.c.b16 %v166, %v165
    %v187 = vpack.c.b16 %v168, %v167
    %v188 = vpack.c.b16 %v170, %v169
    %v189 = vpack.c.b16 %v172, %v171
    %v190 = vpack.c.b16 %v174, %v173
    %v223 = vunpack.c.l.b16 %v95
    %v224 = vunpack.c.l.b16 %v96
    %v225 = vunpack.c.l.b16 %v97
    %v226 = vunpack.c.l.b16 %v98
    %v227 = vunpack.c.l.b16 %v99
    %v228 = vunpack.c.l.b16 %v100
    %v229 = vunpack.c.l.b16 %v101
    %v230 = vunpack.c.l.b16 %v102
    %v231 = vunpack.c.l.b16 %v103
    %v232 = vunpack.c.l.b16 %v104
    %v233 = vunpack.c.l.b16 %v105
    %v234 = vunpack.c.l.b16 %v106
    %v235 = vunpack.c.l.b16 %v107
    %v236 = vunpack.c.l.b16 %v108
    %v237 = vunpack.c.l.b16 %v109
    %v238 = vunpack.c.l.b16 %v110
    %v239 = vpack.c.b16 %v224, %v223
    %v240 = vpack.c.b16 %v226, %v225
    %v241 = vpack.c.b16 %v228, %v227
    %v242 = vpack.c.b16 %v230, %v229
    %v243 = vpack.c.b16 %v232, %v231
    %v244 = vpack.c.b16 %v234, %v233
    %v245 = vpack.c.b16 %v236, %v235
    %v246 = vpack.c.b16 %v238, %v237
    %255 = vmatprep.subr.bf16.mxu0 0
    %256 = vmatpush1.bf16.msra.mxu0 %v239
    %257 = vmatprep.subr.bf16.mxu0 0
    %258 = vmatpush1.bf16.msra.mxu0 %v240
    %259 = vmatprep.subr.bf16.mxu0 0
    %260 = vmatpush1.bf16.msra.mxu0 %v241
    %261 = vmatprep.subr.bf16.mxu0 0
    %262 = vmatpush1.bf16.msra.mxu0 %v242
    %263 = vmatprep.subr.bf16.mxu0 0
    %264 = vmatpush1.bf16.msra.mxu0 %v243
    %265 = vmatprep.subr.bf16.mxu0 0
    %266 = vmatpush1.bf16.msra.mxu0 %v244
    %267 = vmatprep.subr.bf16.mxu0 0
    %268 = vmatpush1.bf16.msra.mxu0 %v245
    %269 = vmatprep.subr.bf16.mxu0 0
    %270 = vmatpush1.bf16.msra.mxu0 %v246
    %271 = vmatprep.subr.bf16.mxu0 0
    %272 = vmatpush1.bf16.msra.mxu0 0
    %273 = vmatprep.subr.bf16.mxu0 0
    %274 = vmatpush1.bf16.msra.mxu0 0
    %275 = vmatprep.subr.bf16.mxu0 0
    %276 = vmatpush1.bf16.msra.mxu0 0
    %277 = vmatprep.subr.bf16.mxu0 0
    %278 = vmatpush1.bf16.msra.mxu0 0
    %279 = vmatprep.subr.bf16.mxu0 0
    %280 = vmatpush1.bf16.msra.mxu0 0
    %281 = vmatprep.subr.bf16.mxu0 0
    %282 = vmatpush1.bf16.msra.mxu0 0
    %283 = vmatprep.subr.bf16.mxu0 0
    %284 = vmatpush1.bf16.msra.mxu0 0
    %285 = vmatprep.subr.bf16.mxu0 0
    %286 = vmatpush1.bf16.msra.mxu0 0
    %287 = vmatprep.mubr.bf16.mxu0 0
    %288 = vmatmul.mubr.bf16.gmra.mrb[0].mxu0 %v175
    %v289 = vpop.f32.mrb[0].mxu0
    %v290 = vadd.f32 0.0, %v289
    %v291 = vpop.f32.mrb[0].mxu0
    %v292 = vpop.f32.mrb[0].mxu0
    %v293 = vadd.f32 0.0, %v292
    %v294 = vpop.f32.mrb[0].mxu0
    %295 = vmatprep.mubr.bf16.mxu0 0
    %296 = vmatmul.mubr.bf16.gmra.mrb[0].mxu0 %v176
    %v297 = vpop.f32.mrb[0].mxu0
    %v298 = vadd.f32 0.0, %v297
    %v299 = vpop.f32.mrb[0].mxu0
    %v300 = vpop.f32.mrb[0].mxu0
    %v301 = vadd.f32 0.0, %v300
    %v302 = vpop.f32.mrb[0].mxu0
    %303 = vmatprep.mubr.bf16.mxu0 0
    %304 = vmatmul.mubr.bf16.gmra.mrb[0].mxu0 %v177
    %v305 = vpop.f32.mrb[0].mxu0
    %v306 = vadd.f32 0.0, %v305
    %v307 = vpop.f32.mrb[0].mxu0
    %v308 = vpop.f32.mrb[0].mxu0
    %v309 = vadd.f32 0.0, %v308
    %v310 = vpop.f32.mrb[0].mxu0
    %311 = vmatprep.mubr.bf16.mxu0 0
    %312 = vmatmul.mubr.bf16.gmra.mrb[0].mxu0 %v178
    %v313 = vpop.f32.mrb[0].mxu0
    %v314 = vadd.f32 0.0, %v313
    %v315 = vpop.f32.mrb[0].mxu0
    %v316 = vpop.f32.mrb[0].mxu0
    %v317 = vadd.f32 0.0, %v316
    %v318 = vpop.f32.mrb[0].mxu0
    %319 = vmatprep.mubr.bf16.mxu0 0
    %320 = vmatmul.mubr.bf16.gmra.mrb[0].mxu0 %v179
    %v321 = vpop.f32.mrb[0].mxu0
    %v322 = vadd.f32 0.0, %v321
    %v323 = vpop.f32.mrb[0].mxu0
    %v324 = vpop.f32.mrb[0].mxu0
    %v325 = vadd.f32 0.0, %v324
    %v326 = vpop.f32.mrb[0].mxu0
    %327 = vmatprep.mubr.bf16.mxu0 0
    %328 = vmatmul.mubr.bf16.gmra.mrb[0].mxu0 %v180
    %v329 = vpop.f32.mrb[0].mxu0
    %v330 = vadd.f32 0.0, %v329
    %v331 = vpop.f32.mrb[0].mxu0
    %v332 = vpop.f32.mrb[0].mxu0
    %v333 = vadd.f32 0.0, %v332
    %v334 = vpop.f32.mrb[0].mxu0
    %335 = vmatprep.mubr.bf16.mxu0 0
    %336 = vmatmul.mubr.bf16.gmra.mrb[0].mxu0 %v181
    %v337 = vpop.f32.mrb[0].mxu0
    %v338 = vadd.f32 0.0, %v337
    %v339 = vpop.f32.mrb[0].mxu0
    %v340 = vpop.f32.mrb[0].mxu0
    %v341 = vadd.f32 0.0, %v340
    %v342 = vpop.f32.mrb[0].mxu0
    %343 = vmatprep.mubr.bf16.mxu0 0
    %344 = vmatmul.mubr.bf16.gmra.mrb[0].mxu0 %v182
    %v345 = vpop.f32.mrb[0].mxu0
    %v346 = vadd.f32 0.0, %v345
    %v347 = vpop.f32.mrb[0].mxu0
    %v348 = vpop.f32.mrb[0].mxu0
    %v349 = vadd.f32 0.0, %v348
    %v350 = vpop.f32.mrb[0].mxu0
    %351 = vmatprep.mubr.bf16.mxu0 0
    %352 = vmatmul.mubr.bf16.gmra.mrb[0].mxu0 %v183
    %v353 = vpop.f32.mrb[0].mxu0
    %v354 = vadd.f32 0.0, %v353
    %v355 = vpop.f32.mrb[0].mxu0
    %v356 = vpop.f32.mrb[0].mxu0
    %v357 = vadd.f32 0.0, %v356
    %v358 = vpop.f32.mrb[0].mxu0
    %359 = vmatprep.mubr.bf16.mxu0 0
    %360 = vmatmul.mubr.bf16.gmra.mrb[0].mxu0 %v184
    %v361 = vpop.f32.mrb[0].mxu0
    %v362 = vadd.f32 0.0, %v361
    %v363 = vpop.f32.mrb[0].mxu0
    %v364 = vpop.f32.mrb[0].mxu0
    %v365 = vadd.f32 0.0, %v364
    %v366 = vpop.f32.mrb[0].mxu0
    %367 = vmatprep.mubr.bf16.mxu0 0
    %368 = vmatmul.mubr.bf16.gmra.mrb[0].mxu0 %v185
    %v369 = vpop.f32.mrb[0].mxu0
    %v370 = vadd.f32 0.0, %v369
    %v371 = vpop.f32.mrb[0].mxu0
    %v372 = vpop.f32.mrb[0].mxu0
    %v373 = vadd.f32 0.0, %v372
    %v374 = vpop.f32.mrb[0].mxu0
    %375 = vmatprep.mubr.bf16.mxu0 0
    %376 = vmatmul.mubr.bf16.gmra.mrb[0].mxu0 %v186
    %v377 = vpop.f32.mrb[0].mxu0
    %v378 = vadd.f32 0.0, %v377
    %v379 = vpop.f32.mrb[0].mxu0
    %v380 = vpop.f32.mrb[0].mxu0
    %v381 = vadd.f32 0.0, %v380
    %v382 = vpop.f32.mrb[0].mxu0
    %383 = vmatprep.mubr.bf16.mxu0 0
    %384 = vmatmul.mubr.bf16.gmra.mrb[0].mxu0 %v187
    %v385 = vpop.f32.mrb[0].mxu0
    %v386 = vadd.f32 0.0, %v385
    %v387 = vpop.f32.mrb[0].mxu0
    %v388 = vpop.f32.mrb[0].mxu0
    %v389 = vadd.f32 0.0, %v388
    %v390 = vpop.f32.mrb[0].mxu0
    %391 = vmatprep.mubr.bf16.mxu0 0
    %392 = vmatmul.mubr.bf16.gmra.mrb[0].mxu0 %v188
    %v393 = vpop.f32.mrb[0].mxu0
    %v394 = vadd.f32 0.0, %v393
    %v395 = vpop.f32.mrb[0].mxu0
    %v396 = vpop.f32.mrb[0].mxu0
    %v397 = vadd.f32 0.0, %v396
    %v398 = vpop.f32.mrb[0].mxu0
    %399 = vmatprep.mubr.bf16.mxu0 0
    %400 = vmatmul.mubr.bf16.gmra.mrb[0].mxu0 %v189
    %v401 = vpop.f32.mrb[0].mxu0
    %v402 = vadd.f32 0.0, %v401
    %v403 = vpop.f32.mrb[0].mxu0
    %v404 = vpop.f32.mrb[0].mxu0
    %v405 = vadd.f32 0.0, %v404
    %v406 = vpop.f32.mrb[0].mxu0
    %407 = vmatprep.mubr.bf16.mxu0 0
    %408 = vmatmul.mubr.bf16.gmra.mrb[0].mxu0 %v190
    %v409 = vpop.f32.mrb[0].mxu0
    %v410 = vadd.f32 0.0, %v409
    %v411 = vpop.f32.mrb[0].mxu0
    %v412 = vpop.f32.mrb[0].mxu0
    %v413 = vadd.f32 0.0, %v412
    %v414 = vpop.f32.mrb[0].mxu0
    %415 = vdwg.mxu0
    %416 = vst [vmem:[#allocation5] sm:$0xff] %v290
    %417 = vst [vmem:[#allocation5 + $0x8] sm:$0xff] %v293
    %418 = vst [vmem:[#allocation5 + $0x10] sm:$0xff] %v298
    %419 = vst [vmem:[#allocation5 + $0x18] sm:$0xff] %v301
    %420 = vst [vmem:[#allocation5 + $0x20] sm:$0xff] %v306
    %421 = vst [vmem:[#allocation5 + $0x28] sm:$0xff] %v309
    %422 = vst [vmem:[#allocation5 + $0x30] sm:$0xff] %v314
    %423 = vst [vmem:[#allocation5 + $0x38] sm:$0xff] %v317
    %424 = vst [vmem:[#allocation5 + $0x40] sm:$0xff] %v322
    %425 = vst [vmem:[#allocation5 + $0x48] sm:$0xff] %v325
    %426 = vst [vmem:[#allocation5 + $0x50] sm:$0xff] %v330
    %427 = vst [vmem:[#allocation5 + $0x58] sm:$0xff] %v333
    %428 = vst [vmem:[#allocation5 + $0x60] sm:$0xff] %v338
    %429 = vst [vmem:[#allocation5 + $0x68] sm:$0xff] %v341
    %430 = vst [vmem:[#allocation5 + $0x70] sm:$0xff] %v346
    %431 = vst [vmem:[#allocation5 + $0x78] sm:$0xff] %v349
    %432 = vst [vmem:[#allocation5 + $0x80] sm:$0xff] %v354
    %433 = vst [vmem:[#allocation5 + $0x88] sm:$0xff] %v357
    %434 = vst [vmem:[#allocation5 + $0x90] sm:$0xff] %v362
    %435 = vst [vmem:[#allocation5 + $0x98] sm:$0xff] %v365
    %436 = vst [vmem:[#allocation5 + $0xa0] sm:$0xff] %v370
    %437 = vst [vmem:[#allocation5 + $0xa8] sm:$0xff] %v373
    %438 = vst [vmem:[#allocation5 + $0xb0] sm:$0xff] %v378
    %439 = vst [vmem:[#allocation5 + $0xb8] sm:$0xff] %v381
    %440 = vst [vmem:[#allocation5 + $0xc0] sm:$0xff] %v386
    %441 = vst [vmem:[#allocation5 + $0xc8] sm:$0xff] %v389
    %442 = vst [vmem:[#allocation5 + $0xd0] sm:$0xff] %v394
    %443 = vst [vmem:[#allocation5 + $0xd8] sm:$0xff] %v397
    %444 = vst [vmem:[#allocation5 + $0xe0] sm:$0xff] %v402
    %445 = vst [vmem:[#allocation5 + $0xe8] sm:$0xff] %v405
    %446 = vst [vmem:[#allocation5 + $0xf0] sm:$0xff] %v410
    %447 = vst [vmem:[#allocation5 + $0xf8] sm:$0xff] %v413
    %v448 = vld [vmem:[%s0 + $0x80] sm:$0xf]
    %v449 = vld [vmem:[%s0 + $0x84] sm:$0xf]
    %v450 = vld [vmem:[%s0 + $0x88] sm:$0xf]
    %v451 = vld [vmem:[%s0 + $0x8c] sm:$0xf]
    %v452 = vld [vmem:[%s0 + $0x90] sm:$0xf]
    %v453 = vld [vmem:[%s0 + $0x94] sm:$0xf]
    %v454 = vld [vmem:[%s0 + $0x98] sm:$0xf]
    %v455 = vld [vmem:[%s0 + $0x9c] sm:$0xf]
    %v456 = vld [vmem:[%s0 + $0xa0] sm:$0xf]
    %v457 = vld [vmem:[%s0 + $0xa4] sm:$0xf]
    %v458 = vld [vmem:[%s0 + $0xa8] sm:$0xf]
    %v459 = vld [vmem:[%s0 + $0xac] sm:$0xf]
    %v460 = vld [vmem:[%s0 + $0xb0] sm:$0xf]
    %v461 = vld [vmem:[%s0 + $0xb4] sm:$0xf]
    %v462 = vld [vmem:[%s0 + $0xb8] sm:$0xf]
    %v463 = vld [vmem:[%s0 + $0xbc] sm:$0xf]
    %v464 = vld [vmem:[%s0 + $0xc0] sm:$0xf]
    %v465 = vld [vmem:[%s0 + $0xc4] sm:$0xf]
    %v466 = vld [vmem:[%s0 + $0xc8] sm:$0xf]
    %v467 = vld [vmem:[%s0 + $0xcc] sm:$0xf]
    %v468 = vld [vmem:[%s0 + $0xd0] sm:$0xf]
    %v469 = vld [vmem:[%s0 + $0xd4] sm:$0xf]
    %v470 = vld [vmem:[%s0 + $0xd8] sm:$0xf]
    %v471 = vld [vmem:[%s0 + $0xdc] sm:$0xf]
    %v472 = vld [vmem:[%s0 + $0xe0] sm:$0xf]
    %v473 = vld [vmem:[%s0 + $0xe4] sm:$0xf]
    %v474 = vld [vmem:[%s0 + $0xe8] sm:$0xf]
    %v475 = vld [vmem:[%s0 + $0xec] sm:$0xf]
    %v476 = vld [vmem:[%s0 + $0xf0] sm:$0xf]
    %v477 = vld [vmem:[%s0 + $0xf4] sm:$0xf]
    %v478 = vld [vmem:[%s0 + $0xf8] sm:$0xf]
    %v479 = vld [vmem:[%s0 + $0xfc] sm:$0xf]
    %v480 = vld [vmem:[%s1] sm:$0xf]
    %v481 = vld [vmem:[%s1 + $0x4] sm:$0xf]
    %v482 = vld [vmem:[%s1 + $0x8] sm:$0xf]
    %v483 = vld [vmem:[%s1 + $0xc] sm:$0xf]
    %v484 = vld [vmem:[%s1 + $0x10] sm:$0xf]
    %v485 = vld [vmem:[%s1 + $0x14] sm:$0xf]
    %v486 = vld [vmem:[%s1 + $0x18] sm:$0xf]
    %v487 = vld [vmem:[%s1 + $0x1c] sm:$0xf]
    %v488 = vld [vmem:[%s1 + $0x20] sm:$0xf]
    %v489 = vld [vmem:[%s1 + $0x24] sm:$0xf]
    %v490 = vld [vmem:[%s1 + $0x28] sm:$0xf]
    %v491 = vld [vmem:[%s1 + $0x2c] sm:$0xf]
    %v492 = vld [vmem:[%s1 + $0x30] sm:$0xf]
    %v493 = vld [vmem:[%s1 + $0x34] sm:$0xf]
    %v494 = vld [vmem:[%s1 + $0x38] sm:$0xf]
    %v495 = vld [vmem:[%s1 + $0x3c] sm:$0xf]
    %v528 = vunpack.c.l.b16 %v448
    %v529 = vunpack.c.l.b16 %v449
    %v530 = vunpack.c.l.b16 %v450
    %v531 = vunpack.c.l.b16 %v451
    %v532 = vunpack.c.l.b16 %v452
    %v533 = vunpack.c.l.b16 %v453
    %v534 = vunpack.c.l.b16 %v454
    %v535 = vunpack.c.l.b16 %v455
    %v536 = vunpack.c.l.b16 %v456
    %v537 = vunpack.c.l.b16 %v457
    %v538 = vunpack.c.l.b16 %v458
    %v539 = vunpack.c.l.b16 %v459
    %v540 = vunpack.c.l.b16 %v460
    %v541 = vunpack.c.l.b16 %v461
    %v542 = vunpack.c.l.b16 %v462
    %v543 = vunpack.c.l.b16 %v463
    %v544 = vunpack.c.l.b16 %v464
    %v545 = vunpack.c.l.b16 %v465
    %v546 = vunpack.c.l.b16 %v466
    %v547 = vunpack.c.l.b16 %v467
    %v548 = vunpack.c.l.b16 %v468
    %v549 = vunpack.c.l.b16 %v469
    %v550 = vunpack.c.l.b16 %v470
    %v551 = vunpack.c.l.b16 %v471
    %v552 = vunpack.c.l.b16 %v472
    %v553 = vunpack.c.l.b16 %v473
    %v554 = vunpack.c.l.b16 %v474
    %v555 = vunpack.c.l.b16 %v475
    %v556 = vunpack.c.l.b16 %v476
    %v557 = vunpack.c.l.b16 %v477
    %v558 = vunpack.c.l.b16 %v478
    %v559 = vunpack.c.l.b16 %v479
    %v560 = vpack.c.b16 %v529, %v528
    %v561 = vpack.c.b16 %v531, %v530
    %v562 = vpack.c.b16 %v533, %v532
    %v563 = vpack.c.b16 %v535, %v534
    %v564 = vpack.c.b16 %v537, %v536
    %v565 = vpack.c.b16 %v539, %v538
    %v566 = vpack.c.b16 %v541, %v540
    %v567 = vpack.c.b16 %v543, %v542
    %v568 = vpack.c.b16 %v545, %v544
    %v569 = vpack.c.b16 %v547, %v546
    %v570 = vpack.c.b16 %v549, %v548
    %v571 = vpack.c.b16 %v551, %v550
    %v572 = vpack.c.b16 %v553, %v552
    %v573 = vpack.c.b16 %v555, %v554
    %v574 = vpack.c.b16 %v557, %v556
    %v575 = vpack.c.b16 %v559, %v558
    %v608 = vunpack.c.l.b16 %v480
    %v609 = vunpack.c.l.b16 %v481
    %v610 = vunpack.c.l.b16 %v482
    %v611 = vunpack.c.l.b16 %v483
    %v612 = vunpack.c.l.b16 %v484
    %v613 = vunpack.c.l.b16 %v485
    %v614 = vunpack.c.l.b16 %v486
    %v615 = vunpack.c.l.b16 %v487
    %v616 = vunpack.c.l.b16 %v488
    %v617 = vunpack.c.l.b16 %v489
    %v618 = vunpack.c.l.b16 %v490
    %v619 = vunpack.c.l.b16 %v491
    %v620 = vunpack.c.l.b16 %v492
    %v621 = vunpack.c.l.b16 %v493
    %v622 = vunpack.c.l.b16 %v494
    %v623 = vunpack.c.l.b16 %v495
    %v624 = vpack.c.b16 %v609, %v608
    %v625 = vpack.c.b16 %v611, %v610
    %v626 = vpack.c.b16 %v613, %v612
    %v627 = vpack.c.b16 %v615, %v614
    %v628 = vpack.c.b16 %v617, %v616
    %v629 = vpack.c.b16 %v619, %v618
    %v630 = vpack.c.b16 %v621, %v620
    %v631 = vpack.c.b16 %v623, %v622
    %640 = vmatprep.subr.bf16.mxu0 0
    %641 = vmatpush1.bf16.msra.mxu0 %v624
    %642 = vmatprep.subr.bf16.mxu0 0
    %643 = vmatpush1.bf16.msra.mxu0 %v625
    %644 = vmatprep.subr.bf16.mxu0 0
    %645 = vmatpush1.bf16.msra.mxu0 %v626
    %646 = vmatprep.subr.bf16.mxu0 0
    %647 = vmatpush1.bf16.msra.mxu0 %v627
    %648 = vmatprep.subr.bf16.mxu0 0
    %649 = vmatpush1.bf16.msra.mxu0 %v628
    %650 = vmatprep.subr.bf16.mxu0 0
    %651 = vmatpush1.bf16.msra.mxu0 %v629
    %652 = vmatprep.subr.bf16.mxu0 0
    %653 = vmatpush1.bf16.msra.mxu0 %v630
    %654 = vmatprep.subr.bf16.mxu0 0
    %655 = vmatpush1.bf16.msra.mxu0 %v631
    %656 = vmatprep.subr.bf16.mxu0 0
    %657 = vmatpush1.bf16.msra.mxu0 0
    %658 = vmatprep.subr.bf16.mxu0 0
    %659 = vmatpush1.bf16.msra.mxu0 0
    %660 = vmatprep.subr.bf16.mxu0 0
    %661 = vmatpush1.bf16.msra.mxu0 0
    %662 = vmatprep.subr.bf16.mxu0 0
    %663 = vmatpush1.bf16.msra.mxu0 0
    %664 = vmatprep.subr.bf16.mxu0 0
    %665 = vmatpush1.bf16.msra.mxu0 0
    %666 = vmatprep.subr.bf16.mxu0 0
    %667 = vmatpush1.bf16.msra.mxu0 0
    %668 = vmatprep.subr.bf16.mxu0 0
    %669 = vmatpush1.bf16.msra.mxu0 0
    %670 = vmatprep.subr.bf16.mxu0 0
    %671 = vmatpush1.bf16.msra.mxu0 0
    %672 = vmatprep.mubr.bf16.mxu0 0
    %673 = vmatmul.mubr.bf16.gmra.mrb[0].mxu0 %v560
    %v674 = vpop.f32.mrb[0].mxu0
    %v675 = vadd.f32 0.0, %v674
    %v676 = vpop.f32.mrb[0].mxu0
    %v677 = vpop.f32.mrb[0].mxu0
    %v678 = vadd.f32 0.0, %v677
    %v679 = vpop.f32.mrb[0].mxu0
    %680 = vmatprep.mubr.bf16.mxu0 0
    %681 = vmatmul.mubr.bf16.gmra.mrb[0].mxu0 %v561
    %v682 = vpop.f32.mrb[0].mxu0
    %v683 = vadd.f32 0.0, %v682
    %v684 = vpop.f32.mrb[0].mxu0
    %v685 = vpop.f32.mrb[0].mxu0
    %v686 = vadd.f32 0.0, %v685
    %v687 = vpop.f32.mrb[0].mxu0
    %688 = vmatprep.mubr.bf16.mxu0 0
    %689 = vmatmul.mubr.bf16.gmra.mrb[0].mxu0 %v562
    %v690 = vpop.f32.mrb[0].mxu0
    %v691 = vadd.f32 0.0, %v690
    %v692 = vpop.f32.mrb[0].mxu0
    %v693 = vpop.f32.mrb[0].mxu0
    %v694 = vadd.f32 0.0, %v693
    %v695 = vpop.f32.mrb[0].mxu0
    %696 = vmatprep.mubr.bf16.mxu0 0
    %697 = vmatmul.mubr.bf16.gmra.mrb[0].mxu0 %v563
    %v698 = vpop.f32.mrb[0].mxu0
    %v699 = vadd.f32 0.0, %v698
    %v700 = vpop.f32.mrb[0].mxu0
    %v701 = vpop.f32.mrb[0].mxu0
    %v702 = vadd.f32 0.0, %v701
    %v703 = vpop.f32.mrb[0].mxu0
    %704 = vmatprep.mubr.bf16.mxu0 0
    %705 = vmatmul.mubr.bf16.gmra.mrb[0].mxu0 %v564
    %v706 = vpop.f32.mrb[0].mxu0
    %v707 = vadd.f32 0.0, %v706
    %v708 = vpop.f32.mrb[0].mxu0
    %v709 = vpop.f32.mrb[0].mxu0
    %v710 = vadd.f32 0.0, %v709
    %v711 = vpop.f32.mrb[0].mxu0
    %712 = vmatprep.mubr.bf16.mxu0 0
    %713 = vmatmul.mubr.bf16.gmra.mrb[0].mxu0 %v565
    %v714 = vpop.f32.mrb[0].mxu0
    %v715 = vadd.f32 0.0, %v714
    %v716 = vpop.f32.mrb[0].mxu0
    %v717 = vpop.f32.mrb[0].mxu0
    %v718 = vadd.f32 0.0, %v717
    %v719 = vpop.f32.mrb[0].mxu0
    %720 = vmatprep.mubr.bf16.mxu0 0
    %721 = vmatmul.mubr.bf16.gmra.mrb[0].mxu0 %v566
    %v722 = vpop.f32.mrb[0].mxu0
    %v723 = vadd.f32 0.0, %v722
    %v724 = vpop.f32.mrb[0].mxu0
    %v725 = vpop.f32.mrb[0].mxu0
    %v726 = vadd.f32 0.0, %v725
    %v727 = vpop.f32.mrb[0].mxu0
    %728 = vmatprep.mubr.bf16.mxu0 0
    %729 = vmatmul.mubr.bf16.gmra.mrb[0].mxu0 %v567
    %v730 = vpop.f32.mrb[0].mxu0
    %v731 = vadd.f32 0.0, %v730
    %v732 = vpop.f32.mrb[0].mxu0
    %v733 = vpop.f32.mrb[0].mxu0
    %v734 = vadd.f32 0.0, %v733
    %v735 = vpop.f32.mrb[0].mxu0
    %736 = vmatprep.mubr.bf16.mxu0 0
    %737 = vmatmul.mubr.bf16.gmra.mrb[0].mxu0 %v568
    %v738 = vpop.f32.mrb[0].mxu0
    %v739 = vadd.f32 0.0, %v738
    %v740 = vpop.f32.mrb[0].mxu0
    %v741 = vpop.f32.mrb[0].mxu0
    %v742 = vadd.f32 0.0, %v741
    %v743 = vpop.f32.mrb[0].mxu0
    %744 = vmatprep.mubr.bf16.mxu0 0
    %745 = vmatmul.mubr.bf16.gmra.mrb[0].mxu0 %v569
    %v746 = vpop.f32.mrb[0].mxu0
    %v747 = vadd.f32 0.0, %v746
    %v748 = vpop.f32.mrb[0].mxu0
    %v749 = vpop.f32.mrb[0].mxu0
    %v750 = vadd.f32 0.0, %v749
    %v751 = vpop.f32.mrb[0].mxu0
    %752 = vmatprep.mubr.bf16.mxu0 0
    %753 = vmatmul.mubr.bf16.gmra.mrb[0].mxu0 %v570
    %v754 = vpop.f32.mrb[0].mxu0
    %v755 = vadd.f32 0.0, %v754
    %v756 = vpop.f32.mrb[0].mxu0
    %v757 = vpop.f32.mrb[0].mxu0
    %v758 = vadd.f32 0.0, %v757
    %v759 = vpop.f32.mrb[0].mxu0
    %760 = vmatprep.mubr.bf16.mxu0 0
    %761 = vmatmul.mubr.bf16.gmra.mrb[0].mxu0 %v571
    %v762 = vpop.f32.mrb[0].mxu0
    %v763 = vadd.f32 0.0, %v762
    %v764 = vpop.f32.mrb[0].mxu0
    %v765 = vpop.f32.mrb[0].mxu0
    %v766 = vadd.f32 0.0, %v765
    %v767 = vpop.f32.mrb[0].mxu0
    %768 = vmatprep.mubr.bf16.mxu0 0
    %769 = vmatmul.mubr.bf16.gmra.mrb[0].mxu0 %v572
    %v770 = vpop.f32.mrb[0].mxu0
    %v771 = vadd.f32 0.0, %v770
    %v772 = vpop.f32.mrb[0].mxu0
    %v773 = vpop.f32.mrb[0].mxu0
    %v774 = vadd.f32 0.0, %v773
    %v775 = vpop.f32.mrb[0].mxu0
    %776 = vmatprep.mubr.bf16.mxu0 0
    %777 = vmatmul.mubr.bf16.gmra.mrb[0].mxu0 %v573
    %v778 = vpop.f32.mrb[0].mxu0
    %v779 = vadd.f32 0.0, %v778
    %v780 = vpop.f32.mrb[0].mxu0
    %v781 = vpop.f32.mrb[0].mxu0
    %v782 = vadd.f32 0.0, %v781
    %v783 = vpop.f32.mrb[0].mxu0
    %784 = vmatprep.mubr.bf16.mxu0 0
    %785 = vmatmul.mubr.bf16.gmra.mrb[0].mxu0 %v574
    %v786 = vpop.f32.mrb[0].mxu0
    %v787 = vadd.f32 0.0, %v786
    %v788 = vpop.f32.mrb[0].mxu0
    %v789 = vpop.f32.mrb[0].mxu0
    %v790 = vadd.f32 0.0, %v789
    %v791 = vpop.f32.mrb[0].mxu0
    %792 = vmatprep.mubr.bf16.mxu0 0
    %793 = vmatmul.mubr.bf16.gmra.mrb[0].mxu0 %v575
    %v794 = vpop.f32.mrb[0].mxu0
    %v795 = vadd.f32 0.0, %v794
    %v796 = vpop.f32.mrb[0].mxu0
    %v797 = vpop.f32.mrb[0].mxu0
    %v798 = vadd.f32 0.0, %v797
    %v799 = vpop.f32.mrb[0].mxu0
    %800 = vdwg.mxu0
    %801 = vst [vmem:[#allocation5 + $0x100] sm:$0xff] %v675
    %802 = vst [vmem:[#allocation5 + $0x108] sm:$0xff] %v678
    %803 = vst [vmem:[#allocation5 + $0x110] sm:$0xff] %v683
    %804 = vst [vmem:[#allocation5 + $0x118] sm:$0xff] %v686
    %805 = vst [vmem:[#allocation5 + $0x120] sm:$0xff] %v691
    %806 = vst [vmem:[#allocation5 + $0x128] sm:$0xff] %v694
    %807 = vst [vmem:[#allocation5 + $0x130] sm:$0xff] %v699
    %808 = vst [vmem:[#allocation5 + $0x138] sm:$0xff] %v702
    %809 = vst [vmem:[#allocation5 + $0x140] sm:$0xff] %v707
    %810 = vst [vmem:[#allocation5 + $0x148] sm:$0xff] %v710
    %811 = vst [vmem:[#allocation5 + $0x150] sm:$0xff] %v715
    %812 = vst [vmem:[#allocation5 + $0x158] sm:$0xff] %v718
    %813 = vst [vmem:[#allocation5 + $0x160] sm:$0xff] %v723
    %814 = vst [vmem:[#allocation5 + $0x168] sm:$0xff] %v726
    %815 = vst [vmem:[#allocation5 + $0x170] sm:$0xff] %v731
    %816 = vst [vmem:[#allocation5 + $0x178] sm:$0xff] %v734
    %817 = vst [vmem:[#allocation5 + $0x180] sm:$0xff] %v739
    %818 = vst [vmem:[#allocation5 + $0x188] sm:$0xff] %v742
    %819 = vst [vmem:[#allocation5 + $0x190] sm:$0xff] %v747
    %820 = vst [vmem:[#allocation5 + $0x198] sm:$0xff] %v750
    %821 = vst [vmem:[#allocation5 + $0x1a0] sm:$0xff] %v755
    %822 = vst [vmem:[#allocation5 + $0x1a8] sm:$0xff] %v758
    %823 = vst [vmem:[#allocation5 + $0x1b0] sm:$0xff] %v763
    %824 = vst [vmem:[#allocation5 + $0x1b8] sm:$0xff] %v766
    %825 = vst [vmem:[#allocation5 + $0x1c0] sm:$0xff] %v771
    %826 = vst [vmem:[#allocation5 + $0x1c8] sm:$0xff] %v774
    %827 = vst [vmem:[#allocation5 + $0x1d0] sm:$0xff] %v779
    %828 = vst [vmem:[#allocation5 + $0x1d8] sm:$0xff] %v782
    %829 = vst [vmem:[#allocation5 + $0x1e0] sm:$0xff] %v787
    %830 = vst [vmem:[#allocation5 + $0x1e8] sm:$0xff] %v790
    %831 = vst [vmem:[#allocation5 + $0x1f0] sm:$0xff] %v795
    %832 = vst [vmem:[#allocation5 + $0x1f8] sm:$0xff] %v798
    %v833 = vld [vmem:[%s5] sm:$0x1]
    %v834 = vlaneseq
    %v835 = vshrl.u32 %v834, 7
    %v836 = vsub.s32 0, %v835
    %v837 = vrot.slane %v833, %v836
    %v838 = vld [vmem:[#allocation5] ss:$2 sm:$0xff]
    %s839 = scalar_lea.vmem [#allocation5], 1
    %v840 = vld [vmem:[%s839] ss:$2 sm:$0xff]
    %v841 = vmax.f32 %v838, %v840
    %s842 = scalar_lea.vmem [#allocation5], 16
    %v843 = vld [vmem:[%s842] ss:$2 sm:$0xff]
    %s844 = scalar_lea.vmem [#allocation5], 17
    %v845 = vld [vmem:[%s844] ss:$2 sm:$0xff]
    %v846 = vmax.f32 %v843, %v845
    %v847 = vmax.f32 %v841, %v846
    %v848 = vadd.f32 %v847, %v837
    %v849 = vmax.f32 %v848, 0.0
    %v850 = vpack.c.bf16 %v849, %v849
    %v852 = vunpack.c.l.b16 %v850
    %v853 = vpack.c.b16 %v852, %v852
    %v855 = vshrl.u32 %v853, 16
    %v857 = vrot.slane %v855, 6
    %v858 = vshll.u32 %v853, 16
    %v860 = vrot.slane %v858, 7
    %v861 = vor.u32 %v857, %v860
    %v862 = vrot.slane %v861, 4
    %vm865 = vcmask 1043457
    %vm866 = vsmask.f32 7942
    %vm867 = vmand %vm865, %vm866
    %v868 = vld [vmem:[#allocation2 + $0x4] sm:$0xe]
    %v869 = vsel %vm867, %v861, %v868
    %870 = vst [vmem:[#allocation2 + $0x4] sm:$0xe] %v869
    %vm871 = vcmask 1041408
    %vm872 = vsmask.f32 1280
    %vm873 = vmand %vm871, %vm872
    %v874 = vld [vmem:[#allocation2 + $0x8] sm:$0x3]
    %v875 = vsel %vm873, %v862, %v874
    %876 = vst [vmem:[#allocation2 + $0x8] sm:$0x3] %v875
    %s877 = scalar_lea.vmem [#allocation5], 32
    %v878 = vld [vmem:[%s877] ss:$2 sm:$0xff]
    %s879 = scalar_lea.vmem [#allocation5], 33
    %v880 = vld [vmem:[%s879] ss:$2 sm:$0xff]
    %v881 = vmax.f32 %v878, %v880
    %s882 = scalar_lea.vmem [#allocation5], 48
    %v883 = vld [vmem:[%s882] ss:$2 sm:$0xff]
    %s884 = scalar_lea.vmem [#allocation5], 49
    %v885 = vld [vmem:[%s884] ss:$2 sm:$0xff]
    %v886 = vmax.f32 %v883, %v885
    %v887 = vmax.f32 %v881, %v886
    %v888 = vadd.f32 %v887, %v837
    %v889 = vmax.f32 %v888, 0.0
    %v890 = vpack.c.bf16 %v889, %v889
    %v892 = vunpack.c.l.b16 %v890
    %v893 = vpack.c.b16 %v892, %v892
    %v895 = vshrl.u32 %v893, 16
    %v897 = vrot.slane %v895, 5
    %v898 = vshll.u32 %v893, 16
    %v900 = vrot.slane %v898, 6
    %v901 = vor.u32 %v897, %v900
    %v902 = vrot.slane %v901, 4
    %vm905 = vcmask 1043458
    %vm906 = vsmask.f32 7946
    %vm907 = vmand %vm905, %vm906
    %v908 = vld [vmem:[#allocation2 + $0x8] sm:$0xc]
    %v909 = vsel %vm907, %v901, %v908
    %910 = vst [vmem:[#allocation2 + $0x8] sm:$0xc] %v909
    %vm911 = vcmask 1042432
    %vm912 = vsmask.f32 2304
    %vm913 = vmand %vm911, %vm912
    %v914 = vld [vmem:[#allocation2 + $0xc] sm:$0x7]
    %v915 = vsel %vm913, %v902, %v914
    %916 = vst [vmem:[#allocation2 + $0xc] sm:$0x7] %v915
    %s917 = scalar_lea.vmem [#allocation5], 64
    %v918 = vld [vmem:[%s917] ss:$2 sm:$0xff]
    %s919 = scalar_lea.vmem [#allocation5], 65
    %v920 = vld [vmem:[%s919] ss:$2 sm:$0xff]
    %v921 = vmax.f32 %v918, %v920
    %s922 = scalar_lea.vmem [#allocation5], 80
    %v923 = vld [vmem:[%s922] ss:$2 sm:$0xff]
    %s924 = scalar_lea.vmem [#allocation5], 81
    %v925 = vld [vmem:[%s924] ss:$2 sm:$0xff]
    %v926 = vmax.f32 %v923, %v925
    %v927 = vmax.f32 %v921, %v926
    %v928 = vadd.f32 %v927, %v837
    %v929 = vmax.f32 %v928, 0.0
    %v930 = vpack.c.bf16 %v929, %v929
    %v932 = vunpack.c.l.b16 %v930
    %v933 = vpack.c.b16 %v932, %v932
    %v935 = vshll.u32 %v933, 16
    %v937 = vrot.slane %v935, 5
    %v938 = vshrl.u32 %v933, 16
    %v940 = vrot.slane %v938, 4
    %v941 = vor.u32 %v940, %v937
    %v942 = vrot.slane %v941, 4
    %vm945 = vcmask 1043459
    %vm946 = vsmask.f32 7950
    %vm947 = vmand %vm945, %vm946
    %v948 = vld [vmem:[#allocation2 + $0xc] sm:$0x8]
    %v949 = vsel %vm947, %v937, %v948
    %950 = vst [vmem:[#allocation2 + $0xc] sm:$0x8] %v949
    %vm951 = vcmask 1043456
    %vm952 = vsmask.f32 3328
    %vm953 = vmand %vm951, %vm952
    %v954 = vld [vmem:[#allocation2 + $0x10] sm:$0xf]
    %v955 = vsel %vm953, %v942, %v954
    %956 = vst [vmem:[#allocation2 + $0x10] sm:$0xf] %v955
    %s957 = scalar_lea.vmem [#allocation5], 96
    %v958 = vld [vmem:[%s957] ss:$2 sm:$0xff]
    %s959 = scalar_lea.vmem [#allocation5], 97
    %v960 = vld [vmem:[%s959] ss:$2 sm:$0xff]
    %v961 = vmax.f32 %v958, %v960
    %s962 = scalar_lea.vmem [#allocation5], 112
    %v963 = vld [vmem:[%s962] ss:$2 sm:$0xff]
    %s964 = scalar_lea.vmem [#allocation5], 113
    %v965 = vld [vmem:[%s964] ss:$2 sm:$0xff]
    %v966 = vmax.f32 %v963, %v965
    %v967 = vmax.f32 %v961, %v966
    %v968 = vadd.f32 %v967, %v837
    %v969 = vmax.f32 %v968, 0.0
    %v970 = vpack.c.bf16 %v969, %v969
    %v972 = vunpack.c.l.b16 %v970
    %v973 = vpack.c.b16 %v972, %v972
    %v975 = vshrl.u32 %v973, 16
    %v977 = vrot.slane %v975, 7
    %v978 = vshll.u32 %v973, 16
    %v980 = vor.u32 %v977, %v978
    %v981 = vrot.slane %v977, 4
    %vm984 = vsmask.f32 7938
    %vm985 = vmand %vm951, %vm984
    %v986 = vld [vmem:[#allocation2 + $0x14] sm:$0xf]
    %v987 = vsel %vm985, %v980, %v986
    %988 = vst [vmem:[#allocation2 + $0x14] sm:$0xf] %v987
    %vm989 = vcmask 1040384
    %vm990 = vsmask.f32 256
    %vm991 = vmand %vm989, %vm990
    %v992 = vld [vmem:[#allocation2 + $0x18] sm:$0x1]
    %v993 = vsel %vm991, %v981, %v992
    %994 = vst [vmem:[#allocation2 + $0x18] sm:$0x1] %v993
    %s995 = scalar_lea.vmem [#allocation5], 128
    %v996 = vld [vmem:[%s995] ss:$2 sm:$0xff]
    %s997 = scalar_lea.vmem [#allocation5], 129
    %v998 = vld [vmem:[%s997] ss:$2 sm:$0xff]
    %v999 = vmax.f32 %v996, %v998
    %s1000 = scalar_lea.vmem [#allocation5], 144
    %v1001 = vld [vmem:[%s1000] ss:$2 sm:$0xff]
    %s1002 = scalar_lea.vmem [#allocation5], 145
    %v1003 = vld [vmem:[%s1002] ss:$2 sm:$0xff]
    %v1004 = vmax.f32 %v1001, %v1003
    %v1005 = vmax.f32 %v999, %v1004
    %v1006 = vadd.f32 %v1005, %v837
    %v1007 = vmax.f32 %v1006, 0.0
    %v1008 = vpack.c.bf16 %v1007, %v1007
    %v1010 = vunpack.c.l.b16 %v1008
    %v1011 = vpack.c.b16 %v1010, %v1010
    %v1013 = vshrl.u32 %v1011, 16
    %v1015 = vrot.slane %v1013, 6
    %v1016 = vshll.u32 %v1011, 16
    %v1018 = vrot.slane %v1016, 7
    %v1019 = vor.u32 %v1015, %v1018
    %v1020 = vrot.slane %v1019, 4
    %v1023 = vld [vmem:[#allocation2 + $0x18] sm:$0xe]
    %v1024 = vsel %vm867, %v1019, %v1023
    %1025 = vst [vmem:[#allocation2 + $0x18] sm:$0xe] %v1024
    %v1026 = vld [vmem:[#allocation2 + $0x1c] sm:$0x3]
    %v1027 = vsel %vm873, %v1020, %v1026
    %1028 = vst [vmem:[#allocation2 + $0x1c] sm:$0x3] %v1027
    %s1029 = scalar_lea.vmem [#allocation5], 160
    %v1030 = vld [vmem:[%s1029] ss:$2 sm:$0xff]
    %s1031 = scalar_lea.vmem [#allocation5], 161
    %v1032 = vld [vmem:[%s1031] ss:$2 sm:$0xff]
    %v1033 = vmax.f32 %v1030, %v1032
    %s1034 = scalar_lea.vmem [#allocation5], 176
    %v1035 = vld [vmem:[%s1034] ss:$2 sm:$0xff]
    %s1036 = scalar_lea.vmem [#allocation5], 177
    %v1037 = vld [vmem:[%s1036] ss:$2 sm:$0xff]
    %v1038 = vmax.f32 %v1035, %v1037
    %v1039 = vmax.f32 %v1033, %v1038
    %v1040 = vadd.f32 %v1039, %v837
    %v1041 = vmax.f32 %v1040, 0.0
    %v1042 = vpack.c.bf16 %v1041, %v1041
    %v1044 = vunpack.c.l.b16 %v1042
    %v1045 = vpack.c.b16 %v1044, %v1044
    %v1047 = vshrl.u32 %v1045, 16
    %v1049 = vrot.slane %v1047, 5
    %v1050 = vshll.u32 %v1045, 16
    %v1052 = vrot.slane %v1050, 6
    %v1053 = vor.u32 %v1049, %v1052
    %v1054 = vrot.slane %v1053, 4
    %v1057 = vld [vmem:[#allocation2 + $0x1c] sm:$0xc]
    %v1058 = vsel %vm907, %v1053, %v1057
    %1059 = vst [vmem:[#allocation2 + $0x1c] sm:$0xc] %v1058
    %v1060 = vld [vmem:[#allocation2 + $0x20] sm:$0x7]
    %v1061 = vsel %vm913, %v1054, %v1060
    %1062 = vst [vmem:[#allocation2 + $0x20] sm:$0x7] %v1061
    %s1063 = scalar_lea.vmem [#allocation5], 192
    %v1064 = vld [vmem:[%s1063] ss:$2 sm:$0xff]
    %s1065 = scalar_lea.vmem [#allocation5], 193
    %v1066 = vld [vmem:[%s1065] ss:$2 sm:$0xff]
    %v1067 = vmax.f32 %v1064, %v1066
    %s1068 = scalar_lea.vmem [#allocation5], 208
    %v1069 = vld [vmem:[%s1068] ss:$2 sm:$0xff]
    %s1070 = scalar_lea.vmem [#allocation5], 209
    %v1071 = vld [vmem:[%s1070] ss:$2 sm:$0xff]
    %v1072 = vmax.f32 %v1069, %v1071
    %v1073 = vmax.f32 %v1067, %v1072
    %v1074 = vadd.f32 %v1073, %v837
    %v1075 = vmax.f32 %v1074, 0.0
    %v1076 = vpack.c.bf16 %v1075, %v1075
    %v1078 = vunpack.c.l.b16 %v1076
    %v1079 = vpack.c.b16 %v1078, %v1078
    %v1081 = vshll.u32 %v1079, 16
    %v1083 = vrot.slane %v1081, 5
    %v1084 = vshrl.u32 %v1079, 16
    %v1086 = vrot.slane %v1084, 4
    %v1087 = vor.u32 %v1086, %v1083
    %v1088 = vrot.slane %v1087, 4
    %v1091 = vld [vmem:[#allocation2 + $0x20] sm:$0x8]
    %v1092 = vsel %vm947, %v1083, %v1091
    %1093 = vst [vmem:[#allocation2 + $0x20] sm:$0x8] %v1092
    %v1094 = vld [vmem:[#allocation2 + $0x24] sm:$0xf]
    %v1095 = vsel %vm953, %v1088, %v1094
    %1096 = vst [vmem:[#allocation2 + $0x24] sm:$0xf] %v1095
    %s1097 = scalar_lea.vmem [#allocation5], 224
    %v1098 = vld [vmem:[%s1097] ss:$2 sm:$0xff]
    %s1099 = scalar_lea.vmem [#allocation5], 225
    %v1100 = vld [vmem:[%s1099] ss:$2 sm:$0xff]
    %v1101 = vmax.f32 %v1098, %v1100
    %s1102 = scalar_lea.vmem [#allocation5], 240
    %v1103 = vld [vmem:[%s1102] ss:$2 sm:$0xff]
    %s1104 = scalar_lea.vmem [#allocation5], 241
    %v1105 = vld [vmem:[%s1104] ss:$2 sm:$0xff]
    %v1106 = vmax.f32 %v1103, %v1105
    %v1107 = vmax.f32 %v1101, %v1106
    %v1108 = vadd.f32 %v1107, %v837
    %v1109 = vmax.f32 %v1108, 0.0
    %v1110 = vpack.c.bf16 %v1109, %v1109
    %v1112 = vunpack.c.l.b16 %v1110
    %v1113 = vpack.c.b16 %v1112, %v1112
    %v1115 = vshrl.u32 %v1113, 16
    %v1117 = vrot.slane %v1115, 7
    %v1118 = vshll.u32 %v1113, 16
    %v1120 = vor.u32 %v1117, %v1118
    %v1121 = vrot.slane %v1117, 4
    %v1124 = vld [vmem:[#allocation2 + $0x28] sm:$0xf]
    %v1125 = vsel %vm985, %v1120, %v1124
    %1126 = vst [vmem:[#allocation2 + $0x28] sm:$0xf] %v1125
    %v1127 = vld [vmem:[#allocation2 + $0x2c] sm:$0x1]
    %v1128 = vsel %vm991, %v1121, %v1127
    %1129 = vst [vmem:[#allocation2 + $0x2c] sm:$0x1] %v1128
    %s1130 = scalar_lea.vmem [#allocation5], 256
    %v1131 = vld [vmem:[%s1130] ss:$2 sm:$0xff]
    %s1132 = scalar_lea.vmem [#allocation5], 257
    %v1133 = vld [vmem:[%s1132] ss:$2 sm:$0xff]
    %v1134 = vmax.f32 %v1131, %v1133
    %s1135 = scalar_lea.vmem [#allocation5], 272
    %v1136 = vld [vmem:[%s1135] ss:$2 sm:$0xff]
    %s1137 = scalar_lea.vmem [#allocation5], 273
    %v1138 = vld [vmem:[%s1137] ss:$2 sm:$0xff]
    %v1139 = vmax.f32 %v1136, %v1138
    %v1140 = vmax.f32 %v1134, %v1139
    %v1141 = vadd.f32 %v1140, %v837
    %v1142 = vmax.f32 %v1141, 0.0
    %v1143 = vpack.c.bf16 %v1142, %v1142
    %v1145 = vunpack.c.l.b16 %v1143
    %v1146 = vpack.c.b16 %v1145, %v1145
    %v1148 = vshrl.u32 %v1146, 16
    %v1150 = vrot.slane %v1148, 6
    %v1151 = vshll.u32 %v1146, 16
    %v1153 = vrot.slane %v1151, 7
    %v1154 = vor.u32 %v1150, %v1153
    %v1155 = vrot.slane %v1154, 4
    %v1158 = vld [vmem:[#allocation2 + $0x38] sm:$0xe]
    %v1159 = vsel %vm867, %v1154, %v1158
    %1160 = vst [vmem:[#allocation2 + $0x38] sm:$0xe] %v1159
    %v1161 = vld [vmem:[#allocation2 + $0x3c] sm:$0x3]
    %v1162 = vsel %vm873, %v1155, %v1161
    %1163 = vst [vmem:[#allocation2 + $0x3c] sm:$0x3] %v1162
    %s1164 = scalar_lea.vmem [#allocation5], 288
    %v1165 = vld [vmem:[%s1164] ss:$2 sm:$0xff]
    %s1166 = scalar_lea.vmem [#allocation5], 289
    %v1167 = vld [vmem:[%s1166] ss:$2 sm:$0xff]
    %v1168 = vmax.f32 %v1165, %v1167
    %s1169 = scalar_lea.vmem [#allocation5], 304
    %v1170 = vld [vmem:[%s1169] ss:$2 sm:$0xff]
    %s1171 = scalar_lea.vmem [#allocation5], 305
    %v1172 = vld [vmem:[%s1171] ss:$2 sm:$0xff]
    %v1173 = vmax.f32 %v1170, %v1172
    %v1174 = vmax.f32 %v1168, %v1173
    %v1175 = vadd.f32 %v1174, %v837
    %v1176 = vmax.f32 %v1175, 0.0
    %v1177 = vpack.c.bf16 %v1176, %v1176
    %v1179 = vunpack.c.l.b16 %v1177
    %v1180 = vpack.c.b16 %v1179, %v1179
    %v1182 = vshrl.u32 %v1180, 16
    %v1184 = vrot.slane %v1182, 5
    %v1185 = vshll.u32 %v1180, 16
    %v1187 = vrot.slane %v1185, 6
    %v1188 = vor.u32 %v1184, %v1187
    %v1189 = vrot.slane %v1188, 4
    %v1192 = vld [vmem:[#allocation2 + $0x3c] sm:$0xc]
    %v1193 = vsel %vm907, %v1188, %v1192
    %1194 = vst [vmem:[#allocation2 + $0x3c] sm:$0xc] %v1193
    %v1195 = vld [vmem:[#allocation2 + $0x40] sm:$0x7]
    %v1196 = vsel %vm913, %v1189, %v1195
    %1197 = vst [vmem:[#allocation2 + $0x40] sm:$0x7] %v1196
    %s1198 = scalar_lea.vmem [#allocation5], 320
    %v1199 = vld [vmem:[%s1198] ss:$2 sm:$0xff]
    %s1200 = scalar_lea.vmem [#allocation5], 321
    %v1201 = vld [vmem:[%s1200] ss:$2 sm:$0xff]
    %v1202 = vmax.f32 %v1199, %v1201
    %s1203 = scalar_lea.vmem [#allocation5], 336
    %v1204 = vld [vmem:[%s1203] ss:$2 sm:$0xff]
    %s1205 = scalar_lea.vmem [#allocation5], 337
    %v1206 = vld [vmem:[%s1205] ss:$2 sm:$0xff]
    %v1207 = vmax.f32 %v1204, %v1206
    %v1208 = vmax.f32 %v1202, %v1207
    %v1209 = vadd.f32 %v1208, %v837
    %v1210 = vmax.f32 %v1209, 0.0
    %v1211 = vpack.c.bf16 %v1210, %v1210
    %v1213 = vunpack.c.l.b16 %v1211
    %v1214 = vpack.c.b16 %v1213, %v1213
    %v1216 = vshll.u32 %v1214, 16
    %v1218 = vrot.slane %v1216, 5
    %v1219 = vshrl.u32 %v1214, 16
    %v1221 = vrot.slane %v1219, 4
    %v1222 = vor.u32 %v1221, %v1218
    %v1223 = vrot.slane %v1222, 4
    %v1226 = vld [vmem:[#allocation2 + $0x40] sm:$0x8]
    %v1227 = vsel %vm947, %v1218, %v1226
    %1228 = vst [vmem:[#allocation2 + $0x40] sm:$0x8] %v1227
    %v1229 = vld [vmem:[#allocation2 + $0x44] sm:$0xf]
    %v1230 = vsel %vm953, %v1223, %v1229
    %1231 = vst [vmem:[#allocation2 + $0x44] sm:$0xf] %v1230
    %s1232 = scalar_lea.vmem [#allocation5], 352
    %v1233 = vld [vmem:[%s1232] ss:$2 sm:$0xff]
    %s1234 = scalar_lea.vmem [#allocation5], 353
    %v1235 = vld [vmem:[%s1234] ss:$2 sm:$0xff]
    %v1236 = vmax.f32 %v1233, %v1235
    %s1237 = scalar_lea.vmem [#allocation5], 368
    %v1238 = vld [vmem:[%s1237] ss:$2 sm:$0xff]
    %s1239 = scalar_lea.vmem [#allocation5], 369
    %v1240 = vld [vmem:[%s1239] ss:$2 sm:$0xff]
    %v1241 = vmax.f32 %v1238, %v1240
    %v1242 = vmax.f32 %v1236, %v1241
    %v1243 = vadd.f32 %v1242, %v837
    %v1244 = vmax.f32 %v1243, 0.0
    %v1245 = vpack.c.bf16 %v1244, %v1244
    %v1247 = vunpack.c.l.b16 %v1245
    %v1248 = vpack.c.b16 %v1247, %v1247
    %v1250 = vshrl.u32 %v1248, 16
    %v1252 = vrot.slane %v1250, 7
    %v1253 = vshll.u32 %v1248, 16
    %v1255 = vor.u32 %v1252, %v1253
    %v1256 = vrot.slane %v1252, 4
    %v1259 = vld [vmem:[#allocation2 + $0x48] sm:$0xf]
    %v1260 = vsel %vm985, %v1255, %v1259
    %1261 = vst [vmem:[#allocation2 + $0x48] sm:$0xf] %v1260
    %v1262 = vld [vmem:[#allocation2 + $0x4c] sm:$0x1]
    %v1263 = vsel %vm991, %v1256, %v1262
    %1264 = vst [vmem:[#allocation2 + $0x4c] sm:$0x1] %v1263
    %s1265 = scalar_lea.vmem [#allocation5], 384
    %v1266 = vld [vmem:[%s1265] ss:$2 sm:$0xff]
    %s1267 = scalar_lea.vmem [#allocation5], 385
    %v1268 = vld [vmem:[%s1267] ss:$2 sm:$0xff]
    %v1269 = vmax.f32 %v1266, %v1268
    %s1270 = scalar_lea.vmem [#allocation5], 400
    %v1271 = vld [vmem:[%s1270] ss:$2 sm:$0xff]
    %s1272 = scalar_lea.vmem [#allocation5], 401
    %v1273 = vld [vmem:[%s1272] ss:$2 sm:$0xff]
    %v1274 = vmax.f32 %v1271, %v1273
    %v1275 = vmax.f32 %v1269, %v1274
    %v1276 = vadd.f32 %v1275, %v837
    %v1277 = vmax.f32 %v1276, 0.0
    %v1278 = vpack.c.bf16 %v1277, %v1277
    %v1280 = vunpack.c.l.b16 %v1278
    %v1281 = vpack.c.b16 %v1280, %v1280
    %v1283 = vshrl.u32 %v1281, 16
    %v1285 = vrot.slane %v1283, 6
    %v1286 = vshll.u32 %v1281, 16
    %v1288 = vrot.slane %v1286, 7
    %v1289 = vor.u32 %v1285, %v1288
    %v1290 = vrot.slane %v1289, 4
    %v1293 = vld [vmem:[#allocation2 + $0x4c] sm:$0xe]
    %v1294 = vsel %vm867, %v1289, %v1293
    %1295 = vst [vmem:[#allocation2 + $0x4c] sm:$0xe] %v1294
    %v1296 = vld [vmem:[#allocation2 + $0x50] sm:$0x3]
    %v1297 = vsel %vm873, %v1290, %v1296
    %1298 = vst [vmem:[#allocation2 + $0x50] sm:$0x3] %v1297
    %s1299 = scalar_lea.vmem [#allocation5], 416
    %v1300 = vld [vmem:[%s1299] ss:$2 sm:$0xff]
    %s1301 = scalar_lea.vmem [#allocation5], 417
    %v1302 = vld [vmem:[%s1301] ss:$2 sm:$0xff]
    %v1303 = vmax.f32 %v1300, %v1302
    %s1304 = scalar_lea.vmem [#allocation5], 432
    %v1305 = vld [vmem:[%s1304] ss:$2 sm:$0xff]
    %s1306 = scalar_lea.vmem [#allocation5], 433
    %v1307 = vld [vmem:[%s1306] ss:$2 sm:$0xff]
    %v1308 = vmax.f32 %v1305, %v1307
    %v1309 = vmax.f32 %v1303, %v1308
    %v1310 = vadd.f32 %v1309, %v837
    %v1311 = vmax.f32 %v1310, 0.0
    %v1312 = vpack.c.bf16 %v1311, %v1311
    %v1314 = vunpack.c.l.b16 %v1312
    %v1315 = vpack.c.b16 %v1314, %v1314
    %v1317 = vshrl.u32 %v1315, 16
    %v1319 = vrot.slane %v1317, 5
    %v1320 = vshll.u32 %v1315, 16
    %v1322 = vrot.slane %v1320, 6
    %v1323 = vor.u32 %v1319, %v1322
    %v1324 = vrot.slane %v1323, 4
    %v1327 = vld [vmem:[#allocation2 + $0x50] sm:$0xc]
    %v1328 = vsel %vm907, %v1323, %v1327
    %1329 = vst [vmem:[#allocation2 + $0x50] sm:$0xc] %v1328
    %v1330 = vld [vmem:[#allocation2 + $0x54] sm:$0x7]
    %v1331 = vsel %vm913, %v1324, %v1330
    %1332 = vst [vmem:[#allocation2 + $0x54] sm:$0x7] %v1331
    %s1333 = scalar_lea.vmem [#allocation5], 448
    %v1334 = vld [vmem:[%s1333] ss:$2 sm:$0xff]
    %s1335 = scalar_lea.vmem [#allocation5], 449
    %v1336 = vld [vmem:[%s1335] ss:$2 sm:$0xff]
    %v1337 = vmax.f32 %v1334, %v1336
    %s1338 = scalar_lea.vmem [#allocation5], 464
    %v1339 = vld [vmem:[%s1338] ss:$2 sm:$0xff]
    %s1340 = scalar_lea.vmem [#allocation5], 465
    %v1341 = vld [vmem:[%s1340] ss:$2 sm:$0xff]
    %v1342 = vmax.f32 %v1339, %v1341
    %v1343 = vmax.f32 %v1337, %v1342
    %v1344 = vadd.f32 %v1343, %v837
    %v1345 = vmax.f32 %v1344, 0.0
    %v1346 = vpack.c.bf16 %v1345, %v1345
    %v1348 = vunpack.c.l.b16 %v1346
    %v1349 = vpack.c.b16 %v1348, %v1348
    %v1351 = vshll.u32 %v1349, 16
    %v1353 = vrot.slane %v1351, 5
    %v1354 = vshrl.u32 %v1349, 16
    %v1356 = vrot.slane %v1354, 4
    %v1357 = vor.u32 %v1356, %v1353
    %v1358 = vrot.slane %v1357, 4
    %v1361 = vld [vmem:[#allocation2 + $0x54] sm:$0x8]
    %v1362 = vsel %vm947, %v1353, %v1361
    %1363 = vst [vmem:[#allocation2 + $0x54] sm:$0x8] %v1362
    %v1364 = vld [vmem:[#allocation2 + $0x58] sm:$0xf]
    %v1365 = vsel %vm953, %v1358, %v1364
    %1366 = vst [vmem:[#allocation2 + $0x58] sm:$0xf] %v1365
    %s1367 = scalar_lea.vmem [#allocation5], 480
    %v1368 = vld [vmem:[%s1367] ss:$2 sm:$0xff]
    %s1369 = scalar_lea.vmem [#allocation5], 481
    %v1370 = vld [vmem:[%s1369] ss:$2 sm:$0xff]
    %v1371 = vmax.f32 %v1368, %v1370
    %s1372 = scalar_lea.vmem [#allocation5], 496
    %v1373 = vld [vmem:[%s1372] ss:$2 sm:$0xff]
    %s1374 = scalar_lea.vmem [#allocation5], 497
    %v1375 = vld [vmem:[%s1374] ss:$2 sm:$0xff]
    %v1376 = vmax.f32 %v1373, %v1375
    %v1377 = vmax.f32 %v1371, %v1376
    %v1378 = vadd.f32 %v1377, %v837
    %v1379 = vmax.f32 %v1378, 0.0
    %v1380 = vpack.c.bf16 %v1379, %v1379
    %v1382 = vunpack.c.l.b16 %v1380
    %v1383 = vpack.c.b16 %v1382, %v1382
    %v1385 = vshrl.u32 %v1383, 16
    %v1387 = vrot.slane %v1385, 7
    %v1388 = vshll.u32 %v1383, 16
    %v1390 = vor.u32 %v1387, %v1388
    %v1391 = vrot.slane %v1387, 4
    %v1394 = vld [vmem:[#allocation2 + $0x5c] sm:$0xf]
    %v1395 = vsel %vm985, %v1390, %v1394
    %1396 = vst [vmem:[#allocation2 + $0x5c] sm:$0xf] %v1395
    %v1397 = vld [vmem:[#allocation2 + $0x60] sm:$0x1]
    %v1398 = vsel %vm991, %v1391, %v1397
    %1399 = vst [vmem:[#allocation2 + $0x60] sm:$0x1] %v1398
    %v1400 = vld [vmem:[#allocation2] sm:$0xf]
    %v1401 = vld [vmem:[#allocation2 + $0x4] sm:$0xf]
    %v1402 = vld [vmem:[#allocation2 + $0x8] sm:$0xf]
    %v1403 = vld [vmem:[#allocation2 + $0xc] sm:$0xf]
    %v1404 = vld [vmem:[#allocation2 + $0x10] sm:$0xf]
    %v1405 = vld [vmem:[#allocation2 + $0x14] sm:$0xf]
    %v1406 = vld [vmem:[#allocation2 + $0x18] sm:$0xf]
    %v1407 = vld [vmem:[#allocation2 + $0x1c] sm:$0xf]
    %v1408 = vld [vmem:[#allocation2 + $0x20] sm:$0xf]
    %v1409 = vld [vmem:[#allocation2 + $0x24] sm:$0xf]
    %v1410 = vld [vmem:[#allocation2 + $0x28] sm:$0xf]
    %v1411 = vld [vmem:[#allocation2 + $0x2c] sm:$0xf]
    %v1412 = vld [vmem:[#allocation2 + $0x30] sm:$0xf]
    %v1413 = vld [vmem:[#allocation2 + $0x34] sm:$0xf]
    %v1414 = vld [vmem:[#allocation2 + $0x38] sm:$0xf]
    %v1415 = vld [vmem:[#allocation2 + $0x3c] sm:$0xf]
    %v1416 = vld [vmem:[#allocation2 + $0x40] sm:$0xf]
    %v1417 = vld [vmem:[#allocation2 + $0x44] sm:$0xf]
    %v1418 = vld [vmem:[#allocation2 + $0x48] sm:$0xf]
    %v1419 = vld [vmem:[#allocation2 + $0x4c] sm:$0xf]
    %v1420 = vld [vmem:[#allocation2 + $0x50] sm:$0xf]
    %v1421 = vld [vmem:[#allocation2 + $0x54] sm:$0xf]
    %v1422 = vld [vmem:[#allocation2 + $0x58] sm:$0xf]
    %v1423 = vld [vmem:[#allocation2 + $0x5c] sm:$0xf]
    %v1424 = vld [vmem:[#allocation2 + $0x60] sm:$0xf]
    %v1425 = vld [vmem:[#allocation2 + $0x64] sm:$0xf]
    %v1426 = vld [vmem:[%s2] sm:$0xf]
    %v1427 = vld [vmem:[%s2 + $0x4] sm:$0xf]
    %v1428 = vld [vmem:[%s2 + $0x8] sm:$0xf]
    %v1429 = vld [vmem:[%s2 + $0xc] sm:$0xf]
    %v1430 = vld [vmem:[%s2 + $0x10] sm:$0xf]
    %v1431 = vld [vmem:[%s2 + $0x14] sm:$0xf]
    %v1432 = vld [vmem:[%s2 + $0x18] sm:$0xf]
    %v1433 = vld [vmem:[%s2 + $0x1c] sm:$0xf]
    %v1434 = vld [vmem:[%s2 + $0x20] sm:$0xf]
    %v1435 = vld [vmem:[%s2 + $0x24] sm:$0xf]
    %v1436 = vld [vmem:[%s2 + $0x28] sm:$0xf]
    %v1437 = vld [vmem:[%s2 + $0x2c] sm:$0xf]
    %v1438 = vld [vmem:[%s2 + $0x30] sm:$0xf]
    %v1439 = vld [vmem:[%s2 + $0x34] sm:$0xf]
    %v1440 = vld [vmem:[%s2 + $0x38] sm:$0xf]
    %v1441 = vld [vmem:[%s2 + $0x3c] sm:$0xf]
    %v1442 = vld [vmem:[#allocation2 + $0x68] sm:$0x1]
    %v1443 = vld [vmem:[%s2 + $0x40] sm:$0xf]
    %v1444 = vld [vmem:[%s2 + $0x44] sm:$0xf]
    %v1445 = vld [vmem:[%s2 + $0x48] sm:$0xf]
    %v1446 = vld [vmem:[%s2 + $0x4c] sm:$0xf]
    %v1447 = vld [vmem:[%s2 + $0x50] sm:$0xf]
    %v1448 = vld [vmem:[%s2 + $0x54] sm:$0xf]
    %v1449 = vld [vmem:[%s2 + $0x58] sm:$0xf]
    %v1450 = vld [vmem:[%s2 + $0x5c] sm:$0xf]
    %v1451 = vld [vmem:[%s2 + $0x60] sm:$0xf]
    %v1452 = vld [vmem:[%s2 + $0x64] sm:$0xf]
    %v1453 = vld [vmem:[%s2 + $0x68] sm:$0xf]
    %v1454 = vld [vmem:[%s2 + $0x6c] sm:$0xf]
    %v1455 = vld [vmem:[%s2 + $0x70] sm:$0xf]
    %v1456 = vld [vmem:[%s2 + $0x74] sm:$0xf]
    %v1457 = vld [vmem:[%s2 + $0x78] sm:$0xf]
    %v1458 = vld [vmem:[%s2 + $0x7c] sm:$0xf]
    %v1486 = vunpack.c.l.b16 %v1400
    %v1487 = vunpack.c.l.b16 %v1401
    %v1488 = vunpack.c.l.b16 %v1402
    %v1489 = vunpack.c.l.b16 %v1403
    %v1490 = vunpack.c.l.b16 %v1404
    %v1491 = vunpack.c.l.b16 %v1405
    %v1492 = vunpack.c.l.b16 %v1406
    %v1493 = vunpack.c.l.b16 %v1407
    %v1494 = vunpack.c.l.b16 %v1408
    %v1495 = vunpack.c.l.b16 %v1409
    %v1496 = vunpack.c.l.b16 %v1410
    %v1497 = vunpack.c.l.b16 %v1411
    %v1498 = vunpack.c.l.b16 %v1412
    %v1499 = vunpack.c.l.b16 %v1413
    %v1500 = vunpack.c.l.b16 %v1414
    %v1501 = vunpack.c.l.b16 %v1415
    %v1502 = vunpack.c.l.b16 %v1416
    %v1503 = vunpack.c.l.b16 %v1417
    %v1504 = vunpack.c.l.b16 %v1418
    %v1505 = vunpack.c.l.b16 %v1419
    %v1506 = vunpack.c.l.b16 %v1420
    %v1507 = vunpack.c.l.b16 %v1421
    %v1508 = vunpack.c.l.b16 %v1422
    %v1509 = vunpack.c.l.b16 %v1423
    %v1510 = vunpack.c.l.b16 %v1424
    %v1511 = vunpack.c.l.b16 %v1425
    %v1512 = vunpack.c.l.b16 %v1442
    %v1513 = vpack.c.b16 %v1487, %v1486
    %v1514 = vpack.c.b16 %v1489, %v1488
    %v1515 = vpack.c.b16 %v1491, %v1490
    %v1516 = vpack.c.b16 %v1493, %v1492
    %v1517 = vpack.c.b16 %v1495, %v1494
    %v1518 = vpack.c.b16 %v1497, %v1496
    %v1519 = vpack.c.b16 %v1499, %v1498
    %v1520 = vpack.c.b16 %v1501, %v1500
    %v1521 = vpack.c.b16 %v1503, %v1502
    %v1522 = vpack.c.b16 %v1505, %v1504
    %v1523 = vpack.c.b16 %v1507, %v1506
    %v1524 = vpack.c.b16 %v1509, %v1508
    %v1525 = vpack.c.b16 %v1511, %v1510
    %v1526 = vpack.c.b16 %v1512, %v1512
    %vm1527 = vsmask.f32 7424
    %v1529 = vshrl.u32 %v1513, 16
    %v1531 = vshll.u32 %v1513, 16
    %v1533 = vrot.slane %v1531, 1
    %v1534 = vor.u32 %v1529, %v1533
    %v1536 = vshll.u32 %v1514, 16
    %v1538 = vrot.slane %v1536, 1
    %v1539 = vsel %vm1527, %v1534, %v1538
    %v1540 = vshrl.u32 %v1514, 16
    %v1542 = vor.u32 %v1540, %v1538
    %v1544 = vshll.u32 %v1515, 16
    %v1546 = vrot.slane %v1544, 1
    %v1547 = vsel %vm1527, %v1542, %v1546
    %v1548 = vshrl.u32 %v1515, 16
    %v1550 = vor.u32 %v1548, %v1546
    %v1552 = vshll.u32 %v1516, 16
    %v1554 = vrot.slane %v1552, 1
    %v1555 = vsel %vm1527, %v1550, %v1554
    %v1556 = vshrl.u32 %v1516, 16
    %v1558 = vor.u32 %v1556, %v1554
    %v1560 = vshll.u32 %v1517, 16
    %v1562 = vrot.slane %v1560, 1
    %v1563 = vsel %vm1527, %v1558, %v1562
    %v1564 = vshrl.u32 %v1517, 16
    %v1566 = vor.u32 %v1564, %v1562
    %v1568 = vshll.u32 %v1518, 16
    %v1570 = vrot.slane %v1568, 1
    %v1571 = vsel %vm1527, %v1566, %v1570
    %v1572 = vshrl.u32 %v1518, 16
    %v1574 = vor.u32 %v1572, %v1570
    %v1576 = vshll.u32 %v1519, 16
    %v1578 = vrot.slane %v1576, 1
    %v1579 = vsel %vm1527, %v1574, %v1578
    %v1580 = vshrl.u32 %v1519, 16
    %v1582 = vor.u32 %v1580, %v1578
    %v1584 = vshll.u32 %v1520, 16
    %v1586 = vrot.slane %v1584, 1
    %v1587 = vsel %vm1527, %v1582, %v1586
    %v1588 = vshrl.u32 %v1520, 16
    %v1590 = vor.u32 %v1588, %v1586
    %v1592 = vshll.u32 %v1521, 16
    %v1594 = vrot.slane %v1592, 1
    %v1595 = vsel %vm1527, %v1590, %v1594
    %v1596 = vshrl.u32 %v1521, 16
    %v1598 = vor.u32 %v1596, %v1594
    %v1600 = vshll.u32 %v1522, 16
    %v1602 = vrot.slane %v1600, 1
    %v1603 = vsel %vm1527, %v1598, %v1602
    %v1604 = vshrl.u32 %v1522, 16
    %v1606 = vor.u32 %v1604, %v1602
    %v1608 = vshll.u32 %v1523, 16
    %v1610 = vrot.slane %v1608, 1
    %v1611 = vsel %vm1527, %v1606, %v1610
    %v1612 = vshrl.u32 %v1523, 16
    %v1614 = vor.u32 %v1612, %v1610
    %v1616 = vshll.u32 %v1524, 16
    %v1618 = vrot.slane %v1616, 1
    %v1619 = vsel %vm1527, %v1614, %v1618
    %v1620 = vshrl.u32 %v1524, 16
    %v1622 = vor.u32 %v1620, %v1618
    %v1624 = vshll.u32 %v1525, 16
    %v1626 = vrot.slane %v1624, 1
    %v1627 = vsel %vm1527, %v1622, %v1626
    %v1628 = vshrl.u32 %v1525, 16
    %v1630 = vor.u32 %v1628, %v1626
    %v1632 = vshll.u32 %v1526, 16
    %v1634 = vrot.slane %v1632, 1
    %v1635 = vsel %vm1527, %v1630, %v1634
    %v1665 = vunpack.c.l.b16 %v1443
    %v1666 = vunpack.c.l.b16 %v1444
    %v1667 = vunpack.c.l.b16 %v1445
    %v1668 = vunpack.c.l.b16 %v1446
    %v1669 = vunpack.c.l.b16 %v1447
    %v1670 = vunpack.c.l.b16 %v1448
    %v1671 = vunpack.c.l.b16 %v1449
    %v1672 = vunpack.c.l.b16 %v1450
    %v1673 = vunpack.c.l.b16 %v1451
    %v1674 = vunpack.c.l.b16 %v1452
    %v1675 = vunpack.c.l.b16 %v1453
    %v1676 = vunpack.c.l.b16 %v1454
    %v1677 = vunpack.c.l.b16 %v1455
    %v1678 = vunpack.c.l.b16 %v1456
    %v1679 = vunpack.c.l.b16 %v1457
    %v1680 = vunpack.c.l.b16 %v1458
    %v1681 = vpack.c.b16 %v1666, %v1665
    %v1682 = vpack.c.b16 %v1668, %v1667
    %v1683 = vpack.c.b16 %v1670, %v1669
    %v1684 = vpack.c.b16 %v1672, %v1671
    %v1685 = vpack.c.b16 %v1674, %v1673
    %v1686 = vpack.c.b16 %v1676, %v1675
    %v1687 = vpack.c.b16 %v1678, %v1677
    %v1688 = vpack.c.b16 %v1680, %v1679
    %1697 = vmatprep.subr.bf16.mxu0 0
    %1698 = vmatpush1.bf16.msra.mxu0 %v1681
    %1699 = vmatprep.subr.bf16.mxu0 0
    %1700 = vmatpush1.bf16.msra.mxu0 %v1682
    %1701 = vmatprep.subr.bf16.mxu0 0
    %1702 = vmatpush1.bf16.msra.mxu0 %v1683
    %1703 = vmatprep.subr.bf16.mxu0 0
    %1704 = vmatpush1.bf16.msra.mxu0 %v1684
    %1705 = vmatprep.subr.bf16.mxu0 0
    %1706 = vmatpush1.bf16.msra.mxu0 %v1685
    %1707 = vmatprep.subr.bf16.mxu0 0
    %1708 = vmatpush1.bf16.msra.mxu0 %v1686
    %1709 = vmatprep.subr.bf16.mxu0 0
    %1710 = vmatpush1.bf16.msra.mxu0 %v1687
    %1711 = vmatprep.subr.bf16.mxu0 0
    %1712 = vmatpush1.bf16.msra.mxu0 %v1688
    %1713 = vmatprep.subr.bf16.mxu0 0
    %1714 = vmatpush1.bf16.msra.mxu0 0
    %1715 = vmatprep.subr.bf16.mxu0 0
    %1716 = vmatpush1.bf16.msra.mxu0 0
    %1717 = vmatprep.subr.bf16.mxu0 0
    %1718 = vmatpush1.bf16.msra.mxu0 0
    %1719 = vmatprep.subr.bf16.mxu0 0
    %1720 = vmatpush1.bf16.msra.mxu0 0
    %1721 = vmatprep.subr.bf16.mxu0 0
    %1722 = vmatpush1.bf16.msra.mxu0 0
    %1723 = vmatprep.subr.bf16.mxu0 0
    %1724 = vmatpush1.bf16.msra.mxu0 0
    %1725 = vmatprep.subr.bf16.mxu0 0
    %1726 = vmatpush1.bf16.msra.mxu0 0
    %1727 = vmatprep.subr.bf16.mxu0 0
    %1728 = vmatpush1.bf16.msra.mxu0 0
    %1729 = vmatprep.mubr.bf16.mxu0 0
    %1730 = vmatmul.mubr.bf16.gmra.mrb[0].mxu0 %v1539
    %v1731 = vpop.f32.mrb[0].mxu0
    %v1732 = vadd.f32 0.0, %v1731
    %v1733 = vpop.f32.mrb[0].mxu0
    %v1734 = vpop.f32.mrb[0].mxu0
    %v1735 = vadd.f32 0.0, %v1734
    %v1736 = vpop.f32.mrb[0].mxu0
    %1737 = vmatprep.mubr.bf16.mxu0 0
    %1738 = vmatmul.mubr.bf16.gmra.mrb[0].mxu0 %v1547
    %v1739 = vpop.f32.mrb[0].mxu0
    %v1740 = vadd.f32 0.0, %v1739
    %v1741 = vpop.f32.mrb[0].mxu0
    %v1742 = vpop.f32.mrb[0].mxu0
    %v1743 = vadd.f32 0.0, %v1742
    %v1744 = vpop.f32.mrb[0].mxu0
    %1745 = vmatprep.mubr.bf16.mxu0 0
    %1746 = vmatmul.mubr.bf16.gmra.mrb[0].mxu0 %v1555
    %v1747 = vpop.f32.mrb[0].mxu0
    %v1748 = vadd.f32 0.0, %v1747
    %v1749 = vpop.f32.mrb[0].mxu0
    %v1750 = vpop.f32.mrb[0].mxu0
    %v1751 = vadd.f32 0.0, %v1750
    %v1752 = vpop.f32.mrb[0].mxu0
    %1753 = vmatprep.mubr.bf16.mxu0 0
    %1754 = vmatmul.mubr.bf16.gmra.mrb[0].mxu0 %v1563
    %v1755 = vpop.f32.mrb[0].mxu0
    %v1756 = vadd.f32 0.0, %v1755
    %v1757 = vpop.f32.mrb[0].mxu0
    %v1758 = vpop.f32.mrb[0].mxu0
    %v1759 = vadd.f32 0.0, %v1758
    %v1760 = vpop.f32.mrb[0].mxu0
    %1761 = vmatprep.mubr.bf16.mxu0 0
    %1762 = vmatmul.mubr.bf16.gmra.mrb[0].mxu0 %v1571
    %v1763 = vpop.f32.mrb[0].mxu0
    %v1764 = vadd.f32 0.0, %v1763
    %v1765 = vpop.f32.mrb[0].mxu0
    %v1766 = vpop.f32.mrb[0].mxu0
    %v1767 = vadd.f32 0.0, %v1766
    %v1768 = vpop.f32.mrb[0].mxu0
    %1769 = vmatprep.mubr.bf16.mxu0 0
    %1770 = vmatmul.mubr.bf16.gmra.mrb[0].mxu0 %v1579
    %v1771 = vpop.f32.mrb[0].mxu0
    %v1772 = vadd.f32 0.0, %v1771
    %v1773 = vpop.f32.mrb[0].mxu0
    %v1774 = vpop.f32.mrb[0].mxu0
    %v1775 = vadd.f32 0.0, %v1774
    %v1776 = vpop.f32.mrb[0].mxu0
    %1777 = vmatprep.mubr.bf16.mxu0 0
    %1778 = vmatmul.mubr.bf16.gmra.mrb[0].mxu0 %v1587
    %v1779 = vpop.f32.mrb[0].mxu0
    %v1780 = vadd.f32 0.0, %v1779
    %v1781 = vpop.f32.mrb[0].mxu0
    %v1782 = vpop.f32.mrb[0].mxu0
    %v1783 = vadd.f32 0.0, %v1782
    %v1784 = vpop.f32.mrb[0].mxu0
    %1785 = vmatprep.mubr.bf16.mxu0 0
    %1786 = vmatmul.mubr.bf16.gmra.mrb[0].mxu0 %v1595
    %v1787 = vpop.f32.mrb[0].mxu0
    %v1788 = vadd.f32 0.0, %v1787
    %v1789 = vpop.f32.mrb[0].mxu0
    %v1790 = vpop.f32.mrb[0].mxu0
    %v1791 = vadd.f32 0.0, %v1790
    %v1792 = vpop.f32.mrb[0].mxu0
    %1793 = vmatprep.mubr.bf16.mxu0 0
    %1794 = vmatmul.mubr.bf16.gmra.mrb[0].mxu0 %v1603
    %v1795 = vpop.f32.mrb[0].mxu0
    %v1796 = vadd.f32 0.0, %v1795
    %v1797 = vpop.f32.mrb[0].mxu0
    %v1798 = vpop.f32.mrb[0].mxu0
    %v1799 = vadd.f32 0.0, %v1798
    %v1800 = vpop.f32.mrb[0].mxu0
    %1801 = vmatprep.mubr.bf16.mxu0 0
    %1802 = vmatmul.mubr.bf16.gmra.mrb[0].mxu0 %v1611
    %v1803 = vpop.f32.mrb[0].mxu0
    %v1804 = vadd.f32 0.0, %v1803
    %v1805 = vpop.f32.mrb[0].mxu0
    %v1806 = vpop.f32.mrb[0].mxu0
    %v1807 = vadd.f32 0.0, %v1806
    %v1808 = vpop.f32.mrb[0].mxu0
    %1809 = vmatprep.mubr.bf16.mxu0 0
    %1810 = vmatmul.mubr.bf16.gmra.mrb[0].mxu0 %v1619
    %v1811 = vpop.f32.mrb[0].mxu0
    %v1812 = vadd.f32 0.0, %v1811
    %v1813 = vpop.f32.mrb[0].mxu0
    %v1814 = vpop.f32.mrb[0].mxu0
    %v1815 = vadd.f32 0.0, %v1814
    %v1816 = vpop.f32.mrb[0].mxu0
    %1817 = vmatprep.mubr.bf16.mxu0 0
    %1818 = vmatmul.mubr.bf16.gmra.mrb[0].mxu0 %v1627
    %v1819 = vpop.f32.mrb[0].mxu0
    %v1820 = vadd.f32 0.0, %v1819
    %v1821 = vpop.f32.mrb[0].mxu0
    %v1822 = vpop.f32.mrb[0].mxu0
    %v1823 = vadd.f32 0.0, %v1822
    %v1824 = vpop.f32.mrb[0].mxu0
    %1825 = vmatprep.mubr.bf16.mxu0 0
    %1826 = vmatmul.mubr.bf16.gmra.mrb[0].mxu0 %v1635
    %v1827 = vpop.f32.mrb[0].mxu0
    %v1828 = vadd.f32 0.0, %v1827
    %v1829 = vpop.f32.mrb[0].mxu0
    %v1830 = vpop.f32.mrb[0].mxu0
    %v1831 = vadd.f32 0.0, %v1830
    %v1832 = vpop.f32.mrb[0].mxu0
    %1833 = vdwg.mxu0
    %v1863 = vunpack.c.l.b16 %v1426
    %v1864 = vunpack.c.l.b16 %v1427
    %v1865 = vunpack.c.l.b16 %v1428
    %v1866 = vunpack.c.l.b16 %v1429
    %v1867 = vunpack.c.l.b16 %v1430
    %v1868 = vunpack.c.l.b16 %v1431
    %v1869 = vunpack.c.l.b16 %v1432
    %v1870 = vunpack.c.l.b16 %v1433
    %v1871 = vunpack.c.l.b16 %v1434
    %v1872 = vunpack.c.l.b16 %v1435
    %v1873 = vunpack.c.l.b16 %v1436
    %v1874 = vunpack.c.l.b16 %v1437
    %v1875 = vunpack.c.l.b16 %v1438
    %v1876 = vunpack.c.l.b16 %v1439
    %v1877 = vunpack.c.l.b16 %v1440
    %v1878 = vunpack.c.l.b16 %v1441
    %v1879 = vpack.c.b16 %v1864, %v1863
    %v1880 = vpack.c.b16 %v1866, %v1865
    %v1881 = vpack.c.b16 %v1868, %v1867
    %v1882 = vpack.c.b16 %v1870, %v1869
    %v1883 = vpack.c.b16 %v1872, %v1871
    %v1884 = vpack.c.b16 %v1874, %v1873
    %v1885 = vpack.c.b16 %v1876, %v1875
    %v1886 = vpack.c.b16 %v1878, %v1877
    %1895 = vmatprep.subr.bf16.mxu0 0
    %1896 = vmatpush1.bf16.msra.mxu0 %v1879
    %1897 = vmatprep.subr.bf16.mxu0 0
    %1898 = vmatpush1.bf16.msra.mxu0 %v1880
    %1899 = vmatprep.subr.bf16.mxu0 0
    %1900 = vmatpush1.bf16.msra.mxu0 %v1881
    %1901 = vmatprep.subr.bf16.mxu0 0
    %1902 = vmatpush1.bf16.msra.mxu0 %v1882
    %1903 = vmatprep.subr.bf16.mxu0 0
    %1904 = vmatpush1.bf16.msra.mxu0 %v1883
    %1905 = vmatprep.subr.bf16.mxu0 0
    %1906 = vmatpush1.bf16.msra.mxu0 %v1884
    %1907 = vmatprep.subr.bf16.mxu0 0
    %1908 = vmatpush1.bf16.msra.mxu0 %v1885
    %1909 = vmatprep.subr.bf16.mxu0 0
    %1910 = vmatpush1.bf16.msra.mxu0 %v1886
    %1911 = vmatprep.subr.bf16.mxu0 0
    %1912 = vmatpush1.bf16.msra.mxu0 0
    %1913 = vmatprep.subr.bf16.mxu0 0
    %1914 = vmatpush1.bf16.msra.mxu0 0
    %1915 = vmatprep.subr.bf16.mxu0 0
    %1916 = vmatpush1.bf16.msra.mxu0 0
    %1917 = vmatprep.subr.bf16.mxu0 0
    %1918 = vmatpush1.bf16.msra.mxu0 0
    %1919 = vmatprep.subr.bf16.mxu0 0
    %1920 = vmatpush1.bf16.msra.mxu0 0
    %1921 = vmatprep.subr.bf16.mxu0 0
    %1922 = vmatpush1.bf16.msra.mxu0 0
    %1923 = vmatprep.subr.bf16.mxu0 0
    %1924 = vmatpush1.bf16.msra.mxu0 0
    %1925 = vmatprep.subr.bf16.mxu0 0
    %1926 = vmatpush1.bf16.msra.mxu0 0
    %1927 = vmatprep.mubr.bf16.mxu0 0
    %1928 = vmatmul.mubr.bf16.gmra.mrb[0].mxu0 %v1513
    %v1929 = vpop.f32.mrb[0].mxu0
    %v1930 = vadd.f32 %v1732, %v1929
    %v1931 = vpop.f32.mrb[0].mxu0
    %v1932 = vpop.f32.mrb[0].mxu0
    %v1933 = vadd.f32 %v1735, %v1932
    %v1934 = vpop.f32.mrb[0].mxu0
    %1935 = vmatprep.mubr.bf16.mxu0 0
    %1936 = vmatmul.mubr.bf16.gmra.mrb[0].mxu0 %v1514
    %v1937 = vpop.f32.mrb[0].mxu0
    %v1938 = vadd.f32 %v1740, %v1937
    %v1939 = vpop.f32.mrb[0].mxu0
    %v1940 = vpop.f32.mrb[0].mxu0
    %v1941 = vadd.f32 %v1743, %v1940
    %v1942 = vpop.f32.mrb[0].mxu0
    %1943 = vmatprep.mubr.bf16.mxu0 0
    %1944 = vmatmul.mubr.bf16.gmra.mrb[0].mxu0 %v1515
    %v1945 = vpop.f32.mrb[0].mxu0
    %v1946 = vadd.f32 %v1748, %v1945
    %v1947 = vpop.f32.mrb[0].mxu0
    %v1948 = vpop.f32.mrb[0].mxu0
    %v1949 = vadd.f32 %v1751, %v1948
    %v1950 = vpop.f32.mrb[0].mxu0
    %1951 = vmatprep.mubr.bf16.mxu0 0
    %1952 = vmatmul.mubr.bf16.gmra.mrb[0].mxu0 %v1516
    %v1953 = vpop.f32.mrb[0].mxu0
    %v1954 = vadd.f32 %v1756, %v1953
    %v1955 = vpop.f32.mrb[0].mxu0
    %v1956 = vpop.f32.mrb[0].mxu0
    %v1957 = vadd.f32 %v1759, %v1956
    %v1958 = vpop.f32.mrb[0].mxu0
    %1959 = vmatprep.mubr.bf16.mxu0 0
    %1960 = vmatmul.mubr.bf16.gmra.mrb[0].mxu0 %v1517
    %v1961 = vpop.f32.mrb[0].mxu0
    %v1962 = vadd.f32 %v1764, %v1961
    %v1963 = vpop.f32.mrb[0].mxu0
    %v1964 = vpop.f32.mrb[0].mxu0
    %v1965 = vadd.f32 %v1767, %v1964
    %v1966 = vpop.f32.mrb[0].mxu0
    %1967 = vmatprep.mubr.bf16.mxu0 0
    %1968 = vmatmul.mubr.bf16.gmra.mrb[0].mxu0 %v1518
    %v1969 = vpop.f32.mrb[0].mxu0
    %v1970 = vadd.f32 %v1772, %v1969
    %v1971 = vpop.f32.mrb[0].mxu0
    %v1972 = vpop.f32.mrb[0].mxu0
    %v1973 = vadd.f32 %v1775, %v1972
    %v1974 = vpop.f32.mrb[0].mxu0
    %1975 = vmatprep.mubr.bf16.mxu0 0
    %1976 = vmatmul.mubr.bf16.gmra.mrb[0].mxu0 %v1519
    %v1977 = vpop.f32.mrb[0].mxu0
    %v1978 = vadd.f32 %v1780, %v1977
    %v1979 = vpop.f32.mrb[0].mxu0
    %v1980 = vpop.f32.mrb[0].mxu0
    %v1981 = vadd.f32 %v1783, %v1980
    %v1982 = vpop.f32.mrb[0].mxu0
    %1983 = vmatprep.mubr.bf16.mxu0 0
    %1984 = vmatmul.mubr.bf16.gmra.mrb[0].mxu0 %v1520
    %v1985 = vpop.f32.mrb[0].mxu0
    %v1986 = vadd.f32 %v1788, %v1985
    %v1987 = vpop.f32.mrb[0].mxu0
    %v1988 = vpop.f32.mrb[0].mxu0
    %v1989 = vadd.f32 %v1791, %v1988
    %v1990 = vpop.f32.mrb[0].mxu0
    %1991 = vmatprep.mubr.bf16.mxu0 0
    %1992 = vmatmul.mubr.bf16.gmra.mrb[0].mxu0 %v1521
    %v1993 = vpop.f32.mrb[0].mxu0
    %v1994 = vadd.f32 %v1796, %v1993
    %v1995 = vpop.f32.mrb[0].mxu0
    %v1996 = vpop.f32.mrb[0].mxu0
    %v1997 = vadd.f32 %v1799, %v1996
    %v1998 = vpop.f32.mrb[0].mxu0
    %1999 = vmatprep.mubr.bf16.mxu0 0
    %2000 = vmatmul.mubr.bf16.gmra.mrb[0].mxu0 %v1522
    %v2001 = vpop.f32.mrb[0].mxu0
    %v2002 = vadd.f32 %v1804, %v2001
    %v2003 = vpop.f32.mrb[0].mxu0
    %v2004 = vpop.f32.mrb[0].mxu0
    %v2005 = vadd.f32 %v1807, %v2004
    %v2006 = vpop.f32.mrb[0].mxu0
    %2007 = vmatprep.mubr.bf16.mxu0 0
    %2008 = vmatmul.mubr.bf16.gmra.mrb[0].mxu0 %v1523
    %v2009 = vpop.f32.mrb[0].mxu0
    %v2010 = vadd.f32 %v1812, %v2009
    %v2011 = vpop.f32.mrb[0].mxu0
    %v2012 = vpop.f32.mrb[0].mxu0
    %v2013 = vadd.f32 %v1815, %v2012
    %v2014 = vpop.f32.mrb[0].mxu0
    %2015 = vmatprep.mubr.bf16.mxu0 0
    %2016 = vmatmul.mubr.bf16.gmra.mrb[0].mxu0 %v1524
    %v2017 = vpop.f32.mrb[0].mxu0
    %v2018 = vadd.f32 %v1820, %v2017
    %v2019 = vpop.f32.mrb[0].mxu0
    %v2020 = vpop.f32.mrb[0].mxu0
    %v2021 = vadd.f32 %v1823, %v2020
    %v2022 = vpop.f32.mrb[0].mxu0
    %2023 = vmatprep.mubr.bf16.mxu0 0
    %2024 = vmatmul.mubr.bf16.gmra.mrb[0].mxu0 %v1525
    %v2025 = vpop.f32.mrb[0].mxu0
    %v2026 = vadd.f32 %v1828, %v2025
    %v2027 = vpop.f32.mrb[0].mxu0
    %v2028 = vpop.f32.mrb[0].mxu0
    %v2029 = vadd.f32 %v1831, %v2028
    %v2030 = vpop.f32.mrb[0].mxu0
    %2031 = vdwg.mxu0
    %v2032 = vld [vmem:[#allocation2] sm:$0xe]
    %v2033 = vld [vmem:[%s2 + $0x80] sm:$0xf]
    %v2034 = vld [vmem:[%s2 + $0x84] sm:$0xf]
    %v2035 = vld [vmem:[%s2 + $0x88] sm:$0xf]
    %v2036 = vld [vmem:[%s2 + $0x8c] sm:$0xf]
    %v2037 = vld [vmem:[%s2 + $0x90] sm:$0xf]
    %v2038 = vld [vmem:[%s2 + $0x94] sm:$0xf]
    %v2039 = vld [vmem:[%s2 + $0x98] sm:$0xf]
    %v2040 = vld [vmem:[%s2 + $0x9c] sm:$0xf]
    %v2041 = vld [vmem:[%s2 + $0xa0] sm:$0xf]
    %v2042 = vld [vmem:[%s2 + $0xa4] sm:$0xf]
    %v2043 = vld [vmem:[%s2 + $0xa8] sm:$0xf]
    %v2044 = vld [vmem:[%s2 + $0xac] sm:$0xf]
    %v2045 = vld [vmem:[%s2 + $0xb0] sm:$0xf]
    %v2046 = vld [vmem:[%s2 + $0xb4] sm:$0xf]
    %v2047 = vld [vmem:[%s2 + $0xb8] sm:$0xf]
    %v2048 = vld [vmem:[%s2 + $0xbc] sm:$0xf]
    %v2050 = vunpack.c.l.b16 %v2032
    %v2051 = vpack.c.b16 %v1487, %v2050
    %vm2052 = vcmask 1046528
    %v2053 = vrot.slane %v2051, 1
    %v2054 = vrot.slane %v1514, 1
    %v2055 = vsel %vm2052, %v2053, %v2054
    %v2056 = vrot.slane %v1515, 1
    %v2057 = vsel %vm2052, %v2054, %v2056
    %v2058 = vrot.slane %v1516, 1
    %v2059 = vsel %vm2052, %v2056, %v2058
    %v2060 = vrot.slane %v1517, 1
    %v2061 = vsel %vm2052, %v2058, %v2060
    %v2062 = vrot.slane %v1518, 1
    %v2063 = vsel %vm2052, %v2060, %v2062
    %v2064 = vrot.slane %v1519, 1
    %v2065 = vsel %vm2052, %v2062, %v2064
    %v2066 = vrot.slane %v1520, 1
    %v2067 = vsel %vm2052, %v2064, %v2066
    %v2068 = vrot.slane %v1521, 1
    %v2069 = vsel %vm2052, %v2066, %v2068
    %v2070 = vrot.slane %v1522, 1
    %v2071 = vsel %vm2052, %v2068, %v2070
    %v2072 = vrot.slane %v1523, 1
    %v2073 = vsel %vm2052, %v2070, %v2072
    %v2074 = vrot.slane %v1524, 1
    %v2075 = vsel %vm2052, %v2072, %v2074
    %v2076 = vrot.slane %v1525, 1
    %v2077 = vsel %vm2052, %v2074, %v2076
    %v2078 = vrot.slane %v1526, 1
    %v2079 = vsel %vm2052, %v2076, %v2078
    %v2109 = vunpack.c.l.b16 %v2033
    %v2110 = vunpack.c.l.b16 %v2034
    %v2111 = vunpack.c.l.b16 %v2035
    %v2112 = vunpack.c.l.b16 %v2036
    %v2113 = vunpack.c.l.b16 %v2037
    %v2114 = vunpack.c.l.b16 %v2038
    %v2115 = vunpack.c.l.b16 %v2039
    %v2116 = vunpack.c.l.b16 %v2040
    %v2117 = vunpack.c.l.b16 %v2041
    %v2118 = vunpack.c.l.b16 %v2042
    %v2119 = vunpack.c.l.b16 %v2043
    %v2120 = vunpack.c.l.b16 %v2044
    %v2121 = vunpack.c.l.b16 %v2045
    %v2122 = vunpack.c.l.b16 %v2046
    %v2123 = vunpack.c.l.b16 %v2047
    %v2124 = vunpack.c.l.b16 %v2048
    %v2125 = vpack.c.b16 %v2110, %v2109
    %v2126 = vpack.c.b16 %v2112, %v2111
    %v2127 = vpack.c.b16 %v2114, %v2113
    %v2128 = vpack.c.b16 %v2116, %v2115
    %v2129 = vpack.c.b16 %v2118, %v2117
    %v2130 = vpack.c.b16 %v2120, %v2119
    %v2131 = vpack.c.b16 %v2122, %v2121
    %v2132 = vpack.c.b16 %v2124, %v2123
    %2141 = vmatprep.subr.bf16.mxu0 0
    %2142 = vmatpush1.bf16.msra.mxu0 %v2125
    %2143 = vmatprep.subr.bf16.mxu0 0
    %2144 = vmatpush1.bf16.msra.mxu0 %v2126
    %2145 = vmatprep.subr.bf16.mxu0 0
    %2146 = vmatpush1.bf16.msra.mxu0 %v2127
    %2147 = vmatprep.subr.bf16.mxu0 0
    %2148 = vmatpush1.bf16.msra.mxu0 %v2128
    %2149 = vmatprep.subr.bf16.mxu0 0
    %2150 = vmatpush1.bf16.msra.mxu0 %v2129
    %2151 = vmatprep.subr.bf16.mxu0 0
    %2152 = vmatpush1.bf16.msra.mxu0 %v2130
    %2153 = vmatprep.subr.bf16.mxu0 0
    %2154 = vmatpush1.bf16.msra.mxu0 %v2131
    %2155 = vmatprep.subr.bf16.mxu0 0
    %2156 = vmatpush1.bf16.msra.mxu0 %v2132
    %2157 = vmatprep.subr.bf16.mxu0 0
    %2158 = vmatpush1.bf16.msra.mxu0 0
    %2159 = vmatprep.subr.bf16.mxu0 0
    %2160 = vmatpush1.bf16.msra.mxu0 0
    %2161 = vmatprep.subr.bf16.mxu0 0
    %2162 = vmatpush1.bf16.msra.mxu0 0
    %2163 = vmatprep.subr.bf16.mxu0 0
    %2164 = vmatpush1.bf16.msra.mxu0 0
    %2165 = vmatprep.subr.bf16.mxu0 0
    %2166 = vmatpush1.bf16.msra.mxu0 0
    %2167 = vmatprep.subr.bf16.mxu0 0
    %2168 = vmatpush1.bf16.msra.mxu0 0
    %2169 = vmatprep.subr.bf16.mxu0 0
    %2170 = vmatpush1.bf16.msra.mxu0 0
    %2171 = vmatprep.subr.bf16.mxu0 0
    %2172 = vmatpush1.bf16.msra.mxu0 0
    %2173 = vmatprep.mubr.bf16.mxu0 0
    %2174 = vmatmul.mubr.bf16.gmra.mrb[0].mxu0 %v2055
    %v2175 = vpop.f32.mrb[0].mxu0
    %v2176 = vadd.f32 0.0, %v2175
    %v2177 = vpop.f32.mrb[0].mxu0
    %v2178 = vpop.f32.mrb[0].mxu0
    %v2179 = vadd.f32 0.0, %v2178
    %v2180 = vpop.f32.mrb[0].mxu0
    %2181 = vmatprep.mubr.bf16.mxu0 0
    %2182 = vmatmul.mubr.bf16.gmra.mrb[0].mxu0 %v2057
    %v2183 = vpop.f32.mrb[0].mxu0
    %v2184 = vadd.f32 0.0, %v2183
    %v2185 = vpop.f32.mrb[0].mxu0
    %v2186 = vpop.f32.mrb[0].mxu0
    %v2187 = vadd.f32 0.0, %v2186
    %v2188 = vpop.f32.mrb[0].mxu0
    %2189 = vmatprep.mubr.bf16.mxu0 0
    %2190 = vmatmul.mubr.bf16.gmra.mrb[0].mxu0 %v2059
    %v2191 = vpop.f32.mrb[0].mxu0
    %v2192 = vadd.f32 0.0, %v2191
    %v2193 = vpop.f32.mrb[0].mxu0
    %v2194 = vpop.f32.mrb[0].mxu0
    %v2195 = vadd.f32 0.0, %v2194
    %v2196 = vpop.f32.mrb[0].mxu0
    %2197 = vmatprep.mubr.bf16.mxu0 0
    %2198 = vmatmul.mubr.bf16.gmra.mrb[0].mxu0 %v2061
    %v2199 = vpop.f32.mrb[0].mxu0
    %v2200 = vadd.f32 0.0, %v2199
    %v2201 = vpop.f32.mrb[0].mxu0
    %v2202 = vpop.f32.mrb[0].mxu0
    %v2203 = vadd.f32 0.0, %v2202
    %v2204 = vpop.f32.mrb[0].mxu0
    %2205 = vmatprep.mubr.bf16.mxu0 0
    %2206 = vmatmul.mubr.bf16.gmra.mrb[0].mxu0 %v2063
    %v2207 = vpop.f32.mrb[0].mxu0
    %v2208 = vadd.f32 0.0, %v2207
    %v2209 = vpop.f32.mrb[0].mxu0
    %v2210 = vpop.f32.mrb[0].mxu0
    %v2211 = vadd.f32 0.0, %v2210
    %v2212 = vpop.f32.mrb[0].mxu0
    %2213 = vmatprep.mubr.bf16.mxu0 0
    %2214 = vmatmul.mubr.bf16.gmra.mrb[0].mxu0 %v2065
    %v2215 = vpop.f32.mrb[0].mxu0
    %v2216 = vadd.f32 0.0, %v2215
    %v2217 = vpop.f32.mrb[0].mxu0
    %v2218 = vpop.f32.mrb[0].mxu0
    %v2219 = vadd.f32 0.0, %v2218
    %v2220 = vpop.f32.mrb[0].mxu0
    %2221 = vmatprep.mubr.bf16.mxu0 0
    %2222 = vmatmul.mubr.bf16.gmra.mrb[0].mxu0 %v2067
    %v2223 = vpop.f32.mrb[0].mxu0
    %v2224 = vadd.f32 0.0, %v2223
    %v2225 = vpop.f32.mrb[0].mxu0
    %v2226 = vpop.f32.mrb[0].mxu0
    %v2227 = vadd.f32 0.0, %v2226
    %v2228 = vpop.f32.mrb[0].mxu0
    %2229 = vmatprep.mubr.bf16.mxu0 0
    %2230 = vmatmul.mubr.bf16.gmra.mrb[0].mxu0 %v2069
    %v2231 = vpop.f32.mrb[0].mxu0
    %v2232 = vadd.f32 0.0, %v2231
    %v2233 = vpop.f32.mrb[0].mxu0
    %v2234 = vpop.f32.mrb[0].mxu0
    %v2235 = vadd.f32 0.0, %v2234
    %v2236 = vpop.f32.mrb[0].mxu0
    %2237 = vmatprep.mubr.bf16.mxu0 0
    %2238 = vmatmul.mubr.bf16.gmra.mrb[0].mxu0 %v2071
    %v2239 = vpop.f32.mrb[0].mxu0
    %v2240 = vadd.f32 0.0, %v2239
    %v2241 = vpop.f32.mrb[0].mxu0
    %v2242 = vpop.f32.mrb[0].mxu0
    %v2243 = vadd.f32 0.0, %v2242
    %v2244 = vpop.f32.mrb[0].mxu0
    %2245 = vmatprep.mubr.bf16.mxu0 0
    %2246 = vmatmul.mubr.bf16.gmra.mrb[0].mxu0 %v2073
    %v2247 = vpop.f32.mrb[0].mxu0
    %v2248 = vadd.f32 0.0, %v2247
    %v2249 = vpop.f32.mrb[0].mxu0
    %v2250 = vpop.f32.mrb[0].mxu0
    %v2251 = vadd.f32 0.0, %v2250
    %v2252 = vpop.f32.mrb[0].mxu0
    %2253 = vmatprep.mubr.bf16.mxu0 0
    %2254 = vmatmul.mubr.bf16.gmra.mrb[0].mxu0 %v2075
    %v2255 = vpop.f32.mrb[0].mxu0
    %v2256 = vadd.f32 0.0, %v2255
    %v2257 = vpop.f32.mrb[0].mxu0
    %v2258 = vpop.f32.mrb[0].mxu0
    %v2259 = vadd.f32 0.0, %v2258
    %v2260 = vpop.f32.mrb[0].mxu0
    %2261 = vmatprep.mubr.bf16.mxu0 0
    %2262 = vmatmul.mubr.bf16.gmra.mrb[0].mxu0 %v2077
    %v2263 = vpop.f32.mrb[0].mxu0
    %v2264 = vadd.f32 0.0, %v2263
    %v2265 = vpop.f32.mrb[0].mxu0
    %v2266 = vpop.f32.mrb[0].mxu0
    %v2267 = vadd.f32 0.0, %v2266
    %v2268 = vpop.f32.mrb[0].mxu0
    %2269 = vmatprep.mubr.bf16.mxu0 0
    %2270 = vmatmul.mubr.bf16.gmra.mrb[0].mxu0 %v2079
    %v2271 = vpop.f32.mrb[0].mxu0
    %v2272 = vadd.f32 0.0, %v2271
    %v2273 = vpop.f32.mrb[0].mxu0
    %v2274 = vpop.f32.mrb[0].mxu0
    %v2275 = vadd.f32 0.0, %v2274
    %v2276 = vpop.f32.mrb[0].mxu0
    %2277 = vdwg.mxu0
    %v2278 = vadd.f32 %v1930, %v2176
    %v2279 = vadd.f32 %v1933, %v2179
    %v2280 = vadd.f32 %v1938, %v2184
    %v2281 = vadd.f32 %v1941, %v2187
    %v2282 = vadd.f32 %v1946, %v2192
    %v2283 = vadd.f32 %v1949, %v2195
    %v2284 = vadd.f32 %v1954, %v2200
    %v2285 = vadd.f32 %v1957, %v2203
    %v2286 = vadd.f32 %v1962, %v2208
    %v2287 = vadd.f32 %v1965, %v2211
    %v2288 = vadd.f32 %v1970, %v2216
    %v2289 = vadd.f32 %v1973, %v2219
    %v2290 = vadd.f32 %v1978, %v2224
    %v2291 = vadd.f32 %v1981, %v2227
    %v2292 = vadd.f32 %v1986, %v2232
    %v2293 = vadd.f32 %v1989, %v2235
    %v2294 = vadd.f32 %v1994, %v2240
    %v2295 = vadd.f32 %v1997, %v2243
    %v2296 = vadd.f32 %v2002, %v2248
    %v2297 = vadd.f32 %v2005, %v2251
    %v2298 = vadd.f32 %v2010, %v2256
    %v2299 = vadd.f32 %v2013, %v2259
    %v2300 = vadd.f32 %v2018, %v2264
    %v2301 = vadd.f32 %v2021, %v2267
    %v2302 = vadd.f32 %v2026, %v2272
    %v2303 = vadd.f32 %v2029, %v2275
    %v2304 = vld [vmem:[#allocation2 + $0x4] sm:$0xe]
    %v2305 = vld [vmem:[#allocation2 + $0x8] sm:$0xf]
    %v2306 = vld [vmem:[#allocation2 + $0xc] sm:$0xf]
    %v2307 = vld [vmem:[#allocation2 + $0x10] sm:$0xf]
    %v2308 = vld [vmem:[#allocation2 + $0x14] sm:$0xf]
    %v2309 = vld [vmem:[#allocation2 + $0x18] sm:$0xf]
    %v2310 = vld [vmem:[#allocation2 + $0x1c] sm:$0xf]
    %v2311 = vld [vmem:[#allocation2 + $0x20] sm:$0xf]
    %v2312 = vld [vmem:[#allocation2 + $0x24] sm:$0xf]
    %v2313 = vld [vmem:[#allocation2 + $0x28] sm:$0xf]
    %v2314 = vld [vmem:[#allocation2 + $0x2c] sm:$0xf]
    %v2315 = vld [vmem:[#allocation2 + $0x30] sm:$0xf]
    %v2316 = vld [vmem:[#allocation2 + $0x34] sm:$0xf]
    %v2317 = vld [vmem:[#allocation2 + $0x38] sm:$0xf]
    %v2318 = vld [vmem:[#allocation2 + $0x3c] sm:$0xf]
    %v2319 = vld [vmem:[#allocation2 + $0x40] sm:$0xf]
    %v2320 = vld [vmem:[#allocation2 + $0x44] sm:$0xf]
    %v2321 = vld [vmem:[#allocation2 + $0x48] sm:$0xf]
    %v2322 = vld [vmem:[#allocation2 + $0x4c] sm:$0xf]
    %v2323 = vld [vmem:[#allocation2 + $0x50] sm:$0xf]
    %v2324 = vld [vmem:[#allocation2 + $0x54] sm:$0xf]
    %v2325 = vld [vmem:[#allocation2 + $0x58] sm:$0xf]
    %v2326 = vld [vmem:[#allocation2 + $0x5c] sm:$0xf]
    %v2327 = vld [vmem:[#allocation2 + $0x60] sm:$0xf]
    %v2328 = vld [vmem:[#allocation2 + $0x64] sm:$0xf]
    %v2329 = vld [vmem:[#allocation2 + $0x68] sm:$0xf]
    %v2330 = vld [vmem:[#allocation2 + $0x6c] sm:$0x1]
    %v2331 = vld [vmem:[%s2 + $0xc0] sm:$0xf]
    %v2332 = vld [vmem:[%s2 + $0xc4] sm:$0xf]
    %v2333 = vld [vmem:[%s2 + $0xc8] sm:$0xf]
    %v2334 = vld [vmem:[%s2 + $0xcc] sm:$0xf]
    %v2335 = vld [vmem:[%s2 + $0xd0] sm:$0xf]
    %v2336 = vld [vmem:[%s2 + $0xd4] sm:$0xf]
    %v2337 = vld [vmem:[%s2 + $0xd8] sm:$0xf]
    %v2338 = vld [vmem:[%s2 + $0xdc] sm:$0xf]
    %v2339 = vld [vmem:[%s2 + $0xe0] sm:$0xf]
    %v2340 = vld [vmem:[%s2 + $0xe4] sm:$0xf]
    %v2341 = vld [vmem:[%s2 + $0xe8] sm:$0xf]
    %v2342 = vld [vmem:[%s2 + $0xec] sm:$0xf]
    %v2343 = vld [vmem:[%s2 + $0xf0] sm:$0xf]
    %v2344 = vld [vmem:[%s2 + $0xf4] sm:$0xf]
    %v2345 = vld [vmem:[%s2 + $0xf8] sm:$0xf]
    %v2346 = vld [vmem:[%s2 + $0xfc] sm:$0xf]
    %v2374 = vunpack.c.l.b16 %v2304
    %v2375 = vunpack.c.l.b16 %v2305
    %v2376 = vunpack.c.l.b16 %v2306
    %v2377 = vunpack.c.l.b16 %v2307
    %v2378 = vunpack.c.l.b16 %v2308
    %v2379 = vunpack.c.l.b16 %v2309
    %v2380 = vunpack.c.l.b16 %v2310
    %v2381 = vunpack.c.l.b16 %v2311
    %v2382 = vunpack.c.l.b16 %v2312
    %v2383 = vunpack.c.l.b16 %v2313
    %v2384 = vunpack.c.l.b16 %v2314
    %v2385 = vunpack.c.l.b16 %v2315
    %v2386 = vunpack.c.l.b16 %v2316
    %v2387 = vunpack.c.l.b16 %v2317
    %v2388 = vunpack.c.l.b16 %v2318
    %v2389 = vunpack.c.l.b16 %v2319
    %v2390 = vunpack.c.l.b16 %v2320
    %v2391 = vunpack.c.l.b16 %v2321
    %v2392 = vunpack.c.l.b16 %v2322
    %v2393 = vunpack.c.l.b16 %v2323
    %v2394 = vunpack.c.l.b16 %v2324
    %v2395 = vunpack.c.l.b16 %v2325
    %v2396 = vunpack.c.l.b16 %v2326
    %v2397 = vunpack.c.l.b16 %v2327
    %v2398 = vunpack.c.l.b16 %v2328
    %v2399 = vunpack.c.l.b16 %v2329
    %v2400 = vunpack.c.l.b16 %v2330
    %v2401 = vpack.c.b16 %v2375, %v2374
    %v2402 = vpack.c.b16 %v2377, %v2376
    %v2403 = vpack.c.b16 %v2379, %v2378
    %v2404 = vpack.c.b16 %v2381, %v2380
    %v2405 = vpack.c.b16 %v2383, %v2382
    %v2406 = vpack.c.b16 %v2385, %v2384
    %v2407 = vpack.c.b16 %v2387, %v2386
    %v2408 = vpack.c.b16 %v2389, %v2388
    %v2409 = vpack.c.b16 %v2391, %v2390
    %v2410 = vpack.c.b16 %v2393, %v2392
    %v2411 = vpack.c.b16 %v2395, %v2394
    %v2412 = vpack.c.b16 %v2397, %v2396
    %v2413 = vpack.c.b16 %v2399, %v2398
    %v2414 = vpack.c.b16 %v2400, %v2400
    %v2415 = vrot.slane %v2401, 1
    %v2416 = vrot.slane %v2402, 1
    %v2417 = vsel %vm2052, %v2415, %v2416
    %v2418 = vrot.slane %v2403, 1
    %v2419 = vsel %vm2052, %v2416, %v2418
    %v2420 = vrot.slane %v2404, 1
    %v2421 = vsel %vm2052, %v2418, %v2420
    %v2422 = vrot.slane %v2405, 1
    %v2423 = vsel %vm2052, %v2420, %v2422
    %v2424 = vrot.slane %v2406, 1
    %v2425 = vsel %vm2052, %v2422, %v2424
    %v2426 = vrot.slane %v2407, 1
    %v2427 = vsel %vm2052, %v2424, %v2426
    %v2428 = vrot.slane %v2408, 1
    %v2429 = vsel %vm2052, %v2426, %v2428
    %v2430 = vrot.slane %v2409, 1
    %v2431 = vsel %vm2052, %v2428, %v2430
    %v2432 = vrot.slane %v2410, 1
    %v2433 = vsel %vm2052, %v2430, %v2432
    %v2434 = vrot.slane %v2411, 1
    %v2435 = vsel %vm2052, %v2432, %v2434
    %v2436 = vrot.slane %v2412, 1
    %v2437 = vsel %vm2052, %v2434, %v2436
    %v2438 = vrot.slane %v2413, 1
    %v2439 = vsel %vm2052, %v2436, %v2438
    %v2440 = vrot.slane %v2414, 1
    %v2441 = vsel %vm2052, %v2438, %v2440
    %v2471 = vunpack.c.l.b16 %v2331
    %v2472 = vunpack.c.l.b16 %v2332
    %v2473 = vunpack.c.l.b16 %v2333
    %v2474 = vunpack.c.l.b16 %v2334
    %v2475 = vunpack.c.l.b16 %v2335
    %v2476 = vunpack.c.l.b16 %v2336
    %v2477 = vunpack.c.l.b16 %v2337
    %v2478 = vunpack.c.l.b16 %v2338
    %v2479 = vunpack.c.l.b16 %v2339
    %v2480 = vunpack.c.l.b16 %v2340
    %v2481 = vunpack.c.l.b16 %v2341
    %v2482 = vunpack.c.l.b16 %v2342
    %v2483 = vunpack.c.l.b16 %v2343
    %v2484 = vunpack.c.l.b16 %v2344
    %v2485 = vunpack.c.l.b16 %v2345
    %v2486 = vunpack.c.l.b16 %v2346
    %v2487 = vpack.c.b16 %v2472, %v2471
    %v2488 = vpack.c.b16 %v2474, %v2473
    %v2489 = vpack.c.b16 %v2476, %v2475
    %v2490 = vpack.c.b16 %v2478, %v2477
    %v2491 = vpack.c.b16 %v2480, %v2479
    %v2492 = vpack.c.b16 %v2482, %v2481
    %v2493 = vpack.c.b16 %v2484, %v2483
    %v2494 = vpack.c.b16 %v2486, %v2485
    %2503 = vmatprep.subr.bf16.mxu0 0
    %2504 = vmatpush1.bf16.msra.mxu0 %v2487
    %2505 = vmatprep.subr.bf16.mxu0 0
    %2506 = vmatpush1.bf16.msra.mxu0 %v2488
    %2507 = vmatprep.subr.bf16.mxu0 0
    %2508 = vmatpush1.bf16.msra.mxu0 %v2489
    %2509 = vmatprep.subr.bf16.mxu0 0
    %2510 = vmatpush1.bf16.msra.mxu0 %v2490
    %2511 = vmatprep.subr.bf16.mxu0 0
    %2512 = vmatpush1.bf16.msra.mxu0 %v2491
    %2513 = vmatprep.subr.bf16.mxu0 0
    %2514 = vmatpush1.bf16.msra.mxu0 %v2492
    %2515 = vmatprep.subr.bf16.mxu0 0
    %2516 = vmatpush1.bf16.msra.mxu0 %v2493
    %2517 = vmatprep.subr.bf16.mxu0 0
    %2518 = vmatpush1.bf16.msra.mxu0 %v2494
    %2519 = vmatprep.subr.bf16.mxu0 0
    %2520 = vmatpush1.bf16.msra.mxu0 0
    %2521 = vmatprep.subr.bf16.mxu0 0
    %2522 = vmatpush1.bf16.msra.mxu0 0
    %2523 = vmatprep.subr.bf16.mxu0 0
    %2524 = vmatpush1.bf16.msra.mxu0 0
    %2525 = vmatprep.subr.bf16.mxu0 0
    %2526 = vmatpush1.bf16.msra.mxu0 0
    %2527 = vmatprep.subr.bf16.mxu0 0
    %2528 = vmatpush1.bf16.msra.mxu0 0
    %2529 = vmatprep.subr.bf16.mxu0 0
    %2530 = vmatpush1.bf16.msra.mxu0 0
    %2531 = vmatprep.subr.bf16.mxu0 0
    %2532 = vmatpush1.bf16.msra.mxu0 0
    %2533 = vmatprep.subr.bf16.mxu0 0
    %2534 = vmatpush1.bf16.msra.mxu0 0
    %2535 = vmatprep.mubr.bf16.mxu0 0
    %2536 = vmatmul.mubr.bf16.gmra.mrb[0].mxu0 %v2417
    %v2537 = vpop.f32.mrb[0].mxu0
    %v2538 = vadd.f32 0.0, %v2537
    %v2539 = vpop.f32.mrb[0].mxu0
    %v2540 = vpop.f32.mrb[0].mxu0
    %v2541 = vadd.f32 0.0, %v2540
    %v2542 = vpop.f32.mrb[0].mxu0
    %2543 = vmatprep.mubr.bf16.mxu0 0
    %2544 = vmatmul.mubr.bf16.gmra.mrb[0].mxu0 %v2419
    %v2545 = vpop.f32.mrb[0].mxu0
    %v2546 = vadd.f32 0.0, %v2545
    %v2547 = vpop.f32.mrb[0].mxu0
    %v2548 = vpop.f32.mrb[0].mxu0
    %v2549 = vadd.f32 0.0, %v2548
    %v2550 = vpop.f32.mrb[0].mxu0
    %2551 = vmatprep.mubr.bf16.mxu0 0
    %2552 = vmatmul.mubr.bf16.gmra.mrb[0].mxu0 %v2421
    %v2553 = vpop.f32.mrb[0].mxu0
    %v2554 = vadd.f32 0.0, %v2553
    %v2555 = vpop.f32.mrb[0].mxu0
    %v2556 = vpop.f32.mrb[0].mxu0
    %v2557 = vadd.f32 0.0, %v2556
    %v2558 = vpop.f32.mrb[0].mxu0
    %2559 = vmatprep.mubr.bf16.mxu0 0
    %2560 = vmatmul.mubr.bf16.gmra.mrb[0].mxu0 %v2423
    %v2561 = vpop.f32.mrb[0].mxu0
    %v2562 = vadd.f32 0.0, %v2561
    %v2563 = vpop.f32.mrb[0].mxu0
    %v2564 = vpop.f32.mrb[0].mxu0
    %v2565 = vadd.f32 0.0, %v2564
    %v2566 = vpop.f32.mrb[0].mxu0
    %2567 = vmatprep.mubr.bf16.mxu0 0
    %2568 = vmatmul.mubr.bf16.gmra.mrb[0].mxu0 %v2425
    %v2569 = vpop.f32.mrb[0].mxu0
    %v2570 = vadd.f32 0.0, %v2569
    %v2571 = vpop.f32.mrb[0].mxu0
    %v2572 = vpop.f32.mrb[0].mxu0
    %v2573 = vadd.f32 0.0, %v2572
    %v2574 = vpop.f32.mrb[0].mxu0
    %2575 = vmatprep.mubr.bf16.mxu0 0
    %2576 = vmatmul.mubr.bf16.gmra.mrb[0].mxu0 %v2427
    %v2577 = vpop.f32.mrb[0].mxu0
    %v2578 = vadd.f32 0.0, %v2577
    %v2579 = vpop.f32.mrb[0].mxu0
    %v2580 = vpop.f32.mrb[0].mxu0
    %v2581 = vadd.f32 0.0, %v2580
    %v2582 = vpop.f32.mrb[0].mxu0
    %2583 = vmatprep.mubr.bf16.mxu0 0
    %2584 = vmatmul.mubr.bf16.gmra.mrb[0].mxu0 %v2429
    %v2585 = vpop.f32.mrb[0].mxu0
    %v2586 = vadd.f32 0.0, %v2585
    %v2587 = vpop.f32.mrb[0].mxu0
    %v2588 = vpop.f32.mrb[0].mxu0
    %v2589 = vadd.f32 0.0, %v2588
    %v2590 = vpop.f32.mrb[0].mxu0
    %2591 = vmatprep.mubr.bf16.mxu0 0
    %2592 = vmatmul.mubr.bf16.gmra.mrb[0].mxu0 %v2431
    %v2593 = vpop.f32.mrb[0].mxu0
    %v2594 = vadd.f32 0.0, %v2593
    %v2595 = vpop.f32.mrb[0].mxu0
    %v2596 = vpop.f32.mrb[0].mxu0
    %v2597 = vadd.f32 0.0, %v2596
    %v2598 = vpop.f32.mrb[0].mxu0
    %2599 = vmatprep.mubr.bf16.mxu0 0
    %2600 = vmatmul.mubr.bf16.gmra.mrb[0].mxu0 %v2433
    %v2601 = vpop.f32.mrb[0].mxu0
    %v2602 = vadd.f32 0.0, %v2601
    %v2603 = vpop.f32.mrb[0].mxu0
    %v2604 = vpop.f32.mrb[0].mxu0
    %v2605 = vadd.f32 0.0, %v2604
    %v2606 = vpop.f32.mrb[0].mxu0
    %2607 = vmatprep.mubr.bf16.mxu0 0
    %2608 = vmatmul.mubr.bf16.gmra.mrb[0].mxu0 %v2435
    %v2609 = vpop.f32.mrb[0].mxu0
    %v2610 = vadd.f32 0.0, %v2609
    %v2611 = vpop.f32.mrb[0].mxu0
    %v2612 = vpop.f32.mrb[0].mxu0
    %v2613 = vadd.f32 0.0, %v2612
    %v2614 = vpop.f32.mrb[0].mxu0
    %2615 = vmatprep.mubr.bf16.mxu0 0
    %2616 = vmatmul.mubr.bf16.gmra.mrb[0].mxu0 %v2437
    %v2617 = vpop.f32.mrb[0].mxu0
    %v2618 = vadd.f32 0.0, %v2617
    %v2619 = vpop.f32.mrb[0].mxu0
    %v2620 = vpop.f32.mrb[0].mxu0
    %v2621 = vadd.f32 0.0, %v2620
    %v2622 = vpop.f32.mrb[0].mxu0
    %2623 = vmatprep.mubr.bf16.mxu0 0
    %2624 = vmatmul.mubr.bf16.gmra.mrb[0].mxu0 %v2439
    %v2625 = vpop.f32.mrb[0].mxu0
    %v2626 = vadd.f32 0.0, %v2625
    %v2627 = vpop.f32.mrb[0].mxu0
    %v2628 = vpop.f32.mrb[0].mxu0
    %v2629 = vadd.f32 0.0, %v2628
    %v2630 = vpop.f32.mrb[0].mxu0
    %2631 = vmatprep.mubr.bf16.mxu0 0
    %2632 = vmatmul.mubr.bf16.gmra.mrb[0].mxu0 %v2441
    %v2633 = vpop.f32.mrb[0].mxu0
    %v2634 = vadd.f32 0.0, %v2633
    %v2635 = vpop.f32.mrb[0].mxu0
    %v2636 = vpop.f32.mrb[0].mxu0
    %v2637 = vadd.f32 0.0, %v2636
    %v2638 = vpop.f32.mrb[0].mxu0
    %2639 = vdwg.mxu0
    %v2640 = vadd.f32 %v2278, %v2538
    %v2641 = vadd.f32 %v2279, %v2541
    %v2642 = vadd.f32 %v2280, %v2546
    %v2643 = vadd.f32 %v2281, %v2549
    %v2644 = vadd.f32 %v2282, %v2554
    %v2645 = vadd.f32 %v2283, %v2557
    %v2646 = vadd.f32 %v2284, %v2562
    %v2647 = vadd.f32 %v2285, %v2565
    %v2648 = vadd.f32 %v2286, %v2570
    %v2649 = vadd.f32 %v2287, %v2573
    %v2650 = vadd.f32 %v2288, %v2578
    %v2651 = vadd.f32 %v2289, %v2581
    %v2652 = vadd.f32 %v2290, %v2586
    %v2653 = vadd.f32 %v2291, %v2589
    %v2654 = vadd.f32 %v2292, %v2594
    %v2655 = vadd.f32 %v2293, %v2597
    %v2656 = vadd.f32 %v2294, %v2602
    %v2657 = vadd.f32 %v2295, %v2605
    %v2658 = vadd.f32 %v2296, %v2610
    %v2659 = vadd.f32 %v2297, %v2613
    %v2660 = vadd.f32 %v2298, %v2618
    %v2661 = vadd.f32 %v2299, %v2621
    %v2662 = vadd.f32 %v2300, %v2626
    %v2663 = vadd.f32 %v2301, %v2629
    %v2664 = vadd.f32 %v2302, %v2634
    %v2665 = vadd.f32 %v2303, %v2637
    %v2666 = vld [vmem:[#allocation2 + $0x6c] sm:$0x3]
    %v2667 = vld [vmem:[%s2 + $0x100] sm:$0xf]
    %v2668 = vld [vmem:[%s2 + $0x104] sm:$0xf]
    %v2669 = vld [vmem:[%s2 + $0x108] sm:$0xf]
    %v2670 = vld [vmem:[%s2 + $0x10c] sm:$0xf]
    %v2671 = vld [vmem:[%s2 + $0x110] sm:$0xf]
    %v2672 = vld [vmem:[%s2 + $0x114] sm:$0xf]
    %v2673 = vld [vmem:[%s2 + $0x118] sm:$0xf]
    %v2674 = vld [vmem:[%s2 + $0x11c] sm:$0xf]
    %v2675 = vld [vmem:[%s2 + $0x120] sm:$0xf]
    %v2676 = vld [vmem:[%s2 + $0x124] sm:$0xf]
    %v2677 = vld [vmem:[%s2 + $0x128] sm:$0xf]
    %v2678 = vld [vmem:[%s2 + $0x12c] sm:$0xf]
    %v2679 = vld [vmem:[%s2 + $0x130] sm:$0xf]
    %v2680 = vld [vmem:[%s2 + $0x134] sm:$0xf]
    %v2681 = vld [vmem:[%s2 + $0x138] sm:$0xf]
    %v2682 = vld [vmem:[%s2 + $0x13c] sm:$0xf]
    %v2684 = vunpack.c.l.b16 %v2666
    %v2685 = vpack.c.b16 %v2684, %v2684
    %vm2686 = vsmask.f32 6400
    %v2688 = vshrl.u32 %v2401, 16
    %v2690 = vrot.slane %v2688, 1
    %v2691 = vshll.u32 %v2401, 16
    %v2693 = vrot.slane %v2691, 2
    %v2694 = vor.u32 %v2690, %v2693
    %v2696 = vshrl.u32 %v2402, 16
    %v2698 = vrot.slane %v2696, 1
    %v2699 = vshll.u32 %v2402, 16
    %v2701 = vrot.slane %v2699, 2
    %v2702 = vor.u32 %v2698, %v2701
    %v2703 = vsel %vm2686, %v2694, %v2702
    %v2705 = vshrl.u32 %v2403, 16
    %v2707 = vrot.slane %v2705, 1
    %v2708 = vshll.u32 %v2403, 16
    %v2710 = vrot.slane %v2708, 2
    %v2711 = vor.u32 %v2707, %v2710
    %v2712 = vsel %vm2686, %v2702, %v2711
    %v2714 = vshrl.u32 %v2404, 16
    %v2716 = vrot.slane %v2714, 1
    %v2717 = vshll.u32 %v2404, 16
    %v2719 = vrot.slane %v2717, 2
    %v2720 = vor.u32 %v2716, %v2719
    %v2721 = vsel %vm2686, %v2711, %v2720
    %v2723 = vshrl.u32 %v2405, 16
    %v2725 = vrot.slane %v2723, 1
    %v2726 = vshll.u32 %v2405, 16
    %v2728 = vrot.slane %v2726, 2
    %v2729 = vor.u32 %v2725, %v2728
    %v2730 = vsel %vm2686, %v2720, %v2729
    %v2732 = vshrl.u32 %v2406, 16
    %v2734 = vrot.slane %v2732, 1
    %v2735 = vshll.u32 %v2406, 16
    %v2737 = vrot.slane %v2735, 2
    %v2738 = vor.u32 %v2734, %v2737
    %v2739 = vsel %vm2686, %v2729, %v2738
    %v2741 = vshrl.u32 %v2407, 16
    %v2743 = vrot.slane %v2741, 1
    %v2744 = vshll.u32 %v2407, 16
    %v2746 = vrot.slane %v2744, 2
    %v2747 = vor.u32 %v2743, %v2746
    %v2748 = vsel %vm2686, %v2738, %v2747
    %v2750 = vshrl.u32 %v2408, 16
    %v2752 = vrot.slane %v2750, 1
    %v2753 = vshll.u32 %v2408, 16
    %v2755 = vrot.slane %v2753, 2
    %v2756 = vor.u32 %v2752, %v2755
    %v2757 = vsel %vm2686, %v2747, %v2756
    %v2759 = vshrl.u32 %v2409, 16
    %v2761 = vrot.slane %v2759, 1
    %v2762 = vshll.u32 %v2409, 16
    %v2764 = vrot.slane %v2762, 2
    %v2765 = vor.u32 %v2761, %v2764
    %v2766 = vsel %vm2686, %v2756, %v2765
    %v2768 = vshrl.u32 %v2410, 16
    %v2770 = vrot.slane %v2768, 1
    %v2771 = vshll.u32 %v2410, 16
    %v2773 = vrot.slane %v2771, 2
    %v2774 = vor.u32 %v2770, %v2773
    %v2775 = vsel %vm2686, %v2765, %v2774
    %v2777 = vshrl.u32 %v2411, 16
    %v2779 = vrot.slane %v2777, 1
    %v2780 = vshll.u32 %v2411, 16
    %v2782 = vrot.slane %v2780, 2
    %v2783 = vor.u32 %v2779, %v2782
    %v2784 = vsel %vm2686, %v2774, %v2783
    %v2786 = vshrl.u32 %v2412, 16
    %v2788 = vrot.slane %v2786, 1
    %v2789 = vshll.u32 %v2412, 16
    %v2791 = vrot.slane %v2789, 2
    %v2792 = vor.u32 %v2788, %v2791
    %v2793 = vsel %vm2686, %v2783, %v2792
    %v2795 = vshrl.u32 %v2413, 16
    %v2797 = vrot.slane %v2795, 1
    %v2798 = vshll.u32 %v2413, 16
    %v2800 = vrot.slane %v2798, 2
    %v2801 = vor.u32 %v2797, %v2800
    %v2802 = vsel %vm2686, %v2792, %v2801
    %v2804 = vshrl.u32 %v2685, 16
    %v2806 = vrot.slane %v2804, 1
    %v2807 = vshll.u32 %v2685, 16
    %v2809 = vrot.slane %v2807, 2
    %v2810 = vor.u32 %v2806, %v2809
    %v2811 = vsel %vm2686, %v2801, %v2810
    %v2841 = vunpack.c.l.b16 %v2667
    %v2842 = vunpack.c.l.b16 %v2668
    %v2843 = vunpack.c.l.b16 %v2669
    %v2844 = vunpack.c.l.b16 %v2670
    %v2845 = vunpack.c.l.b16 %v2671
    %v2846 = vunpack.c.l.b16 %v2672
    %v2847 = vunpack.c.l.b16 %v2673
    %v2848 = vunpack.c.l.b16 %v2674
    %v2849 = vunpack.c.l.b16 %v2675
    %v2850 = vunpack.c.l.b16 %v2676
    %v2851 = vunpack.c.l.b16 %v2677
    %v2852 = vunpack.c.l.b16 %v2678
    %v2853 = vunpack.c.l.b16 %v2679
    %v2854 = vunpack.c.l.b16 %v2680
    %v2855 = vunpack.c.l.b16 %v2681
    %v2856 = vunpack.c.l.b16 %v2682
    %v2857 = vpack.c.b16 %v2842, %v2841
    %v2858 = vpack.c.b16 %v2844, %v2843
    %v2859 = vpack.c.b16 %v2846, %v2845
    %v2860 = vpack.c.b16 %v2848, %v2847
    %v2861 = vpack.c.b16 %v2850, %v2849
    %v2862 = vpack.c.b16 %v2852, %v2851
    %v2863 = vpack.c.b16 %v2854, %v2853
    %v2864 = vpack.c.b16 %v2856, %v2855
    %2873 = vmatprep.subr.bf16.mxu0 0
    %2874 = vmatpush1.bf16.msra.mxu0 %v2857
    %2875 = vmatprep.subr.bf16.mxu0 0
    %2876 = vmatpush1.bf16.msra.mxu0 %v2858
    %2877 = vmatprep.subr.bf16.mxu0 0
    %2878 = vmatpush1.bf16.msra.mxu0 %v2859
    %2879 = vmatprep.subr.bf16.mxu0 0
    %2880 = vmatpush1.bf16.msra.mxu0 %v2860
    %2881 = vmatprep.subr.bf16.mxu0 0
    %2882 = vmatpush1.bf16.msra.mxu0 %v2861
    %2883 = vmatprep.subr.bf16.mxu0 0
    %2884 = vmatpush1.bf16.msra.mxu0 %v2862
    %2885 = vmatprep.subr.bf16.mxu0 0
    %2886 = vmatpush1.bf16.msra.mxu0 %v2863
    %2887 = vmatprep.subr.bf16.mxu0 0
    %2888 = vmatpush1.bf16.msra.mxu0 %v2864
    %2889 = vmatprep.subr.bf16.mxu0 0
    %2890 = vmatpush1.bf16.msra.mxu0 0
    %2891 = vmatprep.subr.bf16.mxu0 0
    %2892 = vmatpush1.bf16.msra.mxu0 0
    %2893 = vmatprep.subr.bf16.mxu0 0
    %2894 = vmatpush1.bf16.msra.mxu0 0
    %2895 = vmatprep.subr.bf16.mxu0 0
    %2896 = vmatpush1.bf16.msra.mxu0 0
    %2897 = vmatprep.subr.bf16.mxu0 0
    %2898 = vmatpush1.bf16.msra.mxu0 0
    %2899 = vmatprep.subr.bf16.mxu0 0
    %2900 = vmatpush1.bf16.msra.mxu0 0
    %2901 = vmatprep.subr.bf16.mxu0 0
    %2902 = vmatpush1.bf16.msra.mxu0 0
    %2903 = vmatprep.subr.bf16.mxu0 0
    %2904 = vmatpush1.bf16.msra.mxu0 0
    %2905 = vmatprep.mubr.bf16.mxu0 0
    %2906 = vmatmul.mubr.bf16.gmra.mrb[0].mxu0 %v2703
    %v2907 = vpop.f32.mrb[0].mxu0
    %v2908 = vadd.f32 0.0, %v2907
    %v2909 = vpop.f32.mrb[0].mxu0
    %v2910 = vpop.f32.mrb[0].mxu0
    %v2911 = vadd.f32 0.0, %v2910
    %v2912 = vpop.f32.mrb[0].mxu0
    %2913 = vmatprep.mubr.bf16.mxu0 0
    %2914 = vmatmul.mubr.bf16.gmra.mrb[0].mxu0 %v2712
    %v2915 = vpop.f32.mrb[0].mxu0
    %v2916 = vadd.f32 0.0, %v2915
    %v2917 = vpop.f32.mrb[0].mxu0
    %v2918 = vpop.f32.mrb[0].mxu0
    %v2919 = vadd.f32 0.0, %v2918
    %v2920 = vpop.f32.mrb[0].mxu0
    %2921 = vmatprep.mubr.bf16.mxu0 0
    %2922 = vmatmul.mubr.bf16.gmra.mrb[0].mxu0 %v2721
    %v2923 = vpop.f32.mrb[0].mxu0
    %v2924 = vadd.f32 0.0, %v2923
    %v2925 = vpop.f32.mrb[0].mxu0
    %v2926 = vpop.f32.mrb[0].mxu0
    %v2927 = vadd.f32 0.0, %v2926
    %v2928 = vpop.f32.mrb[0].mxu0
    %2929 = vmatprep.mubr.bf16.mxu0 0
    %2930 = vmatmul.mubr.bf16.gmra.mrb[0].mxu0 %v2730
    %v2931 = vpop.f32.mrb[0].mxu0
    %v2932 = vadd.f32 0.0, %v2931
    %v2933 = vpop.f32.mrb[0].mxu0
    %v2934 = vpop.f32.mrb[0].mxu0
    %v2935 = vadd.f32 0.0, %v2934
    %v2936 = vpop.f32.mrb[0].mxu0
    %2937 = vmatprep.mubr.bf16.mxu0 0
    %2938 = vmatmul.mubr.bf16.gmra.mrb[0].mxu0 %v2739
    %v2939 = vpop.f32.mrb[0].mxu0
    %v2940 = vadd.f32 0.0, %v2939
    %v2941 = vpop.f32.mrb[0].mxu0
    %v2942 = vpop.f32.mrb[0].mxu0
    %v2943 = vadd.f32 0.0, %v2942
    %v2944 = vpop.f32.mrb[0].mxu0
    %2945 = vmatprep.mubr.bf16.mxu0 0
    %2946 = vmatmul.mubr.bf16.gmra.mrb[0].mxu0 %v2748
    %v2947 = vpop.f32.mrb[0].mxu0
    %v2948 = vadd.f32 0.0, %v2947
    %v2949 = vpop.f32.mrb[0].mxu0
    %v2950 = vpop.f32.mrb[0].mxu0
    %v2951 = vadd.f32 0.0, %v2950
    %v2952 = vpop.f32.mrb[0].mxu0
    %2953 = vmatprep.mubr.bf16.mxu0 0
    %2954 = vmatmul.mubr.bf16.gmra.mrb[0].mxu0 %v2757
    %v2955 = vpop.f32.mrb[0].mxu0
    %v2956 = vadd.f32 0.0, %v2955
    %v2957 = vpop.f32.mrb[0].mxu0
    %v2958 = vpop.f32.mrb[0].mxu0
    %v2959 = vadd.f32 0.0, %v2958
    %v2960 = vpop.f32.mrb[0].mxu0
    %2961 = vmatprep.mubr.bf16.mxu0 0
    %2962 = vmatmul.mubr.bf16.gmra.mrb[0].mxu0 %v2766
    %v2963 = vpop.f32.mrb[0].mxu0
    %v2964 = vadd.f32 0.0, %v2963
    %v2965 = vpop.f32.mrb[0].mxu0
    %v2966 = vpop.f32.mrb[0].mxu0
    %v2967 = vadd.f32 0.0, %v2966
    %v2968 = vpop.f32.mrb[0].mxu0
    %2969 = vmatprep.mubr.bf16.mxu0 0
    %2970 = vmatmul.mubr.bf16.gmra.mrb[0].mxu0 %v2775
    %v2971 = vpop.f32.mrb[0].mxu0
    %v2972 = vadd.f32 0.0, %v2971
    %v2973 = vpop.f32.mrb[0].mxu0
    %v2974 = vpop.f32.mrb[0].mxu0
    %v2975 = vadd.f32 0.0, %v2974
    %v2976 = vpop.f32.mrb[0].mxu0
    %2977 = vmatprep.mubr.bf16.mxu0 0
    %2978 = vmatmul.mubr.bf16.gmra.mrb[0].mxu0 %v2784
    %v2979 = vpop.f32.mrb[0].mxu0
    %v2980 = vadd.f32 0.0, %v2979
    %v2981 = vpop.f32.mrb[0].mxu0
    %v2982 = vpop.f32.mrb[0].mxu0
    %v2983 = vadd.f32 0.0, %v2982
    %v2984 = vpop.f32.mrb[0].mxu0
    %2985 = vmatprep.mubr.bf16.mxu0 0
    %2986 = vmatmul.mubr.bf16.gmra.mrb[0].mxu0 %v2793
    %v2987 = vpop.f32.mrb[0].mxu0
    %v2988 = vadd.f32 0.0, %v2987
    %v2989 = vpop.f32.mrb[0].mxu0
    %v2990 = vpop.f32.mrb[0].mxu0
    %v2991 = vadd.f32 0.0, %v2990
    %v2992 = vpop.f32.mrb[0].mxu0
    %2993 = vmatprep.mubr.bf16.mxu0 0
    %2994 = vmatmul.mubr.bf16.gmra.mrb[0].mxu0 %v2802
    %v2995 = vpop.f32.mrb[0].mxu0
    %v2996 = vadd.f32 0.0, %v2995
    %v2997 = vpop.f32.mrb[0].mxu0
    %v2998 = vpop.f32.mrb[0].mxu0
    %v2999 = vadd.f32 0.0, %v2998
    %v3000 = vpop.f32.mrb[0].mxu0
    %3001 = vmatprep.mubr.bf16.mxu0 0
    %3002 = vmatmul.mubr.bf16.gmra.mrb[0].mxu0 %v2811
    %v3003 = vpop.f32.mrb[0].mxu0
    %v3004 = vadd.f32 0.0, %v3003
    %v3005 = vpop.f32.mrb[0].mxu0
    %v3006 = vpop.f32.mrb[0].mxu0
    %v3007 = vadd.f32 0.0, %v3006
    %v3008 = vpop.f32.mrb[0].mxu0
    %3009 = vdwg.mxu0
    %v3010 = vadd.f32 %v2640, %v2908
    %v3011 = vadd.f32 %v2641, %v2911
    %v3012 = vadd.f32 %v2642, %v2916
    %v3013 = vadd.f32 %v2643, %v2919
    %v3014 = vadd.f32 %v2644, %v2924
    %v3015 = vadd.f32 %v2645, %v2927
    %v3016 = vadd.f32 %v2646, %v2932
    %v3017 = vadd.f32 %v2647, %v2935
    %v3018 = vadd.f32 %v2648, %v2940
    %v3019 = vadd.f32 %v2649, %v2943
    %v3020 = vadd.f32 %v2650, %v2948
    %v3021 = vadd.f32 %v2651, %v2951
    %v3022 = vadd.f32 %v2652, %v2956
    %v3023 = vadd.f32 %v2653, %v2959
    %v3024 = vadd.f32 %v2654, %v2964
    %v3025 = vadd.f32 %v2655, %v2967
    %v3026 = vadd.f32 %v2656, %v2972
    %v3027 = vadd.f32 %v2657, %v2975
    %v3028 = vadd.f32 %v2658, %v2980
    %v3029 = vadd.f32 %v2659, %v2983
    %v3030 = vadd.f32 %v2660, %v2988
    %v3031 = vadd.f32 %v2661, %v2991
    %v3032 = vadd.f32 %v2662, %v2996
    %v3033 = vadd.f32 %v2663, %v2999
    %v3034 = vadd.f32 %v2664, %v3004
    %v3035 = vadd.f32 %v2665, %v3007
    %v3036 = vld [vmem:[#allocation2 + $0x4] sm:$0xc]
    %v3037 = vld [vmem:[%s2 + $0x140] sm:$0xf]
    %v3038 = vld [vmem:[%s2 + $0x144] sm:$0xf]
    %v3039 = vld [vmem:[%s2 + $0x148] sm:$0xf]
    %v3040 = vld [vmem:[%s2 + $0x14c] sm:$0xf]
    %v3041 = vld [vmem:[%s2 + $0x150] sm:$0xf]
    %v3042 = vld [vmem:[%s2 + $0x154] sm:$0xf]
    %v3043 = vld [vmem:[%s2 + $0x158] sm:$0xf]
    %v3044 = vld [vmem:[%s2 + $0x15c] sm:$0xf]
    %v3045 = vld [vmem:[%s2 + $0x160] sm:$0xf]
    %v3046 = vld [vmem:[%s2 + $0x164] sm:$0xf]
    %v3047 = vld [vmem:[%s2 + $0x168] sm:$0xf]
    %v3048 = vld [vmem:[%s2 + $0x16c] sm:$0xf]
    %v3049 = vld [vmem:[%s2 + $0x170] sm:$0xf]
    %v3050 = vld [vmem:[%s2 + $0x174] sm:$0xf]
    %v3051 = vld [vmem:[%s2 + $0x178] sm:$0xf]
    %v3052 = vld [vmem:[%s2 + $0x17c] sm:$0xf]
    %v3054 = vunpack.c.l.b16 %v3036
    %v3055 = vpack.c.b16 %v2375, %v3054
    %vm3056 = vcmask 1045504
    %v3057 = vrot.slane %v3055, 2
    %v3058 = vrot.slane %v2402, 2
    %v3059 = vsel %vm3056, %v3057, %v3058
    %v3060 = vrot.slane %v2403, 2
    %v3061 = vsel %vm3056, %v3058, %v3060
    %v3062 = vrot.slane %v2404, 2
    %v3063 = vsel %vm3056, %v3060, %v3062
    %v3064 = vrot.slane %v2405, 2
    %v3065 = vsel %vm3056, %v3062, %v3064
    %v3066 = vrot.slane %v2406, 2
    %v3067 = vsel %vm3056, %v3064, %v3066
    %v3068 = vrot.slane %v2407, 2
    %v3069 = vsel %vm3056, %v3066, %v3068
    %v3070 = vrot.slane %v2408, 2
    %v3071 = vsel %vm3056, %v3068, %v3070
    %v3072 = vrot.slane %v2409, 2
    %v3073 = vsel %vm3056, %v3070, %v3072
    %v3074 = vrot.slane %v2410, 2
    %v3075 = vsel %vm3056, %v3072, %v3074
    %v3076 = vrot.slane %v2411, 2
    %v3077 = vsel %vm3056, %v3074, %v3076
    %v3078 = vrot.slane %v2412, 2
    %v3079 = vsel %vm3056, %v3076, %v3078
    %v3080 = vrot.slane %v2413, 2
    %v3081 = vsel %vm3056, %v3078, %v3080
    %v3082 = vrot.slane %v2685, 2
    %v3083 = vsel %vm3056, %v3080, %v3082
    %v3113 = vunpack.c.l.b16 %v3037
    %v3114 = vunpack.c.l.b16 %v3038
    %v3115 = vunpack.c.l.b16 %v3039
    %v3116 = vunpack.c.l.b16 %v3040
    %v3117 = vunpack.c.l.b16 %v3041
    %v3118 = vunpack.c.l.b16 %v3042
    %v3119 = vunpack.c.l.b16 %v3043
    %v3120 = vunpack.c.l.b16 %v3044
    %v3121 = vunpack.c.l.b16 %v3045
    %v3122 = vunpack.c.l.b16 %v3046
    %v3123 = vunpack.c.l.b16 %v3047
    %v3124 = vunpack.c.l.b16 %v3048
    %v3125 = vunpack.c.l.b16 %v3049
    %v3126 = vunpack.c.l.b16 %v3050
    %v3127 = vunpack.c.l.b16 %v3051
    %v3128 = vunpack.c.l.b16 %v3052
    %v3129 = vpack.c.b16 %v3114, %v3113
    %v3130 = vpack.c.b16 %v3116, %v3115
    %v3131 = vpack.c.b16 %v3118, %v3117
    %v3132 = vpack.c.b16 %v3120, %v3119
    %v3133 = vpack.c.b16 %v3122, %v3121
    %v3134 = vpack.c.b16 %v3124, %v3123
    %v3135 = vpack.c.b16 %v3126, %v3125
    %v3136 = vpack.c.b16 %v3128, %v3127
    %3145 = vmatprep.subr.bf16.mxu0 0
    %3146 = vmatpush1.bf16.msra.mxu0 %v3129
    %3147 = vmatprep.subr.bf16.mxu0 0
    %3148 = vmatpush1.bf16.msra.mxu0 %v3130
    %3149 = vmatprep.subr.bf16.mxu0 0
    %3150 = vmatpush1.bf16.msra.mxu0 %v3131
    %3151 = vmatprep.subr.bf16.mxu0 0
    %3152 = vmatpush1.bf16.msra.mxu0 %v3132
    %3153 = vmatprep.subr.bf16.mxu0 0
    %3154 = vmatpush1.bf16.msra.mxu0 %v3133
    %3155 = vmatprep.subr.bf16.mxu0 0
    %3156 = vmatpush1.bf16.msra.mxu0 %v3134
    %3157 = vmatprep.subr.bf16.mxu0 0
    %3158 = vmatpush1.bf16.msra.mxu0 %v3135
    %3159 = vmatprep.subr.bf16.mxu0 0
    %3160 = vmatpush1.bf16.msra.mxu0 %v3136
    %3161 = vmatprep.subr.bf16.mxu0 0
    %3162 = vmatpush1.bf16.msra.mxu0 0
    %3163 = vmatprep.subr.bf16.mxu0 0
    %3164 = vmatpush1.bf16.msra.mxu0 0
    %3165 = vmatprep.subr.bf16.mxu0 0
    %3166 = vmatpush1.bf16.msra.mxu0 0
    %3167 = vmatprep.subr.bf16.mxu0 0
    %3168 = vmatpush1.bf16.msra.mxu0 0
    %3169 = vmatprep.subr.bf16.mxu0 0
    %3170 = vmatpush1.bf16.msra.mxu0 0
    %3171 = vmatprep.subr.bf16.mxu0 0
    %3172 = vmatpush1.bf16.msra.mxu0 0
    %3173 = vmatprep.subr.bf16.mxu0 0
    %3174 = vmatpush1.bf16.msra.mxu0 0
    %3175 = vmatprep.subr.bf16.mxu0 0
    %3176 = vmatpush1.bf16.msra.mxu0 0
    %3177 = vmatprep.mubr.bf16.mxu0 0
    %3178 = vmatmul.mubr.bf16.gmra.mrb[0].mxu0 %v3059
    %v3179 = vpop.f32.mrb[0].mxu0
    %v3180 = vadd.f32 0.0, %v3179
    %v3181 = vpop.f32.mrb[0].mxu0
    %v3182 = vpop.f32.mrb[0].mxu0
    %v3183 = vadd.f32 0.0, %v3182
    %v3184 = vpop.f32.mrb[0].mxu0
    %3185 = vmatprep.mubr.bf16.mxu0 0
    %3186 = vmatmul.mubr.bf16.gmra.mrb[0].mxu0 %v3061
    %v3187 = vpop.f32.mrb[0].mxu0
    %v3188 = vadd.f32 0.0, %v3187
    %v3189 = vpop.f32.mrb[0].mxu0
    %v3190 = vpop.f32.mrb[0].mxu0
    %v3191 = vadd.f32 0.0, %v3190
    %v3192 = vpop.f32.mrb[0].mxu0
    %3193 = vmatprep.mubr.bf16.mxu0 0
    %3194 = vmatmul.mubr.bf16.gmra.mrb[0].mxu0 %v3063
    %v3195 = vpop.f32.mrb[0].mxu0
    %v3196 = vadd.f32 0.0, %v3195
    %v3197 = vpop.f32.mrb[0].mxu0
    %v3198 = vpop.f32.mrb[0].mxu0
    %v3199 = vadd.f32 0.0, %v3198
    %v3200 = vpop.f32.mrb[0].mxu0
    %3201 = vmatprep.mubr.bf16.mxu0 0
    %3202 = vmatmul.mubr.bf16.gmra.mrb[0].mxu0 %v3065
    %v3203 = vpop.f32.mrb[0].mxu0
    %v3204 = vadd.f32 0.0, %v3203
    %v3205 = vpop.f32.mrb[0].mxu0
    %v3206 = vpop.f32.mrb[0].mxu0
    %v3207 = vadd.f32 0.0, %v3206
    %v3208 = vpop.f32.mrb[0].mxu0
    %3209 = vmatprep.mubr.bf16.mxu0 0
    %3210 = vmatmul.mubr.bf16.gmra.mrb[0].mxu0 %v3067
    %v3211 = vpop.f32.mrb[0].mxu0
    %v3212 = vadd.f32 0.0, %v3211
    %v3213 = vpop.f32.mrb[0].mxu0
    %v3214 = vpop.f32.mrb[0].mxu0
    %v3215 = vadd.f32 0.0, %v3214
    %v3216 = vpop.f32.mrb[0].mxu0
    %3217 = vmatprep.mubr.bf16.mxu0 0
    %3218 = vmatmul.mubr.bf16.gmra.mrb[0].mxu0 %v3069
    %v3219 = vpop.f32.mrb[0].mxu0
    %v3220 = vadd.f32 0.0, %v3219
    %v3221 = vpop.f32.mrb[0].mxu0
    %v3222 = vpop.f32.mrb[0].mxu0
    %v3223 = vadd.f32 0.0, %v3222
    %v3224 = vpop.f32.mrb[0].mxu0
    %3225 = vmatprep.mubr.bf16.mxu0 0
    %3226 = vmatmul.mubr.bf16.gmra.mrb[0].mxu0 %v3071
    %v3227 = vpop.f32.mrb[0].mxu0
    %v3228 = vadd.f32 0.0, %v3227
    %v3229 = vpop.f32.mrb[0].mxu0
    %v3230 = vpop.f32.mrb[0].mxu0
    %v3231 = vadd.f32 0.0, %v3230
    %v3232 = vpop.f32.mrb[0].mxu0
    %3233 = vmatprep.mubr.bf16.mxu0 0
    %3234 = vmatmul.mubr.bf16.gmra.mrb[0].mxu0 %v3073
    %v3235 = vpop.f32.mrb[0].mxu0
    %v3236 = vadd.f32 0.0, %v3235
    %v3237 = vpop.f32.mrb[0].mxu0
    %v3238 = vpop.f32.mrb[0].mxu0
    %v3239 = vadd.f32 0.0, %v3238
    %v3240 = vpop.f32.mrb[0].mxu0
    %3241 = vmatprep.mubr.bf16.mxu0 0
    %3242 = vmatmul.mubr.bf16.gmra.mrb[0].mxu0 %v3075
    %v3243 = vpop.f32.mrb[0].mxu0
    %v3244 = vadd.f32 0.0, %v3243
    %v3245 = vpop.f32.mrb[0].mxu0
    %v3246 = vpop.f32.mrb[0].mxu0
    %v3247 = vadd.f32 0.0, %v3246
    %v3248 = vpop.f32.mrb[0].mxu0
    %3249 = vmatprep.mubr.bf16.mxu0 0
    %3250 = vmatmul.mubr.bf16.gmra.mrb[0].mxu0 %v3077
    %v3251 = vpop.f32.mrb[0].mxu0
    %v3252 = vadd.f32 0.0, %v3251
    %v3253 = vpop.f32.mrb[0].mxu0
    %v3254 = vpop.f32.mrb[0].mxu0
    %v3255 = vadd.f32 0.0, %v3254
    %v3256 = vpop.f32.mrb[0].mxu0
    %3257 = vmatprep.mubr.bf16.mxu0 0
    %3258 = vmatmul.mubr.bf16.gmra.mrb[0].mxu0 %v3079
    %v3259 = vpop.f32.mrb[0].mxu0
    %v3260 = vadd.f32 0.0, %v3259
    %v3261 = vpop.f32.mrb[0].mxu0
    %v3262 = vpop.f32.mrb[0].mxu0
    %v3263 = vadd.f32 0.0, %v3262
    %v3264 = vpop.f32.mrb[0].mxu0
    %3265 = vmatprep.mubr.bf16.mxu0 0
    %3266 = vmatmul.mubr.bf16.gmra.mrb[0].mxu0 %v3081
    %v3267 = vpop.f32.mrb[0].mxu0
    %v3268 = vadd.f32 0.0, %v3267
    %v3269 = vpop.f32.mrb[0].mxu0
    %v3270 = vpop.f32.mrb[0].mxu0
    %v3271 = vadd.f32 0.0, %v3270
    %v3272 = vpop.f32.mrb[0].mxu0
    %3273 = vmatprep.mubr.bf16.mxu0 0
    %3274 = vmatmul.mubr.bf16.gmra.mrb[0].mxu0 %v3083
    %v3275 = vpop.f32.mrb[0].mxu0
    %v3276 = vadd.f32 0.0, %v3275
    %v3277 = vpop.f32.mrb[0].mxu0
    %v3278 = vpop.f32.mrb[0].mxu0
    %v3279 = vadd.f32 0.0, %v3278
    %v3280 = vpop.f32.mrb[0].mxu0
    %3281 = vdwg.mxu0
    %v3282 = vadd.f32 %v3010, %v3180
    %v3283 = vadd.f32 %v3011, %v3183
    %v3284 = vadd.f32 %v3012, %v3188
    %v3285 = vadd.f32 %v3013, %v3191
    %v3286 = vadd.f32 %v3014, %v3196
    %v3287 = vadd.f32 %v3015, %v3199
    %v3288 = vadd.f32 %v3016, %v3204
    %v3289 = vadd.f32 %v3017, %v3207
    %v3290 = vadd.f32 %v3018, %v3212
    %v3291 = vadd.f32 %v3019, %v3215
    %v3292 = vadd.f32 %v3020, %v3220
    %v3293 = vadd.f32 %v3021, %v3223
    %v3294 = vadd.f32 %v3022, %v3228
    %v3295 = vadd.f32 %v3023, %v3231
    %v3296 = vadd.f32 %v3024, %v3236
    %v3297 = vadd.f32 %v3025, %v3239
    %v3298 = vadd.f32 %v3026, %v3244
    %v3299 = vadd.f32 %v3027, %v3247
    %v3300 = vadd.f32 %v3028, %v3252
    %v3301 = vadd.f32 %v3029, %v3255
    %v3302 = vadd.f32 %v3030, %v3260
    %v3303 = vadd.f32 %v3031, %v3263
    %v3304 = vadd.f32 %v3032, %v3268
    %v3305 = vadd.f32 %v3033, %v3271
    %v3306 = vadd.f32 %v3034, %v3276
    %v3307 = vadd.f32 %v3035, %v3279
    %v3308 = vld [vmem:[#allocation2 + $0x8] sm:$0xc]
    %v3309 = vld [vmem:[#allocation2 + $0xc] sm:$0xf]
    %v3310 = vld [vmem:[#allocation2 + $0x10] sm:$0xf]
    %v3311 = vld [vmem:[#allocation2 + $0x14] sm:$0xf]
    %v3312 = vld [vmem:[#allocation2 + $0x18] sm:$0xf]
    %v3313 = vld [vmem:[#allocation2 + $0x1c] sm:$0xf]
    %v3314 = vld [vmem:[#allocation2 + $0x20] sm:$0xf]
    %v3315 = vld [vmem:[#allocation2 + $0x24] sm:$0xf]
    %v3316 = vld [vmem:[#allocation2 + $0x28] sm:$0xf]
    %v3317 = vld [vmem:[#allocation2 + $0x2c] sm:$0xf]
    %v3318 = vld [vmem:[#allocation2 + $0x30] sm:$0xf]
    %v3319 = vld [vmem:[#allocation2 + $0x34] sm:$0xf]
    %v3320 = vld [vmem:[#allocation2 + $0x38] sm:$0xf]
    %v3321 = vld [vmem:[#allocation2 + $0x3c] sm:$0xf]
    %v3322 = vld [vmem:[#allocation2 + $0x40] sm:$0xf]
    %v3323 = vld [vmem:[#allocation2 + $0x44] sm:$0xf]
    %v3324 = vld [vmem:[#allocation2 + $0x48] sm:$0xf]
    %v3325 = vld [vmem:[#allocation2 + $0x4c] sm:$0xf]
    %v3326 = vld [vmem:[#allocation2 + $0x50] sm:$0xf]
    %v3327 = vld [vmem:[#allocation2 + $0x54] sm:$0xf]
    %v3328 = vld [vmem:[#allocation2 + $0x58] sm:$0xf]
    %v3329 = vld [vmem:[#allocation2 + $0x5c] sm:$0xf]
    %v3330 = vld [vmem:[#allocation2 + $0x60] sm:$0xf]
    %v3331 = vld [vmem:[#allocation2 + $0x64] sm:$0xf]
    %v3332 = vld [vmem:[#allocation2 + $0x68] sm:$0xf]
    %v3333 = vld [vmem:[#allocation2 + $0x6c] sm:$0xf]
    %v3334 = vld [vmem:[#allocation2 + $0x70] sm:$0x3]
    %v3335 = vld [vmem:[%s2 + $0x180] sm:$0xf]
    %v3336 = vld [vmem:[%s2 + $0x184] sm:$0xf]
    %v3337 = vld [vmem:[%s2 + $0x188] sm:$0xf]
    %v3338 = vld [vmem:[%s2 + $0x18c] sm:$0xf]
    %v3339 = vld [vmem:[%s2 + $0x190] sm:$0xf]
    %v3340 = vld [vmem:[%s2 + $0x194] sm:$0xf]
    %v3341 = vld [vmem:[%s2 + $0x198] sm:$0xf]
    %v3342 = vld [vmem:[%s2 + $0x19c] sm:$0xf]
    %v3343 = vld [vmem:[%s2 + $0x1a0] sm:$0xf]
    %v3344 = vld [vmem:[%s2 + $0x1a4] sm:$0xf]
    %v3345 = vld [vmem:[%s2 + $0x1a8] sm:$0xf]
    %v3346 = vld [vmem:[%s2 + $0x1ac] sm:$0xf]
    %v3347 = vld [vmem:[%s2 + $0x1b0] sm:$0xf]
    %v3348 = vld [vmem:[%s2 + $0x1b4] sm:$0xf]
    %v3349 = vld [vmem:[%s2 + $0x1b8] sm:$0xf]
    %v3350 = vld [vmem:[%s2 + $0x1bc] sm:$0xf]
    %v3378 = vunpack.c.l.b16 %v3308
    %v3379 = vunpack.c.l.b16 %v3309
    %v3380 = vunpack.c.l.b16 %v3310
    %v3381 = vunpack.c.l.b16 %v3311
    %v3382 = vunpack.c.l.b16 %v3312
    %v3383 = vunpack.c.l.b16 %v3313
    %v3384 = vunpack.c.l.b16 %v3314
    %v3385 = vunpack.c.l.b16 %v3315
    %v3386 = vunpack.c.l.b16 %v3316
    %v3387 = vunpack.c.l.b16 %v3317
    %v3388 = vunpack.c.l.b16 %v3318
    %v3389 = vunpack.c.l.b16 %v3319
    %v3390 = vunpack.c.l.b16 %v3320
    %v3391 = vunpack.c.l.b16 %v3321
    %v3392 = vunpack.c.l.b16 %v3322
    %v3393 = vunpack.c.l.b16 %v3323
    %v3394 = vunpack.c.l.b16 %v3324
    %v3395 = vunpack.c.l.b16 %v3325
    %v3396 = vunpack.c.l.b16 %v3326
    %v3397 = vunpack.c.l.b16 %v3327
    %v3398 = vunpack.c.l.b16 %v3328
    %v3399 = vunpack.c.l.b16 %v3329
    %v3400 = vunpack.c.l.b16 %v3330
    %v3401 = vunpack.c.l.b16 %v3331
    %v3402 = vunpack.c.l.b16 %v3332
    %v3403 = vunpack.c.l.b16 %v3333
    %v3404 = vunpack.c.l.b16 %v3334
    %v3405 = vpack.c.b16 %v3379, %v3378
    %v3406 = vpack.c.b16 %v3381, %v3380
    %v3407 = vpack.c.b16 %v3383, %v3382
    %v3408 = vpack.c.b16 %v3385, %v3384
    %v3409 = vpack.c.b16 %v3387, %v3386
    %v3410 = vpack.c.b16 %v3389, %v3388
    %v3411 = vpack.c.b16 %v3391, %v3390
    %v3412 = vpack.c.b16 %v3393, %v3392
    %v3413 = vpack.c.b16 %v3395, %v3394
    %v3414 = vpack.c.b16 %v3397, %v3396
    %v3415 = vpack.c.b16 %v3399, %v3398
    %v3416 = vpack.c.b16 %v3401, %v3400
    %v3417 = vpack.c.b16 %v3403, %v3402
    %v3418 = vpack.c.b16 %v3404, %v3404
    %v3419 = vrot.slane %v3405, 2
    %v3420 = vrot.slane %v3406, 2
    %v3421 = vsel %vm3056, %v3419, %v3420
    %v3422 = vrot.slane %v3407, 2
    %v3423 = vsel %vm3056, %v3420, %v3422
    %v3424 = vrot.slane %v3408, 2
    %v3425 = vsel %vm3056, %v3422, %v3424
    %v3426 = vrot.slane %v3409, 2
    %v3427 = vsel %vm3056, %v3424, %v3426
    %v3428 = vrot.slane %v3410, 2
    %v3429 = vsel %vm3056, %v3426, %v3428
    %v3430 = vrot.slane %v3411, 2
    %v3431 = vsel %vm3056, %v3428, %v3430
    %v3432 = vrot.slane %v3412, 2
    %v3433 = vsel %vm3056, %v3430, %v3432
    %v3434 = vrot.slane %v3413, 2
    %v3435 = vsel %vm3056, %v3432, %v3434
    %v3436 = vrot.slane %v3414, 2
    %v3437 = vsel %vm3056, %v3434, %v3436
    %v3438 = vrot.slane %v3415, 2
    %v3439 = vsel %vm3056, %v3436, %v3438
    %v3440 = vrot.slane %v3416, 2
    %v3441 = vsel %vm3056, %v3438, %v3440
    %v3442 = vrot.slane %v3417, 2
    %v3443 = vsel %vm3056, %v3440, %v3442
    %v3444 = vrot.slane %v3418, 2
    %v3445 = vsel %vm3056, %v3442, %v3444
    %v3475 = vunpack.c.l.b16 %v3335
    %v3476 = vunpack.c.l.b16 %v3336
    %v3477 = vunpack.c.l.b16 %v3337
    %v3478 = vunpack.c.l.b16 %v3338
    %v3479 = vunpack.c.l.b16 %v3339
    %v3480 = vunpack.c.l.b16 %v3340
    %v3481 = vunpack.c.l.b16 %v3341
    %v3482 = vunpack.c.l.b16 %v3342
    %v3483 = vunpack.c.l.b16 %v3343
    %v3484 = vunpack.c.l.b16 %v3344
    %v3485 = vunpack.c.l.b16 %v3345
    %v3486 = vunpack.c.l.b16 %v3346
    %v3487 = vunpack.c.l.b16 %v3347
    %v3488 = vunpack.c.l.b16 %v3348
    %v3489 = vunpack.c.l.b16 %v3349
    %v3490 = vunpack.c.l.b16 %v3350
    %v3491 = vpack.c.b16 %v3476, %v3475
    %v3492 = vpack.c.b16 %v3478, %v3477
    %v3493 = vpack.c.b16 %v3480, %v3479
    %v3494 = vpack.c.b16 %v3482, %v3481
    %v3495 = vpack.c.b16 %v3484, %v3483
    %v3496 = vpack.c.b16 %v3486, %v3485
    %v3497 = vpack.c.b16 %v3488, %v3487
    %v3498 = vpack.c.b16 %v3490, %v3489
    %3507 = vmatprep.subr.bf16.mxu0 0
    %3508 = vmatpush1.bf16.msra.mxu0 %v3491
    %3509 = vmatprep.subr.bf16.mxu0 0
    %3510 = vmatpush1.bf16.msra.mxu0 %v3492
    %3511 = vmatprep.subr.bf16.mxu0 0
    %3512 = vmatpush1.bf16.msra.mxu0 %v3493
    %3513 = vmatprep.subr.bf16.mxu0 0
    %3514 = vmatpush1.bf16.msra.mxu0 %v3494
    %3515 = vmatprep.subr.bf16.mxu0 0
    %3516 = vmatpush1.bf16.msra.mxu0 %v3495
    %3517 = vmatprep.subr.bf16.mxu0 0
    %3518 = vmatpush1.bf16.msra.mxu0 %v3496
    %3519 = vmatprep.subr.bf16.mxu0 0
    %3520 = vmatpush1.bf16.msra.mxu0 %v3497
    %3521 = vmatprep.subr.bf16.mxu0 0
    %3522 = vmatpush1.bf16.msra.mxu0 %v3498
    %3523 = vmatprep.subr.bf16.mxu0 0
    %3524 = vmatpush1.bf16.msra.mxu0 0
    %3525 = vmatprep.subr.bf16.mxu0 0
    %3526 = vmatpush1.bf16.msra.mxu0 0
    %3527 = vmatprep.subr.bf16.mxu0 0
    %3528 = vmatpush1.bf16.msra.mxu0 0
    %3529 = vmatprep.subr.bf16.mxu0 0
    %3530 = vmatpush1.bf16.msra.mxu0 0
    %3531 = vmatprep.subr.bf16.mxu0 0
    %3532 = vmatpush1.bf16.msra.mxu0 0
    %3533 = vmatprep.subr.bf16.mxu0 0
    %3534 = vmatpush1.bf16.msra.mxu0 0
    %3535 = vmatprep.subr.bf16.mxu0 0
    %3536 = vmatpush1.bf16.msra.mxu0 0
    %3537 = vmatprep.subr.bf16.mxu0 0
    %3538 = vmatpush1.bf16.msra.mxu0 0
    %3539 = vmatprep.mubr.bf16.mxu0 0
    %3540 = vmatmul.mubr.bf16.gmra.mrb[0].mxu0 %v3421
    %v3541 = vpop.f32.mrb[0].mxu0
    %v3542 = vadd.f32 0.0, %v3541
    %v3543 = vpop.f32.mrb[0].mxu0
    %v3544 = vpop.f32.mrb[0].mxu0
    %v3545 = vadd.f32 0.0, %v3544
    %v3546 = vpop.f32.mrb[0].mxu0
    %3547 = vmatprep.mubr.bf16.mxu0 0
    %3548 = vmatmul.mubr.bf16.gmra.mrb[0].mxu0 %v3423
    %v3549 = vpop.f32.mrb[0].mxu0
    %v3550 = vadd.f32 0.0, %v3549
    %v3551 = vpop.f32.mrb[0].mxu0
    %v3552 = vpop.f32.mrb[0].mxu0
    %v3553 = vadd.f32 0.0, %v3552
    %v3554 = vpop.f32.mrb[0].mxu0
    %3555 = vmatprep.mubr.bf16.mxu0 0
    %3556 = vmatmul.mubr.bf16.gmra.mrb[0].mxu0 %v3425
    %v3557 = vpop.f32.mrb[0].mxu0
    %v3558 = vadd.f32 0.0, %v3557
    %v3559 = vpop.f32.mrb[0].mxu0
    %v3560 = vpop.f32.mrb[0].mxu0
    %v3561 = vadd.f32 0.0, %v3560
    %v3562 = vpop.f32.mrb[0].mxu0
    %3563 = vmatprep.mubr.bf16.mxu0 0
    %3564 = vmatmul.mubr.bf16.gmra.mrb[0].mxu0 %v3427
    %v3565 = vpop.f32.mrb[0].mxu0
    %v3566 = vadd.f32 0.0, %v3565
    %v3567 = vpop.f32.mrb[0].mxu0
    %v3568 = vpop.f32.mrb[0].mxu0
    %v3569 = vadd.f32 0.0, %v3568
    %v3570 = vpop.f32.mrb[0].mxu0
    %3571 = vmatprep.mubr.bf16.mxu0 0
    %3572 = vmatmul.mubr.bf16.gmra.mrb[0].mxu0 %v3429
    %v3573 = vpop.f32.mrb[0].mxu0
    %v3574 = vadd.f32 0.0, %v3573
    %v3575 = vpop.f32.mrb[0].mxu0
    %v3576 = vpop.f32.mrb[0].mxu0
    %v3577 = vadd.f32 0.0, %v3576
    %v3578 = vpop.f32.mrb[0].mxu0
    %3579 = vmatprep.mubr.bf16.mxu0 0
    %3580 = vmatmul.mubr.bf16.gmra.mrb[0].mxu0 %v3431
    %v3581 = vpop.f32.mrb[0].mxu0
    %v3582 = vadd.f32 0.0, %v3581
    %v3583 = vpop.f32.mrb[0].mxu0
    %v3584 = vpop.f32.mrb[0].mxu0
    %v3585 = vadd.f32 0.0, %v3584
    %v3586 = vpop.f32.mrb[0].mxu0
    %3587 = vmatprep.mubr.bf16.mxu0 0
    %3588 = vmatmul.mubr.bf16.gmra.mrb[0].mxu0 %v3433
    %v3589 = vpop.f32.mrb[0].mxu0
    %v3590 = vadd.f32 0.0, %v3589
    %v3591 = vpop.f32.mrb[0].mxu0
    %v3592 = vpop.f32.mrb[0].mxu0
    %v3593 = vadd.f32 0.0, %v3592
    %v3594 = vpop.f32.mrb[0].mxu0
    %3595 = vmatprep.mubr.bf16.mxu0 0
    %3596 = vmatmul.mubr.bf16.gmra.mrb[0].mxu0 %v3435
    %v3597 = vpop.f32.mrb[0].mxu0
    %v3598 = vadd.f32 0.0, %v3597
    %v3599 = vpop.f32.mrb[0].mxu0
    %v3600 = vpop.f32.mrb[0].mxu0
    %v3601 = vadd.f32 0.0, %v3600
    %v3602 = vpop.f32.mrb[0].mxu0
    %3603 = vmatprep.mubr.bf16.mxu0 0
    %3604 = vmatmul.mubr.bf16.gmra.mrb[0].mxu0 %v3437
    %v3605 = vpop.f32.mrb[0].mxu0
    %v3606 = vadd.f32 0.0, %v3605
    %v3607 = vpop.f32.mrb[0].mxu0
    %v3608 = vpop.f32.mrb[0].mxu0
    %v3609 = vadd.f32 0.0, %v3608
    %v3610 = vpop.f32.mrb[0].mxu0
    %3611 = vmatprep.mubr.bf16.mxu0 0
    %3612 = vmatmul.mubr.bf16.gmra.mrb[0].mxu0 %v3439
    %v3613 = vpop.f32.mrb[0].mxu0
    %v3614 = vadd.f32 0.0, %v3613
    %v3615 = vpop.f32.mrb[0].mxu0
    %v3616 = vpop.f32.mrb[0].mxu0
    %v3617 = vadd.f32 0.0, %v3616
    %v3618 = vpop.f32.mrb[0].mxu0
    %3619 = vmatprep.mubr.bf16.mxu0 0
    %3620 = vmatmul.mubr.bf16.gmra.mrb[0].mxu0 %v3441
    %v3621 = vpop.f32.mrb[0].mxu0
    %v3622 = vadd.f32 0.0, %v3621
    %v3623 = vpop.f32.mrb[0].mxu0
    %v3624 = vpop.f32.mrb[0].mxu0
    %v3625 = vadd.f32 0.0, %v3624
    %v3626 = vpop.f32.mrb[0].mxu0
    %3627 = vmatprep.mubr.bf16.mxu0 0
    %3628 = vmatmul.mubr.bf16.gmra.mrb[0].mxu0 %v3443
    %v3629 = vpop.f32.mrb[0].mxu0
    %v3630 = vadd.f32 0.0, %v3629
    %v3631 = vpop.f32.mrb[0].mxu0
    %v3632 = vpop.f32.mrb[0].mxu0
    %v3633 = vadd.f32 0.0, %v3632
    %v3634 = vpop.f32.mrb[0].mxu0
    %3635 = vmatprep.mubr.bf16.mxu0 0
    %3636 = vmatmul.mubr.bf16.gmra.mrb[0].mxu0 %v3445
    %v3637 = vpop.f32.mrb[0].mxu0
    %v3638 = vadd.f32 0.0, %v3637
    %v3639 = vpop.f32.mrb[0].mxu0
    %v3640 = vpop.f32.mrb[0].mxu0
    %v3641 = vadd.f32 0.0, %v3640
    %v3642 = vpop.f32.mrb[0].mxu0
    %3643 = vdwg.mxu0
    %v3644 = vadd.f32 %v3282, %v3542
    %v3645 = vadd.f32 %v3283, %v3545
    %v3646 = vadd.f32 %v3284, %v3550
    %v3647 = vadd.f32 %v3285, %v3553
    %v3648 = vadd.f32 %v3286, %v3558
    %v3649 = vadd.f32 %v3287, %v3561
    %v3650 = vadd.f32 %v3288, %v3566
    %v3651 = vadd.f32 %v3289, %v3569
    %v3652 = vadd.f32 %v3290, %v3574
    %v3653 = vadd.f32 %v3291, %v3577
    %v3654 = vadd.f32 %v3292, %v3582
    %v3655 = vadd.f32 %v3293, %v3585
    %v3656 = vadd.f32 %v3294, %v3590
    %v3657 = vadd.f32 %v3295, %v3593
    %v3658 = vadd.f32 %v3296, %v3598
    %v3659 = vadd.f32 %v3297, %v3601
    %v3660 = vadd.f32 %v3298, %v3606
    %v3661 = vadd.f32 %v3299, %v3609
    %v3662 = vadd.f32 %v3300, %v3614
    %v3663 = vadd.f32 %v3301, %v3617
    %v3664 = vadd.f32 %v3302, %v3622
    %v3665 = vadd.f32 %v3303, %v3625
    %v3666 = vadd.f32 %v3304, %v3630
    %v3667 = vadd.f32 %v3305, %v3633
    %v3668 = vadd.f32 %v3306, %v3638
    %v3669 = vadd.f32 %v3307, %v3641
    %v3670 = vld [vmem:[#allocation2 + $0x70] sm:$0x7]
    %v3671 = vld [vmem:[%s2 + $0x1c0] sm:$0xf]
    %v3672 = vld [vmem:[%s2 + $0x1c4] sm:$0xf]
    %v3673 = vld [vmem:[%s2 + $0x1c8] sm:$0xf]
    %v3674 = vld [vmem:[%s2 + $0x1cc] sm:$0xf]
    %v3675 = vld [vmem:[%s2 + $0x1d0] sm:$0xf]
    %v3676 = vld [vmem:[%s2 + $0x1d4] sm:$0xf]
    %v3677 = vld [vmem:[%s2 + $0x1d8] sm:$0xf]
    %v3678 = vld [vmem:[%s2 + $0x1dc] sm:$0xf]
    %v3679 = vld [vmem:[%s2 + $0x1e0] sm:$0xf]
    %v3680 = vld [vmem:[%s2 + $0x1e4] sm:$0xf]
    %v3681 = vld [vmem:[%s2 + $0x1e8] sm:$0xf]
    %v3682 = vld [vmem:[%s2 + $0x1ec] sm:$0xf]
    %v3683 = vld [vmem:[%s2 + $0x1f0] sm:$0xf]
    %v3684 = vld [vmem:[%s2 + $0x1f4] sm:$0xf]
    %v3685 = vld [vmem:[%s2 + $0x1f8] sm:$0xf]
    %v3686 = vld [vmem:[%s2 + $0x1fc] sm:$0xf]
    %v3688 = vunpack.c.l.b16 %v3670
    %v3689 = vpack.c.b16 %v3688, %v3688
    %vm3690 = vsmask.f32 5376
    %v3692 = vshrl.u32 %v3405, 16
    %v3694 = vrot.slane %v3692, 2
    %v3695 = vshll.u32 %v3405, 16
    %v3697 = vrot.slane %v3695, 3
    %v3698 = vor.u32 %v3694, %v3697
    %v3700 = vshrl.u32 %v3406, 16
    %v3702 = vrot.slane %v3700, 2
    %v3703 = vshll.u32 %v3406, 16
    %v3705 = vrot.slane %v3703, 3
    %v3706 = vor.u32 %v3702, %v3705
    %v3707 = vsel %vm3690, %v3698, %v3706
    %v3709 = vshrl.u32 %v3407, 16
    %v3711 = vrot.slane %v3709, 2
    %v3712 = vshll.u32 %v3407, 16
    %v3714 = vrot.slane %v3712, 3
    %v3715 = vor.u32 %v3711, %v3714
    %v3716 = vsel %vm3690, %v3706, %v3715
    %v3718 = vshrl.u32 %v3408, 16
    %v3720 = vrot.slane %v3718, 2
    %v3721 = vshll.u32 %v3408, 16
    %v3723 = vrot.slane %v3721, 3
    %v3724 = vor.u32 %v3720, %v3723
    %v3725 = vsel %vm3690, %v3715, %v3724
    %v3727 = vshrl.u32 %v3409, 16
    %v3729 = vrot.slane %v3727, 2
    %v3730 = vshll.u32 %v3409, 16
    %v3732 = vrot.slane %v3730, 3
    %v3733 = vor.u32 %v3729, %v3732
    %v3734 = vsel %vm3690, %v3724, %v3733
    %v3736 = vshrl.u32 %v3410, 16
    %v3738 = vrot.slane %v3736, 2
    %v3739 = vshll.u32 %v3410, 16
    %v3741 = vrot.slane %v3739, 3
    %v3742 = vor.u32 %v3738, %v3741
    %v3743 = vsel %vm3690, %v3733, %v3742
    %v3745 = vshrl.u32 %v3411, 16
    %v3747 = vrot.slane %v3745, 2
    %v3748 = vshll.u32 %v3411, 16
    %v3750 = vrot.slane %v3748, 3
    %v3751 = vor.u32 %v3747, %v3750
    %v3752 = vsel %vm3690, %v3742, %v3751
    %v3754 = vshrl.u32 %v3412, 16
    %v3756 = vrot.slane %v3754, 2
    %v3757 = vshll.u32 %v3412, 16
    %v3759 = vrot.slane %v3757, 3
    %v3760 = vor.u32 %v3756, %v3759
    %v3761 = vsel %vm3690, %v3751, %v3760
    %v3763 = vshrl.u32 %v3413, 16
    %v3765 = vrot.slane %v3763, 2
    %v3766 = vshll.u32 %v3413, 16
    %v3768 = vrot.slane %v3766, 3
    %v3769 = vor.u32 %v3765, %v3768
    %v3770 = vsel %vm3690, %v3760, %v3769
    %v3772 = vshrl.u32 %v3414, 16
    %v3774 = vrot.slane %v3772, 2
    %v3775 = vshll.u32 %v3414, 16
    %v3777 = vrot.slane %v3775, 3
    %v3778 = vor.u32 %v3774, %v3777
    %v3779 = vsel %vm3690, %v3769, %v3778
    %v3781 = vshrl.u32 %v3415, 16
    %v3783 = vrot.slane %v3781, 2
    %v3784 = vshll.u32 %v3415, 16
    %v3786 = vrot.slane %v3784, 3
    %v3787 = vor.u32 %v3783, %v3786
    %v3788 = vsel %vm3690, %v3778, %v3787
    %v3790 = vshrl.u32 %v3416, 16
    %v3792 = vrot.slane %v3790, 2
    %v3793 = vshll.u32 %v3416, 16
    %v3795 = vrot.slane %v3793, 3
    %v3796 = vor.u32 %v3792, %v3795
    %v3797 = vsel %vm3690, %v3787, %v3796
    %v3799 = vshrl.u32 %v3417, 16
    %v3801 = vrot.slane %v3799, 2
    %v3802 = vshll.u32 %v3417, 16
    %v3804 = vrot.slane %v3802, 3
    %v3805 = vor.u32 %v3801, %v3804
    %v3806 = vsel %vm3690, %v3796, %v3805
    %v3808 = vshrl.u32 %v3689, 16
    %v3810 = vrot.slane %v3808, 2
    %v3811 = vshll.u32 %v3689, 16
    %v3813 = vrot.slane %v3811, 3
    %v3814 = vor.u32 %v3810, %v3813
    %v3815 = vsel %vm3690, %v3805, %v3814
    %v3845 = vunpack.c.l.b16 %v3671
    %v3846 = vunpack.c.l.b16 %v3672
    %v3847 = vunpack.c.l.b16 %v3673
    %v3848 = vunpack.c.l.b16 %v3674
    %v3849 = vunpack.c.l.b16 %v3675
    %v3850 = vunpack.c.l.b16 %v3676
    %v3851 = vunpack.c.l.b16 %v3677
    %v3852 = vunpack.c.l.b16 %v3678
    %v3853 = vunpack.c.l.b16 %v3679
    %v3854 = vunpack.c.l.b16 %v3680
    %v3855 = vunpack.c.l.b16 %v3681
    %v3856 = vunpack.c.l.b16 %v3682
    %v3857 = vunpack.c.l.b16 %v3683
    %v3858 = vunpack.c.l.b16 %v3684
    %v3859 = vunpack.c.l.b16 %v3685
    %v3860 = vunpack.c.l.b16 %v3686
    %v3861 = vpack.c.b16 %v3846, %v3845
    %v3862 = vpack.c.b16 %v3848, %v3847
    %v3863 = vpack.c.b16 %v3850, %v3849
    %v3864 = vpack.c.b16 %v3852, %v3851
    %v3865 = vpack.c.b16 %v3854, %v3853
    %v3866 = vpack.c.b16 %v3856, %v3855
    %v3867 = vpack.c.b16 %v3858, %v3857
    %v3868 = vpack.c.b16 %v3860, %v3859
    %3877 = vmatprep.subr.bf16.mxu0 0
    %3878 = vmatpush1.bf16.msra.mxu0 %v3861
    %3879 = vmatprep.subr.bf16.mxu0 0
    %3880 = vmatpush1.bf16.msra.mxu0 %v3862
    %3881 = vmatprep.subr.bf16.mxu0 0
    %3882 = vmatpush1.bf16.msra.mxu0 %v3863
    %3883 = vmatprep.subr.bf16.mxu0 0
    %3884 = vmatpush1.bf16.msra.mxu0 %v3864
    %3885 = vmatprep.subr.bf16.mxu0 0
    %3886 = vmatpush1.bf16.msra.mxu0 %v3865
    %3887 = vmatprep.subr.bf16.mxu0 0
    %3888 = vmatpush1.bf16.msra.mxu0 %v3866
    %3889 = vmatprep.subr.bf16.mxu0 0
    %3890 = vmatpush1.bf16.msra.mxu0 %v3867
    %3891 = vmatprep.subr.bf16.mxu0 0
    %3892 = vmatpush1.bf16.msra.mxu0 %v3868
    %3893 = vmatprep.subr.bf16.mxu0 0
    %3894 = vmatpush1.bf16.msra.mxu0 0
    %3895 = vmatprep.subr.bf16.mxu0 0
    %3896 = vmatpush1.bf16.msra.mxu0 0
    %3897 = vmatprep.subr.bf16.mxu0 0
    %3898 = vmatpush1.bf16.msra.mxu0 0
    %3899 = vmatprep.subr.bf16.mxu0 0
    %3900 = vmatpush1.bf16.msra.mxu0 0
    %3901 = vmatprep.subr.bf16.mxu0 0
    %3902 = vmatpush1.bf16.msra.mxu0 0
    %3903 = vmatprep.subr.bf16.mxu0 0
    %3904 = vmatpush1.bf16.msra.mxu0 0
    %3905 = vmatprep.subr.bf16.mxu0 0
    %3906 = vmatpush1.bf16.msra.mxu0 0
    %3907 = vmatprep.subr.bf16.mxu0 0
    %3908 = vmatpush1.bf16.msra.mxu0 0
    %3909 = vmatprep.mubr.bf16.mxu0 0
    %3910 = vmatmul.mubr.bf16.gmra.mrb[0].mxu0 %v3707
    %v3911 = vpop.f32.mrb[0].mxu0
    %v3912 = vadd.f32 0.0, %v3911
    %v3913 = vpop.f32.mrb[0].mxu0
    %v3914 = vpop.f32.mrb[0].mxu0
    %v3915 = vadd.f32 0.0, %v3914
    %v3916 = vpop.f32.mrb[0].mxu0
    %3917 = vmatprep.mubr.bf16.mxu0 0
    %3918 = vmatmul.mubr.bf16.gmra.mrb[0].mxu0 %v3716
    %v3919 = vpop.f32.mrb[0].mxu0
    %v3920 = vadd.f32 0.0, %v3919
    %v3921 = vpop.f32.mrb[0].mxu0
    %v3922 = vpop.f32.mrb[0].mxu0
    %v3923 = vadd.f32 0.0, %v3922
    %v3924 = vpop.f32.mrb[0].mxu0
    %3925 = vmatprep.mubr.bf16.mxu0 0
    %3926 = vmatmul.mubr.bf16.gmra.mrb[0].mxu0 %v3725
    %v3927 = vpop.f32.mrb[0].mxu0
    %v3928 = vadd.f32 0.0, %v3927
    %v3929 = vpop.f32.mrb[0].mxu0
    %v3930 = vpop.f32.mrb[0].mxu0
    %v3931 = vadd.f32 0.0, %v3930
    %v3932 = vpop.f32.mrb[0].mxu0
    %3933 = vmatprep.mubr.bf16.mxu0 0
    %3934 = vmatmul.mubr.bf16.gmra.mrb[0].mxu0 %v3734
    %v3935 = vpop.f32.mrb[0].mxu0
    %v3936 = vadd.f32 0.0, %v3935
    %v3937 = vpop.f32.mrb[0].mxu0
    %v3938 = vpop.f32.mrb[0].mxu0
    %v3939 = vadd.f32 0.0, %v3938
    %v3940 = vpop.f32.mrb[0].mxu0
    %3941 = vmatprep.mubr.bf16.mxu0 0
    %3942 = vmatmul.mubr.bf16.gmra.mrb[0].mxu0 %v3743
    %v3943 = vpop.f32.mrb[0].mxu0
    %v3944 = vadd.f32 0.0, %v3943
    %v3945 = vpop.f32.mrb[0].mxu0
    %v3946 = vpop.f32.mrb[0].mxu0
    %v3947 = vadd.f32 0.0, %v3946
    %v3948 = vpop.f32.mrb[0].mxu0
    %3949 = vmatprep.mubr.bf16.mxu0 0
    %3950 = vmatmul.mubr.bf16.gmra.mrb[0].mxu0 %v3752
    %v3951 = vpop.f32.mrb[0].mxu0
    %v3952 = vadd.f32 0.0, %v3951
    %v3953 = vpop.f32.mrb[0].mxu0
    %v3954 = vpop.f32.mrb[0].mxu0
    %v3955 = vadd.f32 0.0, %v3954
    %v3956 = vpop.f32.mrb[0].mxu0
    %3957 = vmatprep.mubr.bf16.mxu0 0
    %3958 = vmatmul.mubr.bf16.gmra.mrb[0].mxu0 %v3761
    %v3959 = vpop.f32.mrb[0].mxu0
    %v3960 = vadd.f32 0.0, %v3959
    %v3961 = vpop.f32.mrb[0].mxu0
    %v3962 = vpop.f32.mrb[0].mxu0
    %v3963 = vadd.f32 0.0, %v3962
    %v3964 = vpop.f32.mrb[0].mxu0
    %3965 = vmatprep.mubr.bf16.mxu0 0
    %3966 = vmatmul.mubr.bf16.gmra.mrb[0].mxu0 %v3770
    %v3967 = vpop.f32.mrb[0].mxu0
    %v3968 = vadd.f32 0.0, %v3967
    %v3969 = vpop.f32.mrb[0].mxu0
    %v3970 = vpop.f32.mrb[0].mxu0
    %v3971 = vadd.f32 0.0, %v3970
    %v3972 = vpop.f32.mrb[0].mxu0
    %3973 = vmatprep.mubr.bf16.mxu0 0
    %3974 = vmatmul.mubr.bf16.gmra.mrb[0].mxu0 %v3779
    %v3975 = vpop.f32.mrb[0].mxu0
    %v3976 = vadd.f32 0.0, %v3975
    %v3977 = vpop.f32.mrb[0].mxu0
    %v3978 = vpop.f32.mrb[0].mxu0
    %v3979 = vadd.f32 0.0, %v3978
    %v3980 = vpop.f32.mrb[0].mxu0
    %3981 = vmatprep.mubr.bf16.mxu0 0
    %3982 = vmatmul.mubr.bf16.gmra.mrb[0].mxu0 %v3788
    %v3983 = vpop.f32.mrb[0].mxu0
    %v3984 = vadd.f32 0.0, %v3983
    %v3985 = vpop.f32.mrb[0].mxu0
    %v3986 = vpop.f32.mrb[0].mxu0
    %v3987 = vadd.f32 0.0, %v3986
    %v3988 = vpop.f32.mrb[0].mxu0
    %3989 = vmatprep.mubr.bf16.mxu0 0
    %3990 = vmatmul.mubr.bf16.gmra.mrb[0].mxu0 %v3797
    %v3991 = vpop.f32.mrb[0].mxu0
    %v3992 = vadd.f32 0.0, %v3991
    %v3993 = vpop.f32.mrb[0].mxu0
    %v3994 = vpop.f32.mrb[0].mxu0
    %v3995 = vadd.f32 0.0, %v3994
    %v3996 = vpop.f32.mrb[0].mxu0
    %3997 = vmatprep.mubr.bf16.mxu0 0
    %3998 = vmatmul.mubr.bf16.gmra.mrb[0].mxu0 %v3806
    %v3999 = vpop.f32.mrb[0].mxu0
    %v4000 = vadd.f32 0.0, %v3999
    %v4001 = vpop.f32.mrb[0].mxu0
    %v4002 = vpop.f32.mrb[0].mxu0
    %v4003 = vadd.f32 0.0, %v4002
    %v4004 = vpop.f32.mrb[0].mxu0
    %4005 = vmatprep.mubr.bf16.mxu0 0
    %4006 = vmatmul.mubr.bf16.gmra.mrb[0].mxu0 %v3815
    %v4007 = vpop.f32.mrb[0].mxu0
    %v4008 = vadd.f32 0.0, %v4007
    %v4009 = vpop.f32.mrb[0].mxu0
    %v4010 = vpop.f32.mrb[0].mxu0
    %v4011 = vadd.f32 0.0, %v4010
    %v4012 = vpop.f32.mrb[0].mxu0
    %4013 = vdwg.mxu0
    %v4014 = vadd.f32 %v3644, %v3912
    %v4015 = vadd.f32 %v3645, %v3915
    %v4016 = vadd.f32 %v3646, %v3920
    %v4017 = vadd.f32 %v3647, %v3923
    %v4018 = vadd.f32 %v3648, %v3928
    %v4019 = vadd.f32 %v3649, %v3931
    %v4020 = vadd.f32 %v3650, %v3936
    %v4021 = vadd.f32 %v3651, %v3939
    %v4022 = vadd.f32 %v3652, %v3944
    %v4023 = vadd.f32 %v3653, %v3947
    %v4024 = vadd.f32 %v3654, %v3952
    %v4025 = vadd.f32 %v3655, %v3955
    %v4026 = vadd.f32 %v3656, %v3960
    %v4027 = vadd.f32 %v3657, %v3963
    %v4028 = vadd.f32 %v3658, %v3968
    %v4029 = vadd.f32 %v3659, %v3971
    %v4030 = vadd.f32 %v3660, %v3976
    %v4031 = vadd.f32 %v3661, %v3979
    %v4032 = vadd.f32 %v3662, %v3984
    %v4033 = vadd.f32 %v3663, %v3987
    %v4034 = vadd.f32 %v3664, %v3992
    %v4035 = vadd.f32 %v3665, %v3995
    %v4036 = vadd.f32 %v3666, %v4000
    %v4037 = vadd.f32 %v3667, %v4003
    %v4038 = vadd.f32 %v3668, %v4008
    %v4039 = vadd.f32 %v3669, %v4011
    %v4040 = vld [vmem:[#allocation2 + $0x8] sm:$0x8]
    %v4041 = vld [vmem:[%s2 + $0x200] sm:$0xf]
    %v4042 = vld [vmem:[%s2 + $0x204] sm:$0xf]
    %v4043 = vld [vmem:[%s2 + $0x208] sm:$0xf]
    %v4044 = vld [vmem:[%s2 + $0x20c] sm:$0xf]
    %v4045 = vld [vmem:[%s2 + $0x210] sm:$0xf]
    %v4046 = vld [vmem:[%s2 + $0x214] sm:$0xf]
    %v4047 = vld [vmem:[%s2 + $0x218] sm:$0xf]
    %v4048 = vld [vmem:[%s2 + $0x21c] sm:$0xf]
    %v4049 = vld [vmem:[%s2 + $0x220] sm:$0xf]
    %v4050 = vld [vmem:[%s2 + $0x224] sm:$0xf]
    %v4051 = vld [vmem:[%s2 + $0x228] sm:$0xf]
    %v4052 = vld [vmem:[%s2 + $0x22c] sm:$0xf]
    %v4053 = vld [vmem:[%s2 + $0x230] sm:$0xf]
    %v4054 = vld [vmem:[%s2 + $0x234] sm:$0xf]
    %v4055 = vld [vmem:[%s2 + $0x238] sm:$0xf]
    %v4056 = vld [vmem:[%s2 + $0x23c] sm:$0xf]
    %v4058 = vunpack.c.l.b16 %v4040
    %v4059 = vpack.c.b16 %v3379, %v4058
    %vm4060 = vcmask 1044480
    %v4061 = vrot.slane %v4059, 3
    %v4062 = vrot.slane %v3406, 3
    %v4063 = vsel %vm4060, %v4061, %v4062
    %v4064 = vrot.slane %v3407, 3
    %v4065 = vsel %vm4060, %v4062, %v4064
    %v4066 = vrot.slane %v3408, 3
    %v4067 = vsel %vm4060, %v4064, %v4066
    %v4068 = vrot.slane %v3409, 3
    %v4069 = vsel %vm4060, %v4066, %v4068
    %v4070 = vrot.slane %v3410, 3
    %v4071 = vsel %vm4060, %v4068, %v4070
    %v4072 = vrot.slane %v3411, 3
    %v4073 = vsel %vm4060, %v4070, %v4072
    %v4074 = vrot.slane %v3412, 3
    %v4075 = vsel %vm4060, %v4072, %v4074
    %v4076 = vrot.slane %v3413, 3
    %v4077 = vsel %vm4060, %v4074, %v4076
    %v4078 = vrot.slane %v3414, 3
    %v4079 = vsel %vm4060, %v4076, %v4078
    %v4080 = vrot.slane %v3415, 3
    %v4081 = vsel %vm4060, %v4078, %v4080
    %v4082 = vrot.slane %v3416, 3
    %v4083 = vsel %vm4060, %v4080, %v4082
    %v4084 = vrot.slane %v3417, 3
    %v4085 = vsel %vm4060, %v4082, %v4084
    %v4086 = vrot.slane %v3689, 3
    %v4087 = vsel %vm4060, %v4084, %v4086
    %v4117 = vunpack.c.l.b16 %v4041
    %v4118 = vunpack.c.l.b16 %v4042
    %v4119 = vunpack.c.l.b16 %v4043
    %v4120 = vunpack.c.l.b16 %v4044
    %v4121 = vunpack.c.l.b16 %v4045
    %v4122 = vunpack.c.l.b16 %v4046
    %v4123 = vunpack.c.l.b16 %v4047
    %v4124 = vunpack.c.l.b16 %v4048
    %v4125 = vunpack.c.l.b16 %v4049
    %v4126 = vunpack.c.l.b16 %v4050
    %v4127 = vunpack.c.l.b16 %v4051
    %v4128 = vunpack.c.l.b16 %v4052
    %v4129 = vunpack.c.l.b16 %v4053
    %v4130 = vunpack.c.l.b16 %v4054
    %v4131 = vunpack.c.l.b16 %v4055
    %v4132 = vunpack.c.l.b16 %v4056
    %v4133 = vpack.c.b16 %v4118, %v4117
    %v4134 = vpack.c.b16 %v4120, %v4119
    %v4135 = vpack.c.b16 %v4122, %v4121
    %v4136 = vpack.c.b16 %v4124, %v4123
    %v4137 = vpack.c.b16 %v4126, %v4125
    %v4138 = vpack.c.b16 %v4128, %v4127
    %v4139 = vpack.c.b16 %v4130, %v4129
    %v4140 = vpack.c.b16 %v4132, %v4131
    %4149 = vmatprep.subr.bf16.mxu0 0
    %4150 = vmatpush1.bf16.msra.mxu0 %v4133
    %4151 = vmatprep.subr.bf16.mxu0 0
    %4152 = vmatpush1.bf16.msra.mxu0 %v4134
    %4153 = vmatprep.subr.bf16.mxu0 0
    %4154 = vmatpush1.bf16.msra.mxu0 %v4135
    %4155 = vmatprep.subr.bf16.mxu0 0
    %4156 = vmatpush1.bf16.msra.mxu0 %v4136
    %4157 = vmatprep.subr.bf16.mxu0 0
    %4158 = vmatpush1.bf16.msra.mxu0 %v4137
    %4159 = vmatprep.subr.bf16.mxu0 0
    %4160 = vmatpush1.bf16.msra.mxu0 %v4138
    %4161 = vmatprep.subr.bf16.mxu0 0
    %4162 = vmatpush1.bf16.msra.mxu0 %v4139
    %4163 = vmatprep.subr.bf16.mxu0 0
    %4164 = vmatpush1.bf16.msra.mxu0 %v4140
    %4165 = vmatprep.subr.bf16.mxu0 0
    %4166 = vmatpush1.bf16.msra.mxu0 0
    %4167 = vmatprep.subr.bf16.mxu0 0
    %4168 = vmatpush1.bf16.msra.mxu0 0
    %4169 = vmatprep.subr.bf16.mxu0 0
    %4170 = vmatpush1.bf16.msra.mxu0 0
    %4171 = vmatprep.subr.bf16.mxu0 0
    %4172 = vmatpush1.bf16.msra.mxu0 0
    %4173 = vmatprep.subr.bf16.mxu0 0
    %4174 = vmatpush1.bf16.msra.mxu0 0
    %4175 = vmatprep.subr.bf16.mxu0 0
    %4176 = vmatpush1.bf16.msra.mxu0 0
    %4177 = vmatprep.subr.bf16.mxu0 0
    %4178 = vmatpush1.bf16.msra.mxu0 0
    %4179 = vmatprep.subr.bf16.mxu0 0
    %4180 = vmatpush1.bf16.msra.mxu0 0
    %4181 = vmatprep.mubr.bf16.mxu0 0
    %4182 = vmatmul.mubr.bf16.gmra.mrb[0].mxu0 %v4063
    %v4183 = vpop.f32.mrb[0].mxu0
    %v4184 = vadd.f32 0.0, %v4183
    %v4185 = vpop.f32.mrb[0].mxu0
    %v4186 = vpop.f32.mrb[0].mxu0
    %v4187 = vadd.f32 0.0, %v4186
    %v4188 = vpop.f32.mrb[0].mxu0
    %4189 = vmatprep.mubr.bf16.mxu0 0
    %4190 = vmatmul.mubr.bf16.gmra.mrb[0].mxu0 %v4065
    %v4191 = vpop.f32.mrb[0].mxu0
    %v4192 = vadd.f32 0.0, %v4191
    %v4193 = vpop.f32.mrb[0].mxu0
    %v4194 = vpop.f32.mrb[0].mxu0
    %v4195 = vadd.f32 0.0, %v4194
    %v4196 = vpop.f32.mrb[0].mxu0
    %4197 = vmatprep.mubr.bf16.mxu0 0
    %4198 = vmatmul.mubr.bf16.gmra.mrb[0].mxu0 %v4067
    %v4199 = vpop.f32.mrb[0].mxu0
    %v4200 = vadd.f32 0.0, %v4199
    %v4201 = vpop.f32.mrb[0].mxu0
    %v4202 = vpop.f32.mrb[0].mxu0
    %v4203 = vadd.f32 0.0, %v4202
    %v4204 = vpop.f32.mrb[0].mxu0
    %4205 = vmatprep.mubr.bf16.mxu0 0
    %4206 = vmatmul.mubr.bf16.gmra.mrb[0].mxu0 %v4069
    %v4207 = vpop.f32.mrb[0].mxu0
    %v4208 = vadd.f32 0.0, %v4207
    %v4209 = vpop.f32.mrb[0].mxu0
    %v4210 = vpop.f32.mrb[0].mxu0
    %v4211 = vadd.f32 0.0, %v4210
    %v4212 = vpop.f32.mrb[0].mxu0
    %4213 = vmatprep.mubr.bf16.mxu0 0
    %4214 = vmatmul.mubr.bf16.gmra.mrb[0].mxu0 %v4071
    %v4215 = vpop.f32.mrb[0].mxu0
    %v4216 = vadd.f32 0.0, %v4215
    %v4217 = vpop.f32.mrb[0].mxu0
    %v4218 = vpop.f32.mrb[0].mxu0
    %v4219 = vadd.f32 0.0, %v4218
    %v4220 = vpop.f32.mrb[0].mxu0
    %4221 = vmatprep.mubr.bf16.mxu0 0
    %4222 = vmatmul.mubr.bf16.gmra.mrb[0].mxu0 %v4073
    %v4223 = vpop.f32.mrb[0].mxu0
    %v4224 = vadd.f32 0.0, %v4223
    %v4225 = vpop.f32.mrb[0].mxu0
    %v4226 = vpop.f32.mrb[0].mxu0
    %v4227 = vadd.f32 0.0, %v4226
    %v4228 = vpop.f32.mrb[0].mxu0
    %4229 = vmatprep.mubr.bf16.mxu0 0
    %4230 = vmatmul.mubr.bf16.gmra.mrb[0].mxu0 %v4075
    %v4231 = vpop.f32.mrb[0].mxu0
    %v4232 = vadd.f32 0.0, %v4231
    %v4233 = vpop.f32.mrb[0].mxu0
    %v4234 = vpop.f32.mrb[0].mxu0
    %v4235 = vadd.f32 0.0, %v4234
    %v4236 = vpop.f32.mrb[0].mxu0
    %4237 = vmatprep.mubr.bf16.mxu0 0
    %4238 = vmatmul.mubr.bf16.gmra.mrb[0].mxu0 %v4077
    %v4239 = vpop.f32.mrb[0].mxu0
    %v4240 = vadd.f32 0.0, %v4239
    %v4241 = vpop.f32.mrb[0].mxu0
    %v4242 = vpop.f32.mrb[0].mxu0
    %v4243 = vadd.f32 0.0, %v4242
    %v4244 = vpop.f32.mrb[0].mxu0
    %4245 = vmatprep.mubr.bf16.mxu0 0
    %4246 = vmatmul.mubr.bf16.gmra.mrb[0].mxu0 %v4079
    %v4247 = vpop.f32.mrb[0].mxu0
    %v4248 = vadd.f32 0.0, %v4247
    %v4249 = vpop.f32.mrb[0].mxu0
    %v4250 = vpop.f32.mrb[0].mxu0
    %v4251 = vadd.f32 0.0, %v4250
    %v4252 = vpop.f32.mrb[0].mxu0
    %4253 = vmatprep.mubr.bf16.mxu0 0
    %4254 = vmatmul.mubr.bf16.gmra.mrb[0].mxu0 %v4081
    %v4255 = vpop.f32.mrb[0].mxu0
    %v4256 = vadd.f32 0.0, %v4255
    %v4257 = vpop.f32.mrb[0].mxu0
    %v4258 = vpop.f32.mrb[0].mxu0
    %v4259 = vadd.f32 0.0, %v4258
    %v4260 = vpop.f32.mrb[0].mxu0
    %4261 = vmatprep.mubr.bf16.mxu0 0
    %4262 = vmatmul.mubr.bf16.gmra.mrb[0].mxu0 %v4083
    %v4263 = vpop.f32.mrb[0].mxu0
    %v4264 = vadd.f32 0.0, %v4263
    %v4265 = vpop.f32.mrb[0].mxu0
    %v4266 = vpop.f32.mrb[0].mxu0
    %v4267 = vadd.f32 0.0, %v4266
    %v4268 = vpop.f32.mrb[0].mxu0
    %4269 = vmatprep.mubr.bf16.mxu0 0
    %4270 = vmatmul.mubr.bf16.gmra.mrb[0].mxu0 %v4085
    %v4271 = vpop.f32.mrb[0].mxu0
    %v4272 = vadd.f32 0.0, %v4271
    %v4273 = vpop.f32.mrb[0].mxu0
    %v4274 = vpop.f32.mrb[0].mxu0
    %v4275 = vadd.f32 0.0, %v4274
    %v4276 = vpop.f32.mrb[0].mxu0
    %4277 = vmatprep.mubr.bf16.mxu0 0
    %4278 = vmatmul.mubr.bf16.gmra.mrb[0].mxu0 %v4087
    %v4279 = vpop.f32.mrb[0].mxu0
    %v4280 = vadd.f32 0.0, %v4279
    %v4281 = vpop.f32.mrb[0].mxu0
    %v4282 = vpop.f32.mrb[0].mxu0
    %v4283 = vadd.f32 0.0, %v4282
    %v4284 = vpop.f32.mrb[0].mxu0
    %4285 = vdwg.mxu0
    %v4286 = vadd.f32 %v4014, %v4184
    %v4287 = vadd.f32 %v4015, %v4187
    %v4288 = vadd.f32 %v4016, %v4192
    %v4289 = vadd.f32 %v4017, %v4195
    %v4290 = vadd.f32 %v4018, %v4200
    %v4291 = vadd.f32 %v4019, %v4203
    %v4292 = vadd.f32 %v4020, %v4208
    %v4293 = vadd.f32 %v4021, %v4211
    %v4294 = vadd.f32 %v4022, %v4216
    %v4295 = vadd.f32 %v4023, %v4219
    %v4296 = vadd.f32 %v4024, %v4224
    %v4297 = vadd.f32 %v4025, %v4227
    %v4298 = vadd.f32 %v4026, %v4232
    %v4299 = vadd.f32 %v4027, %v4235
    %v4300 = vadd.f32 %v4028, %v4240
    %v4301 = vadd.f32 %v4029, %v4243
    %v4302 = vadd.f32 %v4030, %v4248
    %v4303 = vadd.f32 %v4031, %v4251
    %v4304 = vadd.f32 %v4032, %v4256
    %v4305 = vadd.f32 %v4033, %v4259
    %v4306 = vadd.f32 %v4034, %v4264
    %v4307 = vadd.f32 %v4035, %v4267
    %v4308 = vadd.f32 %v4036, %v4272
    %v4309 = vadd.f32 %v4037, %v4275
    %v4310 = vadd.f32 %v4038, %v4280
    %v4311 = vadd.f32 %v4039, %v4283
    %4312 = vst [vmem:[#allocation5] sm:$0xff] %v4286
    %4313 = vst [vmem:[#allocation5 + $0x8] sm:$0xff] %v4287
    %4314 = vst [vmem:[#allocation5 + $0x10] sm:$0xff] %v4288
    %4315 = vst [vmem:[#allocation5 + $0x18] sm:$0xff] %v4289
    %4316 = vst [vmem:[#allocation5 + $0x20] sm:$0xff] %v4290
    %4317 = vst [vmem:[#allocation5 + $0x28] sm:$0xff] %v4291
    %4318 = vst [vmem:[#allocation5 + $0x30] sm:$0xff] %v4292
    %4319 = vst [vmem:[#allocation5 + $0x38] sm:$0xff] %v4293
    %4320 = vst [vmem:[#allocation5 + $0x40] sm:$0xff] %v4294
    %4321 = vst [vmem:[#allocation5 + $0x48] sm:$0xff] %v4295
    %4322 = vst [vmem:[#allocation5 + $0x50] sm:$0xff] %v4296
    %4323 = vst [vmem:[#allocation5 + $0x58] sm:$0xff] %v4297
    %4324 = vst [vmem:[#allocation5 + $0x60] sm:$0xff] %v4298
    %4325 = vst [vmem:[#allocation5 + $0x68] sm:$0xff] %v4299
    %4326 = vst [vmem:[#allocation5 + $0x70] sm:$0xff] %v4300
    %4327 = vst [vmem:[#allocation5 + $0x78] sm:$0xff] %v4301
    %4328 = vst [vmem:[#allocation5 + $0x80] sm:$0xff] %v4302
    %4329 = vst [vmem:[#allocation5 + $0x88] sm:$0xff] %v4303
    %4330 = vst [vmem:[#allocation5 + $0x90] sm:$0xff] %v4304
    %4331 = vst [vmem:[#allocation5 + $0x98] sm:$0xff] %v4305
    %4332 = vst [vmem:[#allocation5 + $0xa0] sm:$0xff] %v4306
    %4333 = vst [vmem:[#allocation5 + $0xa8] sm:$0xff] %v4307
    %4334 = vst [vmem:[#allocation5 + $0xb0] sm:$0xff] %v4308
    %4335 = vst [vmem:[#allocation5 + $0xb8] sm:$0xff] %v4309
    %4336 = vst [vmem:[#allocation5 + $0xc0] sm:$0xff] %v4310
    %4337 = vst [vmem:[#allocation5 + $0xc8] sm:$0xff] %v4311
    %v4338 = vld [vmem:[%s5 + $0x1] sm:$0x1]
    %v4339 = vlaneseq
    %v4340 = vshrl.u32 %v4339, 7
    %v4341 = vsub.s32 0, %v4340
    %v4342 = vrot.slane %v4338, %v4341
    %v4343 = vld [vmem:[#allocation5] ss:$2 sm:$0xf]
    %v4344 = vld [vmem:[%s839] ss:$2 sm:$0xf]
    %v4345 = vmax.f32 %v4343, %v4344
    %s4346 = scalar_lea.vmem [#allocation5], 10
    %v4347 = vld [vmem:[%s4346] ss:$2 sm:$0xf]
    %s4348 = scalar_lea.vmem [#allocation5], 11
    %v4349 = vld [vmem:[%s4348] ss:$2 sm:$0xf]
    %v4350 = vmax.f32 %v4347, %v4349
    %v4351 = vmax.f32 %v4345, %v4350
    %v4352 = vadd.f32 %v4351, %v4342
    %v4353 = vmax.f32 %v4352, 0.0
    %v4354 = vpack.c.bf16 %v4353, %v4353
    %v4356 = vshrl.u32 %v4354, 16
    %v4358 = vrot.slane %v4356, 4
    %v4359 = vshll.u32 %v4354, 16
    %v4361 = vrot.slane %v4359, 5
    %v4362 = vor.u32 %v4358, %v4361
    %vm4364 = vcmask 1045507
    %vm4365 = vsmask.f32 5390
    %vm4366 = vmand %vm4364, %vm4365
    %v4367 = vld [vmem:[#allocation3] sm:$0x38]
    %v4368 = vsel %vm4366, %v4362, %v4367
    %4369 = vst [vmem:[#allocation3] sm:$0x38] %v4368
    %s4370 = scalar_lea.vmem [#allocation5], 20
    %v4371 = vld [vmem:[%s4370] ss:$2 sm:$0xf]
    %s4372 = scalar_lea.vmem [#allocation5], 21
    %v4373 = vld [vmem:[%s4372] ss:$2 sm:$0xf]
    %v4374 = vmax.f32 %v4371, %v4373
    %s4375 = scalar_lea.vmem [#allocation5], 30
    %v4376 = vld [vmem:[%s4375] ss:$2 sm:$0xf]
    %s4377 = scalar_lea.vmem [#allocation5], 31
    %v4378 = vld [vmem:[%s4377] ss:$2 sm:$0xf]
    %v4379 = vmax.f32 %v4376, %v4378
    %v4380 = vmax.f32 %v4374, %v4379
    %v4381 = vadd.f32 %v4380, %v4342
    %v4382 = vmax.f32 %v4381, 0.0
    %v4383 = vpack.c.bf16 %v4382, %v4382
    %v4385 = vshrl.u32 %v4383, 16
    %v4387 = vrot.slane %v4385, 1
    %v4388 = vshll.u32 %v4383, 16
    %v4390 = vrot.slane %v4388, 2
    %v4391 = vor.u32 %v4387, %v4390
    %vm4394 = vcmask 1047558
    %vm4395 = vsmask.f32 7962
    %vm4396 = vmand %vm4394, %vm4395
    %v4397 = vld [vmem:[#allocation3] sm:$0xc0]
    %v4398 = vsel %vm4396, %v4391, %v4397
    %4399 = vst [vmem:[#allocation3] sm:$0xc0] %v4398
    %v4400 = vld [vmem:[#allocation3 + $0x8] sm:$0x1]
    %v4401 = vsel %vm991, %v4387, %v4400
    %4402 = vst [vmem:[#allocation3 + $0x8] sm:$0x1] %v4401
    %s4403 = scalar_lea.vmem [#allocation5], 40
    %v4404 = vld [vmem:[%s4403] ss:$2 sm:$0xf]
    %s4405 = scalar_lea.vmem [#allocation5], 41
    %v4406 = vld [vmem:[%s4405] ss:$2 sm:$0xf]
    %v4407 = vmax.f32 %v4404, %v4406
    %s4408 = scalar_lea.vmem [#allocation5], 50
    %v4409 = vld [vmem:[%s4408] ss:$2 sm:$0xf]
    %s4410 = scalar_lea.vmem [#allocation5], 51
    %v4411 = vld [vmem:[%s4410] ss:$2 sm:$0xf]
    %v4412 = vmax.f32 %v4409, %v4411
    %v4413 = vmax.f32 %v4407, %v4412
    %v4414 = vadd.f32 %v4413, %v4342
    %v4415 = vmax.f32 %v4414, 0.0
    %v4416 = vpack.c.bf16 %v4415, %v4415
    %v4418 = vshrl.u32 %v4416, 16
    %v4420 = vrot.slane %v4418, 6
    %v4421 = vshll.u32 %v4416, 16
    %v4423 = vrot.slane %v4421, 7
    %v4424 = vor.u32 %v4420, %v4423
    %vm4426 = vsmask.f32 3334
    %vm4427 = vmand %vm865, %vm4426
    %v4428 = vld [vmem:[#allocation3 + $0x8] sm:$0xe]
    %v4429 = vsel %vm4427, %v4424, %v4428
    %4430 = vst [vmem:[#allocation3 + $0x8] sm:$0xe] %v4429
    %s4431 = scalar_lea.vmem [#allocation5], 60
    %v4432 = vld [vmem:[%s4431] ss:$2 sm:$0xf]
    %s4433 = scalar_lea.vmem [#allocation5], 61
    %v4434 = vld [vmem:[%s4433] ss:$2 sm:$0xf]
    %v4435 = vmax.f32 %v4432, %v4434
    %s4436 = scalar_lea.vmem [#allocation5], 70
    %v4437 = vld [vmem:[%s4436] ss:$2 sm:$0xf]
    %s4438 = scalar_lea.vmem [#allocation5], 71
    %v4439 = vld [vmem:[%s4438] ss:$2 sm:$0xf]
    %v4440 = vmax.f32 %v4437, %v4439
    %v4441 = vmax.f32 %v4435, %v4440
    %v4442 = vadd.f32 %v4441, %v4342
    %v4443 = vmax.f32 %v4442, 0.0
    %v4444 = vpack.c.bf16 %v4443, %v4443
    %v4446 = vshrl.u32 %v4444, 16
    %v4448 = vrot.slane %v4446, 3
    %v4449 = vshll.u32 %v4444, 16
    %v4451 = vrot.slane %v4449, 4
    %v4452 = vor.u32 %v4448, %v4451
    %vm4454 = vcmask 1046532
    %vm4455 = vsmask.f32 6418
    %vm4456 = vmand %vm4454, %vm4455
    %v4457 = vld [vmem:[#allocation3 + $0x8] sm:$0x70]
    %v4458 = vsel %vm4456, %v4452, %v4457
    %4459 = vst [vmem:[#allocation3 + $0x8] sm:$0x70] %v4458
    %s4460 = scalar_lea.vmem [#allocation5], 104
    %v4461 = vld [vmem:[%s4460] ss:$2 sm:$0xf]
    %s4462 = scalar_lea.vmem [#allocation5], 105
    %v4463 = vld [vmem:[%s4462] ss:$2 sm:$0xf]
    %v4464 = vmax.f32 %v4461, %v4463
    %s4465 = scalar_lea.vmem [#allocation5], 114
    %v4466 = vld [vmem:[%s4465] ss:$2 sm:$0xf]
    %s4467 = scalar_lea.vmem [#allocation5], 115
    %v4468 = vld [vmem:[%s4467] ss:$2 sm:$0xf]
    %v4469 = vmax.f32 %v4466, %v4468
    %v4470 = vmax.f32 %v4464, %v4469
    %v4471 = vadd.f32 %v4470, %v4342
    %v4472 = vmax.f32 %v4471, 0.0
    %v4473 = vpack.c.bf16 %v4472, %v4472
    %v4475 = vshll.u32 %v4473, 16
    %v4477 = vrot.slane %v4475, 1
    %v4478 = vshrl.u32 %v4473, 16
    %v4480 = vor.u32 %v4478, %v4477
    %vm4483 = vcmask 1047559
    %vm4484 = vsmask.f32 7966
    %vm4485 = vmand %vm4483, %vm4484
    %v4486 = vld [vmem:[#allocation3 + $0x10] sm:$0x80]
    %v4487 = vsel %vm4485, %v4477, %v4486
    %4488 = vst [vmem:[#allocation3 + $0x10] sm:$0x80] %v4487
    %v4489 = vld [vmem:[#allocation3 + $0x18] sm:$0x3]
    %v4490 = vsel %vm873, %v4480, %v4489
    %4491 = vst [vmem:[#allocation3 + $0x18] sm:$0x3] %v4490
    %s4492 = scalar_lea.vmem [#allocation5], 124
    %v4493 = vld [vmem:[%s4492] ss:$2 sm:$0xf]
    %s4494 = scalar_lea.vmem [#allocation5], 125
    %v4495 = vld [vmem:[%s4494] ss:$2 sm:$0xf]
    %v4496 = vmax.f32 %v4493, %v4495
    %s4497 = scalar_lea.vmem [#allocation5], 134
    %v4498 = vld [vmem:[%s4497] ss:$2 sm:$0xf]
    %s4499 = scalar_lea.vmem [#allocation5], 135
    %v4500 = vld [vmem:[%s4499] ss:$2 sm:$0xf]
    %v4501 = vmax.f32 %v4498, %v4500
    %v4502 = vmax.f32 %v4496, %v4501
    %v4503 = vadd.f32 %v4502, %v4342
    %v4504 = vmax.f32 %v4503, 0.0
    %v4505 = vpack.c.bf16 %v4504, %v4504
    %v4507 = vshrl.u32 %v4505, 16
    %v4509 = vrot.slane %v4507, 5
    %v4510 = vshll.u32 %v4505, 16
    %v4512 = vrot.slane %v4510, 6
    %v4513 = vor.u32 %v4509, %v4512
    %vm4515 = vcmask 1044482
    %vm4516 = vsmask.f32 4362
    %vm4517 = vmand %vm4515, %vm4516
    %v4518 = vld [vmem:[#allocation3 + $0x18] sm:$0x1c]
    %v4519 = vsel %vm4517, %v4513, %v4518
    %4520 = vst [vmem:[#allocation3 + $0x18] sm:$0x1c] %v4519
    %v4521 = vld [vmem:[%s1000] ss:$2 sm:$0xf]
    %v4522 = vld [vmem:[%s1002] ss:$2 sm:$0xf]
    %v4523 = vmax.f32 %v4521, %v4522
    %s4524 = scalar_lea.vmem [#allocation5], 154
    %v4525 = vld [vmem:[%s4524] ss:$2 sm:$0xf]
    %s4526 = scalar_lea.vmem [#allocation5], 155
    %v4527 = vld [vmem:[%s4526] ss:$2 sm:$0xf]
    %v4528 = vmax.f32 %v4525, %v4527
    %v4529 = vmax.f32 %v4523, %v4528
    %v4530 = vadd.f32 %v4529, %v4342
    %v4531 = vmax.f32 %v4530, 0.0
    %v4532 = vpack.c.bf16 %v4531, %v4531
    %v4534 = vshrl.u32 %v4532, 16
    %v4536 = vrot.slane %v4534, 2
    %v4537 = vshll.u32 %v4532, 16
    %v4539 = vrot.slane %v4537, 3
    %v4540 = vor.u32 %v4536, %v4539
    %vm4542 = vcmask 1047557
    %vm4543 = vsmask.f32 7446
    %vm4544 = vmand %vm4542, %vm4543
    %v4545 = vld [vmem:[#allocation3 + $0x18] sm:$0xe0]
    %v4546 = vsel %vm4544, %v4540, %v4545
    %4547 = vst [vmem:[#allocation3 + $0x18] sm:$0xe0] %v4546
    %s4548 = scalar_lea.vmem [#allocation5], 164
    %v4549 = vld [vmem:[%s4548] ss:$2 sm:$0xf]
    %s4550 = scalar_lea.vmem [#allocation5], 165
    %v4551 = vld [vmem:[%s4550] ss:$2 sm:$0xf]
    %v4552 = vmax.f32 %v4549, %v4551
    %s4553 = scalar_lea.vmem [#allocation5], 174
    %v4554 = vld [vmem:[%s4553] ss:$2 sm:$0xf]
    %s4555 = scalar_lea.vmem [#allocation5], 175
    %v4556 = vld [vmem:[%s4555] ss:$2 sm:$0xf]
    %v4557 = vmax.f32 %v4554, %v4556
    %v4558 = vmax.f32 %v4552, %v4557
    %v4559 = vadd.f32 %v4558, %v4342
    %v4560 = vmax.f32 %v4559, 0.0
    %v4561 = vpack.c.bf16 %v4560, %v4560
    %v4563 = vshrl.u32 %v4561, 16
    %v4565 = vrot.slane %v4563, 7
    %v4566 = vshll.u32 %v4561, 16
    %v4568 = vor.u32 %v4565, %v4566
    %vm4570 = vsmask.f32 2306
    %vm4571 = vmand %vm911, %vm4570
    %v4572 = vld [vmem:[#allocation3 + $0x20] sm:$0x7]
    %v4573 = vsel %vm4571, %v4568, %v4572
    %4574 = vst [vmem:[#allocation3 + $0x20] sm:$0x7] %v4573
    %v4575 = vld [vmem:[#allocation3] sm:$0xff]
    %v4576 = vld [vmem:[#allocation3 + $0x8] sm:$0xff]
    %v4577 = vld [vmem:[#allocation3 + $0x10] sm:$0xff]
    %v4578 = vld [vmem:[#allocation3 + $0x18] sm:$0xff]
    %v4579 = vld [vmem:[#allocation3 + $0x20] sm:$0xff]
    %v4580 = vld [vmem:[%s3] sm:$0xf]
    %v4581 = vld [vmem:[%s3 + $0x4] sm:$0xf]
    %v4582 = vld [vmem:[%s3 + $0x8] sm:$0xf]
    %v4583 = vld [vmem:[%s3 + $0xc] sm:$0xf]
    %v4584 = vld [vmem:[%s3 + $0x10] sm:$0xf]
    %v4585 = vld [vmem:[%s3 + $0x14] sm:$0xf]
    %v4586 = vld [vmem:[%s3 + $0x18] sm:$0xf]
    %v4587 = vld [vmem:[%s3 + $0x1c] sm:$0xf]
    %v4588 = vld [vmem:[%s3 + $0x20] sm:$0xf]
    %v4589 = vld [vmem:[%s3 + $0x24] sm:$0xf]
    %v4590 = vld [vmem:[%s3 + $0x28] sm:$0xf]
    %v4591 = vld [vmem:[%s3 + $0x2c] sm:$0xf]
    %v4592 = vld [vmem:[%s3 + $0x30] sm:$0xf]
    %v4593 = vld [vmem:[%s3 + $0x34] sm:$0xf]
    %v4594 = vld [vmem:[%s3 + $0x38] sm:$0xf]
    %v4595 = vld [vmem:[%s3 + $0x3c] sm:$0xf]
    %v4596 = vld [vmem:[#allocation3] sm:$0xff]
    %v4597 = vld [vmem:[#allocation3 + $0x8] sm:$0xff]
    %v4598 = vld [vmem:[#allocation3 + $0x10] sm:$0xff]
    %v4599 = vld [vmem:[#allocation3 + $0x18] sm:$0xff]
    %v4600 = vld [vmem:[#allocation3 + $0x20] sm:$0xff]
    %v4601 = vld [vmem:[#allocation3 + $0x28] sm:$0x1]
    %v4602 = vld [vmem:[%s3 + $0x40] sm:$0xf]
    %v4603 = vld [vmem:[%s3 + $0x44] sm:$0xf]
    %v4604 = vld [vmem:[%s3 + $0x48] sm:$0xf]
    %v4605 = vld [vmem:[%s3 + $0x4c] sm:$0xf]
    %v4606 = vld [vmem:[%s3 + $0x50] sm:$0xf]
    %v4607 = vld [vmem:[%s3 + $0x54] sm:$0xf]
    %v4608 = vld [vmem:[%s3 + $0x58] sm:$0xf]
    %v4609 = vld [vmem:[%s3 + $0x5c] sm:$0xf]
    %v4610 = vld [vmem:[%s3 + $0x60] sm:$0xf]
    %v4611 = vld [vmem:[%s3 + $0x64] sm:$0xf]
    %v4612 = vld [vmem:[%s3 + $0x68] sm:$0xf]
    %v4613 = vld [vmem:[%s3 + $0x6c] sm:$0xf]
    %v4614 = vld [vmem:[%s3 + $0x70] sm:$0xf]
    %v4615 = vld [vmem:[%s3 + $0x74] sm:$0xf]
    %v4616 = vld [vmem:[%s3 + $0x78] sm:$0xf]
    %v4617 = vld [vmem:[%s3 + $0x7c] sm:$0xf]
    %v4619 = vshrl.u32 %v4596, 16
    %v4621 = vshll.u32 %v4596, 16
    %v4623 = vrot.slane %v4621, 1
    %v4624 = vor.u32 %v4619, %v4623
    %v4626 = vshll.u32 %v4597, 16
    %v4628 = vrot.slane %v4626, 1
    %v4629 = vsel %vm1527, %v4624, %v4628
    %v4630 = vshrl.u32 %v4597, 16
    %v4632 = vor.u32 %v4630, %v4628
    %v4634 = vshll.u32 %v4598, 16
    %v4636 = vrot.slane %v4634, 1
    %v4637 = vsel %vm1527, %v4632, %v4636
    %v4638 = vshrl.u32 %v4598, 16
    %v4640 = vor.u32 %v4638, %v4636
    %v4642 = vshll.u32 %v4599, 16
    %v4644 = vrot.slane %v4642, 1
    %v4645 = vsel %vm1527, %v4640, %v4644
    %v4646 = vshrl.u32 %v4599, 16
    %v4648 = vor.u32 %v4646, %v4644
    %v4650 = vshll.u32 %v4600, 16
    %v4652 = vrot.slane %v4650, 1
    %v4653 = vsel %vm1527, %v4648, %v4652
    %v4654 = vshrl.u32 %v4600, 16
    %v4656 = vor.u32 %v4654, %v4652
    %v4658 = vshll.u32 %v4601, 16
    %v4660 = vrot.slane %v4658, 1
    %v4661 = vsel %vm1527, %v4656, %v4660
    %v4683 = vunpack.c.l.b16 %v4602
    %v4684 = vunpack.c.l.b16 %v4603
    %v4685 = vunpack.c.l.b16 %v4604
    %v4686 = vunpack.c.l.b16 %v4605
    %v4687 = vunpack.c.l.b16 %v4606
    %v4688 = vunpack.c.l.b16 %v4607
    %v4689 = vunpack.c.l.b16 %v4608
    %v4690 = vunpack.c.l.b16 %v4609
    %v4691 = vunpack.c.l.b16 %v4610
    %v4692 = vunpack.c.l.b16 %v4611
    %v4693 = vunpack.c.l.b16 %v4612
    %v4694 = vunpack.c.l.b16 %v4613
    %v4695 = vunpack.c.l.b16 %v4614
    %v4696 = vunpack.c.l.b16 %v4615
    %v4697 = vunpack.c.l.b16 %v4616
    %v4698 = vunpack.c.l.b16 %v4617
    %v4699 = vpack.c.b16 %v4684, %v4683
    %v4700 = vpack.c.b16 %v4686, %v4685
    %v4701 = vpack.c.b16 %v4688, %v4687
    %v4702 = vpack.c.b16 %v4690, %v4689
    %v4703 = vpack.c.b16 %v4692, %v4691
    %v4704 = vpack.c.b16 %v4694, %v4693
    %v4705 = vpack.c.b16 %v4696, %v4695
    %v4706 = vpack.c.b16 %v4698, %v4697
    %4715 = vmatprep.subr.bf16.mxu0 0
    %4716 = vmatpush1.bf16.msra.mxu0 %v4699
    %4717 = vmatprep.subr.bf16.mxu0 0
    %4718 = vmatpush1.bf16.msra.mxu0 %v4700
    %4719 = vmatprep.subr.bf16.mxu0 0
    %4720 = vmatpush1.bf16.msra.mxu0 %v4701
    %4721 = vmatprep.subr.bf16.mxu0 0
    %4722 = vmatpush1.bf16.msra.mxu0 %v4702
    %4723 = vmatprep.subr.bf16.mxu0 0
    %4724 = vmatpush1.bf16.msra.mxu0 %v4703
    %4725 = vmatprep.subr.bf16.mxu0 0
    %4726 = vmatpush1.bf16.msra.mxu0 %v4704
    %4727 = vmatprep.subr.bf16.mxu0 0
    %4728 = vmatpush1.bf16.msra.mxu0 %v4705
    %4729 = vmatprep.subr.bf16.mxu0 0
    %4730 = vmatpush1.bf16.msra.mxu0 %v4706
    %4731 = vmatprep.subr.bf16.mxu0 0
    %4732 = vmatpush1.bf16.msra.mxu0 0
    %4733 = vmatprep.subr.bf16.mxu0 0
    %4734 = vmatpush1.bf16.msra.mxu0 0
    %4735 = vmatprep.subr.bf16.mxu0 0
    %4736 = vmatpush1.bf16.msra.mxu0 0
    %4737 = vmatprep.subr.bf16.mxu0 0
    %4738 = vmatpush1.bf16.msra.mxu0 0
    %4739 = vmatprep.subr.bf16.mxu0 0
    %4740 = vmatpush1.bf16.msra.mxu0 0
    %4741 = vmatprep.subr.bf16.mxu0 0
    %4742 = vmatpush1.bf16.msra.mxu0 0
    %4743 = vmatprep.subr.bf16.mxu0 0
    %4744 = vmatpush1.bf16.msra.mxu0 0
    %4745 = vmatprep.subr.bf16.mxu0 0
    %4746 = vmatpush1.bf16.msra.mxu0 0
    %4747 = vmatprep.mubr.bf16.mxu0 0
    %4748 = vmatmul.mubr.bf16.gmra.mrb[0].mxu0 %v4629
    %v4749 = vpop.f32.mrb[0].mxu0
    %v4750 = vadd.f32 0.0, %v4749
    %v4751 = vpop.f32.mrb[0].mxu0
    %v4752 = vpop.f32.mrb[0].mxu0
    %v4753 = vadd.f32 0.0, %v4752
    %v4754 = vpop.f32.mrb[0].mxu0
    %4755 = vmatprep.mubr.bf16.mxu0 0
    %4756 = vmatmul.mubr.bf16.gmra.mrb[0].mxu0 %v4637
    %v4757 = vpop.f32.mrb[0].mxu0
    %v4758 = vadd.f32 0.0, %v4757
    %v4759 = vpop.f32.mrb[0].mxu0
    %v4760 = vpop.f32.mrb[0].mxu0
    %v4761 = vadd.f32 0.0, %v4760
    %v4762 = vpop.f32.mrb[0].mxu0
    %4763 = vmatprep.mubr.bf16.mxu0 0
    %4764 = vmatmul.mubr.bf16.gmra.mrb[0].mxu0 %v4645
    %v4765 = vpop.f32.mrb[0].mxu0
    %v4766 = vadd.f32 0.0, %v4765
    %v4767 = vpop.f32.mrb[0].mxu0
    %v4768 = vpop.f32.mrb[0].mxu0
    %v4769 = vadd.f32 0.0, %v4768
    %v4770 = vpop.f32.mrb[0].mxu0
    %4771 = vmatprep.mubr.bf16.mxu0 0
    %4772 = vmatmul.mubr.bf16.gmra.mrb[0].mxu0 %v4653
    %v4773 = vpop.f32.mrb[0].mxu0
    %v4774 = vadd.f32 0.0, %v4773
    %v4775 = vpop.f32.mrb[0].mxu0
    %v4776 = vpop.f32.mrb[0].mxu0
    %v4777 = vadd.f32 0.0, %v4776
    %v4778 = vpop.f32.mrb[0].mxu0
    %4779 = vmatprep.mubr.bf16.mxu0 0
    %4780 = vmatmul.mubr.bf16.gmra.mrb[0].mxu0 %v4661
    %v4781 = vpop.f32.mrb[0].mxu0
    %v4782 = vadd.f32 0.0, %v4781
    %v4783 = vpop.f32.mrb[0].mxu0
    %v4784 = vpop.f32.mrb[0].mxu0
    %v4785 = vadd.f32 0.0, %v4784
    %v4786 = vpop.f32.mrb[0].mxu0
    %4787 = vdwg.mxu0
    %v4804 = vunpack.c.l.b16 %v4580
    %v4805 = vunpack.c.l.b16 %v4581
    %v4806 = vunpack.c.l.b16 %v4582
    %v4807 = vunpack.c.l.b16 %v4583
    %v4808 = vunpack.c.l.b16 %v4584
    %v4809 = vunpack.c.l.b16 %v4585
    %v4810 = vunpack.c.l.b16 %v4586
    %v4811 = vunpack.c.l.b16 %v4587
    %v4812 = vunpack.c.l.b16 %v4588
    %v4813 = vunpack.c.l.b16 %v4589
    %v4814 = vunpack.c.l.b16 %v4590
    %v4815 = vunpack.c.l.b16 %v4591
    %v4816 = vunpack.c.l.b16 %v4592
    %v4817 = vunpack.c.l.b16 %v4593
    %v4818 = vunpack.c.l.b16 %v4594
    %v4819 = vunpack.c.l.b16 %v4595
    %v4820 = vpack.c.b16 %v4805, %v4804
    %v4821 = vpack.c.b16 %v4807, %v4806
    %v4822 = vpack.c.b16 %v4809, %v4808
    %v4823 = vpack.c.b16 %v4811, %v4810
    %v4824 = vpack.c.b16 %v4813, %v4812
    %v4825 = vpack.c.b16 %v4815, %v4814
    %v4826 = vpack.c.b16 %v4817, %v4816
    %v4827 = vpack.c.b16 %v4819, %v4818
    %4836 = vmatprep.subr.bf16.mxu0 0
    %4837 = vmatpush1.bf16.msra.mxu0 %v4820
    %4838 = vmatprep.subr.bf16.mxu0 0
    %4839 = vmatpush1.bf16.msra.mxu0 %v4821
    %4840 = vmatprep.subr.bf16.mxu0 0
    %4841 = vmatpush1.bf16.msra.mxu0 %v4822
    %4842 = vmatprep.subr.bf16.mxu0 0
    %4843 = vmatpush1.bf16.msra.mxu0 %v4823
    %4844 = vmatprep.subr.bf16.mxu0 0
    %4845 = vmatpush1.bf16.msra.mxu0 %v4824
    %4846 = vmatprep.subr.bf16.mxu0 0
    %4847 = vmatpush1.bf16.msra.mxu0 %v4825
    %4848 = vmatprep.subr.bf16.mxu0 0
    %4849 = vmatpush1.bf16.msra.mxu0 %v4826
    %4850 = vmatprep.subr.bf16.mxu0 0
    %4851 = vmatpush1.bf16.msra.mxu0 %v4827
    %4852 = vmatprep.subr.bf16.mxu0 0
    %4853 = vmatpush1.bf16.msra.mxu0 0
    %4854 = vmatprep.subr.bf16.mxu0 0
    %4855 = vmatpush1.bf16.msra.mxu0 0
    %4856 = vmatprep.subr.bf16.mxu0 0
    %4857 = vmatpush1.bf16.msra.mxu0 0
    %4858 = vmatprep.subr.bf16.mxu0 0
    %4859 = vmatpush1.bf16.msra.mxu0 0
    %4860 = vmatprep.subr.bf16.mxu0 0
    %4861 = vmatpush1.bf16.msra.mxu0 0
    %4862 = vmatprep.subr.bf16.mxu0 0
    %4863 = vmatpush1.bf16.msra.mxu0 0
    %4864 = vmatprep.subr.bf16.mxu0 0
    %4865 = vmatpush1.bf16.msra.mxu0 0
    %4866 = vmatprep.subr.bf16.mxu0 0
    %4867 = vmatpush1.bf16.msra.mxu0 0
    %4868 = vmatprep.mubr.bf16.mxu0 0
    %4869 = vmatmul.mubr.bf16.gmra.mrb[0].mxu0 %v4575
    %v4870 = vpop.f32.mrb[0].mxu0
    %v4871 = vadd.f32 %v4750, %v4870
    %v4872 = vpop.f32.mrb[0].mxu0
    %v4873 = vpop.f32.mrb[0].mxu0
    %v4874 = vadd.f32 %v4753, %v4873
    %v4875 = vpop.f32.mrb[0].mxu0
    %4876 = vmatprep.mubr.bf16.mxu0 0
    %4877 = vmatmul.mubr.bf16.gmra.mrb[0].mxu0 %v4576
    %v4878 = vpop.f32.mrb[0].mxu0
    %v4879 = vadd.f32 %v4758, %v4878
    %v4880 = vpop.f32.mrb[0].mxu0
    %v4881 = vpop.f32.mrb[0].mxu0
    %v4882 = vadd.f32 %v4761, %v4881
    %v4883 = vpop.f32.mrb[0].mxu0
    %4884 = vmatprep.mubr.bf16.mxu0 0
    %4885 = vmatmul.mubr.bf16.gmra.mrb[0].mxu0 %v4577
    %v4886 = vpop.f32.mrb[0].mxu0
    %v4887 = vadd.f32 %v4766, %v4886
    %v4888 = vpop.f32.mrb[0].mxu0
    %v4889 = vpop.f32.mrb[0].mxu0
    %v4890 = vadd.f32 %v4769, %v4889
    %v4891 = vpop.f32.mrb[0].mxu0
    %4892 = vmatprep.mubr.bf16.mxu0 0
    %4893 = vmatmul.mubr.bf16.gmra.mrb[0].mxu0 %v4578
    %v4894 = vpop.f32.mrb[0].mxu0
    %v4895 = vadd.f32 %v4774, %v4894
    %v4896 = vpop.f32.mrb[0].mxu0
    %v4897 = vpop.f32.mrb[0].mxu0
    %v4898 = vadd.f32 %v4777, %v4897
    %v4899 = vpop.f32.mrb[0].mxu0
    %4900 = vmatprep.mubr.bf16.mxu0 0
    %4901 = vmatmul.mubr.bf16.gmra.mrb[0].mxu0 %v4579
    %v4902 = vpop.f32.mrb[0].mxu0
    %v4903 = vadd.f32 %v4782, %v4902
    %v4904 = vpop.f32.mrb[0].mxu0
    %v4905 = vpop.f32.mrb[0].mxu0
    %v4906 = vadd.f32 %v4785, %v4905
    %v4907 = vpop.f32.mrb[0].mxu0
    %4908 = vdwg.mxu0
    %v4909 = vld [vmem:[#allocation3] sm:$0xfe]
    %v4910 = vld [vmem:[%s3 + $0x80] sm:$0xf]
    %v4911 = vld [vmem:[%s3 + $0x84] sm:$0xf]
    %v4912 = vld [vmem:[%s3 + $0x88] sm:$0xf]
    %v4913 = vld [vmem:[%s3 + $0x8c] sm:$0xf]
    %v4914 = vld [vmem:[%s3 + $0x90] sm:$0xf]
    %v4915 = vld [vmem:[%s3 + $0x94] sm:$0xf]
    %v4916 = vld [vmem:[%s3 + $0x98] sm:$0xf]
    %v4917 = vld [vmem:[%s3 + $0x9c] sm:$0xf]
    %v4918 = vld [vmem:[%s3 + $0xa0] sm:$0xf]
    %v4919 = vld [vmem:[%s3 + $0xa4] sm:$0xf]
    %v4920 = vld [vmem:[%s3 + $0xa8] sm:$0xf]
    %v4921 = vld [vmem:[%s3 + $0xac] sm:$0xf]
    %v4922 = vld [vmem:[%s3 + $0xb0] sm:$0xf]
    %v4923 = vld [vmem:[%s3 + $0xb4] sm:$0xf]
    %v4924 = vld [vmem:[%s3 + $0xb8] sm:$0xf]
    %v4925 = vld [vmem:[%s3 + $0xbc] sm:$0xf]
    %v4932 = vrot.slane %v4909, 1
    %v4933 = vrot.slane %v4597, 1
    %v4934 = vsel %vm2052, %v4932, %v4933
    %v4935 = vrot.slane %v4598, 1
    %v4936 = vsel %vm2052, %v4933, %v4935
    %v4937 = vrot.slane %v4599, 1
    %v4938 = vsel %vm2052, %v4935, %v4937
    %v4939 = vrot.slane %v4600, 1
    %v4940 = vsel %vm2052, %v4937, %v4939
    %v4941 = vrot.slane %v4601, 1
    %v4942 = vsel %vm2052, %v4939, %v4941
    %v4964 = vunpack.c.l.b16 %v4910
    %v4965 = vunpack.c.l.b16 %v4911
    %v4966 = vunpack.c.l.b16 %v4912
    %v4967 = vunpack.c.l.b16 %v4913
    %v4968 = vunpack.c.l.b16 %v4914
    %v4969 = vunpack.c.l.b16 %v4915
    %v4970 = vunpack.c.l.b16 %v4916
    %v4971 = vunpack.c.l.b16 %v4917
    %v4972 = vunpack.c.l.b16 %v4918
    %v4973 = vunpack.c.l.b16 %v4919
    %v4974 = vunpack.c.l.b16 %v4920
    %v4975 = vunpack.c.l.b16 %v4921
    %v4976 = vunpack.c.l.b16 %v4922
    %v4977 = vunpack.c.l.b16 %v4923
    %v4978 = vunpack.c.l.b16 %v4924
    %v4979 = vunpack.c.l.b16 %v4925
    %v4980 = vpack.c.b16 %v4965, %v4964
    %v4981 = vpack.c.b16 %v4967, %v4966
    %v4982 = vpack.c.b16 %v4969, %v4968
    %v4983 = vpack.c.b16 %v4971, %v4970
    %v4984 = vpack.c.b16 %v4973, %v4972
    %v4985 = vpack.c.b16 %v4975, %v4974
    %v4986 = vpack.c.b16 %v4977, %v4976
    %v4987 = vpack.c.b16 %v4979, %v4978
    %4996 = vmatprep.subr.bf16.mxu0 0
    %4997 = vmatpush1.bf16.msra.mxu0 %v4980
    %4998 = vmatprep.subr.bf16.mxu0 0
    %4999 = vmatpush1.bf16.msra.mxu0 %v4981
    %5000 = vmatprep.subr.bf16.mxu0 0
    %5001 = vmatpush1.bf16.msra.mxu0 %v4982
    %5002 = vmatprep.subr.bf16.mxu0 0
    %5003 = vmatpush1.bf16.msra.mxu0 %v4983
    %5004 = vmatprep.subr.bf16.mxu0 0
    %5005 = vmatpush1.bf16.msra.mxu0 %v4984
    %5006 = vmatprep.subr.bf16.mxu0 0
    %5007 = vmatpush1.bf16.msra.mxu0 %v4985
    %5008 = vmatprep.subr.bf16.mxu0 0
    %5009 = vmatpush1.bf16.msra.mxu0 %v4986
    %5010 = vmatprep.subr.bf16.mxu0 0
    %5011 = vmatpush1.bf16.msra.mxu0 %v4987
    %5012 = vmatprep.subr.bf16.mxu0 0
    %5013 = vmatpush1.bf16.msra.mxu0 0
    %5014 = vmatprep.subr.bf16.mxu0 0
    %5015 = vmatpush1.bf16.msra.mxu0 0
    %5016 = vmatprep.subr.bf16.mxu0 0
    %5017 = vmatpush1.bf16.msra.mxu0 0
    %5018 = vmatprep.subr.bf16.mxu0 0
    %5019 = vmatpush1.bf16.msra.mxu0 0
    %5020 = vmatprep.subr.bf16.mxu0 0
    %5021 = vmatpush1.bf16.msra.mxu0 0
    %5022 = vmatprep.subr.bf16.mxu0 0
    %5023 = vmatpush1.bf16.msra.mxu0 0
    %5024 = vmatprep.subr.bf16.mxu0 0
    %5025 = vmatpush1.bf16.msra.mxu0 0
    %5026 = vmatprep.subr.bf16.mxu0 0
    %5027 = vmatpush1.bf16.msra.mxu0 0
    %5028 = vmatprep.mubr.bf16.mxu0 0
    %5029 = vmatmul.mubr.bf16.gmra.mrb[0].mxu0 %v4934
    %v5030 = vpop.f32.mrb[0].mxu0
    %v5031 = vadd.f32 0.0, %v5030
    %v5032 = vpop.f32.mrb[0].mxu0
    %v5033 = vpop.f32.mrb[0].mxu0
    %v5034 = vadd.f32 0.0, %v5033
    %v5035 = vpop.f32.mrb[0].mxu0
    %5036 = vmatprep.mubr.bf16.mxu0 0
    %5037 = vmatmul.mubr.bf16.gmra.mrb[0].mxu0 %v4936
    %v5038 = vpop.f32.mrb[0].mxu0
    %v5039 = vadd.f32 0.0, %v5038
    %v5040 = vpop.f32.mrb[0].mxu0
    %v5041 = vpop.f32.mrb[0].mxu0
    %v5042 = vadd.f32 0.0, %v5041
    %v5043 = vpop.f32.mrb[0].mxu0
    %5044 = vmatprep.mubr.bf16.mxu0 0
    %5045 = vmatmul.mubr.bf16.gmra.mrb[0].mxu0 %v4938
    %v5046 = vpop.f32.mrb[0].mxu0
    %v5047 = vadd.f32 0.0, %v5046
    %v5048 = vpop.f32.mrb[0].mxu0
    %v5049 = vpop.f32.mrb[0].mxu0
    %v5050 = vadd.f32 0.0, %v5049
    %v5051 = vpop.f32.mrb[0].mxu0
    %5052 = vmatprep.mubr.bf16.mxu0 0
    %5053 = vmatmul.mubr.bf16.gmra.mrb[0].mxu0 %v4940
    %v5054 = vpop.f32.mrb[0].mxu0
    %v5055 = vadd.f32 0.0, %v5054
    %v5056 = vpop.f32.mrb[0].mxu0
    %v5057 = vpop.f32.mrb[0].mxu0
    %v5058 = vadd.f32 0.0, %v5057
    %v5059 = vpop.f32.mrb[0].mxu0
    %5060 = vmatprep.mubr.bf16.mxu0 0
    %5061 = vmatmul.mubr.bf16.gmra.mrb[0].mxu0 %v4942
    %v5062 = vpop.f32.mrb[0].mxu0
    %v5063 = vadd.f32 0.0, %v5062
    %v5064 = vpop.f32.mrb[0].mxu0
    %v5065 = vpop.f32.mrb[0].mxu0
    %v5066 = vadd.f32 0.0, %v5065
    %v5067 = vpop.f32.mrb[0].mxu0
    %5068 = vdwg.mxu0
    %v5069 = vadd.f32 %v4871, %v5031
    %v5070 = vadd.f32 %v4874, %v5034
    %v5071 = vadd.f32 %v4879, %v5039
    %v5072 = vadd.f32 %v4882, %v5042
    %v5073 = vadd.f32 %v4887, %v5047
    %v5074 = vadd.f32 %v4890, %v5050
    %v5075 = vadd.f32 %v4895, %v5055
    %v5076 = vadd.f32 %v4898, %v5058
    %v5077 = vadd.f32 %v4903, %v5063
    %v5078 = vadd.f32 %v4906, %v5066
    %v5079 = vld [vmem:[#allocation3] sm:$0xf8]
    %v5080 = vld [vmem:[#allocation3 + $0x28] sm:$0x7]
    %v5081 = vld [vmem:[%s3 + $0xc0] sm:$0xf]
    %v5082 = vld [vmem:[%s3 + $0xc4] sm:$0xf]
    %v5083 = vld [vmem:[%s3 + $0xc8] sm:$0xf]
    %v5084 = vld [vmem:[%s3 + $0xcc] sm:$0xf]
    %v5085 = vld [vmem:[%s3 + $0xd0] sm:$0xf]
    %v5086 = vld [vmem:[%s3 + $0xd4] sm:$0xf]
    %v5087 = vld [vmem:[%s3 + $0xd8] sm:$0xf]
    %v5088 = vld [vmem:[%s3 + $0xdc] sm:$0xf]
    %v5089 = vld [vmem:[%s3 + $0xe0] sm:$0xf]
    %v5090 = vld [vmem:[%s3 + $0xe4] sm:$0xf]
    %v5091 = vld [vmem:[%s3 + $0xe8] sm:$0xf]
    %v5092 = vld [vmem:[%s3 + $0xec] sm:$0xf]
    %v5093 = vld [vmem:[%s3 + $0xf0] sm:$0xf]
    %v5094 = vld [vmem:[%s3 + $0xf4] sm:$0xf]
    %v5095 = vld [vmem:[%s3 + $0xf8] sm:$0xf]
    %v5096 = vld [vmem:[%s3 + $0xfc] sm:$0xf]
    %v5099 = vrot.slane %v5079, 3
    %v5100 = vrot.slane %v4597, 3
    %v5101 = vsel %vm4060, %v5099, %v5100
    %v5102 = vrot.slane %v4598, 3
    %v5103 = vsel %vm4060, %v5100, %v5102
    %v5104 = vrot.slane %v4599, 3
    %v5105 = vsel %vm4060, %v5102, %v5104
    %v5106 = vrot.slane %v4600, 3
    %v5107 = vsel %vm4060, %v5104, %v5106
    %v5108 = vrot.slane %v5080, 3
    %v5109 = vsel %vm4060, %v5106, %v5108
    %v5131 = vunpack.c.l.b16 %v5081
    %v5132 = vunpack.c.l.b16 %v5082
    %v5133 = vunpack.c.l.b16 %v5083
    %v5134 = vunpack.c.l.b16 %v5084
    %v5135 = vunpack.c.l.b16 %v5085
    %v5136 = vunpack.c.l.b16 %v5086
    %v5137 = vunpack.c.l.b16 %v5087
    %v5138 = vunpack.c.l.b16 %v5088
    %v5139 = vunpack.c.l.b16 %v5089
    %v5140 = vunpack.c.l.b16 %v5090
    %v5141 = vunpack.c.l.b16 %v5091
    %v5142 = vunpack.c.l.b16 %v5092
    %v5143 = vunpack.c.l.b16 %v5093
    %v5144 = vunpack.c.l.b16 %v5094
    %v5145 = vunpack.c.l.b16 %v5095
    %v5146 = vunpack.c.l.b16 %v5096
    %v5147 = vpack.c.b16 %v5132, %v5131
    %v5148 = vpack.c.b16 %v5134, %v5133
    %v5149 = vpack.c.b16 %v5136, %v5135
    %v5150 = vpack.c.b16 %v5138, %v5137
    %v5151 = vpack.c.b16 %v5140, %v5139
    %v5152 = vpack.c.b16 %v5142, %v5141
    %v5153 = vpack.c.b16 %v5144, %v5143
    %v5154 = vpack.c.b16 %v5146, %v5145
    %5163 = vmatprep.subr.bf16.mxu0 0
    %5164 = vmatpush1.bf16.msra.mxu0 %v5147
    %5165 = vmatprep.subr.bf16.mxu0 0
    %5166 = vmatpush1.bf16.msra.mxu0 %v5148
    %5167 = vmatprep.subr.bf16.mxu0 0
    %5168 = vmatpush1.bf16.msra.mxu0 %v5149
    %5169 = vmatprep.subr.bf16.mxu0 0
    %5170 = vmatpush1.bf16.msra.mxu0 %v5150
    %5171 = vmatprep.subr.bf16.mxu0 0
    %5172 = vmatpush1.bf16.msra.mxu0 %v5151
    %5173 = vmatprep.subr.bf16.mxu0 0
    %5174 = vmatpush1.bf16.msra.mxu0 %v5152
    %5175 = vmatprep.subr.bf16.mxu0 0
    %5176 = vmatpush1.bf16.msra.mxu0 %v5153
    %5177 = vmatprep.subr.bf16.mxu0 0
    %5178 = vmatpush1.bf16.msra.mxu0 %v5154
    %5179 = vmatprep.subr.bf16.mxu0 0
    %5180 = vmatpush1.bf16.msra.mxu0 0
    %5181 = vmatprep.subr.bf16.mxu0 0
    %5182 = vmatpush1.bf16.msra.mxu0 0
    %5183 = vmatprep.subr.bf16.mxu0 0
    %5184 = vmatpush1.bf16.msra.mxu0 0
    %5185 = vmatprep.subr.bf16.mxu0 0
    %5186 = vmatpush1.bf16.msra.mxu0 0
    %5187 = vmatprep.subr.bf16.mxu0 0
    %5188 = vmatpush1.bf16.msra.mxu0 0
    %5189 = vmatprep.subr.bf16.mxu0 0
    %5190 = vmatpush1.bf16.msra.mxu0 0
    %5191 = vmatprep.subr.bf16.mxu0 0
    %5192 = vmatpush1.bf16.msra.mxu0 0
    %5193 = vmatprep.subr.bf16.mxu0 0
    %5194 = vmatpush1.bf16.msra.mxu0 0
    %5195 = vmatprep.mubr.bf16.mxu0 0
    %5196 = vmatmul.mubr.bf16.gmra.mrb[0].mxu0 %v5101
    %v5197 = vpop.f32.mrb[0].mxu0
    %v5198 = vadd.f32 0.0, %v5197
    %v5199 = vpop.f32.mrb[0].mxu0
    %v5200 = vpop.f32.mrb[0].mxu0
    %v5201 = vadd.f32 0.0, %v5200
    %v5202 = vpop.f32.mrb[0].mxu0
    %5203 = vmatprep.mubr.bf16.mxu0 0
    %5204 = vmatmul.mubr.bf16.gmra.mrb[0].mxu0 %v5103
    %v5205 = vpop.f32.mrb[0].mxu0
    %v5206 = vadd.f32 0.0, %v5205
    %v5207 = vpop.f32.mrb[0].mxu0
    %v5208 = vpop.f32.mrb[0].mxu0
    %v5209 = vadd.f32 0.0, %v5208
    %v5210 = vpop.f32.mrb[0].mxu0
    %5211 = vmatprep.mubr.bf16.mxu0 0
    %5212 = vmatmul.mubr.bf16.gmra.mrb[0].mxu0 %v5105
    %v5213 = vpop.f32.mrb[0].mxu0
    %v5214 = vadd.f32 0.0, %v5213
    %v5215 = vpop.f32.mrb[0].mxu0
    %v5216 = vpop.f32.mrb[0].mxu0
    %v5217 = vadd.f32 0.0, %v5216
    %v5218 = vpop.f32.mrb[0].mxu0
    %5219 = vmatprep.mubr.bf16.mxu0 0
    %5220 = vmatmul.mubr.bf16.gmra.mrb[0].mxu0 %v5107
    %v5221 = vpop.f32.mrb[0].mxu0
    %v5222 = vadd.f32 0.0, %v5221
    %v5223 = vpop.f32.mrb[0].mxu0
    %v5224 = vpop.f32.mrb[0].mxu0
    %v5225 = vadd.f32 0.0, %v5224
    %v5226 = vpop.f32.mrb[0].mxu0
    %5227 = vmatprep.mubr.bf16.mxu0 0
    %5228 = vmatmul.mubr.bf16.gmra.mrb[0].mxu0 %v5109
    %v5229 = vpop.f32.mrb[0].mxu0
    %v5230 = vadd.f32 0.0, %v5229
    %v5231 = vpop.f32.mrb[0].mxu0
    %v5232 = vpop.f32.mrb[0].mxu0
    %v5233 = vadd.f32 0.0, %v5232
    %v5234 = vpop.f32.mrb[0].mxu0
    %5235 = vdwg.mxu0
    %v5236 = vadd.f32 %v5069, %v5198
    %v5237 = vadd.f32 %v5070, %v5201
    %v5238 = vadd.f32 %v5071, %v5206
    %v5239 = vadd.f32 %v5072, %v5209
    %v5240 = vadd.f32 %v5073, %v5214
    %v5241 = vadd.f32 %v5074, %v5217
    %v5242 = vadd.f32 %v5075, %v5222
    %v5243 = vadd.f32 %v5076, %v5225
    %v5244 = vadd.f32 %v5077, %v5230
    %v5245 = vadd.f32 %v5078, %v5233
    %v5246 = vld [vmem:[#allocation3 + $0x28] sm:$0xf]
    %v5247 = vld [vmem:[%s3 + $0x100] sm:$0xf]
    %v5248 = vld [vmem:[%s3 + $0x104] sm:$0xf]
    %v5249 = vld [vmem:[%s3 + $0x108] sm:$0xf]
    %v5250 = vld [vmem:[%s3 + $0x10c] sm:$0xf]
    %v5251 = vld [vmem:[%s3 + $0x110] sm:$0xf]
    %v5252 = vld [vmem:[%s3 + $0x114] sm:$0xf]
    %v5253 = vld [vmem:[%s3 + $0x118] sm:$0xf]
    %v5254 = vld [vmem:[%s3 + $0x11c] sm:$0xf]
    %v5255 = vld [vmem:[%s3 + $0x120] sm:$0xf]
    %v5256 = vld [vmem:[%s3 + $0x124] sm:$0xf]
    %v5257 = vld [vmem:[%s3 + $0x128] sm:$0xf]
    %v5258 = vld [vmem:[%s3 + $0x12c] sm:$0xf]
    %v5259 = vld [vmem:[%s3 + $0x130] sm:$0xf]
    %v5260 = vld [vmem:[%s3 + $0x134] sm:$0xf]
    %v5261 = vld [vmem:[%s3 + $0x138] sm:$0xf]
    %v5262 = vld [vmem:[%s3 + $0x13c] sm:$0xf]
    %vm5263 = vsmask.f32 4352
    %v5265 = vshrl.u32 %v5079, 16
    %v5267 = vrot.slane %v5265, 3
    %v5268 = vshll.u32 %v5079, 16
    %v5270 = vrot.slane %v5268, 4
    %v5271 = vor.u32 %v5267, %v5270
    %v5272 = vrot.slane %v4630, 3
    %v5273 = vrot.slane %v4626, 4
    %v5274 = vor.u32 %v5272, %v5273
    %v5275 = vsel %vm5263, %v5271, %v5274
    %v5276 = vrot.slane %v4638, 3
    %v5277 = vrot.slane %v4634, 4
    %v5278 = vor.u32 %v5276, %v5277
    %v5279 = vsel %vm5263, %v5274, %v5278
    %v5280 = vrot.slane %v4646, 3
    %v5281 = vrot.slane %v4642, 4
    %v5282 = vor.u32 %v5280, %v5281
    %v5283 = vsel %vm5263, %v5278, %v5282
    %v5284 = vrot.slane %v4654, 3
    %v5285 = vrot.slane %v4650, 4
    %v5286 = vor.u32 %v5284, %v5285
    %v5287 = vsel %vm5263, %v5282, %v5286
    %v5289 = vshrl.u32 %v5246, 16
    %v5291 = vrot.slane %v5289, 3
    %v5292 = vshll.u32 %v5246, 16
    %v5294 = vrot.slane %v5292, 4
    %v5295 = vor.u32 %v5291, %v5294
    %v5296 = vsel %vm5263, %v5286, %v5295
    %v5318 = vunpack.c.l.b16 %v5247
    %v5319 = vunpack.c.l.b16 %v5248
    %v5320 = vunpack.c.l.b16 %v5249
    %v5321 = vunpack.c.l.b16 %v5250
    %v5322 = vunpack.c.l.b16 %v5251
    %v5323 = vunpack.c.l.b16 %v5252
    %v5324 = vunpack.c.l.b16 %v5253
    %v5325 = vunpack.c.l.b16 %v5254
    %v5326 = vunpack.c.l.b16 %v5255
    %v5327 = vunpack.c.l.b16 %v5256
    %v5328 = vunpack.c.l.b16 %v5257
    %v5329 = vunpack.c.l.b16 %v5258
    %v5330 = vunpack.c.l.b16 %v5259
    %v5331 = vunpack.c.l.b16 %v5260
    %v5332 = vunpack.c.l.b16 %v5261
    %v5333 = vunpack.c.l.b16 %v5262
    %v5334 = vpack.c.b16 %v5319, %v5318
    %v5335 = vpack.c.b16 %v5321, %v5320
    %v5336 = vpack.c.b16 %v5323, %v5322
    %v5337 = vpack.c.b16 %v5325, %v5324
    %v5338 = vpack.c.b16 %v5327, %v5326
    %v5339 = vpack.c.b16 %v5329, %v5328
    %v5340 = vpack.c.b16 %v5331, %v5330
    %v5341 = vpack.c.b16 %v5333, %v5332
    %5350 = vmatprep.subr.bf16.mxu0 0
    %5351 = vmatpush1.bf16.msra.mxu0 %v5334
    %5352 = vmatprep.subr.bf16.mxu0 0
    %5353 = vmatpush1.bf16.msra.mxu0 %v5335
    %5354 = vmatprep.subr.bf16.mxu0 0
    %5355 = vmatpush1.bf16.msra.mxu0 %v5336
    %5356 = vmatprep.subr.bf16.mxu0 0
    %5357 = vmatpush1.bf16.msra.mxu0 %v5337
    %5358 = vmatprep.subr.bf16.mxu0 0
    %5359 = vmatpush1.bf16.msra.mxu0 %v5338
    %5360 = vmatprep.subr.bf16.mxu0 0
    %5361 = vmatpush1.bf16.msra.mxu0 %v5339
    %5362 = vmatprep.subr.bf16.mxu0 0
    %5363 = vmatpush1.bf16.msra.mxu0 %v5340
    %5364 = vmatprep.subr.bf16.mxu0 0
    %5365 = vmatpush1.bf16.msra.mxu0 %v5341
    %5366 = vmatprep.subr.bf16.mxu0 0
    %5367 = vmatpush1.bf16.msra.mxu0 0
    %5368 = vmatprep.subr.bf16.mxu0 0
    %5369 = vmatpush1.bf16.msra.mxu0 0
    %5370 = vmatprep.subr.bf16.mxu0 0
    %5371 = vmatpush1.bf16.msra.mxu0 0
    %5372 = vmatprep.subr.bf16.mxu0 0
    %5373 = vmatpush1.bf16.msra.mxu0 0
    %5374 = vmatprep.subr.bf16.mxu0 0
    %5375 = vmatpush1.bf16.msra.mxu0 0
    %5376 = vmatprep.subr.bf16.mxu0 0
    %5377 = vmatpush1.bf16.msra.mxu0 0
    %5378 = vmatprep.subr.bf16.mxu0 0
    %5379 = vmatpush1.bf16.msra.mxu0 0
    %5380 = vmatprep.subr.bf16.mxu0 0
    %5381 = vmatpush1.bf16.msra.mxu0 0
    %5382 = vmatprep.mubr.bf16.mxu0 0
    %5383 = vmatmul.mubr.bf16.gmra.mrb[0].mxu0 %v5275
    %v5384 = vpop.f32.mrb[0].mxu0
    %v5385 = vadd.f32 0.0, %v5384
    %v5386 = vpop.f32.mrb[0].mxu0
    %v5387 = vpop.f32.mrb[0].mxu0
    %v5388 = vadd.f32 0.0, %v5387
    %v5389 = vpop.f32.mrb[0].mxu0
    %5390 = vmatprep.mubr.bf16.mxu0 0
    %5391 = vmatmul.mubr.bf16.gmra.mrb[0].mxu0 %v5279
    %v5392 = vpop.f32.mrb[0].mxu0
    %v5393 = vadd.f32 0.0, %v5392
    %v5394 = vpop.f32.mrb[0].mxu0
    %v5395 = vpop.f32.mrb[0].mxu0
    %v5396 = vadd.f32 0.0, %v5395
    %v5397 = vpop.f32.mrb[0].mxu0
    %5398 = vmatprep.mubr.bf16.mxu0 0
    %5399 = vmatmul.mubr.bf16.gmra.mrb[0].mxu0 %v5283
    %v5400 = vpop.f32.mrb[0].mxu0
    %v5401 = vadd.f32 0.0, %v5400
    %v5402 = vpop.f32.mrb[0].mxu0
    %v5403 = vpop.f32.mrb[0].mxu0
    %v5404 = vadd.f32 0.0, %v5403
    %v5405 = vpop.f32.mrb[0].mxu0
    %5406 = vmatprep.mubr.bf16.mxu0 0
    %5407 = vmatmul.mubr.bf16.gmra.mrb[0].mxu0 %v5287
    %v5408 = vpop.f32.mrb[0].mxu0
    %v5409 = vadd.f32 0.0, %v5408
    %v5410 = vpop.f32.mrb[0].mxu0
    %v5411 = vpop.f32.mrb[0].mxu0
    %v5412 = vadd.f32 0.0, %v5411
    %v5413 = vpop.f32.mrb[0].mxu0
    %5414 = vmatprep.mubr.bf16.mxu0 0
    %5415 = vmatmul.mubr.bf16.gmra.mrb[0].mxu0 %v5296
    %v5416 = vpop.f32.mrb[0].mxu0
    %v5417 = vadd.f32 0.0, %v5416
    %v5418 = vpop.f32.mrb[0].mxu0
    %v5419 = vpop.f32.mrb[0].mxu0
    %v5420 = vadd.f32 0.0, %v5419
    %v5421 = vpop.f32.mrb[0].mxu0
    %5422 = vdwg.mxu0
    %v5423 = vadd.f32 %v5236, %v5385
    %v5424 = vadd.f32 %v5237, %v5388
    %v5425 = vadd.f32 %v5238, %v5393
    %v5426 = vadd.f32 %v5239, %v5396
    %v5427 = vadd.f32 %v5240, %v5401
    %v5428 = vadd.f32 %v5241, %v5404
    %v5429 = vadd.f32 %v5242, %v5409
    %v5430 = vadd.f32 %v5243, %v5412
    %v5431 = vadd.f32 %v5244, %v5417
    %v5432 = vadd.f32 %v5245, %v5420
    %v5433 = vld [vmem:[#allocation3] sm:$0xf0]
    %v5434 = vld [vmem:[%s3 + $0x140] sm:$0xf]
    %v5435 = vld [vmem:[%s3 + $0x144] sm:$0xf]
    %v5436 = vld [vmem:[%s3 + $0x148] sm:$0xf]
    %v5437 = vld [vmem:[%s3 + $0x14c] sm:$0xf]
    %v5438 = vld [vmem:[%s3 + $0x150] sm:$0xf]
    %v5439 = vld [vmem:[%s3 + $0x154] sm:$0xf]
    %v5440 = vld [vmem:[%s3 + $0x158] sm:$0xf]
    %v5441 = vld [vmem:[%s3 + $0x15c] sm:$0xf]
    %v5442 = vld [vmem:[%s3 + $0x160] sm:$0xf]
    %v5443 = vld [vmem:[%s3 + $0x164] sm:$0xf]
    %v5444 = vld [vmem:[%s3 + $0x168] sm:$0xf]
    %v5445 = vld [vmem:[%s3 + $0x16c] sm:$0xf]
    %v5446 = vld [vmem:[%s3 + $0x170] sm:$0xf]
    %v5447 = vld [vmem:[%s3 + $0x174] sm:$0xf]
    %v5448 = vld [vmem:[%s3 + $0x178] sm:$0xf]
    %v5449 = vld [vmem:[%s3 + $0x17c] sm:$0xf]
    %v5452 = vrot.slane %v5433, 4
    %v5453 = vrot.slane %v4597, 4
    %v5454 = vsel %vm951, %v5452, %v5453
    %v5455 = vrot.slane %v4598, 4
    %v5456 = vsel %vm951, %v5453, %v5455
    %v5457 = vrot.slane %v4599, 4
    %v5458 = vsel %vm951, %v5455, %v5457
    %v5459 = vrot.slane %v4600, 4
    %v5460 = vsel %vm951, %v5457, %v5459
    %v5461 = vrot.slane %v5246, 4
    %v5462 = vsel %vm951, %v5459, %v5461
    %v5484 = vunpack.c.l.b16 %v5434
    %v5485 = vunpack.c.l.b16 %v5435
    %v5486 = vunpack.c.l.b16 %v5436
    %v5487 = vunpack.c.l.b16 %v5437
    %v5488 = vunpack.c.l.b16 %v5438
    %v5489 = vunpack.c.l.b16 %v5439
    %v5490 = vunpack.c.l.b16 %v5440
    %v5491 = vunpack.c.l.b16 %v5441
    %v5492 = vunpack.c.l.b16 %v5442
    %v5493 = vunpack.c.l.b16 %v5443
    %v5494 = vunpack.c.l.b16 %v5444
    %v5495 = vunpack.c.l.b16 %v5445
    %v5496 = vunpack.c.l.b16 %v5446
    %v5497 = vunpack.c.l.b16 %v5447
    %v5498 = vunpack.c.l.b16 %v5448
    %v5499 = vunpack.c.l.b16 %v5449
    %v5500 = vpack.c.b16 %v5485, %v5484
    %v5501 = vpack.c.b16 %v5487, %v5486
    %v5502 = vpack.c.b16 %v5489, %v5488
    %v5503 = vpack.c.b16 %v5491, %v5490
    %v5504 = vpack.c.b16 %v5493, %v5492
    %v5505 = vpack.c.b16 %v5495, %v5494
    %v5506 = vpack.c.b16 %v5497, %v5496
    %v5507 = vpack.c.b16 %v5499, %v5498
    %5516 = vmatprep.subr.bf16.mxu0 0
    %5517 = vmatpush1.bf16.msra.mxu0 %v5500
    %5518 = vmatprep.subr.bf16.mxu0 0
    %5519 = vmatpush1.bf16.msra.mxu0 %v5501
    %5520 = vmatprep.subr.bf16.mxu0 0
    %5521 = vmatpush1.bf16.msra.mxu0 %v5502
    %5522 = vmatprep.subr.bf16.mxu0 0
    %5523 = vmatpush1.bf16.msra.mxu0 %v5503
    %5524 = vmatprep.subr.bf16.mxu0 0
    %5525 = vmatpush1.bf16.msra.mxu0 %v5504
    %5526 = vmatprep.subr.bf16.mxu0 0
    %5527 = vmatpush1.bf16.msra.mxu0 %v5505
    %5528 = vmatprep.subr.bf16.mxu0 0
    %5529 = vmatpush1.bf16.msra.mxu0 %v5506
    %5530 = vmatprep.subr.bf16.mxu0 0
    %5531 = vmatpush1.bf16.msra.mxu0 %v5507
    %5532 = vmatprep.subr.bf16.mxu0 0
    %5533 = vmatpush1.bf16.msra.mxu0 0
    %5534 = vmatprep.subr.bf16.mxu0 0
    %5535 = vmatpush1.bf16.msra.mxu0 0
    %5536 = vmatprep.subr.bf16.mxu0 0
    %5537 = vmatpush1.bf16.msra.mxu0 0
    %5538 = vmatprep.subr.bf16.mxu0 0
    %5539 = vmatpush1.bf16.msra.mxu0 0
    %5540 = vmatprep.subr.bf16.mxu0 0
    %5541 = vmatpush1.bf16.msra.mxu0 0
    %5542 = vmatprep.subr.bf16.mxu0 0
    %5543 = vmatpush1.bf16.msra.mxu0 0
    %5544 = vmatprep.subr.bf16.mxu0 0
    %5545 = vmatpush1.bf16.msra.mxu0 0
    %5546 = vmatprep.subr.bf16.mxu0 0
    %5547 = vmatpush1.bf16.msra.mxu0 0
    %5548 = vmatprep.mubr.bf16.mxu0 0
    %5549 = vmatmul.mubr.bf16.gmra.mrb[0].mxu0 %v5454
    %v5550 = vpop.f32.mrb[0].mxu0
    %v5551 = vadd.f32 0.0, %v5550
    %v5552 = vpop.f32.mrb[0].mxu0
    %v5553 = vpop.f32.mrb[0].mxu0
    %v5554 = vadd.f32 0.0, %v5553
    %v5555 = vpop.f32.mrb[0].mxu0
    %5556 = vmatprep.mubr.bf16.mxu0 0
    %5557 = vmatmul.mubr.bf16.gmra.mrb[0].mxu0 %v5456
    %v5558 = vpop.f32.mrb[0].mxu0
    %v5559 = vadd.f32 0.0, %v5558
    %v5560 = vpop.f32.mrb[0].mxu0
    %v5561 = vpop.f32.mrb[0].mxu0
    %v5562 = vadd.f32 0.0, %v5561
    %v5563 = vpop.f32.mrb[0].mxu0
    %5564 = vmatprep.mubr.bf16.mxu0 0
    %5565 = vmatmul.mubr.bf16.gmra.mrb[0].mxu0 %v5458
    %v5566 = vpop.f32.mrb[0].mxu0
    %v5567 = vadd.f32 0.0, %v5566
    %v5568 = vpop.f32.mrb[0].mxu0
    %v5569 = vpop.f32.mrb[0].mxu0
    %v5570 = vadd.f32 0.0, %v5569
    %v5571 = vpop.f32.mrb[0].mxu0
    %5572 = vmatprep.mubr.bf16.mxu0 0
    %5573 = vmatmul.mubr.bf16.gmra.mrb[0].mxu0 %v5460
    %v5574 = vpop.f32.mrb[0].mxu0
    %v5575 = vadd.f32 0.0, %v5574
    %v5576 = vpop.f32.mrb[0].mxu0
    %v5577 = vpop.f32.mrb[0].mxu0
    %v5578 = vadd.f32 0.0, %v5577
    %v5579 = vpop.f32.mrb[0].mxu0
    %5580 = vmatprep.mubr.bf16.mxu0 0
    %5581 = vmatmul.mubr.bf16.gmra.mrb[0].mxu0 %v5462
    %v5582 = vpop.f32.mrb[0].mxu0
    %v5583 = vadd.f32 0.0, %v5582
    %v5584 = vpop.f32.mrb[0].mxu0
    %v5585 = vpop.f32.mrb[0].mxu0
    %v5586 = vadd.f32 0.0, %v5585
    %v5587 = vpop.f32.mrb[0].mxu0
    %5588 = vdwg.mxu0
    %v5589 = vadd.f32 %v5423, %v5551
    %v5590 = vadd.f32 %v5424, %v5554
    %v5591 = vadd.f32 %v5425, %v5559
    %v5592 = vadd.f32 %v5426, %v5562
    %v5593 = vadd.f32 %v5427, %v5567
    %v5594 = vadd.f32 %v5428, %v5570
    %v5595 = vadd.f32 %v5429, %v5575
    %v5596 = vadd.f32 %v5430, %v5578
    %v5597 = vadd.f32 %v5431, %v5583
    %v5598 = vadd.f32 %v5432, %v5586
    %v5599 = vld [vmem:[#allocation3] sm:$0xc0]
    %v5600 = vld [vmem:[#allocation3 + $0x28] sm:$0x3f]
    %v5601 = vld [vmem:[%s3 + $0x180] sm:$0xf]
    %v5602 = vld [vmem:[%s3 + $0x184] sm:$0xf]
    %v5603 = vld [vmem:[%s3 + $0x188] sm:$0xf]
    %v5604 = vld [vmem:[%s3 + $0x18c] sm:$0xf]
    %v5605 = vld [vmem:[%s3 + $0x190] sm:$0xf]
    %v5606 = vld [vmem:[%s3 + $0x194] sm:$0xf]
    %v5607 = vld [vmem:[%s3 + $0x198] sm:$0xf]
    %v5608 = vld [vmem:[%s3 + $0x19c] sm:$0xf]
    %v5609 = vld [vmem:[%s3 + $0x1a0] sm:$0xf]
    %v5610 = vld [vmem:[%s3 + $0x1a4] sm:$0xf]
    %v5611 = vld [vmem:[%s3 + $0x1a8] sm:$0xf]
    %v5612 = vld [vmem:[%s3 + $0x1ac] sm:$0xf]
    %v5613 = vld [vmem:[%s3 + $0x1b0] sm:$0xf]
    %v5614 = vld [vmem:[%s3 + $0x1b4] sm:$0xf]
    %v5615 = vld [vmem:[%s3 + $0x1b8] sm:$0xf]
    %v5616 = vld [vmem:[%s3 + $0x1bc] sm:$0xf]
    %v5619 = vrot.slane %v5599, 6
    %v5620 = vrot.slane %v4597, 6
    %v5621 = vsel %vm871, %v5619, %v5620
    %v5622 = vrot.slane %v4598, 6
    %v5623 = vsel %vm871, %v5620, %v5622
    %v5624 = vrot.slane %v4599, 6
    %v5625 = vsel %vm871, %v5622, %v5624
    %v5626 = vrot.slane %v4600, 6
    %v5627 = vsel %vm871, %v5624, %v5626
    %v5628 = vrot.slane %v5600, 6
    %v5629 = vsel %vm871, %v5626, %v5628
    %v5651 = vunpack.c.l.b16 %v5601
    %v5652 = vunpack.c.l.b16 %v5602
    %v5653 = vunpack.c.l.b16 %v5603
    %v5654 = vunpack.c.l.b16 %v5604
    %v5655 = vunpack.c.l.b16 %v5605
    %v5656 = vunpack.c.l.b16 %v5606
    %v5657 = vunpack.c.l.b16 %v5607
    %v5658 = vunpack.c.l.b16 %v5608
    %v5659 = vunpack.c.l.b16 %v5609
    %v5660 = vunpack.c.l.b16 %v5610
    %v5661 = vunpack.c.l.b16 %v5611
    %v5662 = vunpack.c.l.b16 %v5612
    %v5663 = vunpack.c.l.b16 %v5613
    %v5664 = vunpack.c.l.b16 %v5614
    %v5665 = vunpack.c.l.b16 %v5615
    %v5666 = vunpack.c.l.b16 %v5616
    %v5667 = vpack.c.b16 %v5652, %v5651
    %v5668 = vpack.c.b16 %v5654, %v5653
    %v5669 = vpack.c.b16 %v5656, %v5655
    %v5670 = vpack.c.b16 %v5658, %v5657
    %v5671 = vpack.c.b16 %v5660, %v5659
    %v5672 = vpack.c.b16 %v5662, %v5661
    %v5673 = vpack.c.b16 %v5664, %v5663
    %v5674 = vpack.c.b16 %v5666, %v5665
    %5683 = vmatprep.subr.bf16.mxu0 0
    %5684 = vmatpush1.bf16.msra.mxu0 %v5667
    %5685 = vmatprep.subr.bf16.mxu0 0
    %5686 = vmatpush1.bf16.msra.mxu0 %v5668
    %5687 = vmatprep.subr.bf16.mxu0 0
    %5688 = vmatpush1.bf16.msra.mxu0 %v5669
    %5689 = vmatprep.subr.bf16.mxu0 0
    %5690 = vmatpush1.bf16.msra.mxu0 %v5670
    %5691 = vmatprep.subr.bf16.mxu0 0
    %5692 = vmatpush1.bf16.msra.mxu0 %v5671
    %5693 = vmatprep.subr.bf16.mxu0 0
    %5694 = vmatpush1.bf16.msra.mxu0 %v5672
    %5695 = vmatprep.subr.bf16.mxu0 0
    %5696 = vmatpush1.bf16.msra.mxu0 %v5673
    %5697 = vmatprep.subr.bf16.mxu0 0
    %5698 = vmatpush1.bf16.msra.mxu0 %v5674
    %5699 = vmatprep.subr.bf16.mxu0 0
    %5700 = vmatpush1.bf16.msra.mxu0 0
    %5701 = vmatprep.subr.bf16.mxu0 0
    %5702 = vmatpush1.bf16.msra.mxu0 0
    %5703 = vmatprep.subr.bf16.mxu0 0
    %5704 = vmatpush1.bf16.msra.mxu0 0
    %5705 = vmatprep.subr.bf16.mxu0 0
    %5706 = vmatpush1.bf16.msra.mxu0 0
    %5707 = vmatprep.subr.bf16.mxu0 0
    %5708 = vmatpush1.bf16.msra.mxu0 0
    %5709 = vmatprep.subr.bf16.mxu0 0
    %5710 = vmatpush1.bf16.msra.mxu0 0
    %5711 = vmatprep.subr.bf16.mxu0 0
    %5712 = vmatpush1.bf16.msra.mxu0 0
    %5713 = vmatprep.subr.bf16.mxu0 0
    %5714 = vmatpush1.bf16.msra.mxu0 0
    %5715 = vmatprep.mubr.bf16.mxu0 0
    %5716 = vmatmul.mubr.bf16.gmra.mrb[0].mxu0 %v5621
    %v5717 = vpop.f32.mrb[0].mxu0
    %v5718 = vadd.f32 0.0, %v5717
    %v5719 = vpop.f32.mrb[0].mxu0
    %v5720 = vpop.f32.mrb[0].mxu0
    %v5721 = vadd.f32 0.0, %v5720
    %v5722 = vpop.f32.mrb[0].mxu0
    %5723 = vmatprep.mubr.bf16.mxu0 0
    %5724 = vmatmul.mubr.bf16.gmra.mrb[0].mxu0 %v5623
    %v5725 = vpop.f32.mrb[0].mxu0
    %v5726 = vadd.f32 0.0, %v5725
    %v5727 = vpop.f32.mrb[0].mxu0
    %v5728 = vpop.f32.mrb[0].mxu0
    %v5729 = vadd.f32 0.0, %v5728
    %v5730 = vpop.f32.mrb[0].mxu0
    %5731 = vmatprep.mubr.bf16.mxu0 0
    %5732 = vmatmul.mubr.bf16.gmra.mrb[0].mxu0 %v5625
    %v5733 = vpop.f32.mrb[0].mxu0
    %v5734 = vadd.f32 0.0, %v5733
    %v5735 = vpop.f32.mrb[0].mxu0
    %v5736 = vpop.f32.mrb[0].mxu0
    %v5737 = vadd.f32 0.0, %v5736
    %v5738 = vpop.f32.mrb[0].mxu0
    %5739 = vmatprep.mubr.bf16.mxu0 0
    %5740 = vmatmul.mubr.bf16.gmra.mrb[0].mxu0 %v5627
    %v5741 = vpop.f32.mrb[0].mxu0
    %v5742 = vadd.f32 0.0, %v5741
    %v5743 = vpop.f32.mrb[0].mxu0
    %v5744 = vpop.f32.mrb[0].mxu0
    %v5745 = vadd.f32 0.0, %v5744
    %v5746 = vpop.f32.mrb[0].mxu0
    %5747 = vmatprep.mubr.bf16.mxu0 0
    %5748 = vmatmul.mubr.bf16.gmra.mrb[0].mxu0 %v5629
    %v5749 = vpop.f32.mrb[0].mxu0
    %v5750 = vadd.f32 0.0, %v5749
    %v5751 = vpop.f32.mrb[0].mxu0
    %v5752 = vpop.f32.mrb[0].mxu0
    %v5753 = vadd.f32 0.0, %v5752
    %v5754 = vpop.f32.mrb[0].mxu0
    %5755 = vdwg.mxu0
    %v5756 = vadd.f32 %v5589, %v5718
    %v5757 = vadd.f32 %v5590, %v5721
    %v5758 = vadd.f32 %v5591, %v5726
    %v5759 = vadd.f32 %v5592, %v5729
    %v5760 = vadd.f32 %v5593, %v5734
    %v5761 = vadd.f32 %v5594, %v5737
    %v5762 = vadd.f32 %v5595, %v5742
    %v5763 = vadd.f32 %v5596, %v5745
    %v5764 = vadd.f32 %v5597, %v5750
    %v5765 = vadd.f32 %v5598, %v5753
    %v5766 = vld [vmem:[#allocation3 + $0x28] sm:$0x7f]
    %v5767 = vld [vmem:[%s3 + $0x1c0] sm:$0xf]
    %v5768 = vld [vmem:[%s3 + $0x1c4] sm:$0xf]
    %v5769 = vld [vmem:[%s3 + $0x1c8] sm:$0xf]
    %v5770 = vld [vmem:[%s3 + $0x1cc] sm:$0xf]
    %v5771 = vld [vmem:[%s3 + $0x1d0] sm:$0xf]
    %v5772 = vld [vmem:[%s3 + $0x1d4] sm:$0xf]
    %v5773 = vld [vmem:[%s3 + $0x1d8] sm:$0xf]
    %v5774 = vld [vmem:[%s3 + $0x1dc] sm:$0xf]
    %v5775 = vld [vmem:[%s3 + $0x1e0] sm:$0xf]
    %v5776 = vld [vmem:[%s3 + $0x1e4] sm:$0xf]
    %v5777 = vld [vmem:[%s3 + $0x1e8] sm:$0xf]
    %v5778 = vld [vmem:[%s3 + $0x1ec] sm:$0xf]
    %v5779 = vld [vmem:[%s3 + $0x1f0] sm:$0xf]
    %v5780 = vld [vmem:[%s3 + $0x1f4] sm:$0xf]
    %v5781 = vld [vmem:[%s3 + $0x1f8] sm:$0xf]
    %v5782 = vld [vmem:[%s3 + $0x1fc] sm:$0xf]
    %v5784 = vshrl.u32 %v5599, 16
    %v5786 = vrot.slane %v5784, 6
    %v5787 = vshll.u32 %v5599, 16
    %v5789 = vrot.slane %v5787, 7
    %v5790 = vor.u32 %v5786, %v5789
    %v5791 = vrot.slane %v4630, 6
    %v5792 = vrot.slane %v4626, 7
    %v5793 = vor.u32 %v5791, %v5792
    %v5794 = vsel %vm872, %v5790, %v5793
    %v5795 = vrot.slane %v4638, 6
    %v5796 = vrot.slane %v4634, 7
    %v5797 = vor.u32 %v5795, %v5796
    %v5798 = vsel %vm872, %v5793, %v5797
    %v5799 = vrot.slane %v4646, 6
    %v5800 = vrot.slane %v4642, 7
    %v5801 = vor.u32 %v5799, %v5800
    %v5802 = vsel %vm872, %v5797, %v5801
    %v5803 = vrot.slane %v4654, 6
    %v5804 = vrot.slane %v4650, 7
    %v5805 = vor.u32 %v5803, %v5804
    %v5806 = vsel %vm872, %v5801, %v5805
    %v5808 = vshrl.u32 %v5766, 16
    %v5810 = vrot.slane %v5808, 6
    %v5811 = vshll.u32 %v5766, 16
    %v5813 = vrot.slane %v5811, 7
    %v5814 = vor.u32 %v5810, %v5813
    %v5815 = vsel %vm872, %v5805, %v5814
    %v5837 = vunpack.c.l.b16 %v5767
    %v5838 = vunpack.c.l.b16 %v5768
    %v5839 = vunpack.c.l.b16 %v5769
    %v5840 = vunpack.c.l.b16 %v5770
    %v5841 = vunpack.c.l.b16 %v5771
    %v5842 = vunpack.c.l.b16 %v5772
    %v5843 = vunpack.c.l.b16 %v5773
    %v5844 = vunpack.c.l.b16 %v5774
    %v5845 = vunpack.c.l.b16 %v5775
    %v5846 = vunpack.c.l.b16 %v5776
    %v5847 = vunpack.c.l.b16 %v5777
    %v5848 = vunpack.c.l.b16 %v5778
    %v5849 = vunpack.c.l.b16 %v5779
    %v5850 = vunpack.c.l.b16 %v5780
    %v5851 = vunpack.c.l.b16 %v5781
    %v5852 = vunpack.c.l.b16 %v5782
    %v5853 = vpack.c.b16 %v5838, %v5837
    %v5854 = vpack.c.b16 %v5840, %v5839
    %v5855 = vpack.c.b16 %v5842, %v5841
    %v5856 = vpack.c.b16 %v5844, %v5843
    %v5857 = vpack.c.b16 %v5846, %v5845
    %v5858 = vpack.c.b16 %v5848, %v5847
    %v5859 = vpack.c.b16 %v5850, %v5849
    %v5860 = vpack.c.b16 %v5852, %v5851
    %5869 = vmatprep.subr.bf16.mxu0 0
    %5870 = vmatpush1.bf16.msra.mxu0 %v5853
    %5871 = vmatprep.subr.bf16.mxu0 0
    %5872 = vmatpush1.bf16.msra.mxu0 %v5854
    %5873 = vmatprep.subr.bf16.mxu0 0
    %5874 = vmatpush1.bf16.msra.mxu0 %v5855
    %5875 = vmatprep.subr.bf16.mxu0 0
    %5876 = vmatpush1.bf16.msra.mxu0 %v5856
    %5877 = vmatprep.subr.bf16.mxu0 0
    %5878 = vmatpush1.bf16.msra.mxu0 %v5857
    %5879 = vmatprep.subr.bf16.mxu0 0
    %5880 = vmatpush1.bf16.msra.mxu0 %v5858
    %5881 = vmatprep.subr.bf16.mxu0 0
    %5882 = vmatpush1.bf16.msra.mxu0 %v5859
    %5883 = vmatprep.subr.bf16.mxu0 0
    %5884 = vmatpush1.bf16.msra.mxu0 %v5860
    %5885 = vmatprep.subr.bf16.mxu0 0
    %5886 = vmatpush1.bf16.msra.mxu0 0
    %5887 = vmatprep.subr.bf16.mxu0 0
    %5888 = vmatpush1.bf16.msra.mxu0 0
    %5889 = vmatprep.subr.bf16.mxu0 0
    %5890 = vmatpush1.bf16.msra.mxu0 0
    %5891 = vmatprep.subr.bf16.mxu0 0
    %5892 = vmatpush1.bf16.msra.mxu0 0
    %5893 = vmatprep.subr.bf16.mxu0 0
    %5894 = vmatpush1.bf16.msra.mxu0 0
    %5895 = vmatprep.subr.bf16.mxu0 0
    %5896 = vmatpush1.bf16.msra.mxu0 0
    %5897 = vmatprep.subr.bf16.mxu0 0
    %5898 = vmatpush1.bf16.msra.mxu0 0
    %5899 = vmatprep.subr.bf16.mxu0 0
    %5900 = vmatpush1.bf16.msra.mxu0 0
    %5901 = vmatprep.mubr.bf16.mxu0 0
    %5902 = vmatmul.mubr.bf16.gmra.mrb[0].mxu0 %v5794
    %v5903 = vpop.f32.mrb[0].mxu0
    %v5904 = vadd.f32 0.0, %v5903
    %v5905 = vpop.f32.mrb[0].mxu0
    %v5906 = vpop.f32.mrb[0].mxu0
    %v5907 = vadd.f32 0.0, %v5906
    %v5908 = vpop.f32.mrb[0].mxu0
    %5909 = vmatprep.mubr.bf16.mxu0 0
    %5910 = vmatmul.mubr.bf16.gmra.mrb[0].mxu0 %v5798
    %v5911 = vpop.f32.mrb[0].mxu0
    %v5912 = vadd.f32 0.0, %v5911
    %v5913 = vpop.f32.mrb[0].mxu0
    %v5914 = vpop.f32.mrb[0].mxu0
    %v5915 = vadd.f32 0.0, %v5914
    %v5916 = vpop.f32.mrb[0].mxu0
    %5917 = vmatprep.mubr.bf16.mxu0 0
    %5918 = vmatmul.mubr.bf16.gmra.mrb[0].mxu0 %v5802
    %v5919 = vpop.f32.mrb[0].mxu0
    %v5920 = vadd.f32 0.0, %v5919
    %v5921 = vpop.f32.mrb[0].mxu0
    %v5922 = vpop.f32.mrb[0].mxu0
    %v5923 = vadd.f32 0.0, %v5922
    %v5924 = vpop.f32.mrb[0].mxu0
    %5925 = vmatprep.mubr.bf16.mxu0 0
    %5926 = vmatmul.mubr.bf16.gmra.mrb[0].mxu0 %v5806
    %v5927 = vpop.f32.mrb[0].mxu0
    %v5928 = vadd.f32 0.0, %v5927
    %v5929 = vpop.f32.mrb[0].mxu0
    %v5930 = vpop.f32.mrb[0].mxu0
    %v5931 = vadd.f32 0.0, %v5930
    %v5932 = vpop.f32.mrb[0].mxu0
    %5933 = vmatprep.mubr.bf16.mxu0 0
    %5934 = vmatmul.mubr.bf16.gmra.mrb[0].mxu0 %v5815
    %v5935 = vpop.f32.mrb[0].mxu0
    %v5936 = vadd.f32 0.0, %v5935
    %v5937 = vpop.f32.mrb[0].mxu0
    %v5938 = vpop.f32.mrb[0].mxu0
    %v5939 = vadd.f32 0.0, %v5938
    %v5940 = vpop.f32.mrb[0].mxu0
    %5941 = vdwg.mxu0
    %v5942 = vadd.f32 %v5756, %v5904
    %v5943 = vadd.f32 %v5757, %v5907
    %v5944 = vadd.f32 %v5758, %v5912
    %v5945 = vadd.f32 %v5759, %v5915
    %v5946 = vadd.f32 %v5760, %v5920
    %v5947 = vadd.f32 %v5761, %v5923
    %v5948 = vadd.f32 %v5762, %v5928
    %v5949 = vadd.f32 %v5763, %v5931
    %v5950 = vadd.f32 %v5764, %v5936
    %v5951 = vadd.f32 %v5765, %v5939
    %v5952 = vld [vmem:[#allocation3] sm:$0x80]
    %v5953 = vld [vmem:[%s3 + $0x200] sm:$0xf]
    %v5954 = vld [vmem:[%s3 + $0x204] sm:$0xf]
    %v5955 = vld [vmem:[%s3 + $0x208] sm:$0xf]
    %v5956 = vld [vmem:[%s3 + $0x20c] sm:$0xf]
    %v5957 = vld [vmem:[%s3 + $0x210] sm:$0xf]
    %v5958 = vld [vmem:[%s3 + $0x214] sm:$0xf]
    %v5959 = vld [vmem:[%s3 + $0x218] sm:$0xf]
    %v5960 = vld [vmem:[%s3 + $0x21c] sm:$0xf]
    %v5961 = vld [vmem:[%s3 + $0x220] sm:$0xf]
    %v5962 = vld [vmem:[%s3 + $0x224] sm:$0xf]
    %v5963 = vld [vmem:[%s3 + $0x228] sm:$0xf]
    %v5964 = vld [vmem:[%s3 + $0x22c] sm:$0xf]
    %v5965 = vld [vmem:[%s3 + $0x230] sm:$0xf]
    %v5966 = vld [vmem:[%s3 + $0x234] sm:$0xf]
    %v5967 = vld [vmem:[%s3 + $0x238] sm:$0xf]
    %v5968 = vld [vmem:[%s3 + $0x23c] sm:$0xf]
    %v5971 = vrot.slane %v5952, 7
    %v5972 = vrot.slane %v4597, 7
    %v5973 = vsel %vm989, %v5971, %v5972
    %v5974 = vrot.slane %v4598, 7
    %v5975 = vsel %vm989, %v5972, %v5974
    %v5976 = vrot.slane %v4599, 7
    %v5977 = vsel %vm989, %v5974, %v5976
    %v5978 = vrot.slane %v4600, 7
    %v5979 = vsel %vm989, %v5976, %v5978
    %v5980 = vrot.slane %v5766, 7
    %v5981 = vsel %vm989, %v5978, %v5980
    %v6003 = vunpack.c.l.b16 %v5953
    %v6004 = vunpack.c.l.b16 %v5954
    %v6005 = vunpack.c.l.b16 %v5955
    %v6006 = vunpack.c.l.b16 %v5956
    %v6007 = vunpack.c.l.b16 %v5957
    %v6008 = vunpack.c.l.b16 %v5958
    %v6009 = vunpack.c.l.b16 %v5959
    %v6010 = vunpack.c.l.b16 %v5960
    %v6011 = vunpack.c.l.b16 %v5961
    %v6012 = vunpack.c.l.b16 %v5962
    %v6013 = vunpack.c.l.b16 %v5963
    %v6014 = vunpack.c.l.b16 %v5964
    %v6015 = vunpack.c.l.b16 %v5965
    %v6016 = vunpack.c.l.b16 %v5966
    %v6017 = vunpack.c.l.b16 %v5967
    %v6018 = vunpack.c.l.b16 %v5968
    %v6019 = vpack.c.b16 %v6004, %v6003
    %v6020 = vpack.c.b16 %v6006, %v6005
    %v6021 = vpack.c.b16 %v6008, %v6007
    %v6022 = vpack.c.b16 %v6010, %v6009
    %v6023 = vpack.c.b16 %v6012, %v6011
    %v6024 = vpack.c.b16 %v6014, %v6013
    %v6025 = vpack.c.b16 %v6016, %v6015
    %v6026 = vpack.c.b16 %v6018, %v6017
    %6035 = vmatprep.subr.bf16.mxu0 0
    %6036 = vmatpush1.bf16.msra.mxu0 %v6019
    %6037 = vmatprep.subr.bf16.mxu0 0
    %6038 = vmatpush1.bf16.msra.mxu0 %v6020
    %6039 = vmatprep.subr.bf16.mxu0 0
    %6040 = vmatpush1.bf16.msra.mxu0 %v6021
    %6041 = vmatprep.subr.bf16.mxu0 0
    %6042 = vmatpush1.bf16.msra.mxu0 %v6022
    %6043 = vmatprep.subr.bf16.mxu0 0
    %6044 = vmatpush1.bf16.msra.mxu0 %v6023
    %6045 = vmatprep.subr.bf16.mxu0 0
    %6046 = vmatpush1.bf16.msra.mxu0 %v6024
    %6047 = vmatprep.subr.bf16.mxu0 0
    %6048 = vmatpush1.bf16.msra.mxu0 %v6025
    %6049 = vmatprep.subr.bf16.mxu0 0
    %6050 = vmatpush1.bf16.msra.mxu0 %v6026
    %6051 = vmatprep.subr.bf16.mxu0 0
    %6052 = vmatpush1.bf16.msra.mxu0 0
    %6053 = vmatprep.subr.bf16.mxu0 0
    %6054 = vmatpush1.bf16.msra.mxu0 0
    %6055 = vmatprep.subr.bf16.mxu0 0
    %6056 = vmatpush1.bf16.msra.mxu0 0
    %6057 = vmatprep.subr.bf16.mxu0 0
    %6058 = vmatpush1.bf16.msra.mxu0 0
    %6059 = vmatprep.subr.bf16.mxu0 0
    %6060 = vmatpush1.bf16.msra.mxu0 0
    %6061 = vmatprep.subr.bf16.mxu0 0
    %6062 = vmatpush1.bf16.msra.mxu0 0
    %6063 = vmatprep.subr.bf16.mxu0 0
    %6064 = vmatpush1.bf16.msra.mxu0 0
    %6065 = vmatprep.subr.bf16.mxu0 0
    %6066 = vmatpush1.bf16.msra.mxu0 0
    %6067 = vmatprep.mubr.bf16.mxu0 0
    %6068 = vmatmul.mubr.bf16.gmra.mrb[0].mxu0 %v5973
    %v6069 = vpop.f32.mrb[0].mxu0
    %v6070 = vadd.f32 0.0, %v6069
    %v6071 = vpop.f32.mrb[0].mxu0
    %v6072 = vpop.f32.mrb[0].mxu0
    %v6073 = vadd.f32 0.0, %v6072
    %v6074 = vpop.f32.mrb[0].mxu0
    %6075 = vmatprep.mubr.bf16.mxu0 0
    %6076 = vmatmul.mubr.bf16.gmra.mrb[0].mxu0 %v5975
    %v6077 = vpop.f32.mrb[0].mxu0
    %v6078 = vadd.f32 0.0, %v6077
    %v6079 = vpop.f32.mrb[0].mxu0
    %v6080 = vpop.f32.mrb[0].mxu0
    %v6081 = vadd.f32 0.0, %v6080
    %v6082 = vpop.f32.mrb[0].mxu0
    %6083 = vmatprep.mubr.bf16.mxu0 0
    %6084 = vmatmul.mubr.bf16.gmra.mrb[0].mxu0 %v5977
    %v6085 = vpop.f32.mrb[0].mxu0
    %v6086 = vadd.f32 0.0, %v6085
    %v6087 = vpop.f32.mrb[0].mxu0
    %v6088 = vpop.f32.mrb[0].mxu0
    %v6089 = vadd.f32 0.0, %v6088
    %v6090 = vpop.f32.mrb[0].mxu0
    %6091 = vmatprep.mubr.bf16.mxu0 0
    %6092 = vmatmul.mubr.bf16.gmra.mrb[0].mxu0 %v5979
    %v6093 = vpop.f32.mrb[0].mxu0
    %v6094 = vadd.f32 0.0, %v6093
    %v6095 = vpop.f32.mrb[0].mxu0
    %v6096 = vpop.f32.mrb[0].mxu0
    %v6097 = vadd.f32 0.0, %v6096
    %v6098 = vpop.f32.mrb[0].mxu0
    %6099 = vmatprep.mubr.bf16.mxu0 0
    %6100 = vmatmul.mubr.bf16.gmra.mrb[0].mxu0 %v5981
    %v6101 = vpop.f32.mrb[0].mxu0
    %v6102 = vadd.f32 0.0, %v6101
    %v6103 = vpop.f32.mrb[0].mxu0
    %v6104 = vpop.f32.mrb[0].mxu0
    %v6105 = vadd.f32 0.0, %v6104
    %v6106 = vpop.f32.mrb[0].mxu0
    %6107 = vdwg.mxu0
    %v6108 = vadd.f32 %v5942, %v6070
    %v6109 = vadd.f32 %v5943, %v6073
    %v6110 = vadd.f32 %v5944, %v6078
    %v6111 = vadd.f32 %v5945, %v6081
    %v6112 = vadd.f32 %v5946, %v6086
    %v6113 = vadd.f32 %v5947, %v6089
    %v6114 = vadd.f32 %v5948, %v6094
    %v6115 = vadd.f32 %v5949, %v6097
    %v6116 = vadd.f32 %v5950, %v6102
    %v6117 = vadd.f32 %v5951, %v6105
    %6118 = vst [vmem:[#allocation5] sm:$0xff] %v6108
    %6119 = vst [vmem:[#allocation5 + $0x8] sm:$0xff] %v6109
    %6120 = vst [vmem:[#allocation5 + $0x10] sm:$0xff] %v6110
    %6121 = vst [vmem:[#allocation5 + $0x18] sm:$0xff] %v6111
    %6122 = vst [vmem:[#allocation5 + $0x20] sm:$0xff] %v6112
    %6123 = vst [vmem:[#allocation5 + $0x28] sm:$0xff] %v6113
    %6124 = vst [vmem:[#allocation5 + $0x30] sm:$0xff] %v6114
    %6125 = vst [vmem:[#allocation5 + $0x38] sm:$0xff] %v6115
    %6126 = vst [vmem:[#allocation5 + $0x40] sm:$0xff] %v6116
    %6127 = vst [vmem:[#allocation5 + $0x48] sm:$0xff] %v6117
    %v6128 = vld [vmem:[%s5 + $0x2] sm:$0x1]
    %v6129 = vlaneseq
    %v6130 = vshrl.u32 %v6129, 7
    %v6131 = vsub.s32 0, %v6130
    %v6132 = vrot.slane %v6128, %v6131
    %v6133 = vld [vmem:[#allocation5] ss:$2 sm:$0x3]
    %v6134 = vld [vmem:[%s839] ss:$2 sm:$0x3]
    %v6135 = vmax.f32 %v6133, %v6134
    %s6136 = scalar_lea.vmem [#allocation5], 6
    %v6137 = vld [vmem:[%s6136] ss:$2 sm:$0x3]
    %s6138 = scalar_lea.vmem [#allocation5], 7
    %v6139 = vld [vmem:[%s6138] ss:$2 sm:$0x3]
    %v6140 = vmax.f32 %v6137, %v6139
    %v6141 = vmax.f32 %v6135, %v6140
    %v6142 = vadd.f32 %v6141, %v6132
    %v6143 = vmax.f32 %v6142, 0.0
    %v6144 = vpack.c.bf16 %v6143, %v6143
    %v6146 = vshrl.u32 %v6144, 16
    %v6148 = vrot.slane %v6146, 5
    %v6149 = vshll.u32 %v6144, 16
    %v6151 = vrot.slane %v6149, 6
    %v6152 = vor.u32 %v6148, %v6151
    %vm6154 = vsmask.f32 3338
    %vm6155 = vmand %vm905, %vm6154
    %v6156 = vld [vmem:[#allocation4] sm:$0xc]
    %v6157 = vsel %vm6155, %v6152, %v6156
    %6158 = vst [vmem:[#allocation4] sm:$0xc] %v6157
    %s6159 = scalar_lea.vmem [#allocation5], 12
    %v6160 = vld [vmem:[%s6159] ss:$2 sm:$0x3]
    %s6161 = scalar_lea.vmem [#allocation5], 13
    %v6162 = vld [vmem:[%s6161] ss:$2 sm:$0x3]
    %v6163 = vmax.f32 %v6160, %v6162
    %s6164 = scalar_lea.vmem [#allocation5], 18
    %v6165 = vld [vmem:[%s6164] ss:$2 sm:$0x3]
    %s6166 = scalar_lea.vmem [#allocation5], 19
    %v6167 = vld [vmem:[%s6166] ss:$2 sm:$0x3]
    %v6168 = vmax.f32 %v6165, %v6167
    %v6169 = vmax.f32 %v6163, %v6168
    %v6170 = vadd.f32 %v6169, %v6132
    %v6171 = vmax.f32 %v6170, 0.0
    %v6172 = vpack.c.bf16 %v6171, %v6171
    %v6174 = vshrl.u32 %v6172, 16
    %v6176 = vrot.slane %v6174, 3
    %v6177 = vshll.u32 %v6172, 16
    %v6179 = vrot.slane %v6177, 4
    %v6180 = vor.u32 %v6176, %v6179
    %vm6182 = vcmask 1045508
    %vm6183 = vsmask.f32 5394
    %vm6184 = vmand %vm6182, %vm6183
    %v6185 = vld [vmem:[#allocation4] sm:$0x30]
    %v6186 = vsel %vm6184, %v6180, %v6185
    %6187 = vst [vmem:[#allocation4] sm:$0x30] %v6186
    %v6188 = vld [vmem:[%s4403] ss:$2 sm:$0x3]
    %v6189 = vld [vmem:[%s4405] ss:$2 sm:$0x3]
    %v6190 = vmax.f32 %v6188, %v6189
    %s6191 = scalar_lea.vmem [#allocation5], 46
    %v6192 = vld [vmem:[%s6191] ss:$2 sm:$0x3]
    %s6193 = scalar_lea.vmem [#allocation5], 47
    %v6194 = vld [vmem:[%s6193] ss:$2 sm:$0x3]
    %v6195 = vmax.f32 %v6192, %v6194
    %v6196 = vmax.f32 %v6190, %v6195
    %v6197 = vadd.f32 %v6196, %v6132
    %v6198 = vmax.f32 %v6197, 0.0
    %v6199 = vpack.c.bf16 %v6198, %v6198
    %v6201 = vshrl.u32 %v6199, 16
    %v6203 = vrot.slane %v6201, 5
    %v6204 = vshll.u32 %v6199, 16
    %v6206 = vrot.slane %v6204, 6
    %v6207 = vor.u32 %v6203, %v6206
    %v6209 = vld [vmem:[#allocation4 + $0x8] sm:$0xc]
    %v6210 = vsel %vm6155, %v6207, %v6209
    %6211 = vst [vmem:[#allocation4 + $0x8] sm:$0xc] %v6210
    %s6212 = scalar_lea.vmem [#allocation5], 52
    %v6213 = vld [vmem:[%s6212] ss:$2 sm:$0x3]
    %s6214 = scalar_lea.vmem [#allocation5], 53
    %v6215 = vld [vmem:[%s6214] ss:$2 sm:$0x3]
    %v6216 = vmax.f32 %v6213, %v6215
    %s6217 = scalar_lea.vmem [#allocation5], 58
    %v6218 = vld [vmem:[%s6217] ss:$2 sm:$0x3]
    %s6219 = scalar_lea.vmem [#allocation5], 59
    %v6220 = vld [vmem:[%s6219] ss:$2 sm:$0x3]
    %v6221 = vmax.f32 %v6218, %v6220
    %v6222 = vmax.f32 %v6216, %v6221
    %v6223 = vadd.f32 %v6222, %v6132
    %v6224 = vmax.f32 %v6223, 0.0
    %v6225 = vpack.c.bf16 %v6224, %v6224
    %v6227 = vshrl.u32 %v6225, 16
    %v6229 = vrot.slane %v6227, 3
    %v6230 = vshll.u32 %v6225, 16
    %v6232 = vrot.slane %v6230, 4
    %v6233 = vor.u32 %v6229, %v6232
    %v6235 = vld [vmem:[#allocation4 + $0x8] sm:$0x30]
    %v6236 = vsel %vm6184, %v6233, %v6235
    %6237 = vst [vmem:[#allocation4 + $0x8] sm:$0x30] %v6236
    %v6238 = vld [vmem:[#allocation4] sm:$0xff]
    %v6239 = vld [vmem:[#allocation4 + $0x8] sm:$0xff]
    %v6240 = vld [vmem:[%s4] sm:$0xf]
    %v6241 = vld [vmem:[%s4 + $0x4] sm:$0xf]
    %v6242 = vld [vmem:[%s4 + $0x8] sm:$0xf]
    %v6243 = vld [vmem:[%s4 + $0xc] sm:$0xf]
    %v6244 = vld [vmem:[%s4 + $0x10] sm:$0xf]
    %v6245 = vld [vmem:[%s4 + $0x14] sm:$0xf]
    %v6246 = vld [vmem:[%s4 + $0x18] sm:$0xf]
    %v6247 = vld [vmem:[%s4 + $0x1c] sm:$0xf]
    %v6248 = vld [vmem:[%s4 + $0x20] sm:$0xf]
    %v6249 = vld [vmem:[%s4 + $0x24] sm:$0xf]
    %v6250 = vld [vmem:[%s4 + $0x28] sm:$0xf]
    %v6251 = vld [vmem:[%s4 + $0x2c] sm:$0xf]
    %v6252 = vld [vmem:[%s4 + $0x30] sm:$0xf]
    %v6253 = vld [vmem:[%s4 + $0x34] sm:$0xf]
    %v6254 = vld [vmem:[%s4 + $0x38] sm:$0xf]
    %v6255 = vld [vmem:[%s4 + $0x3c] sm:$0xf]
    %v6256 = vld [vmem:[#allocation4] sm:$0xff]
    %v6257 = vld [vmem:[#allocation4 + $0x8] sm:$0xff]
    %v6258 = vld [vmem:[#allocation4 + $0x10] sm:$0x1]
    %v6259 = vld [vmem:[%s4 + $0x40] sm:$0xf]
    %v6260 = vld [vmem:[%s4 + $0x44] sm:$0xf]
    %v6261 = vld [vmem:[%s4 + $0x48] sm:$0xf]
    %v6262 = vld [vmem:[%s4 + $0x4c] sm:$0xf]
    %v6263 = vld [vmem:[%s4 + $0x50] sm:$0xf]
    %v6264 = vld [vmem:[%s4 + $0x54] sm:$0xf]
    %v6265 = vld [vmem:[%s4 + $0x58] sm:$0xf]
    %v6266 = vld [vmem:[%s4 + $0x5c] sm:$0xf]
    %v6267 = vld [vmem:[%s4 + $0x60] sm:$0xf]
    %v6268 = vld [vmem:[%s4 + $0x64] sm:$0xf]
    %v6269 = vld [vmem:[%s4 + $0x68] sm:$0xf]
    %v6270 = vld [vmem:[%s4 + $0x6c] sm:$0xf]
    %v6271 = vld [vmem:[%s4 + $0x70] sm:$0xf]
    %v6272 = vld [vmem:[%s4 + $0x74] sm:$0xf]
    %v6273 = vld [vmem:[%s4 + $0x78] sm:$0xf]
    %v6274 = vld [vmem:[%s4 + $0x7c] sm:$0xf]
    %v6276 = vshrl.u32 %v6256, 16
    %v6278 = vshll.u32 %v6256, 16
    %v6280 = vrot.slane %v6278, 1
    %v6281 = vor.u32 %v6276, %v6280
    %v6283 = vshll.u32 %v6257, 16
    %v6285 = vrot.slane %v6283, 1
    %v6286 = vsel %vm1527, %v6281, %v6285
    %v6287 = vshrl.u32 %v6257, 16
    %v6289 = vor.u32 %v6287, %v6285
    %v6291 = vshll.u32 %v6258, 16
    %v6293 = vrot.slane %v6291, 1
    %v6294 = vsel %vm1527, %v6289, %v6293
    %v6313 = vunpack.c.l.b16 %v6259
    %v6314 = vunpack.c.l.b16 %v6260
    %v6315 = vunpack.c.l.b16 %v6261
    %v6316 = vunpack.c.l.b16 %v6262
    %v6317 = vunpack.c.l.b16 %v6263
    %v6318 = vunpack.c.l.b16 %v6264
    %v6319 = vunpack.c.l.b16 %v6265
    %v6320 = vunpack.c.l.b16 %v6266
    %v6321 = vunpack.c.l.b16 %v6267
    %v6322 = vunpack.c.l.b16 %v6268
    %v6323 = vunpack.c.l.b16 %v6269
    %v6324 = vunpack.c.l.b16 %v6270
    %v6325 = vunpack.c.l.b16 %v6271
    %v6326 = vunpack.c.l.b16 %v6272
    %v6327 = vunpack.c.l.b16 %v6273
    %v6328 = vunpack.c.l.b16 %v6274
    %v6329 = vpack.c.b16 %v6314, %v6313
    %v6330 = vpack.c.b16 %v6316, %v6315
    %v6331 = vpack.c.b16 %v6318, %v6317
    %v6332 = vpack.c.b16 %v6320, %v6319
    %v6333 = vpack.c.b16 %v6322, %v6321
    %v6334 = vpack.c.b16 %v6324, %v6323
    %v6335 = vpack.c.b16 %v6326, %v6325
    %v6336 = vpack.c.b16 %v6328, %v6327
    %6345 = vmatprep.subr.bf16.mxu0 0
    %6346 = vmatpush1.bf16.msra.mxu0 %v6329
    %6347 = vmatprep.subr.bf16.mxu0 0
    %6348 = vmatpush1.bf16.msra.mxu0 %v6330
    %6349 = vmatprep.subr.bf16.mxu0 0
    %6350 = vmatpush1.bf16.msra.mxu0 %v6331
    %6351 = vmatprep.subr.bf16.mxu0 0
    %6352 = vmatpush1.bf16.msra.mxu0 %v6332
    %6353 = vmatprep.subr.bf16.mxu0 0
    %6354 = vmatpush1.bf16.msra.mxu0 %v6333
    %6355 = vmatprep.subr.bf16.mxu0 0
    %6356 = vmatpush1.bf16.msra.mxu0 %v6334
    %6357 = vmatprep.subr.bf16.mxu0 0
    %6358 = vmatpush1.bf16.msra.mxu0 %v6335
    %6359 = vmatprep.subr.bf16.mxu0 0
    %6360 = vmatpush1.bf16.msra.mxu0 %v6336
    %6361 = vmatprep.subr.bf16.mxu0 0
    %6362 = vmatpush1.bf16.msra.mxu0 0
    %6363 = vmatprep.subr.bf16.mxu0 0
    %6364 = vmatpush1.bf16.msra.mxu0 0
    %6365 = vmatprep.subr.bf16.mxu0 0
    %6366 = vmatpush1.bf16.msra.mxu0 0
    %6367 = vmatprep.subr.bf16.mxu0 0
    %6368 = vmatpush1.bf16.msra.mxu0 0
    %6369 = vmatprep.subr.bf16.mxu0 0
    %6370 = vmatpush1.bf16.msra.mxu0 0
    %6371 = vmatprep.subr.bf16.mxu0 0
    %6372 = vmatpush1.bf16.msra.mxu0 0
    %6373 = vmatprep.subr.bf16.mxu0 0
    %6374 = vmatpush1.bf16.msra.mxu0 0
    %6375 = vmatprep.subr.bf16.mxu0 0
    %6376 = vmatpush1.bf16.msra.mxu0 0
    %6377 = vmatprep.mubr.bf16.mxu0 0
    %6378 = vmatmul.mubr.bf16.gmra.mrb[0].mxu0 %v6286
    %v6379 = vpop.f32.mrb[0].mxu0
    %v6380 = vadd.f32 0.0, %v6379
    %v6381 = vpop.f32.mrb[0].mxu0
    %v6382 = vpop.f32.mrb[0].mxu0
    %v6383 = vadd.f32 0.0, %v6382
    %v6384 = vpop.f32.mrb[0].mxu0
    %6385 = vmatprep.mubr.bf16.mxu0 0
    %6386 = vmatmul.mubr.bf16.gmra.mrb[0].mxu0 %v6294
    %v6387 = vpop.f32.mrb[0].mxu0
    %v6388 = vadd.f32 0.0, %v6387
    %v6389 = vpop.f32.mrb[0].mxu0
    %v6390 = vpop.f32.mrb[0].mxu0
    %v6391 = vadd.f32 0.0, %v6390
    %v6392 = vpop.f32.mrb[0].mxu0
    %6393 = vdwg.mxu0
    %v6410 = vunpack.c.l.b16 %v6240
    %v6411 = vunpack.c.l.b16 %v6241
    %v6412 = vunpack.c.l.b16 %v6242
    %v6413 = vunpack.c.l.b16 %v6243
    %v6414 = vunpack.c.l.b16 %v6244
    %v6415 = vunpack.c.l.b16 %v6245
    %v6416 = vunpack.c.l.b16 %v6246
    %v6417 = vunpack.c.l.b16 %v6247
    %v6418 = vunpack.c.l.b16 %v6248
    %v6419 = vunpack.c.l.b16 %v6249
    %v6420 = vunpack.c.l.b16 %v6250
    %v6421 = vunpack.c.l.b16 %v6251
    %v6422 = vunpack.c.l.b16 %v6252
    %v6423 = vunpack.c.l.b16 %v6253
    %v6424 = vunpack.c.l.b16 %v6254
    %v6425 = vunpack.c.l.b16 %v6255
    %v6426 = vpack.c.b16 %v6411, %v6410
    %v6427 = vpack.c.b16 %v6413, %v6412
    %v6428 = vpack.c.b16 %v6415, %v6414
    %v6429 = vpack.c.b16 %v6417, %v6416
    %v6430 = vpack.c.b16 %v6419, %v6418
    %v6431 = vpack.c.b16 %v6421, %v6420
    %v6432 = vpack.c.b16 %v6423, %v6422
    %v6433 = vpack.c.b16 %v6425, %v6424
    %6442 = vmatprep.subr.bf16.mxu0 0
    %6443 = vmatpush1.bf16.msra.mxu0 %v6426
    %6444 = vmatprep.subr.bf16.mxu0 0
    %6445 = vmatpush1.bf16.msra.mxu0 %v6427
    %6446 = vmatprep.subr.bf16.mxu0 0
    %6447 = vmatpush1.bf16.msra.mxu0 %v6428
    %6448 = vmatprep.subr.bf16.mxu0 0
    %6449 = vmatpush1.bf16.msra.mxu0 %v6429
    %6450 = vmatprep.subr.bf16.mxu0 0
    %6451 = vmatpush1.bf16.msra.mxu0 %v6430
    %6452 = vmatprep.subr.bf16.mxu0 0
    %6453 = vmatpush1.bf16.msra.mxu0 %v6431
    %6454 = vmatprep.subr.bf16.mxu0 0
    %6455 = vmatpush1.bf16.msra.mxu0 %v6432
    %6456 = vmatprep.subr.bf16.mxu0 0
    %6457 = vmatpush1.bf16.msra.mxu0 %v6433
    %6458 = vmatprep.subr.bf16.mxu0 0
    %6459 = vmatpush1.bf16.msra.mxu0 0
    %6460 = vmatprep.subr.bf16.mxu0 0
    %6461 = vmatpush1.bf16.msra.mxu0 0
    %6462 = vmatprep.subr.bf16.mxu0 0
    %6463 = vmatpush1.bf16.msra.mxu0 0
    %6464 = vmatprep.subr.bf16.mxu0 0
    %6465 = vmatpush1.bf16.msra.mxu0 0
    %6466 = vmatprep.subr.bf16.mxu0 0
    %6467 = vmatpush1.bf16.msra.mxu0 0
    %6468 = vmatprep.subr.bf16.mxu0 0
    %6469 = vmatpush1.bf16.msra.mxu0 0
    %6470 = vmatprep.subr.bf16.mxu0 0
    %6471 = vmatpush1.bf16.msra.mxu0 0
    %6472 = vmatprep.subr.bf16.mxu0 0
    %6473 = vmatpush1.bf16.msra.mxu0 0
    %6474 = vmatprep.mubr.bf16.mxu0 0
    %6475 = vmatmul.mubr.bf16.gmra.mrb[0].mxu0 %v6238
    %v6476 = vpop.f32.mrb[0].mxu0
    %v6477 = vadd.f32 %v6380, %v6476
    %v6478 = vpop.f32.mrb[0].mxu0
    %v6479 = vpop.f32.mrb[0].mxu0
    %v6480 = vadd.f32 %v6383, %v6479
    %v6481 = vpop.f32.mrb[0].mxu0
    %6482 = vmatprep.mubr.bf16.mxu0 0
    %6483 = vmatmul.mubr.bf16.gmra.mrb[0].mxu0 %v6239
    %v6484 = vpop.f32.mrb[0].mxu0
    %v6485 = vadd.f32 %v6388, %v6484
    %v6486 = vpop.f32.mrb[0].mxu0
    %v6487 = vpop.f32.mrb[0].mxu0
    %v6488 = vadd.f32 %v6391, %v6487
    %v6489 = vpop.f32.mrb[0].mxu0
    %6490 = vdwg.mxu0
    %v6491 = vld [vmem:[#allocation4] sm:$0xfe]
    %v6492 = vld [vmem:[%s4 + $0x80] sm:$0xf]
    %v6493 = vld [vmem:[%s4 + $0x84] sm:$0xf]
    %v6494 = vld [vmem:[%s4 + $0x88] sm:$0xf]
    %v6495 = vld [vmem:[%s4 + $0x8c] sm:$0xf]
    %v6496 = vld [vmem:[%s4 + $0x90] sm:$0xf]
    %v6497 = vld [vmem:[%s4 + $0x94] sm:$0xf]
    %v6498 = vld [vmem:[%s4 + $0x98] sm:$0xf]
    %v6499 = vld [vmem:[%s4 + $0x9c] sm:$0xf]
    %v6500 = vld [vmem:[%s4 + $0xa0] sm:$0xf]
    %v6501 = vld [vmem:[%s4 + $0xa4] sm:$0xf]
    %v6502 = vld [vmem:[%s4 + $0xa8] sm:$0xf]
    %v6503 = vld [vmem:[%s4 + $0xac] sm:$0xf]
    %v6504 = vld [vmem:[%s4 + $0xb0] sm:$0xf]
    %v6505 = vld [vmem:[%s4 + $0xb4] sm:$0xf]
    %v6506 = vld [vmem:[%s4 + $0xb8] sm:$0xf]
    %v6507 = vld [vmem:[%s4 + $0xbc] sm:$0xf]
    %v6511 = vrot.slane %v6491, 1
    %v6512 = vrot.slane %v6257, 1
    %v6513 = vsel %vm2052, %v6511, %v6512
    %v6514 = vrot.slane %v6258, 1
    %v6515 = vsel %vm2052, %v6512, %v6514
    %v6534 = vunpack.c.l.b16 %v6492
    %v6535 = vunpack.c.l.b16 %v6493
    %v6536 = vunpack.c.l.b16 %v6494
    %v6537 = vunpack.c.l.b16 %v6495
    %v6538 = vunpack.c.l.b16 %v6496
    %v6539 = vunpack.c.l.b16 %v6497
    %v6540 = vunpack.c.l.b16 %v6498
    %v6541 = vunpack.c.l.b16 %v6499
    %v6542 = vunpack.c.l.b16 %v6500
    %v6543 = vunpack.c.l.b16 %v6501
    %v6544 = vunpack.c.l.b16 %v6502
    %v6545 = vunpack.c.l.b16 %v6503
    %v6546 = vunpack.c.l.b16 %v6504
    %v6547 = vunpack.c.l.b16 %v6505
    %v6548 = vunpack.c.l.b16 %v6506
    %v6549 = vunpack.c.l.b16 %v6507
    %v6550 = vpack.c.b16 %v6535, %v6534
    %v6551 = vpack.c.b16 %v6537, %v6536
    %v6552 = vpack.c.b16 %v6539, %v6538
    %v6553 = vpack.c.b16 %v6541, %v6540
    %v6554 = vpack.c.b16 %v6543, %v6542
    %v6555 = vpack.c.b16 %v6545, %v6544
    %v6556 = vpack.c.b16 %v6547, %v6546
    %v6557 = vpack.c.b16 %v6549, %v6548
    %6566 = vmatprep.subr.bf16.mxu0 0
    %6567 = vmatpush1.bf16.msra.mxu0 %v6550
    %6568 = vmatprep.subr.bf16.mxu0 0
    %6569 = vmatpush1.bf16.msra.mxu0 %v6551
    %6570 = vmatprep.subr.bf16.mxu0 0
    %6571 = vmatpush1.bf16.msra.mxu0 %v6552
    %6572 = vmatprep.subr.bf16.mxu0 0
    %6573 = vmatpush1.bf16.msra.mxu0 %v6553
    %6574 = vmatprep.subr.bf16.mxu0 0
    %6575 = vmatpush1.bf16.msra.mxu0 %v6554
    %6576 = vmatprep.subr.bf16.mxu0 0
    %6577 = vmatpush1.bf16.msra.mxu0 %v6555
    %6578 = vmatprep.subr.bf16.mxu0 0
    %6579 = vmatpush1.bf16.msra.mxu0 %v6556
    %6580 = vmatprep.subr.bf16.mxu0 0
    %6581 = vmatpush1.bf16.msra.mxu0 %v6557
    %6582 = vmatprep.subr.bf16.mxu0 0
    %6583 = vmatpush1.bf16.msra.mxu0 0
    %6584 = vmatprep.subr.bf16.mxu0 0
    %6585 = vmatpush1.bf16.msra.mxu0 0
    %6586 = vmatprep.subr.bf16.mxu0 0
    %6587 = vmatpush1.bf16.msra.mxu0 0
    %6588 = vmatprep.subr.bf16.mxu0 0
    %6589 = vmatpush1.bf16.msra.mxu0 0
    %6590 = vmatprep.subr.bf16.mxu0 0
    %6591 = vmatpush1.bf16.msra.mxu0 0
    %6592 = vmatprep.subr.bf16.mxu0 0
    %6593 = vmatpush1.bf16.msra.mxu0 0
    %6594 = vmatprep.subr.bf16.mxu0 0
    %6595 = vmatpush1.bf16.msra.mxu0 0
    %6596 = vmatprep.subr.bf16.mxu0 0
    %6597 = vmatpush1.bf16.msra.mxu0 0
    %6598 = vmatprep.mubr.bf16.mxu0 0
    %6599 = vmatmul.mubr.bf16.gmra.mrb[0].mxu0 %v6513
    %v6600 = vpop.f32.mrb[0].mxu0
    %v6601 = vadd.f32 0.0, %v6600
    %v6602 = vpop.f32.mrb[0].mxu0
    %v6603 = vpop.f32.mrb[0].mxu0
    %v6604 = vadd.f32 0.0, %v6603
    %v6605 = vpop.f32.mrb[0].mxu0
    %6606 = vmatprep.mubr.bf16.mxu0 0
    %6607 = vmatmul.mubr.bf16.gmra.mrb[0].mxu0 %v6515
    %v6608 = vpop.f32.mrb[0].mxu0
    %v6609 = vadd.f32 0.0, %v6608
    %v6610 = vpop.f32.mrb[0].mxu0
    %v6611 = vpop.f32.mrb[0].mxu0
    %v6612 = vadd.f32 0.0, %v6611
    %v6613 = vpop.f32.mrb[0].mxu0
    %6614 = vdwg.mxu0
    %v6615 = vadd.f32 %v6477, %v6601
    %v6616 = vadd.f32 %v6480, %v6604
    %v6617 = vadd.f32 %v6485, %v6609
    %v6618 = vadd.f32 %v6488, %v6612
    %v6619 = vld [vmem:[#allocation4] sm:$0xfc]
    %v6620 = vld [vmem:[#allocation4 + $0x10] sm:$0x3]
    %v6621 = vld [vmem:[%s4 + $0xc0] sm:$0xf]
    %v6622 = vld [vmem:[%s4 + $0xc4] sm:$0xf]
    %v6623 = vld [vmem:[%s4 + $0xc8] sm:$0xf]
    %v6624 = vld [vmem:[%s4 + $0xcc] sm:$0xf]
    %v6625 = vld [vmem:[%s4 + $0xd0] sm:$0xf]
    %v6626 = vld [vmem:[%s4 + $0xd4] sm:$0xf]
    %v6627 = vld [vmem:[%s4 + $0xd8] sm:$0xf]
    %v6628 = vld [vmem:[%s4 + $0xdc] sm:$0xf]
    %v6629 = vld [vmem:[%s4 + $0xe0] sm:$0xf]
    %v6630 = vld [vmem:[%s4 + $0xe4] sm:$0xf]
    %v6631 = vld [vmem:[%s4 + $0xe8] sm:$0xf]
    %v6632 = vld [vmem:[%s4 + $0xec] sm:$0xf]
    %v6633 = vld [vmem:[%s4 + $0xf0] sm:$0xf]
    %v6634 = vld [vmem:[%s4 + $0xf4] sm:$0xf]
    %v6635 = vld [vmem:[%s4 + $0xf8] sm:$0xf]
    %v6636 = vld [vmem:[%s4 + $0xfc] sm:$0xf]
    %v6639 = vrot.slane %v6619, 2
    %v6640 = vrot.slane %v6257, 2
    %v6641 = vsel %vm3056, %v6639, %v6640
    %v6642 = vrot.slane %v6620, 2
    %v6643 = vsel %vm3056, %v6640, %v6642
    %v6662 = vunpack.c.l.b16 %v6621
    %v6663 = vunpack.c.l.b16 %v6622
    %v6664 = vunpack.c.l.b16 %v6623
    %v6665 = vunpack.c.l.b16 %v6624
    %v6666 = vunpack.c.l.b16 %v6625
    %v6667 = vunpack.c.l.b16 %v6626
    %v6668 = vunpack.c.l.b16 %v6627
    %v6669 = vunpack.c.l.b16 %v6628
    %v6670 = vunpack.c.l.b16 %v6629
    %v6671 = vunpack.c.l.b16 %v6630
    %v6672 = vunpack.c.l.b16 %v6631
    %v6673 = vunpack.c.l.b16 %v6632
    %v6674 = vunpack.c.l.b16 %v6633
    %v6675 = vunpack.c.l.b16 %v6634
    %v6676 = vunpack.c.l.b16 %v6635
    %v6677 = vunpack.c.l.b16 %v6636
    %v6678 = vpack.c.b16 %v6663, %v6662
    %v6679 = vpack.c.b16 %v6665, %v6664
    %v6680 = vpack.c.b16 %v6667, %v6666
    %v6681 = vpack.c.b16 %v6669, %v6668
    %v6682 = vpack.c.b16 %v6671, %v6670
    %v6683 = vpack.c.b16 %v6673, %v6672
    %v6684 = vpack.c.b16 %v6675, %v6674
    %v6685 = vpack.c.b16 %v6677, %v6676
    %6694 = vmatprep.subr.bf16.mxu0 0
    %6695 = vmatpush1.bf16.msra.mxu0 %v6678
    %6696 = vmatprep.subr.bf16.mxu0 0
    %6697 = vmatpush1.bf16.msra.mxu0 %v6679
    %6698 = vmatprep.subr.bf16.mxu0 0
    %6699 = vmatpush1.bf16.msra.mxu0 %v6680
    %6700 = vmatprep.subr.bf16.mxu0 0
    %6701 = vmatpush1.bf16.msra.mxu0 %v6681
    %6702 = vmatprep.subr.bf16.mxu0 0
    %6703 = vmatpush1.bf16.msra.mxu0 %v6682
    %6704 = vmatprep.subr.bf16.mxu0 0
    %6705 = vmatpush1.bf16.msra.mxu0 %v6683
    %6706 = vmatprep.subr.bf16.mxu0 0
    %6707 = vmatpush1.bf16.msra.mxu0 %v6684
    %6708 = vmatprep.subr.bf16.mxu0 0
    %6709 = vmatpush1.bf16.msra.mxu0 %v6685
    %6710 = vmatprep.subr.bf16.mxu0 0
    %6711 = vmatpush1.bf16.msra.mxu0 0
    %6712 = vmatprep.subr.bf16.mxu0 0
    %6713 = vmatpush1.bf16.msra.mxu0 0
    %6714 = vmatprep.subr.bf16.mxu0 0
    %6715 = vmatpush1.bf16.msra.mxu0 0
    %6716 = vmatprep.subr.bf16.mxu0 0
    %6717 = vmatpush1.bf16.msra.mxu0 0
    %6718 = vmatprep.subr.bf16.mxu0 0
    %6719 = vmatpush1.bf16.msra.mxu0 0
    %6720 = vmatprep.subr.bf16.mxu0 0
    %6721 = vmatpush1.bf16.msra.mxu0 0
    %6722 = vmatprep.subr.bf16.mxu0 0
    %6723 = vmatpush1.bf16.msra.mxu0 0
    %6724 = vmatprep.subr.bf16.mxu0 0
    %6725 = vmatpush1.bf16.msra.mxu0 0
    %6726 = vmatprep.mubr.bf16.mxu0 0
    %6727 = vmatmul.mubr.bf16.gmra.mrb[0].mxu0 %v6641
    %v6728 = vpop.f32.mrb[0].mxu0
    %v6729 = vadd.f32 0.0, %v6728
    %v6730 = vpop.f32.mrb[0].mxu0
    %v6731 = vpop.f32.mrb[0].mxu0
    %v6732 = vadd.f32 0.0, %v6731
    %v6733 = vpop.f32.mrb[0].mxu0
    %6734 = vmatprep.mubr.bf16.mxu0 0
    %6735 = vmatmul.mubr.bf16.gmra.mrb[0].mxu0 %v6643
    %v6736 = vpop.f32.mrb[0].mxu0
    %v6737 = vadd.f32 0.0, %v6736
    %v6738 = vpop.f32.mrb[0].mxu0
    %v6739 = vpop.f32.mrb[0].mxu0
    %v6740 = vadd.f32 0.0, %v6739
    %v6741 = vpop.f32.mrb[0].mxu0
    %6742 = vdwg.mxu0
    %v6743 = vadd.f32 %v6615, %v6729
    %v6744 = vadd.f32 %v6616, %v6732
    %v6745 = vadd.f32 %v6617, %v6737
    %v6746 = vadd.f32 %v6618, %v6740
    %v6747 = vld [vmem:[#allocation4 + $0x10] sm:$0x7]
    %v6748 = vld [vmem:[%s4 + $0x100] sm:$0xf]
    %v6749 = vld [vmem:[%s4 + $0x104] sm:$0xf]
    %v6750 = vld [vmem:[%s4 + $0x108] sm:$0xf]
    %v6751 = vld [vmem:[%s4 + $0x10c] sm:$0xf]
    %v6752 = vld [vmem:[%s4 + $0x110] sm:$0xf]
    %v6753 = vld [vmem:[%s4 + $0x114] sm:$0xf]
    %v6754 = vld [vmem:[%s4 + $0x118] sm:$0xf]
    %v6755 = vld [vmem:[%s4 + $0x11c] sm:$0xf]
    %v6756 = vld [vmem:[%s4 + $0x120] sm:$0xf]
    %v6757 = vld [vmem:[%s4 + $0x124] sm:$0xf]
    %v6758 = vld [vmem:[%s4 + $0x128] sm:$0xf]
    %v6759 = vld [vmem:[%s4 + $0x12c] sm:$0xf]
    %v6760 = vld [vmem:[%s4 + $0x130] sm:$0xf]
    %v6761 = vld [vmem:[%s4 + $0x134] sm:$0xf]
    %v6762 = vld [vmem:[%s4 + $0x138] sm:$0xf]
    %v6763 = vld [vmem:[%s4 + $0x13c] sm:$0xf]
    %v6765 = vshrl.u32 %v6619, 16
    %v6767 = vrot.slane %v6765, 2
    %v6768 = vshll.u32 %v6619, 16
    %v6770 = vrot.slane %v6768, 3
    %v6771 = vor.u32 %v6767, %v6770
    %v6772 = vrot.slane %v6287, 2
    %v6773 = vrot.slane %v6283, 3
    %v6774 = vor.u32 %v6772, %v6773
    %v6775 = vsel %vm3690, %v6771, %v6774
    %v6777 = vshrl.u32 %v6747, 16
    %v6779 = vrot.slane %v6777, 2
    %v6780 = vshll.u32 %v6747, 16
    %v6782 = vrot.slane %v6780, 3
    %v6783 = vor.u32 %v6779, %v6782
    %v6784 = vsel %vm3690, %v6774, %v6783
    %v6803 = vunpack.c.l.b16 %v6748
    %v6804 = vunpack.c.l.b16 %v6749
    %v6805 = vunpack.c.l.b16 %v6750
    %v6806 = vunpack.c.l.b16 %v6751
    %v6807 = vunpack.c.l.b16 %v6752
    %v6808 = vunpack.c.l.b16 %v6753
    %v6809 = vunpack.c.l.b16 %v6754
    %v6810 = vunpack.c.l.b16 %v6755
    %v6811 = vunpack.c.l.b16 %v6756
    %v6812 = vunpack.c.l.b16 %v6757
    %v6813 = vunpack.c.l.b16 %v6758
    %v6814 = vunpack.c.l.b16 %v6759
    %v6815 = vunpack.c.l.b16 %v6760
    %v6816 = vunpack.c.l.b16 %v6761
    %v6817 = vunpack.c.l.b16 %v6762
    %v6818 = vunpack.c.l.b16 %v6763
    %v6819 = vpack.c.b16 %v6804, %v6803
    %v6820 = vpack.c.b16 %v6806, %v6805
    %v6821 = vpack.c.b16 %v6808, %v6807
    %v6822 = vpack.c.b16 %v6810, %v6809
    %v6823 = vpack.c.b16 %v6812, %v6811
    %v6824 = vpack.c.b16 %v6814, %v6813
    %v6825 = vpack.c.b16 %v6816, %v6815
    %v6826 = vpack.c.b16 %v6818, %v6817
    %6835 = vmatprep.subr.bf16.mxu0 0
    %6836 = vmatpush1.bf16.msra.mxu0 %v6819
    %6837 = vmatprep.subr.bf16.mxu0 0
    %6838 = vmatpush1.bf16.msra.mxu0 %v6820
    %6839 = vmatprep.subr.bf16.mxu0 0
    %6840 = vmatpush1.bf16.msra.mxu0 %v6821
    %6841 = vmatprep.subr.bf16.mxu0 0
    %6842 = vmatpush1.bf16.msra.mxu0 %v6822
    %6843 = vmatprep.subr.bf16.mxu0 0
    %6844 = vmatpush1.bf16.msra.mxu0 %v6823
    %6845 = vmatprep.subr.bf16.mxu0 0
    %6846 = vmatpush1.bf16.msra.mxu0 %v6824
    %6847 = vmatprep.subr.bf16.mxu0 0
    %6848 = vmatpush1.bf16.msra.mxu0 %v6825
    %6849 = vmatprep.subr.bf16.mxu0 0
    %6850 = vmatpush1.bf16.msra.mxu0 %v6826
    %6851 = vmatprep.subr.bf16.mxu0 0
    %6852 = vmatpush1.bf16.msra.mxu0 0
    %6853 = vmatprep.subr.bf16.mxu0 0
    %6854 = vmatpush1.bf16.msra.mxu0 0
    %6855 = vmatprep.subr.bf16.mxu0 0
    %6856 = vmatpush1.bf16.msra.mxu0 0
    %6857 = vmatprep.subr.bf16.mxu0 0
    %6858 = vmatpush1.bf16.msra.mxu0 0
    %6859 = vmatprep.subr.bf16.mxu0 0
    %6860 = vmatpush1.bf16.msra.mxu0 0
    %6861 = vmatprep.subr.bf16.mxu0 0
    %6862 = vmatpush1.bf16.msra.mxu0 0
    %6863 = vmatprep.subr.bf16.mxu0 0
    %6864 = vmatpush1.bf16.msra.mxu0 0
    %6865 = vmatprep.subr.bf16.mxu0 0
    %6866 = vmatpush1.bf16.msra.mxu0 0
    %6867 = vmatprep.mubr.bf16.mxu0 0
    %6868 = vmatmul.mubr.bf16.gmra.mrb[0].mxu0 %v6775
    %v6869 = vpop.f32.mrb[0].mxu0
    %v6870 = vadd.f32 0.0, %v6869
    %v6871 = vpop.f32.mrb[0].mxu0
    %v6872 = vpop.f32.mrb[0].mxu0
    %v6873 = vadd.f32 0.0, %v6872
    %v6874 = vpop.f32.mrb[0].mxu0
    %6875 = vmatprep.mubr.bf16.mxu0 0
    %6876 = vmatmul.mubr.bf16.gmra.mrb[0].mxu0 %v6784
    %v6877 = vpop.f32.mrb[0].mxu0
    %v6878 = vadd.f32 0.0, %v6877
    %v6879 = vpop.f32.mrb[0].mxu0
    %v6880 = vpop.f32.mrb[0].mxu0
    %v6881 = vadd.f32 0.0, %v6880
    %v6882 = vpop.f32.mrb[0].mxu0
    %6883 = vdwg.mxu0
    %v6884 = vadd.f32 %v6743, %v6870
    %v6885 = vadd.f32 %v6744, %v6873
    %v6886 = vadd.f32 %v6745, %v6878
    %v6887 = vadd.f32 %v6746, %v6881
    %v6888 = vld [vmem:[#allocation4] sm:$0xf8]
    %v6889 = vld [vmem:[%s4 + $0x140] sm:$0xf]
    %v6890 = vld [vmem:[%s4 + $0x144] sm:$0xf]
    %v6891 = vld [vmem:[%s4 + $0x148] sm:$0xf]
    %v6892 = vld [vmem:[%s4 + $0x14c] sm:$0xf]
    %v6893 = vld [vmem:[%s4 + $0x150] sm:$0xf]
    %v6894 = vld [vmem:[%s4 + $0x154] sm:$0xf]
    %v6895 = vld [vmem:[%s4 + $0x158] sm:$0xf]
    %v6896 = vld [vmem:[%s4 + $0x15c] sm:$0xf]
    %v6897 = vld [vmem:[%s4 + $0x160] sm:$0xf]
    %v6898 = vld [vmem:[%s4 + $0x164] sm:$0xf]
    %v6899 = vld [vmem:[%s4 + $0x168] sm:$0xf]
    %v6900 = vld [vmem:[%s4 + $0x16c] sm:$0xf]
    %v6901 = vld [vmem:[%s4 + $0x170] sm:$0xf]
    %v6902 = vld [vmem:[%s4 + $0x174] sm:$0xf]
    %v6903 = vld [vmem:[%s4 + $0x178] sm:$0xf]
    %v6904 = vld [vmem:[%s4 + $0x17c] sm:$0xf]
    %v6907 = vrot.slane %v6888, 3
    %v6908 = vrot.slane %v6257, 3
    %v6909 = vsel %vm4060, %v6907, %v6908
    %v6910 = vrot.slane %v6747, 3
    %v6911 = vsel %vm4060, %v6908, %v6910
    %v6930 = vunpack.c.l.b16 %v6889
    %v6931 = vunpack.c.l.b16 %v6890
    %v6932 = vunpack.c.l.b16 %v6891
    %v6933 = vunpack.c.l.b16 %v6892
    %v6934 = vunpack.c.l.b16 %v6893
    %v6935 = vunpack.c.l.b16 %v6894
    %v6936 = vunpack.c.l.b16 %v6895
    %v6937 = vunpack.c.l.b16 %v6896
    %v6938 = vunpack.c.l.b16 %v6897
    %v6939 = vunpack.c.l.b16 %v6898
    %v6940 = vunpack.c.l.b16 %v6899
    %v6941 = vunpack.c.l.b16 %v6900
    %v6942 = vunpack.c.l.b16 %v6901
    %v6943 = vunpack.c.l.b16 %v6902
    %v6944 = vunpack.c.l.b16 %v6903
    %v6945 = vunpack.c.l.b16 %v6904
    %v6946 = vpack.c.b16 %v6931, %v6930
    %v6947 = vpack.c.b16 %v6933, %v6932
    %v6948 = vpack.c.b16 %v6935, %v6934
    %v6949 = vpack.c.b16 %v6937, %v6936
    %v6950 = vpack.c.b16 %v6939, %v6938
    %v6951 = vpack.c.b16 %v6941, %v6940
    %v6952 = vpack.c.b16 %v6943, %v6942
    %v6953 = vpack.c.b16 %v6945, %v6944
    %6962 = vmatprep.subr.bf16.mxu0 0
    %6963 = vmatpush1.bf16.msra.mxu0 %v6946
    %6964 = vmatprep.subr.bf16.mxu0 0
    %6965 = vmatpush1.bf16.msra.mxu0 %v6947
    %6966 = vmatprep.subr.bf16.mxu0 0
    %6967 = vmatpush1.bf16.msra.mxu0 %v6948
    %6968 = vmatprep.subr.bf16.mxu0 0
    %6969 = vmatpush1.bf16.msra.mxu0 %v6949
    %6970 = vmatprep.subr.bf16.mxu0 0
    %6971 = vmatpush1.bf16.msra.mxu0 %v6950
    %6972 = vmatprep.subr.bf16.mxu0 0
    %6973 = vmatpush1.bf16.msra.mxu0 %v6951
    %6974 = vmatprep.subr.bf16.mxu0 0
    %6975 = vmatpush1.bf16.msra.mxu0 %v6952
    %6976 = vmatprep.subr.bf16.mxu0 0
    %6977 = vmatpush1.bf16.msra.mxu0 %v6953
    %6978 = vmatprep.subr.bf16.mxu0 0
    %6979 = vmatpush1.bf16.msra.mxu0 0
    %6980 = vmatprep.subr.bf16.mxu0 0
    %6981 = vmatpush1.bf16.msra.mxu0 0
    %6982 = vmatprep.subr.bf16.mxu0 0
    %6983 = vmatpush1.bf16.msra.mxu0 0
    %6984 = vmatprep.subr.bf16.mxu0 0
    %6985 = vmatpush1.bf16.msra.mxu0 0
    %6986 = vmatprep.subr.bf16.mxu0 0
    %6987 = vmatpush1.bf16.msra.mxu0 0
    %6988 = vmatprep.subr.bf16.mxu0 0
    %6989 = vmatpush1.bf16.msra.mxu0 0
    %6990 = vmatprep.subr.bf16.mxu0 0
    %6991 = vmatpush1.bf16.msra.mxu0 0
    %6992 = vmatprep.subr.bf16.mxu0 0
    %6993 = vmatpush1.bf16.msra.mxu0 0
    %6994 = vmatprep.mubr.bf16.mxu0 0
    %6995 = vmatmul.mubr.bf16.gmra.mrb[0].mxu0 %v6909
    %v6996 = vpop.f32.mrb[0].mxu0
    %v6997 = vadd.f32 0.0, %v6996
    %v6998 = vpop.f32.mrb[0].mxu0
    %v6999 = vpop.f32.mrb[0].mxu0
    %v7000 = vadd.f32 0.0, %v6999
    %v7001 = vpop.f32.mrb[0].mxu0
    %7002 = vmatprep.mubr.bf16.mxu0 0
    %7003 = vmatmul.mubr.bf16.gmra.mrb[0].mxu0 %v6911
    %v7004 = vpop.f32.mrb[0].mxu0
    %v7005 = vadd.f32 0.0, %v7004
    %v7006 = vpop.f32.mrb[0].mxu0
    %v7007 = vpop.f32.mrb[0].mxu0
    %v7008 = vadd.f32 0.0, %v7007
    %v7009 = vpop.f32.mrb[0].mxu0
    %7010 = vdwg.mxu0
    %v7011 = vadd.f32 %v6884, %v6997
    %v7012 = vadd.f32 %v6885, %v7000
    %v7013 = vadd.f32 %v6886, %v7005
    %v7014 = vadd.f32 %v6887, %v7008
    %v7015 = vld [vmem:[#allocation4] sm:$0xf0]
    %v7016 = vld [vmem:[#allocation4 + $0x10] sm:$0xf]
    %v7017 = vld [vmem:[%s4 + $0x180] sm:$0xf]
    %v7018 = vld [vmem:[%s4 + $0x184] sm:$0xf]
    %v7019 = vld [vmem:[%s4 + $0x188] sm:$0xf]
    %v7020 = vld [vmem:[%s4 + $0x18c] sm:$0xf]
    %v7021 = vld [vmem:[%s4 + $0x190] sm:$0xf]
    %v7022 = vld [vmem:[%s4 + $0x194] sm:$0xf]
    %v7023 = vld [vmem:[%s4 + $0x198] sm:$0xf]
    %v7024 = vld [vmem:[%s4 + $0x19c] sm:$0xf]
    %v7025 = vld [vmem:[%s4 + $0x1a0] sm:$0xf]
    %v7026 = vld [vmem:[%s4 + $0x1a4] sm:$0xf]
    %v7027 = vld [vmem:[%s4 + $0x1a8] sm:$0xf]
    %v7028 = vld [vmem:[%s4 + $0x1ac] sm:$0xf]
    %v7029 = vld [vmem:[%s4 + $0x1b0] sm:$0xf]
    %v7030 = vld [vmem:[%s4 + $0x1b4] sm:$0xf]
    %v7031 = vld [vmem:[%s4 + $0x1b8] sm:$0xf]
    %v7032 = vld [vmem:[%s4 + $0x1bc] sm:$0xf]
    %v7035 = vrot.slane %v7015, 4
    %v7036 = vrot.slane %v6257, 4
    %v7037 = vsel %vm951, %v7035, %v7036
    %v7038 = vrot.slane %v7016, 4
    %v7039 = vsel %vm951, %v7036, %v7038
    %v7058 = vunpack.c.l.b16 %v7017
    %v7059 = vunpack.c.l.b16 %v7018
    %v7060 = vunpack.c.l.b16 %v7019
    %v7061 = vunpack.c.l.b16 %v7020
    %v7062 = vunpack.c.l.b16 %v7021
    %v7063 = vunpack.c.l.b16 %v7022
    %v7064 = vunpack.c.l.b16 %v7023
    %v7065 = vunpack.c.l.b16 %v7024
    %v7066 = vunpack.c.l.b16 %v7025
    %v7067 = vunpack.c.l.b16 %v7026
    %v7068 = vunpack.c.l.b16 %v7027
    %v7069 = vunpack.c.l.b16 %v7028
    %v7070 = vunpack.c.l.b16 %v7029
    %v7071 = vunpack.c.l.b16 %v7030
    %v7072 = vunpack.c.l.b16 %v7031
    %v7073 = vunpack.c.l.b16 %v7032
    %v7074 = vpack.c.b16 %v7059, %v7058
    %v7075 = vpack.c.b16 %v7061, %v7060
    %v7076 = vpack.c.b16 %v7063, %v7062
    %v7077 = vpack.c.b16 %v7065, %v7064
    %v7078 = vpack.c.b16 %v7067, %v7066
    %v7079 = vpack.c.b16 %v7069, %v7068
    %v7080 = vpack.c.b16 %v7071, %v7070
    %v7081 = vpack.c.b16 %v7073, %v7072
    %7090 = vmatprep.subr.bf16.mxu0 0
    %7091 = vmatpush1.bf16.msra.mxu0 %v7074
    %7092 = vmatprep.subr.bf16.mxu0 0
    %7093 = vmatpush1.bf16.msra.mxu0 %v7075
    %7094 = vmatprep.subr.bf16.mxu0 0
    %7095 = vmatpush1.bf16.msra.mxu0 %v7076
    %7096 = vmatprep.subr.bf16.mxu0 0
    %7097 = vmatpush1.bf16.msra.mxu0 %v7077
    %7098 = vmatprep.subr.bf16.mxu0 0
    %7099 = vmatpush1.bf16.msra.mxu0 %v7078
    %7100 = vmatprep.subr.bf16.mxu0 0
    %7101 = vmatpush1.bf16.msra.mxu0 %v7079
    %7102 = vmatprep.subr.bf16.mxu0 0
    %7103 = vmatpush1.bf16.msra.mxu0 %v7080
    %7104 = vmatprep.subr.bf16.mxu0 0
    %7105 = vmatpush1.bf16.msra.mxu0 %v7081
    %7106 = vmatprep.subr.bf16.mxu0 0
    %7107 = vmatpush1.bf16.msra.mxu0 0
    %7108 = vmatprep.subr.bf16.mxu0 0
    %7109 = vmatpush1.bf16.msra.mxu0 0
    %7110 = vmatprep.subr.bf16.mxu0 0
    %7111 = vmatpush1.bf16.msra.mxu0 0
    %7112 = vmatprep.subr.bf16.mxu0 0
    %7113 = vmatpush1.bf16.msra.mxu0 0
    %7114 = vmatprep.subr.bf16.mxu0 0
    %7115 = vmatpush1.bf16.msra.mxu0 0
    %7116 = vmatprep.subr.bf16.mxu0 0
    %7117 = vmatpush1.bf16.msra.mxu0 0
    %7118 = vmatprep.subr.bf16.mxu0 0
    %7119 = vmatpush1.bf16.msra.mxu0 0
    %7120 = vmatprep.subr.bf16.mxu0 0
    %7121 = vmatpush1.bf16.msra.mxu0 0
    %7122 = vmatprep.mubr.bf16.mxu0 0
    %7123 = vmatmul.mubr.bf16.gmra.mrb[0].mxu0 %v7037
    %v7124 = vpop.f32.mrb[0].mxu0
    %v7125 = vadd.f32 0.0, %v7124
    %v7126 = vpop.f32.mrb[0].mxu0
    %v7127 = vpop.f32.mrb[0].mxu0
    %v7128 = vadd.f32 0.0, %v7127
    %v7129 = vpop.f32.mrb[0].mxu0
    %7130 = vmatprep.mubr.bf16.mxu0 0
    %7131 = vmatmul.mubr.bf16.gmra.mrb[0].mxu0 %v7039
    %v7132 = vpop.f32.mrb[0].mxu0
    %v7133 = vadd.f32 0.0, %v7132
    %v7134 = vpop.f32.mrb[0].mxu0
    %v7135 = vpop.f32.mrb[0].mxu0
    %v7136 = vadd.f32 0.0, %v7135
    %v7137 = vpop.f32.mrb[0].mxu0
    %7138 = vdwg.mxu0
    %v7139 = vadd.f32 %v7011, %v7125
    %v7140 = vadd.f32 %v7012, %v7128
    %v7141 = vadd.f32 %v7013, %v7133
    %v7142 = vadd.f32 %v7014, %v7136
    %v7143 = vld [vmem:[#allocation4 + $0x10] sm:$0x1f]
    %v7144 = vld [vmem:[%s4 + $0x1c0] sm:$0xf]
    %v7145 = vld [vmem:[%s4 + $0x1c4] sm:$0xf]
    %v7146 = vld [vmem:[%s4 + $0x1c8] sm:$0xf]
    %v7147 = vld [vmem:[%s4 + $0x1cc] sm:$0xf]
    %v7148 = vld [vmem:[%s4 + $0x1d0] sm:$0xf]
    %v7149 = vld [vmem:[%s4 + $0x1d4] sm:$0xf]
    %v7150 = vld [vmem:[%s4 + $0x1d8] sm:$0xf]
    %v7151 = vld [vmem:[%s4 + $0x1dc] sm:$0xf]
    %v7152 = vld [vmem:[%s4 + $0x1e0] sm:$0xf]
    %v7153 = vld [vmem:[%s4 + $0x1e4] sm:$0xf]
    %v7154 = vld [vmem:[%s4 + $0x1e8] sm:$0xf]
    %v7155 = vld [vmem:[%s4 + $0x1ec] sm:$0xf]
    %v7156 = vld [vmem:[%s4 + $0x1f0] sm:$0xf]
    %v7157 = vld [vmem:[%s4 + $0x1f4] sm:$0xf]
    %v7158 = vld [vmem:[%s4 + $0x1f8] sm:$0xf]
    %v7159 = vld [vmem:[%s4 + $0x1fc] sm:$0xf]
    %v7161 = vshrl.u32 %v7015, 16
    %v7163 = vrot.slane %v7161, 4
    %v7164 = vshll.u32 %v7015, 16
    %v7166 = vrot.slane %v7164, 5
    %v7167 = vor.u32 %v7163, %v7166
    %v7168 = vrot.slane %v6287, 4
    %v7169 = vrot.slane %v6283, 5
    %v7170 = vor.u32 %v7168, %v7169
    %v7171 = vsel %vm952, %v7167, %v7170
    %v7173 = vshrl.u32 %v7143, 16
    %v7175 = vrot.slane %v7173, 4
    %v7176 = vshll.u32 %v7143, 16
    %v7178 = vrot.slane %v7176, 5
    %v7179 = vor.u32 %v7175, %v7178
    %v7180 = vsel %vm952, %v7170, %v7179
    %v7199 = vunpack.c.l.b16 %v7144
    %v7200 = vunpack.c.l.b16 %v7145
    %v7201 = vunpack.c.l.b16 %v7146
    %v7202 = vunpack.c.l.b16 %v7147
    %v7203 = vunpack.c.l.b16 %v7148
    %v7204 = vunpack.c.l.b16 %v7149
    %v7205 = vunpack.c.l.b16 %v7150
    %v7206 = vunpack.c.l.b16 %v7151
    %v7207 = vunpack.c.l.b16 %v7152
    %v7208 = vunpack.c.l.b16 %v7153
    %v7209 = vunpack.c.l.b16 %v7154
    %v7210 = vunpack.c.l.b16 %v7155
    %v7211 = vunpack.c.l.b16 %v7156
    %v7212 = vunpack.c.l.b16 %v7157
    %v7213 = vunpack.c.l.b16 %v7158
    %v7214 = vunpack.c.l.b16 %v7159
    %v7215 = vpack.c.b16 %v7200, %v7199
    %v7216 = vpack.c.b16 %v7202, %v7201
    %v7217 = vpack.c.b16 %v7204, %v7203
    %v7218 = vpack.c.b16 %v7206, %v7205
    %v7219 = vpack.c.b16 %v7208, %v7207
    %v7220 = vpack.c.b16 %v7210, %v7209
    %v7221 = vpack.c.b16 %v7212, %v7211
    %v7222 = vpack.c.b16 %v7214, %v7213
    %7231 = vmatprep.subr.bf16.mxu0 0
    %7232 = vmatpush1.bf16.msra.mxu0 %v7215
    %7233 = vmatprep.subr.bf16.mxu0 0
    %7234 = vmatpush1.bf16.msra.mxu0 %v7216
    %7235 = vmatprep.subr.bf16.mxu0 0
    %7236 = vmatpush1.bf16.msra.mxu0 %v7217
    %7237 = vmatprep.subr.bf16.mxu0 0
    %7238 = vmatpush1.bf16.msra.mxu0 %v7218
    %7239 = vmatprep.subr.bf16.mxu0 0
    %7240 = vmatpush1.bf16.msra.mxu0 %v7219
    %7241 = vmatprep.subr.bf16.mxu0 0
    %7242 = vmatpush1.bf16.msra.mxu0 %v7220
    %7243 = vmatprep.subr.bf16.mxu0 0
    %7244 = vmatpush1.bf16.msra.mxu0 %v7221
    %7245 = vmatprep.subr.bf16.mxu0 0
    %7246 = vmatpush1.bf16.msra.mxu0 %v7222
    %7247 = vmatprep.subr.bf16.mxu0 0
    %7248 = vmatpush1.bf16.msra.mxu0 0
    %7249 = vmatprep.subr.bf16.mxu0 0
    %7250 = vmatpush1.bf16.msra.mxu0 0
    %7251 = vmatprep.subr.bf16.mxu0 0
    %7252 = vmatpush1.bf16.msra.mxu0 0
    %7253 = vmatprep.subr.bf16.mxu0 0
    %7254 = vmatpush1.bf16.msra.mxu0 0
    %7255 = vmatprep.subr.bf16.mxu0 0
    %7256 = vmatpush1.bf16.msra.mxu0 0
    %7257 = vmatprep.subr.bf16.mxu0 0
    %7258 = vmatpush1.bf16.msra.mxu0 0
    %7259 = vmatprep.subr.bf16.mxu0 0
    %7260 = vmatpush1.bf16.msra.mxu0 0
    %7261 = vmatprep.subr.bf16.mxu0 0
    %7262 = vmatpush1.bf16.msra.mxu0 0
    %7263 = vmatprep.mubr.bf16.mxu0 0
    %7264 = vmatmul.mubr.bf16.gmra.mrb[0].mxu0 %v7171
    %v7265 = vpop.f32.mrb[0].mxu0
    %v7266 = vadd.f32 0.0, %v7265
    %v7267 = vpop.f32.mrb[0].mxu0
    %v7268 = vpop.f32.mrb[0].mxu0
    %v7269 = vadd.f32 0.0, %v7268
    %v7270 = vpop.f32.mrb[0].mxu0
    %7271 = vmatprep.mubr.bf16.mxu0 0
    %7272 = vmatmul.mubr.bf16.gmra.mrb[0].mxu0 %v7180
    %v7273 = vpop.f32.mrb[0].mxu0
    %v7274 = vadd.f32 0.0, %v7273
    %v7275 = vpop.f32.mrb[0].mxu0
    %v7276 = vpop.f32.mrb[0].mxu0
    %v7277 = vadd.f32 0.0, %v7276
    %v7278 = vpop.f32.mrb[0].mxu0
    %7279 = vdwg.mxu0
    %v7280 = vadd.f32 %v7139, %v7266
    %v7281 = vadd.f32 %v7140, %v7269
    %v7282 = vadd.f32 %v7141, %v7274
    %v7283 = vadd.f32 %v7142, %v7277
    %v7284 = vld [vmem:[#allocation4] sm:$0xe0]
    %v7285 = vld [vmem:[%s4 + $0x200] sm:$0xf]
    %v7286 = vld [vmem:[%s4 + $0x204] sm:$0xf]
    %v7287 = vld [vmem:[%s4 + $0x208] sm:$0xf]
    %v7288 = vld [vmem:[%s4 + $0x20c] sm:$0xf]
    %v7289 = vld [vmem:[%s4 + $0x210] sm:$0xf]
    %v7290 = vld [vmem:[%s4 + $0x214] sm:$0xf]
    %v7291 = vld [vmem:[%s4 + $0x218] sm:$0xf]
    %v7292 = vld [vmem:[%s4 + $0x21c] sm:$0xf]
    %v7293 = vld [vmem:[%s4 + $0x220] sm:$0xf]
    %v7294 = vld [vmem:[%s4 + $0x224] sm:$0xf]
    %v7295 = vld [vmem:[%s4 + $0x228] sm:$0xf]
    %v7296 = vld [vmem:[%s4 + $0x22c] sm:$0xf]
    %v7297 = vld [vmem:[%s4 + $0x230] sm:$0xf]
    %v7298 = vld [vmem:[%s4 + $0x234] sm:$0xf]
    %v7299 = vld [vmem:[%s4 + $0x238] sm:$0xf]
    %v7300 = vld [vmem:[%s4 + $0x23c] sm:$0xf]
    %v7303 = vrot.slane %v7284, 5
    %v7304 = vrot.slane %v6257, 5
    %v7305 = vsel %vm911, %v7303, %v7304
    %v7306 = vrot.slane %v7143, 5
    %v7307 = vsel %vm911, %v7304, %v7306
    %v7326 = vunpack.c.l.b16 %v7285
    %v7327 = vunpack.c.l.b16 %v7286
    %v7328 = vunpack.c.l.b16 %v7287
    %v7329 = vunpack.c.l.b16 %v7288
    %v7330 = vunpack.c.l.b16 %v7289
    %v7331 = vunpack.c.l.b16 %v7290
    %v7332 = vunpack.c.l.b16 %v7291
    %v7333 = vunpack.c.l.b16 %v7292
    %v7334 = vunpack.c.l.b16 %v7293
    %v7335 = vunpack.c.l.b16 %v7294
    %v7336 = vunpack.c.l.b16 %v7295
    %v7337 = vunpack.c.l.b16 %v7296
    %v7338 = vunpack.c.l.b16 %v7297
    %v7339 = vunpack.c.l.b16 %v7298
    %v7340 = vunpack.c.l.b16 %v7299
    %v7341 = vunpack.c.l.b16 %v7300
    %v7342 = vpack.c.b16 %v7327, %v7326
    %v7343 = vpack.c.b16 %v7329, %v7328
    %v7344 = vpack.c.b16 %v7331, %v7330
    %v7345 = vpack.c.b16 %v7333, %v7332
    %v7346 = vpack.c.b16 %v7335, %v7334
    %v7347 = vpack.c.b16 %v7337, %v7336
    %v7348 = vpack.c.b16 %v7339, %v7338
    %v7349 = vpack.c.b16 %v7341, %v7340
    %7358 = vmatprep.subr.bf16.mxu0 0
    %7359 = vmatpush1.bf16.msra.mxu0 %v7342
    %7360 = vmatprep.subr.bf16.mxu0 0
    %7361 = vmatpush1.bf16.msra.mxu0 %v7343
    %7362 = vmatprep.subr.bf16.mxu0 0
    %7363 = vmatpush1.bf16.msra.mxu0 %v7344
    %7364 = vmatprep.subr.bf16.mxu0 0
    %7365 = vmatpush1.bf16.msra.mxu0 %v7345
    %7366 = vmatprep.subr.bf16.mxu0 0
    %7367 = vmatpush1.bf16.msra.mxu0 %v7346
    %7368 = vmatprep.subr.bf16.mxu0 0
    %7369 = vmatpush1.bf16.msra.mxu0 %v7347
    %7370 = vmatprep.subr.bf16.mxu0 0
    %7371 = vmatpush1.bf16.msra.mxu0 %v7348
    %7372 = vmatprep.subr.bf16.mxu0 0
    %7373 = vmatpush1.bf16.msra.mxu0 %v7349
    %7374 = vmatprep.subr.bf16.mxu0 0
    %7375 = vmatpush1.bf16.msra.mxu0 0
    %7376 = vmatprep.subr.bf16.mxu0 0
    %7377 = vmatpush1.bf16.msra.mxu0 0
    %7378 = vmatprep.subr.bf16.mxu0 0
    %7379 = vmatpush1.bf16.msra.mxu0 0
    %7380 = vmatprep.subr.bf16.mxu0 0
    %7381 = vmatpush1.bf16.msra.mxu0 0
    %7382 = vmatprep.subr.bf16.mxu0 0
    %7383 = vmatpush1.bf16.msra.mxu0 0
    %7384 = vmatprep.subr.bf16.mxu0 0
    %7385 = vmatpush1.bf16.msra.mxu0 0
    %7386 = vmatprep.subr.bf16.mxu0 0
    %7387 = vmatpush1.bf16.msra.mxu0 0
    %7388 = vmatprep.subr.bf16.mxu0 0
    %7389 = vmatpush1.bf16.msra.mxu0 0
    %7390 = vmatprep.mubr.bf16.mxu0 0
    %7391 = vmatmul.mubr.bf16.gmra.mrb[0].mxu0 %v7305
    %v7392 = vpop.f32.mrb[0].mxu0
    %v7393 = vadd.f32 0.0, %v7392
    %v7394 = vpop.f32.mrb[0].mxu0
    %v7395 = vpop.f32.mrb[0].mxu0
    %v7396 = vadd.f32 0.0, %v7395
    %v7397 = vpop.f32.mrb[0].mxu0
    %7398 = vmatprep.mubr.bf16.mxu0 0
    %7399 = vmatmul.mubr.bf16.gmra.mrb[0].mxu0 %v7307
    %v7400 = vpop.f32.mrb[0].mxu0
    %v7401 = vadd.f32 0.0, %v7400
    %v7402 = vpop.f32.mrb[0].mxu0
    %v7403 = vpop.f32.mrb[0].mxu0
    %v7404 = vadd.f32 0.0, %v7403
    %v7405 = vpop.f32.mrb[0].mxu0
    %7406 = vdwg.mxu0
    %v7407 = vadd.f32 %v7280, %v7393
    %v7408 = vadd.f32 %v7281, %v7396
    %v7409 = vadd.f32 %v7282, %v7401
    %v7410 = vadd.f32 %v7283, %v7404
    %7411 = vst [vmem:[#allocation5] sm:$0xff] %v7407
    %7412 = vst [vmem:[#allocation5 + $0x8] sm:$0xff] %v7408
    %7413 = vst [vmem:[#allocation5 + $0x10] sm:$0xff] %v7409
    %7414 = vst [vmem:[#allocation5 + $0x18] sm:$0xff] %v7410
    %v7415 = vld [vmem:[%s5 + $0x3] sm:$0x1]
    %v7416 = vld [vmem:[#allocation5] sm:$0x1]
    %v7417 = vld [vmem:[#allocation5 + $0x1] sm:$0x1]
    %v7418 = vmax.f32 %v7416, %v7417
    %v7419 = vld [vmem:[#allocation5 + $0x4] sm:$0x1]
    %v7420 = vld [vmem:[#allocation5 + $0x5] sm:$0x1]
    %v7421 = vmax.f32 %v7419, %v7420
    %v7422 = vmax.f32 %v7418, %v7421
    %v7423 = vadd.f32 %v7422, %v7415
    %v7424 = vmax.f32 %v7423, 0.0
    %7425 = vst [vmem:[#allocation6] sm:$0x1] %v7424
    %v7426 = vld [vmem:[#allocation5 + $0x10] sm:$0x1]
    %v7427 = vld [vmem:[#allocation5 + $0x11] sm:$0x1]
    %v7428 = vmax.f32 %v7426, %v7427
    %v7429 = vld [vmem:[#allocation5 + $0x14] sm:$0x1]
    %v7430 = vld [vmem:[#allocation5 + $0x15] sm:$0x1]
    %v7431 = vmax.f32 %v7429, %v7430
    %v7432 = vmax.f32 %v7428, %v7431
    %v7433 = vadd.f32 %v7432, %v7415
    %v7434 = vmax.f32 %v7433, 0.0
    %7435 = vst [vmem:[#allocation6 + $0x1] sm:$0x1] %v7434
    // Predicated region
    $region26: #{protoconvnet_forward.1} parent=1 // pred_check
      _
    $region27: #{protoconvnet_forward.1} parent=1 // pred_check_branch
      %7437 = sbr.rel (0) target = $region29
    $region28: #{protoconvnet_forward.1} parent=1 // pred_region
      %s7439 = ssub.s32 32, 32
      %7440 = vsyncadd [#allocation7], %s7439
      %s7442 = sshll.u32 [#allocation6], 4
      %s7443 = int_to_ptr.vmem [resolvable:$true] %s7442
      %7445 = dma.vmem_to_hbm [thread:$0]  %s7443, 32, %s6, [#allocation7]
    $region29: #{protoconvnet_forward.1} parent=1 // pred_fallthru
      _
    // Predicated region
    $region30: #{protoconvnet_forward.1} parent=1 // pred_check
      _
    $region31: #{protoconvnet_forward.1} parent=1 // pred_check_branch
      %7447 = sbr.rel (0) target = $region33
    $region32: #{protoconvnet_forward.1} parent=1 // pred_region
      %7448 = dma.done [#allocation7], 32
    $region33: #{protoconvnet_forward.1} parent=1 // pred_fallthru
      _
    %7449 = vsyncpa [#allocation7], 1

</llo_original>
